<compile_context>
chip_gen: v7x
topology: tpu7x:2x2x1
jax: 0.10.0
libtpu: 0.0.40
codegen_flags: <defaults>
</compile_context>

<pallas_src>
import functools
import math

import jax
import jax.numpy as jnp
import numpy as np
from jax.experimental import pallas as pl
from jax.experimental.pallas import tpu as pltpu

BN_EPS = 1e-5


def _get_activation(name):
    if name in (None, "gelu"):
        return lambda x: jax.nn.gelu(x, approximate=True)
    if name == "silu":
        return jax.nn.silu
    if name == "relu":
        return jax.nn.relu
    if name in ("lrelu", "leaky_relu"):
        return lambda x: jax.nn.leaky_relu(x, 0.1)
    raise ValueError(f"unsupported activation: {name}")


# ----------------------------------------------------------------------------
# In-kernel helpers
# ----------------------------------------------------------------------------
def _dw_conv3x3(tap_fn, w, b):
    """Depthwise 3x3 as 9 shifted-tap VPU MACs. tap_fn(kh, kw) -> (rows, W, C) f32."""
    acc = None
    for kh in range(3):
        for kw in range(3):
            k = kh * 3 + kw
            term = tap_fn(kh, kw) * w[k:k + 1, :]
            acc = term if acc is None else acc + term
    return acc + b


def _row_mask(x, first_row, height):
    """Zero rows of x (R, W, C) whose original image row lies outside [0, height)."""
    row = jax.lax.broadcasted_iota(jnp.int32, (x.shape[0], 1, 1), 0) + first_row
    return jnp.where((row >= 0) & (row < height), x, 0.0)


# ----------------------------------------------------------------------------
# K1: bconv1  (1x1 conv recomputed on halo rows -> 3x3 conv -> 1x1 conv, BN folded + act)
# ----------------------------------------------------------------------------
def _bconv1_kernel(hp_ref, mp_ref, w1_ref, b1_ref, w2_ref, b2_ref, w3_ref, b3_ref,
                   o_ref, t1_s, *, th, W, H, act_fn):
    i = pl.program_id(1)
    r0 = pl.multiple_of(i * th, th)
    hd = o_ref.shape[-1]

    # cat([h, m]) on the row-haloed window (th+2 rows); conv1 (1x1) + act recomputed on halo
    hw = hp_ref[0, pl.ds(r0, th + 2), :, :]                           # (th+2, W, hd) f32
    mw = mp_ref[0, pl.ds(r0, th + 2), :, :].astype(jnp.float32)       # (th+2, W, C)  f32
    x = jnp.concatenate([hw, mw], axis=-1).reshape((th + 2) * W, -1)
    t1 = jnp.dot(x.astype(jnp.bfloat16), w1_ref[...],
                 preferred_element_type=jnp.float32) + b1_ref[...]
    t1 = act_fn(t1).reshape(th + 2, W, hd)
    # rows outside the image form conv2's zero padding -> force them to zero
    t1 = _row_mask(t1, i * th - 1, H)

    # column-padded copy of t1 in VMEM scratch, then 3x3 im2col taps (kh, kw, cin order)
    zcol = jnp.zeros((th + 2, 1, hd), jnp.float32)
    t1_s[:, 0:1, :] = zcol
    t1_s[:, W + 1:W + 2, :] = zcol
    t1_s[:, 1:W + 1, :] = t1
    taps = [t1_s[kh:kh + th, kw:kw + W, :].reshape(th * W, hd)
            for kh in range(3) for kw in range(3)]
    p = jnp.concatenate(taps, axis=-1).astype(jnp.bfloat16)           # (th*W, 9*hd)

    y = act_fn(jnp.dot(p, w2_ref[...], preferred_element_type=jnp.float32) + b2_ref[...])
    y = jnp.dot(y.astype(jnp.bfloat16), w3_ref[...],
                preferred_element_type=jnp.float32) + b3_ref[...]
    o_ref[0] = act_fn(y).astype(o_ref.dtype).reshape(th, W, hd)


# ----------------------------------------------------------------------------
# K2: wr / wz depthwise gates (VPU taps) + r-gating of h + bconv2.conv1 (1x1)
# ----------------------------------------------------------------------------
def _gate_kernel(mh1p_ref, hp_ref, mp_ref, wr_ref, br_ref, wz_ref, bz_ref, w4_ref, b4_ref,
                 z_ref, t2_ref, *, th, W, act_fn):
    i = pl.program_id(1)
    r0 = pl.multiple_of(i * th, th)
    hd = z_ref.shape[-1]

    win = mh1p_ref[0, pl.ds(r0, th + 2), :, :].astype(jnp.float32)    # (th+2, W+2, hd)
    tap = lambda kh, kw: win[kh:kh + th, kw:kw + W, :]
    r = jax.nn.sigmoid(act_fn(_dw_conv3x3(tap, wr_ref[...], br_ref[...])))
    z = jax.nn.sigmoid(act_fn(_dw_conv3x3(tap, wz_ref[...], bz_ref[...])))

    h_in = hp_ref[0, pl.ds(r0 + 1, th), :, :]                         # (th, W, hd) f32
    m_in = mp_ref[0, pl.ds(r0 + 1, th), :, :].astype(jnp.float32)     # (th, W, C)  f32
    cat = jnp.concatenate([h_in * r, m_in], axis=-1).reshape(th * W, -1)
    t2 = jnp.dot(cat.astype(jnp.bfloat16), w4_ref[...],
                 preferred_element_type=jnp.float32) + b4_ref[...]

    z_ref[0] = z.astype(z_ref.dtype)
    t2_ref[0] = act_fn(t2).astype(t2_ref.dtype).reshape(th, W, hd)


# ----------------------------------------------------------------------------
# K3: bconv2.conv2 (3x3, recomputed on halo rows) + conv3 (1x1) + wH depthwise + GRU update
# ----------------------------------------------------------------------------
def _update_kernel(t2p_ref, z_ref, hp_ref, w2_ref, b2_ref, w3_ref, b3_ref, wH_ref, bH_ref,
                   o_ref, mr_s, *, th, W, H, act_fn):
    i = pl.program_id(1)
    r0 = pl.multiple_of(i * th, th)
    hd = o_ref.shape[-1]

    # conv2/conv3 recomputed on one extra halo row each side (so mr never hits HBM)
    win = t2p_ref[0, pl.ds(r0, th + 4), :, :].astype(jnp.float32)     # (th+4, W+2, hd)
    taps = [win[kh:kh + th + 2, kw:kw + W, :].reshape((th + 2) * W, hd)
            for kh in range(3) for kw in range(3)]
    p = jnp.concatenate(taps, axis=-1).astype(jnp.bfloat16)           # ((th+2)*W, 9*hd)
    y = act_fn(jnp.dot(p, w2_ref[...], preferred_element_type=jnp.float32) + b2_ref[...])
    y = jnp.dot(y.astype(jnp.bfloat16), w3_ref[...],
                preferred_element_type=jnp.float32) + b3_ref[...]
    mr = act_fn(y).reshape(th + 2, W, hd)
    mr = _row_mask(mr, i * th - 1, H)                                 # wH's zero row padding

    # column-padded mr in VMEM scratch, then wH depthwise 3x3 + sigmoid
    zcol = jnp.zeros((th + 2, 1, hd), jnp.float32)
    mr_s[:, 0:1, :] = zcol
    mr_s[:, W + 1:W + 2, :] = zcol
    mr_s[:, 1:W + 1, :] = mr
    tap = lambda kh, kw: mr_s[kh:kh + th, kw:kw + W, :]
    Hh = jax.nn.sigmoid(act_fn(_dw_conv3x3(tap, wH_ref[...], bH_ref[...])))

    z = z_ref[0]
    h_prev = hp_ref[0, pl.ds(r0 + 1, th), :, :]                       # (th, W, hd) f32
    o_ref[0] = (z * Hh + (1.0 - z) * h_prev).astype(o_ref.dtype)


# ----------------------------------------------------------------------------
# One recConvCell step (NHWC layouts; h state stays (B, H, W, hd) f32 between steps)
# ----------------------------------------------------------------------------
def _pick_row_tile(batch, height, min_steps=4):
    """Largest divisor of `height` that still gives >= min_steps grid steps (v7x: 2/TC)."""
    for th in sorted((d for d in range(1, height + 1) if height % d == 0), reverse=True):
        if batch * (height // th) >= min_steps:
            return th
    return 1


def rec_conv_cell_forward(m_nchw, h, folded, *, hidden_dim, act="gelu"):
    act_fn = _get_activation(act)
    hd = hidden_dim
    B, C, H, W = m_nchw.shape
    th = _pick_row_tile(B, H)
    grid = (B, H // th)
    cparams = pltpu.CompilerParams(dimension_semantics=("parallel", "arbitrary"))

    m = jnp.transpose(m_nchw, (0, 2, 3, 1)).astype(jnp.bfloat16)        # NHWC bf16
    hp = jnp.pad(h, ((0, 0), (1, 1), (0, 0), (0, 0)))                   # (B, H+2, W, hd) f32
    mp = jnp.pad(m, ((0, 0), (1, 1), (0, 0), (0, 0)))                   # (B, H+2, W, C)  bf16

    def const_spec(a):
        return pl.BlockSpec(a.shape, lambda b, i, _n=a.ndim: (0,) * _n)

    hp_spec = pl.BlockSpec((1, H + 2, W, hd), lambda b, i: (b, 0, 0, 0))   # resident per b
    mp_spec = pl.BlockSpec((1, H + 2, W, C), lambda b, i: (b, 0, 0, 0))    # resident per b
    row_spec = pl.BlockSpec((1, th, W, hd), lambda b, i: (b, i, 0, 0))     # row-tiled

    # ---- K1: bconv1 -------------------------------------------------------------------
    k1_consts = ("b1_w1", "b1_b1", "b1_w2", "b1_b2", "b1_w3", "b1_b3")
    mh1 = pl.pallas_call(
        functools.partial(_bconv1_kernel, th=th, W=W, H=H, act_fn=act_fn),
        grid=grid,
        in_specs=[hp_spec, mp_spec] + [const_spec(folded[k]) for k in k1_consts],
        out_specs=row_spec,
        out_shape=jax.ShapeDtypeStruct((B, H, W, hd), jnp.bfloat16),
        scratch_shapes=[pltpu.VMEM((th + 2, W + 2, hd), jnp.float32)],
        compiler_params=cparams,
    )(hp, mp, *[folded[k] for k in k1_consts])

    # ---- K2: wr/wz gates + r-gating + bconv2.conv1 --------------------------------------
    mh1p = jnp.pad(mh1, ((0, 0), (1, 1), (1, 1), (0, 0)))               # (B, H+2, W+2, hd)
    mh1p_spec = pl.BlockSpec((1, H + 2, W + 2, hd), lambda b, i: (b, 0, 0, 0))
    k2_consts = ("w_r", "b_r", "w_z", "b_z", "b2_w1", "b2_b1")
    z, t2 = pl.pallas_call(
        functools.partial(_gate_kernel, th=th, W=W, act_fn=act_fn),
        grid=grid,
        in_specs=[mh1p_spec, hp_spec, mp_spec] + [const_spec(folded[k]) for k in k2_consts],
        out_specs=(row_spec, row_spec),
        out_shape=(jax.ShapeDtypeStruct((B, H, W, hd), jnp.float32),
                   jax.ShapeDtypeStruct((B, H, W, hd), jnp.bfloat16)),
        compiler_params=cparams,
    )(mh1p, hp, mp, *[folded[k] for k in k2_consts])

    # ---- K3: bconv2.conv2/conv3 + wH + GRU-style state update ---------------------------
    t2p = jnp.pad(t2, ((0, 0), (2, 2), (1, 1), (0, 0)))                 # (B, H+4, W+2, hd)
    t2p_spec = pl.BlockSpec((1, H + 4, W + 2, hd), lambda b, i: (b, 0, 0, 0))
    k3_consts = ("b2_w2", "b2_b2", "b2_w3", "b2_b3", "w_H", "b_H")
    h_next = pl.pallas_call(
        functools.partial(_update_kernel, th=th, W=W, H=H, act_fn=act_fn),
        grid=grid,
        in_specs=[t2p_spec, row_spec, hp_spec] + [const_spec(folded[k]) for k in k3_consts],
        out_specs=row_spec,
        out_shape=jax.ShapeDtypeStruct((B, H, W, hd), jnp.float32),
        scratch_shapes=[pltpu.VMEM((th + 2, W + 2, hd), jnp.float32)],
        compiler_params=cparams,
    )(t2p, z, hp, *[folded[k] for k in k3_consts])

    return h_next                                                        # (B, H, W, hd) f32


# ----------------------------------------------------------------------------
# Parameters: raw (for the reference) + BN-folded matmul / tap form (for the kernels)
# ----------------------------------------------------------------------------
def _init_raw_params(key, input_dim, hidden_dim):
    C, hd = input_dim, hidden_dim
    keys = iter(jax.random.split(key, 64))

    def conv_w(shape, fan_in):
        b = 1.0 / math.sqrt(fan_in)
        return jax.random.uniform(next(keys), shape, jnp.float32, -b, b)

    def bn(c):
        return dict(gamma=jax.random.uniform(next(keys), (c,), jnp.float32, 0.8, 1.2),
                    beta=jax.random.uniform(next(keys), (c,), jnp.float32, -0.1, 0.1),
                    mean=jax.random.uniform(next(keys), (c,), jnp.float32, -0.1, 0.1),
                    var=jax.random.uniform(next(keys), (c,), jnp.float32, 0.8, 1.2))

    def bottleneck():
        return dict(w1=conv_w((1, 1, 2 * C, hd), 2 * C), bn1=bn(hd),
                    w2=conv_w((3, 3, hd, hd), 9 * hd), bn2=bn(hd),
                    w3=conv_w((1, 1, hd, hd), hd), bn3=bn(hd))

    def depthwise():
        return dict(w=conv_w((3, 3, hd), 9), bn=bn(hd))

    return dict(b1=bottleneck(), b2=bottleneck(),
                wr=depthwise(), wz=depthwise(), wH=depthwise())


def _fold_bn(bn):
    s = bn["gamma"] / jnp.sqrt(bn["var"] + BN_EPS)
    return s, bn["beta"] - bn["mean"] * s


def _fold_dense(w, bn):
    s, t = _fold_bn(bn)
    kh, kw, cin, cout = w.shape
    W = w.reshape(kh * kw * cin, cout) * s[None, :]
    return W.astype(jnp.bfloat16), t.reshape(1, cout).astype(jnp.float32)


def _fold_depthwise(w, bn):
    s, t = _fold_bn(bn)
    hd = w.shape[-1]
    return ((w.reshape(9, hd) * s[None, :]).astype(jnp.float32),
            t.reshape(1, hd).astype(jnp.float32))


def _fold_params(raw):
    f = {}
    for name in ("b1", "b2"):
        p = raw[name]
        f[name + "_w1"], f[name + "_b1"] = _fold_dense(p["w1"], p["bn1"])
        f[name + "_w2"], f[name + "_b2"] = _fold_dense(p["w2"], p["bn2"])
        f[name + "_w3"], f[name + "_b3"] = _fold_dense(p["w3"], p["bn3"])
    f["w_r"], f["b_r"] = _fold_depthwise(raw["wr"]["w"], raw["wr"]["bn"])
    f["w_z"], f["b_z"] = _fold_depthwise(raw["wz"]["w"], raw["wz"]["bn"])
    f["w_H"], f["b_H"] = _fold_depthwise(raw["wH"]["w"], raw["wH"]["bn"])
    return f


class RecConvCell:
    """JAX/Pallas mirror of the PyTorch recConvCell memory block (inference-mode BN)."""

    def __init__(self, input_dim, hidden_dim, kernel_size, stride, act, key):
        if input_dim != hidden_dim:
            raise ValueError("recConvCell requires hidden_dim == input_dim "
                             "(cat([h, m]) feeds Bottleneck(2*input_dim, ...)).")
        self.input_dim = input_dim
        self.hidden_dim = hidden_dim
        self.kernel_size = kernel_size   # stored but unused, as in the torch module
        self.stride = stride             # stored but unused, as in the torch module
        self.act = act
        self.raw = _init_raw_params(key, input_dim, hidden_dim)
        self.folded = _fold_params(self.raw)
        self._step = jax.jit(functools.partial(
            rec_conv_cell_forward, hidden_dim=hidden_dim, act=act))
        self.clean_memory()

    def clean_memory(self):
        self.has_memory = False
        self.h = None                    # recurrent state, kept as (B, H, W, hd) f32

    def __call__(self, m):
        B, _, H, W = m.shape
        h = self.h if self.has_memory else jnp.zeros((B, H, W, self.hidden_dim), jnp.float32)
        h = self._step(m, h, self.folded)
        self.h = h
        self.has_memory = True
        return jnp.transpose(h, (0, 3, 1, 2))     # NCHW, like the torch module


# ----------------------------------------------------------------------------
# Pure-JAX f32 reference of the same forward pass (for the correctness check)
# ----------------------------------------------------------------------------
def _ref_conv_bn(x, w, bn, stride, pad):
    if w.ndim == 3:                                # depthwise (kh, kw, c)
        kh, kw, c = w.shape
        w_oihw = jnp.transpose(w.reshape(kh, kw, 1, c), (3, 2, 0, 1))
        groups = c
    else:                                          # dense (kh, kw, cin, cout)
        w_oihw = jnp.transpose(w, (3, 2, 0, 1))
        groups = 1
    out = jax.lax.conv_general_dilated(
        x, w_oihw, (stride, stride), [(pad, pad), (pad, pad)],
        dimension_numbers=("NCHW", "OIHW", "NCHW"),
        feature_group_count=groups, precision=jax.lax.Precision.HIGHEST)
    s, t = _fold_bn(bn)
    return out * s.reshape(1, -1, 1, 1) + t.reshape(1, -1, 1, 1)


def _ref_bottleneck(x, p, act_fn):
    y = act_fn(_ref_conv_bn(x, p["w1"], p["bn1"], 1, 0))
    y = act_fn(_ref_conv_bn(y, p["w2"], p["bn2"], 1, 1))
    y = _ref_conv_bn(y, p["w3"], p["bn3"], 1, 0)
    return act_fn(y)   # use_add is False (in_channels = 2*input_dim != hidden_dim)


def _ref_step(m, h, raw, act_fn):
    mh1 = _ref_bottleneck(jnp.concatenate([h, m], axis=1), raw["b1"], act_fn)
    r = jax.nn.sigmoid(act_fn(_ref_conv_bn(mh1, raw["wr"]["w"], raw["wr"]["bn"], 1, 1)))
    z = jax.nn.sigmoid(act_fn(_ref_conv_bn(mh1, raw["wz"]["w"], raw["wz"]["bn"], 1, 1)))
    mr = _ref_bottleneck(jnp.concatenate([h * r, m], axis=1), raw["b2"], act_fn)
    Hh = jax.nn.sigmoid(act_fn(_ref_conv_bn(mr, raw["wH"]["w"], raw["wH"]["bn"], 1, 1)))
    return z * Hh + (1.0 - z) * h


if __name__ == "__main__":
    key = jax.random.PRNGKey(0)
    k_p, k_x1, k_x2 = jax.random.split(key, 3)

    # recConvCell implies hidden_dim == input_dim (cat([h, m]) -> Bottleneck(2*input_dim, ...))
    B, C, H, W = 2, 32, 16, 16
    hidden_dim = 32

    cell = RecConvCell(C, hidden_dim, kernel_size=3, stride=1, act="gelu", key=k_p)
    m1 = jax.random.normal(k_x1, (B, C, H, W), jnp.float32)
    m2 = jax.random.normal(k_x2, (B, C, H, W), jnp.float32)

    h1 = cell(m1)                         # first step: h initialised to zeros
    h2 = cell(m2)                         # second step: uses stored recurrent state
    h2 = jax.block_until_ready(h2)

    # pure-JAX f32 reference of the same two recurrent steps
    act_fn = _get_activation("gelu")
    h0 = jnp.zeros((B, hidden_dim, H, W), jnp.float32)
    hr1 = _ref_step(m1, h0, cell.raw, act_fn)
    hr2 = _ref_step(m2, hr1, cell.raw, act_fn)

    assert h2.shape == (B, hidden_dim, H, W)
    # bf16 MXU operands (f32 accumulation) -> loosened tolerance vs the f32 reference
    np.testing.assert_allclose(np.asarray(h2), np.asarray(hr2), rtol=3e-2, atol=3e-2)
    print("KERNEL_OK")
</pallas_src>

<mosaic_0001>
module attributes {stable_mosaic.version = 11 : i64} {
  func.func @_bconv1_kernel(%arg0: i32, %arg1: i32, %arg2: memref<1x18x16x32xf32, #tpu.memory_space<vmem>>, %arg3: memref<1x18x16x32xbf16, #tpu.memory_space<vmem>>, %arg4: memref<64x32xbf16, #tpu.memory_space<vmem>>, %arg5: memref<1x32xf32, #tpu.memory_space<vmem>>, %arg6: memref<288x32xbf16, #tpu.memory_space<vmem>>, %arg7: memref<1x32xf32, #tpu.memory_space<vmem>>, %arg8: memref<32x32xbf16, #tpu.memory_space<vmem>>, %arg9: memref<1x32xf32, #tpu.memory_space<vmem>>, %arg10: memref<1x8x16x32xbf16, #tpu.memory_space<vmem>>, %arg11: memref<10x18x32xf32, #tpu.memory_space<vmem>>) attributes {dimension_semantics = [#tpu.dimension_semantics<parallel>, #tpu.dimension_semantics<arbitrary>], iteration_bounds = array<i64: 2, 2>, scalar_prefetch = 0 : i64, scratch_operands = 1 : i64, tpu.core_type = #tpu.core_type<tc>, window_params = [{transform_indices = @transform_0, window_bounds = array<i64: 1, 18, 16, 32>}, {transform_indices = @transform_1, window_bounds = array<i64: 1, 18, 16, 32>}, {pipeline_mode = #tpu.pipeline_mode<synchronous>, transform_indices = @transform_2, window_bounds = array<i64: 64, 32>}, {pipeline_mode = #tpu.pipeline_mode<synchronous>, transform_indices = @transform_3, window_bounds = array<i64: 1, 32>}, {pipeline_mode = #tpu.pipeline_mode<synchronous>, transform_indices = @transform_4, window_bounds = array<i64: 288, 32>}, {pipeline_mode = #tpu.pipeline_mode<synchronous>, transform_indices = @transform_5, window_bounds = array<i64: 1, 32>}, {pipeline_mode = #tpu.pipeline_mode<synchronous>, transform_indices = @transform_6, window_bounds = array<i64: 32, 32>}, {pipeline_mode = #tpu.pipeline_mode<synchronous>, transform_indices = @transform_7, window_bounds = array<i64: 1, 32>}, {transform_indices = @transform_8, window_bounds = array<i64: 1, 8, 16, 32>}]} {
    %c8_i32 = arith.constant 8 : i32
    %0 = arith.muli %arg1, %c8_i32 : i32
    %1 = tpu.assume_multiple %0, 8 : i32
    %c0 = arith.constant 0 : index
    %2 = arith.index_cast %1 : i32 to index
    %c0_0 = arith.constant 0 : index
    %c0_1 = arith.constant 0 : index
    %3 = vector.load %arg2[%c0, %2, %c0_0, %c0_1] : memref<1x18x16x32xf32, #tpu.memory_space<vmem>>, vector<1x10x16x32xf32>
    %4 = vector.shape_cast %3 : vector<1x10x16x32xf32> to vector<10x16x32xf32>
    %c0_2 = arith.constant 0 : index
    %5 = arith.index_cast %1 : i32 to index
    %c0_3 = arith.constant 0 : index
    %c0_4 = arith.constant 0 : index
    %6 = vector.load %arg3[%c0_2, %5, %c0_3, %c0_4] : memref<1x18x16x32xbf16, #tpu.memory_space<vmem>>, vector<1x10x16x32xbf16>
    %7 = vector.shape_cast %6 : vector<1x10x16x32xbf16> to vector<10x16x32xbf16>
    %8 = arith.extf %7 : vector<10x16x32xbf16> to vector<10x16x32xf32>
    %9 = tpu.concatenate %4, %8 in 2 : vector<10x16x32xf32>, vector<10x16x32xf32> -> vector<10x16x64xf32>
    %10 = vector.shape_cast %9 : vector<10x16x64xf32> to vector<160x64xf32>
    %11 = arith.truncf %10 : vector<160x64xf32> to vector<160x64xbf16>
    %c0_5 = arith.constant 0 : index
    %c0_6 = arith.constant 0 : index
    %12 = vector.load %arg4[%c0_5, %c0_6] : memref<64x32xbf16, #tpu.memory_space<vmem>>, vector<64x32xbf16>
    %cst = arith.constant dense<0.000000e+00> : vector<160x32xf32>
    %13 = tpu.matmul %11, %12, %cst {dimension_numbers = #tpu.dot_dimension_numbers<[1], [0], [0], [1], [0, 0, 1, 1], [], []>} : vector<160x64xbf16>, vector<64x32xbf16>, vector<160x32xf32> -> vector<160x32xf32>
    %c0_7 = arith.constant 0 : index
    %c0_8 = arith.constant 0 : index
    %14 = vector.load %arg5[%c0_7, %c0_8] : memref<1x32xf32, #tpu.memory_space<vmem>>, vector<1x32xf32>
    %15 = vector.broadcast %14 : vector<1x32xf32> to vector<160x32xf32>
    %16 = arith.addf %13, %15 : vector<160x32xf32>
    %17 = arith.mulf %16, %16 : vector<160x32xf32>
    %18 = arith.mulf %16, %17 : vector<160x32xf32>
    %cst_9 = arith.constant 4.471500e-02 : f32
    %19 = vector.broadcast %cst_9 : f32 to vector<160x32xf32>
    %20 = arith.mulf %19, %18 : vector<160x32xf32>
    %21 = arith.addf %16, %20 : vector<160x32xf32>
    %cst_10 = arith.constant 0.797884583 : f32
    %22 = vector.broadcast %cst_10 : f32 to vector<160x32xf32>
    %23 = arith.mulf %22, %21 : vector<160x32xf32>
    %24 = math.tanh %23 : vector<160x32xf32>
    %cst_11 = arith.constant 1.000000e+00 : f32
    %25 = vector.broadcast %cst_11 : f32 to vector<160x32xf32>
    %26 = arith.addf %25, %24 : vector<160x32xf32>
    %cst_12 = arith.constant 5.000000e-01 : f32
    %27 = vector.broadcast %cst_12 : f32 to vector<160x32xf32>
    %28 = arith.mulf %27, %26 : vector<160x32xf32>
    %29 = arith.mulf %16, %28 : vector<160x32xf32>
    %30 = vector.shape_cast %29 : vector<160x32xf32> to vector<10x16x32xf32>
    %c8_i32_13 = arith.constant 8 : i32
    %31 = arith.muli %arg1, %c8_i32_13 : i32
    %c1_i32 = arith.constant 1 : i32
    %32 = arith.subi %31, %c1_i32 : i32
    %33 = tpu.iota {dimensions = array<i32: 0>} : vector<10x1x1xi32>
    %34 = vector.broadcast %32 : i32 to vector<10x1x1xi32>
    %35 = arith.addi %33, %34 : vector<10x1x1xi32>
    %c0_i32 = arith.constant 0 : i32
    %36 = vector.broadcast %c0_i32 : i32 to vector<10x1x1xi32>
    %37 = arith.cmpi sge, %35, %36 : vector<10x1x1xi32>
    %c16_i32 = arith.constant 16 : i32
    %38 = vector.broadcast %c16_i32 : i32 to vector<10x1x1xi32>
    %39 = arith.cmpi slt, %35, %38 : vector<10x1x1xi32>
    %40 = arith.andi %37, %39 : vector<10x1x1xi1>
    %cst_14 = arith.constant 0.000000e+00 : f32
    %41 = vector.shape_cast %40 : vector<10x1x1xi1> to vector<10x1x1xi1>
    %42 = vector.broadcast %41 : vector<10x1x1xi1> to vector<10x16x32xi1>
    %43 = vector.broadcast %cst_14 : f32 to vector<10x16x32xf32>
    %44 = arith.select %42, %30, %43 : vector<10x16x32xi1>, vector<10x16x32xf32>
    %cst_15 = arith.constant 0.000000e+00 : f32
    %45 = vector.broadcast %cst_15 : f32 to vector<10x1x32xf32>
    %c0_16 = arith.constant 0 : index
    %c0_17 = arith.constant 0 : index
    %c0_18 = arith.constant 0 : index
    %46 = vector.load %arg11[%c0_16, %c0_17, %c0_18] : memref<10x18x32xf32, #tpu.memory_space<vmem>>, vector<10x1x32xf32>
    tpu.vector_store %arg11[%c0_16, %c0_17, %c0_18], %45 {strides = array<i32>} : memref<10x18x32xf32, #tpu.memory_space<vmem>>, vector<10x1x32xf32>,
    %c0_19 = arith.constant 0 : index
    %c17 = arith.constant 17 : index
    %c0_20 = arith.constant 0 : index
    %47 = vector.load %arg11[%c0_19, %c17, %c0_20] : memref<10x18x32xf32, #tpu.memory_space<vmem>>, vector<10x1x32xf32>
    tpu.vector_store %arg11[%c0_19, %c17, %c0_20], %45 {strides = array<i32>} : memref<10x18x32xf32, #tpu.memory_space<vmem>>, vector<10x1x32xf32>,
    %c0_21 = arith.constant 0 : index
    %c1 = arith.constant 1 : index
    %c0_22 = arith.constant 0 : index
    %48 = vector.load %arg11[%c0_21, %c1, %c0_22] : memref<10x18x32xf32, #tpu.memory_space<vmem>>, vector<10x16x32xf32>
    tpu.vector_store %arg11[%c0_21, %c1, %c0_22], %44 {strides = array<i32>} : memref<10x18x32xf32, #tpu.memory_space<vmem>>, vector<10x16x32xf32>,
    %c0_23 = arith.constant 0 : index
    %c0_24 = arith.constant 0 : index
    %c0_25 = arith.constant 0 : index
    %49 = vector.load %arg11[%c0_23, %c0_24, %c0_25] : memref<10x18x32xf32, #tpu.memory_space<vmem>>, vector<8x16x32xf32>
    %50 = vector.shape_cast %49 : vector<8x16x32xf32> to vector<128x32xf32>
    %c0_26 = arith.constant 0 : index
    %c1_27 = arith.constant 1 : index
    %c0_28 = arith.constant 0 : index
    %51 = vector.load %arg11[%c0_26, %c1_27, %c0_28] : memref<10x18x32xf32, #tpu.memory_space<vmem>>, vector<8x16x32xf32>
    %52 = vector.shape_cast %51 : vector<8x16x32xf32> to vector<128x32xf32>
    %c0_29 = arith.constant 0 : index
    %c2 = arith.constant 2 : index
    %c0_30 = arith.constant 0 : index
    %53 = vector.load %arg11[%c0_29, %c2, %c0_30] : memref<10x18x32xf32, #tpu.memory_space<vmem>>, vector<8x16x32xf32>
    %54 = vector.shape_cast %53 : vector<8x16x32xf32> to vector<128x32xf32>
    %c1_31 = arith.constant 1 : index
    %c0_32 = arith.constant 0 : index
    %c0_33 = arith.constant 0 : index
    %55 = vector.load %arg11[%c1_31, %c0_32, %c0_33] : memref<10x18x32xf32, #tpu.memory_space<vmem>>, vector<8x16x32xf32>
    %56 = vector.shape_cast %55 : vector<8x16x32xf32> to vector<128x32xf32>
    %c1_34 = arith.constant 1 : index
    %c1_35 = arith.constant 1 : index
    %c0_36 = arith.constant 0 : index
    %57 = vector.load %arg11[%c1_34, %c1_35, %c0_36] : memref<10x18x32xf32, #tpu.memory_space<vmem>>, vector<8x16x32xf32>
    %58 = vector.shape_cast %57 : vector<8x16x32xf32> to vector<128x32xf32>
    %c1_37 = arith.constant 1 : index
    %c2_38 = arith.constant 2 : index
    %c0_39 = arith.constant 0 : index
    %59 = vector.load %arg11[%c1_37, %c2_38, %c0_39] : memref<10x18x32xf32, #tpu.memory_space<vmem>>, vector<8x16x32xf32>
    %60 = vector.shape_cast %59 : vector<8x16x32xf32> to vector<128x32xf32>
    %c2_40 = arith.constant 2 : index
    %c0_41 = arith.constant 0 : index
    %c0_42 = arith.constant 0 : index
    %61 = vector.load %arg11[%c2_40, %c0_41, %c0_42] : memref<10x18x32xf32, #tpu.memory_space<vmem>>, vector<8x16x32xf32>
    %62 = vector.shape_cast %61 : vector<8x16x32xf32> to vector<128x32xf32>
    %c2_43 = arith.constant 2 : index
    %c1_44 = arith.constant 1 : index
    %c0_45 = arith.constant 0 : index
    %63 = vector.load %arg11[%c2_43, %c1_44, %c0_45] : memref<10x18x32xf32, #tpu.memory_space<vmem>>, vector<8x16x32xf32>
    %64 = vector.shape_cast %63 : vector<8x16x32xf32> to vector<128x32xf32>
    %c2_46 = arith.constant 2 : index
    %c2_47 = arith.constant 2 : index
    %c0_48 = arith.constant 0 : index
    %65 = vector.load %arg11[%c2_46, %c2_47, %c0_48] : memref<10x18x32xf32, #tpu.memory_space<vmem>>, vector<8x16x32xf32>
    %66 = vector.shape_cast %65 : vector<8x16x32xf32> to vector<128x32xf32>
    %67 = tpu.concatenate %50, %52, %54, %56, %58, %60, %62, %64, %66 in 1 : vector<128x32xf32>, vector<128x32xf32>, vector<128x32xf32>, vector<128x32xf32>, vector<128x32xf32>, vector<128x32xf32>, vector<128x32xf32>, vector<128x32xf32>, vector<128x32xf32> -> vector<128x288xf32>
    %68 = arith.truncf %67 : vector<128x288xf32> to vector<128x288xbf16>
    %c0_49 = arith.constant 0 : index
    %c0_50 = arith.constant 0 : index
    %69 = vector.load %arg6[%c0_49, %c0_50] : memref<288x32xbf16, #tpu.memory_space<vmem>>, vector<288x32xbf16>
    %cst_51 = arith.constant dense<0.000000e+00> : vector<128x32xf32>
    %70 = tpu.matmul %68, %69, %cst_51 {dimension_numbers = #tpu.dot_dimension_numbers<[1], [0], [0], [1], [0, 0, 1, 1], [], []>} : vector<128x288xbf16>, vector<288x32xbf16>, vector<128x32xf32> -> vector<128x32xf32>
    %c0_52 = arith.constant 0 : index
    %c0_53 = arith.constant 0 : index
    %71 = vector.load %arg7[%c0_52, %c0_53] : memref<1x32xf32, #tpu.memory_space<vmem>>, vector<1x32xf32>
    %72 = vector.broadcast %71 : vector<1x32xf32> to vector<128x32xf32>
    %73 = arith.addf %70, %72 : vector<128x32xf32>
    %74 = arith.mulf %73, %73 : vector<128x32xf32>
    %75 = arith.mulf %73, %74 : vector<128x32xf32>
    %cst_54 = arith.constant 4.471500e-02 : f32
    %76 = vector.broadcast %cst_54 : f32 to vector<128x32xf32>
    %77 = arith.mulf %76, %75 : vector<128x32xf32>
    %78 = arith.addf %73, %77 : vector<128x32xf32>
    %cst_55 = arith.constant 0.797884583 : f32
    %79 = vector.broadcast %cst_55 : f32 to vector<128x32xf32>
    %80 = arith.mulf %79, %78 : vector<128x32xf32>
    %81 = math.tanh %80 : vector<128x32xf32>
    %cst_56 = arith.constant 1.000000e+00 : f32
    %82 = vector.broadcast %cst_56 : f32 to vector<128x32xf32>
    %83 = arith.addf %82, %81 : vector<128x32xf32>
    %cst_57 = arith.constant 5.000000e-01 : f32
    %84 = vector.broadcast %cst_57 : f32 to vector<128x32xf32>
    %85 = arith.mulf %84, %83 : vector<128x32xf32>
    %86 = arith.mulf %73, %85 : vector<128x32xf32>
    %87 = arith.truncf %86 : vector<128x32xf32> to vector<128x32xbf16>
    %c0_58 = arith.constant 0 : index
    %c0_59 = arith.constant 0 : index
    %88 = vector.load %arg8[%c0_58, %c0_59] : memref<32x32xbf16, #tpu.memory_space<vmem>>, vector<32x32xbf16>
    %cst_60 = arith.constant dense<0.000000e+00> : vector<128x32xf32>
    %89 = tpu.matmul %87, %88, %cst_60 {dimension_numbers = #tpu.dot_dimension_numbers<[1], [0], [0], [1], [0, 0, 1, 1], [], []>} : vector<128x32xbf16>, vector<32x32xbf16>, vector<128x32xf32> -> vector<128x32xf32>
    %c0_61 = arith.constant 0 : index
    %c0_62 = arith.constant 0 : index
    %90 = vector.load %arg9[%c0_61, %c0_62] : memref<1x32xf32, #tpu.memory_space<vmem>>, vector<1x32xf32>
    %91 = vector.broadcast %90 : vector<1x32xf32> to vector<128x32xf32>
    %92 = arith.addf %89, %91 : vector<128x32xf32>
    %93 = arith.mulf %92, %92 : vector<128x32xf32>
    %94 = arith.mulf %92, %93 : vector<128x32xf32>
    %cst_63 = arith.constant 4.471500e-02 : f32
    %95 = vector.broadcast %cst_63 : f32 to vector<128x32xf32>
    %96 = arith.mulf %95, %94 : vector<128x32xf32>
    %97 = arith.addf %92, %96 : vector<128x32xf32>
    %cst_64 = arith.constant 0.797884583 : f32
    %98 = vector.broadcast %cst_64 : f32 to vector<128x32xf32>
    %99 = arith.mulf %98, %97 : vector<128x32xf32>
    %100 = math.tanh %99 : vector<128x32xf32>
    %cst_65 = arith.constant 1.000000e+00 : f32
    %101 = vector.broadcast %cst_65 : f32 to vector<128x32xf32>
    %102 = arith.addf %101, %100 : vector<128x32xf32>
    %cst_66 = arith.constant 5.000000e-01 : f32
    %103 = vector.broadcast %cst_66 : f32 to vector<128x32xf32>
    %104 = arith.mulf %103, %102 : vector<128x32xf32>
    %105 = arith.mulf %92, %104 : vector<128x32xf32>
    %106 = arith.truncf %105 : vector<128x32xf32> to vector<128x32xbf16>
    %107 = vector.shape_cast %106 : vector<128x32xbf16> to vector<8x16x32xbf16>
    %c0_67 = arith.constant 0 : index
    %c0_68 = arith.constant 0 : index
    %c0_69 = arith.constant 0 : index
    %c0_70 = arith.constant 0 : index
    %108 = vector.load %arg10[%c0_67, %c0_68, %c0_69, %c0_70] : memref<1x8x16x32xbf16, #tpu.memory_space<vmem>>, vector<1x8x16x32xbf16>
    %109 = vector.shape_cast %108 : vector<1x8x16x32xbf16> to vector<8x16x32xbf16>
    %110 = vector.shape_cast %107 : vector<8x16x32xbf16> to vector<1x8x16x32xbf16>
    tpu.vector_store %arg10[%c0_67, %c0_68, %c0_69, %c0_70], %110 {strides = array<i32>} : memref<1x8x16x32xbf16, #tpu.memory_space<vmem>>, vector<1x8x16x32xbf16>,
    return
  }
  func.func @transform_0(%arg0: i32, %arg1: i32) -> (i32, i32, i32, i32) {
    %c0_i32 = arith.constant 0 : i32
    %c0_i32_0 = arith.constant 0 : i32
    %c0_i32_1 = arith.constant 0 : i32
    %c0_i32_2 = arith.constant 0 : i32
    return %arg0, %c0_i32, %c0_i32_0, %c0_i32_1 : i32, i32, i32, i32
  }
  func.func @transform_1(%arg0: i32, %arg1: i32) -> (i32, i32, i32, i32) {
    %c0_i32 = arith.constant 0 : i32
    %c0_i32_0 = arith.constant 0 : i32
    %c0_i32_1 = arith.constant 0 : i32
    %c0_i32_2 = arith.constant 0 : i32
    return %arg0, %c0_i32, %c0_i32_0, %c0_i32_1 : i32, i32, i32, i32
  }
  func.func @transform_2(%arg0: i32, %arg1: i32) -> (i32, i32) {
    %c0_i32 = arith.constant 0 : i32
    %c0_i32_0 = arith.constant 0 : i32
    %c0_i32_1 = arith.constant 0 : i32
    return %c0_i32, %c0_i32_0 : i32, i32
  }
  func.func @transform_3(%arg0: i32, %arg1: i32) -> (i32, i32) {
    %c0_i32 = arith.constant 0 : i32
    %c0_i32_0 = arith.constant 0 : i32
    %c0_i32_1 = arith.constant 0 : i32
    return %c0_i32, %c0_i32_0 : i32, i32
  }
  func.func @transform_4(%arg0: i32, %arg1: i32) -> (i32, i32) {
    %c0_i32 = arith.constant 0 : i32
    %c0_i32_0 = arith.constant 0 : i32
    %c0_i32_1 = arith.constant 0 : i32
    return %c0_i32, %c0_i32_0 : i32, i32
  }
  func.func @transform_5(%arg0: i32, %arg1: i32) -> (i32, i32) {
    %c0_i32 = arith.constant 0 : i32
    %c0_i32_0 = arith.constant 0 : i32
    %c0_i32_1 = arith.constant 0 : i32
    return %c0_i32, %c0_i32_0 : i32, i32
  }
  func.func @transform_6(%arg0: i32, %arg1: i32) -> (i32, i32) {
    %c0_i32 = arith.constant 0 : i32
    %c0_i32_0 = arith.constant 0 : i32
    %c0_i32_1 = arith.constant 0 : i32
    return %c0_i32, %c0_i32_0 : i32, i32
  }
  func.func @transform_7(%arg0: i32, %arg1: i32) -> (i32, i32) {
    %c0_i32 = arith.constant 0 : i32
    %c0_i32_0 = arith.constant 0 : i32
    %c0_i32_1 = arith.constant 0 : i32
    return %c0_i32, %c0_i32_0 : i32, i32
  }
  func.func @transform_8(%arg0: i32, %arg1: i32) -> (i32, i32, i32, i32) {
    %c0_i32 = arith.constant 0 : i32
    %c0_i32_0 = arith.constant 0 : i32
    %c0_i32_1 = arith.constant 0 : i32
    return %arg0, %arg1, %c0_i32, %c0_i32_0 : i32, i32, i32, i32
  }
}

module attributes {stable_mosaic.version = 11 : i64} {
  func.func @_gate_kernel(%arg0: i32, %arg1: i32, %arg2: memref<1x18x18x32xbf16, #tpu.memory_space<vmem>>, %arg3: memref<1x18x16x32xf32, #tpu.memory_space<vmem>>, %arg4: memref<1x18x16x32xbf16, #tpu.memory_space<vmem>>, %arg5: memref<9x32xf32, #tpu.memory_space<vmem>>, %arg6: memref<1x32xf32, #tpu.memory_space<vmem>>, %arg7: memref<9x32xf32, #tpu.memory_space<vmem>>, %arg8: memref<1x32xf32, #tpu.memory_space<vmem>>, %arg9: memref<64x32xbf16, #tpu.memory_space<vmem>>, %arg10: memref<1x32xf32, #tpu.memory_space<vmem>>, %arg11: memref<1x8x16x32xf32, #tpu.memory_space<vmem>>, %arg12: memref<1x8x16x32xbf16, #tpu.memory_space<vmem>>) attributes {dimension_semantics = [#tpu.dimension_semantics<parallel>, #tpu.dimension_semantics<arbitrary>], iteration_bounds = array<i64: 2, 2>, scalar_prefetch = 0 : i64, scratch_operands = 0 : i64, tpu.core_type = #tpu.core_type<tc>, window_params = [{transform_indices = @transform_0, window_bounds = array<i64: 1, 18, 18, 32>}, {transform_indices = @transform_1, window_bounds = array<i64: 1, 18, 16, 32>}, {transform_indices = @transform_2, window_bounds = array<i64: 1, 18, 16, 32>}, {pipeline_mode = #tpu.pipeline_mode<synchronous>, transform_indices = @transform_3, window_bounds = array<i64: 9, 32>}, {pipeline_mode = #tpu.pipeline_mode<synchronous>, transform_indices = @transform_4, window_bounds = array<i64: 1, 32>}, {pipeline_mode = #tpu.pipeline_mode<synchronous>, transform_indices = @transform_5, window_bounds = array<i64: 9, 32>}, {pipeline_mode = #tpu.pipeline_mode<synchronous>, transform_indices = @transform_6, window_bounds = array<i64: 1, 32>}, {pipeline_mode = #tpu.pipeline_mode<synchronous>, transform_indices = @transform_7, window_bounds = array<i64: 64, 32>}, {pipeline_mode = #tpu.pipeline_mode<synchronous>, transform_indices = @transform_8, window_bounds = array<i64: 1, 32>}, {transform_indices = @transform_9, window_bounds = array<i64: 1, 8, 16, 32>}, {transform_indices = @transform_10, window_bounds = array<i64: 1, 8, 16, 32>}]} {
    %c8_i32 = arith.constant 8 : i32
    %0 = arith.muli %arg1, %c8_i32 : i32
    %1 = tpu.assume_multiple %0, 8 : i32
    %c0 = arith.constant 0 : index
    %2 = arith.index_cast %1 : i32 to index
    %c0_0 = arith.constant 0 : index
    %c0_1 = arith.constant 0 : index
    %3 = vector.load %arg2[%c0, %2, %c0_0, %c0_1] : memref<1x18x18x32xbf16, #tpu.memory_space<vmem>>, vector<1x10x18x32xbf16>
    %4 = vector.shape_cast %3 : vector<1x10x18x32xbf16> to vector<10x18x32xbf16>
    %5 = arith.extf %4 : vector<10x18x32xbf16> to vector<10x18x32xf32>
    %c0_2 = arith.constant 0 : index
    %c0_3 = arith.constant 0 : index
    %6 = vector.load %arg5[%c0_2, %c0_3] : memref<9x32xf32, #tpu.memory_space<vmem>>, vector<9x32xf32>
    %c0_4 = arith.constant 0 : index
    %c0_5 = arith.constant 0 : index
    %7 = vector.load %arg6[%c0_4, %c0_5] : memref<1x32xf32, #tpu.memory_space<vmem>>, vector<1x32xf32>
    %8 = vector.extract_strided_slice %5 {offsets = [0, 0, 0], sizes = [8, 16, 32], strides = [1, 1, 1]} : vector<10x18x32xf32> to vector<8x16x32xf32>
    %9 = vector.extract_strided_slice %6 {offsets = [0, 0], sizes = [1, 32], strides = [1, 1]} : vector<9x32xf32> to vector<1x32xf32>
    %10 = vector.shape_cast %9 : vector<1x32xf32> to vector<1x1x32xf32>
    %11 = vector.broadcast %10 : vector<1x1x32xf32> to vector<8x16x32xf32>
    %12 = arith.mulf %8, %11 : vector<8x16x32xf32>
    %13 = vector.extract_strided_slice %5 {offsets = [0, 1, 0], sizes = [8, 16, 32], strides = [1, 1, 1]} : vector<10x18x32xf32> to vector<8x16x32xf32>
    %14 = vector.extract_strided_slice %6 {offsets = [1, 0], sizes = [1, 32], strides = [1, 1]} : vector<9x32xf32> to vector<1x32xf32>
    %15 = vector.shape_cast %14 : vector<1x32xf32> to vector<1x1x32xf32>
    %16 = vector.broadcast %15 : vector<1x1x32xf32> to vector<8x16x32xf32>
    %17 = arith.mulf %13, %16 : vector<8x16x32xf32>
    %18 = arith.addf %12, %17 : vector<8x16x32xf32>
    %19 = vector.extract_strided_slice %5 {offsets = [0, 2, 0], sizes = [8, 16, 32], strides = [1, 1, 1]} : vector<10x18x32xf32> to vector<8x16x32xf32>
    %20 = vector.extract_strided_slice %6 {offsets = [2, 0], sizes = [1, 32], strides = [1, 1]} : vector<9x32xf32> to vector<1x32xf32>
    %21 = vector.shape_cast %20 : vector<1x32xf32> to vector<1x1x32xf32>
    %22 = vector.broadcast %21 : vector<1x1x32xf32> to vector<8x16x32xf32>
    %23 = arith.mulf %19, %22 : vector<8x16x32xf32>
    %24 = arith.addf %18, %23 : vector<8x16x32xf32>
    %25 = vector.extract_strided_slice %5 {offsets = [1, 0, 0], sizes = [8, 16, 32], strides = [1, 1, 1]} : vector<10x18x32xf32> to vector<8x16x32xf32>
    %26 = vector.extract_strided_slice %6 {offsets = [3, 0], sizes = [1, 32], strides = [1, 1]} : vector<9x32xf32> to vector<1x32xf32>
    %27 = vector.shape_cast %26 : vector<1x32xf32> to vector<1x1x32xf32>
    %28 = vector.broadcast %27 : vector<1x1x32xf32> to vector<8x16x32xf32>
    %29 = arith.mulf %25, %28 : vector<8x16x32xf32>
    %30 = arith.addf %24, %29 : vector<8x16x32xf32>
    %31 = vector.extract_strided_slice %5 {offsets = [1, 1, 0], sizes = [8, 16, 32], strides = [1, 1, 1]} : vector<10x18x32xf32> to vector<8x16x32xf32>
    %32 = vector.extract_strided_slice %6 {offsets = [4, 0], sizes = [1, 32], strides = [1, 1]} : vector<9x32xf32> to vector<1x32xf32>
    %33 = vector.shape_cast %32 : vector<1x32xf32> to vector<1x1x32xf32>
    %34 = vector.broadcast %33 : vector<1x1x32xf32> to vector<8x16x32xf32>
    %35 = arith.mulf %31, %34 : vector<8x16x32xf32>
    %36 = arith.addf %30, %35 : vector<8x16x32xf32>
    %37 = vector.extract_strided_slice %5 {offsets = [1, 2, 0], sizes = [8, 16, 32], strides = [1, 1, 1]} : vector<10x18x32xf32> to vector<8x16x32xf32>
    %38 = vector.extract_strided_slice %6 {offsets = [5, 0], sizes = [1, 32], strides = [1, 1]} : vector<9x32xf32> to vector<1x32xf32>
    %39 = vector.shape_cast %38 : vector<1x32xf32> to vector<1x1x32xf32>
    %40 = vector.broadcast %39 : vector<1x1x32xf32> to vector<8x16x32xf32>
    %41 = arith.mulf %37, %40 : vector<8x16x32xf32>
    %42 = arith.addf %36, %41 : vector<8x16x32xf32>
    %43 = vector.extract_strided_slice %5 {offsets = [2, 0, 0], sizes = [8, 16, 32], strides = [1, 1, 1]} : vector<10x18x32xf32> to vector<8x16x32xf32>
    %44 = vector.extract_strided_slice %6 {offsets = [6, 0], sizes = [1, 32], strides = [1, 1]} : vector<9x32xf32> to vector<1x32xf32>
    %45 = vector.shape_cast %44 : vector<1x32xf32> to vector<1x1x32xf32>
    %46 = vector.broadcast %45 : vector<1x1x32xf32> to vector<8x16x32xf32>
    %47 = arith.mulf %43, %46 : vector<8x16x32xf32>
    %48 = arith.addf %42, %47 : vector<8x16x32xf32>
    %49 = vector.extract_strided_slice %5 {offsets = [2, 1, 0], sizes = [8, 16, 32], strides = [1, 1, 1]} : vector<10x18x32xf32> to vector<8x16x32xf32>
    %50 = vector.extract_strided_slice %6 {offsets = [7, 0], sizes = [1, 32], strides = [1, 1]} : vector<9x32xf32> to vector<1x32xf32>
    %51 = vector.shape_cast %50 : vector<1x32xf32> to vector<1x1x32xf32>
    %52 = vector.broadcast %51 : vector<1x1x32xf32> to vector<8x16x32xf32>
    %53 = arith.mulf %49, %52 : vector<8x16x32xf32>
    %54 = arith.addf %48, %53 : vector<8x16x32xf32>
    %55 = vector.extract_strided_slice %5 {offsets = [2, 2, 0], sizes = [8, 16, 32], strides = [1, 1, 1]} : vector<10x18x32xf32> to vector<8x16x32xf32>
    %56 = vector.extract_strided_slice %6 {offsets = [8, 0], sizes = [1, 32], strides = [1, 1]} : vector<9x32xf32> to vector<1x32xf32>
    %57 = vector.shape_cast %56 : vector<1x32xf32> to vector<1x1x32xf32>
    %58 = vector.broadcast %57 : vector<1x1x32xf32> to vector<8x16x32xf32>
    %59 = arith.mulf %55, %58 : vector<8x16x32xf32>
    %60 = arith.addf %54, %59 : vector<8x16x32xf32>
    %61 = vector.shape_cast %7 : vector<1x32xf32> to vector<1x1x32xf32>
    %62 = vector.broadcast %61 : vector<1x1x32xf32> to vector<8x16x32xf32>
    %63 = arith.addf %60, %62 : vector<8x16x32xf32>
    %64 = arith.mulf %63, %63 : vector<8x16x32xf32>
    %65 = arith.mulf %63, %64 : vector<8x16x32xf32>
    %cst = arith.constant 4.471500e-02 : f32
    %66 = vector.broadcast %cst : f32 to vector<8x16x32xf32>
    %67 = arith.mulf %66, %65 : vector<8x16x32xf32>
    %68 = arith.addf %63, %67 : vector<8x16x32xf32>
    %cst_6 = arith.constant 0.797884583 : f32
    %69 = vector.broadcast %cst_6 : f32 to vector<8x16x32xf32>
    %70 = arith.mulf %69, %68 : vector<8x16x32xf32>
    %71 = math.tanh %70 : vector<8x16x32xf32>
    %cst_7 = arith.constant 1.000000e+00 : f32
    %72 = vector.broadcast %cst_7 : f32 to vector<8x16x32xf32>
    %73 = arith.addf %72, %71 : vector<8x16x32xf32>
    %cst_8 = arith.constant 5.000000e-01 : f32
    %74 = vector.broadcast %cst_8 : f32 to vector<8x16x32xf32>
    %75 = arith.mulf %74, %73 : vector<8x16x32xf32>
    %76 = arith.mulf %63, %75 : vector<8x16x32xf32>
    %77 = arith.negf %76 : vector<8x16x32xf32>
    %78 = math.exp %77 : vector<8x16x32xf32>
    %cst_9 = arith.constant 1.000000e+00 : f32
    %79 = vector.broadcast %cst_9 : f32 to vector<8x16x32xf32>
    %80 = arith.addf %79, %78 : vector<8x16x32xf32>
    %81 = arith.divf %79, %80 : vector<8x16x32xf32>
    %c0_10 = arith.constant 0 : index
    %c0_11 = arith.constant 0 : index
    %82 = vector.load %arg7[%c0_10, %c0_11] : memref<9x32xf32, #tpu.memory_space<vmem>>, vector<9x32xf32>
    %c0_12 = arith.constant 0 : index
    %c0_13 = arith.constant 0 : index
    %83 = vector.load %arg8[%c0_12, %c0_13] : memref<1x32xf32, #tpu.memory_space<vmem>>, vector<1x32xf32>
    %84 = vector.extract_strided_slice %5 {offsets = [0, 0, 0], sizes = [8, 16, 32], strides = [1, 1, 1]} : vector<10x18x32xf32> to vector<8x16x32xf32>
    %85 = vector.extract_strided_slice %82 {offsets = [0, 0], sizes = [1, 32], strides = [1, 1]} : vector<9x32xf32> to vector<1x32xf32>
    %86 = vector.shape_cast %85 : vector<1x32xf32> to vector<1x1x32xf32>
    %87 = vector.broadcast %86 : vector<1x1x32xf32> to vector<8x16x32xf32>
    %88 = arith.mulf %84, %87 : vector<8x16x32xf32>
    %89 = vector.extract_strided_slice %5 {offsets = [0, 1, 0], sizes = [8, 16, 32], strides = [1, 1, 1]} : vector<10x18x32xf32> to vector<8x16x32xf32>
    %90 = vector.extract_strided_slice %82 {offsets = [1, 0], sizes = [1, 32], strides = [1, 1]} : vector<9x32xf32> to vector<1x32xf32>
    %91 = vector.shape_cast %90 : vector<1x32xf32> to vector<1x1x32xf32>
    %92 = vector.broadcast %91 : vector<1x1x32xf32> to vector<8x16x32xf32>
    %93 = arith.mulf %89, %92 : vector<8x16x32xf32>
    %94 = arith.addf %88, %93 : vector<8x16x32xf32>
    %95 = vector.extract_strided_slice %5 {offsets = [0, 2, 0], sizes = [8, 16, 32], strides = [1, 1, 1]} : vector<10x18x32xf32> to vector<8x16x32xf32>
    %96 = vector.extract_strided_slice %82 {offsets = [2, 0], sizes = [1, 32], strides = [1, 1]} : vector<9x32xf32> to vector<1x32xf32>
    %97 = vector.shape_cast %96 : vector<1x32xf32> to vector<1x1x32xf32>
    %98 = vector.broadcast %97 : vector<1x1x32xf32> to vector<8x16x32xf32>
    %99 = arith.mulf %95, %98 : vector<8x16x32xf32>
    %100 = arith.addf %94, %99 : vector<8x16x32xf32>
    %101 = vector.extract_strided_slice %5 {offsets = [1, 0, 0], sizes = [8, 16, 32], strides = [1, 1, 1]} : vector<10x18x32xf32> to vector<8x16x32xf32>
    %102 = vector.extract_strided_slice %82 {offsets = [3, 0], sizes = [1, 32], strides = [1, 1]} : vector<9x32xf32> to vector<1x32xf32>
    %103 = vector.shape_cast %102 : vector<1x32xf32> to vector<1x1x32xf32>
    %104 = vector.broadcast %103 : vector<1x1x32xf32> to vector<8x16x32xf32>
    %105 = arith.mulf %101, %104 : vector<8x16x32xf32>
    %106 = arith.addf %100, %105 : vector<8x16x32xf32>
    %107 = vector.extract_strided_slice %5 {offsets = [1, 1, 0], sizes = [8, 16, 32], strides = [1, 1, 1]} : vector<10x18x32xf32> to vector<8x16x32xf32>
    %108 = vector.extract_strided_slice %82 {offsets = [4, 0], sizes = [1, 32], strides = [1, 1]} : vector<9x32xf32> to vector<1x32xf32>
    %109 = vector.shape_cast %108 : vector<1x32xf32> to vector<1x1x32xf32>
    %110 = vector.broadcast %109 : vector<1x1x32xf32> to vector<8x16x32xf32>
    %111 = arith.mulf %107, %110 : vector<8x16x32xf32>
    %112 = arith.addf %106, %111 : vector<8x16x32xf32>
    %113 = vector.extract_strided_slice %5 {offsets = [1, 2, 0], sizes = [8, 16, 32], strides = [1, 1, 1]} : vector<10x18x32xf32> to vector<8x16x32xf32>
    %114 = vector.extract_strided_slice %82 {offsets = [5, 0], sizes = [1, 32], strides = [1, 1]} : vector<9x32xf32> to vector<1x32xf32>
    %115 = vector.shape_cast %114 : vector<1x32xf32> to vector<1x1x32xf32>
    %116 = vector.broadcast %115 : vector<1x1x32xf32> to vector<8x16x32xf32>
    %117 = arith.mulf %113, %116 : vector<8x16x32xf32>
    %118 = arith.addf %112, %117 : vector<8x16x32xf32>
    %119 = vector.extract_strided_slice %5 {offsets = [2, 0, 0], sizes = [8, 16, 32], strides = [1, 1, 1]} : vector<10x18x32xf32> to vector<8x16x32xf32>
    %120 = vector.extract_strided_slice %82 {offsets = [6, 0], sizes = [1, 32], strides = [1, 1]} : vector<9x32xf32> to vector<1x32xf32>
    %121 = vector.shape_cast %120 : vector<1x32xf32> to vector<1x1x32xf32>
    %122 = vector.broadcast %121 : vector<1x1x32xf32> to vector<8x16x32xf32>
    %123 = arith.mulf %119, %122 : vector<8x16x32xf32>
    %124 = arith.addf %118, %123 : vector<8x16x32xf32>
    %125 = vector.extract_strided_slice %5 {offsets = [2, 1, 0], sizes = [8, 16, 32], strides = [1, 1, 1]} : vector<10x18x32xf32> to vector<8x16x32xf32>
    %126 = vector.extract_strided_slice %82 {offsets = [7, 0], sizes = [1, 32], strides = [1, 1]} : vector<9x32xf32> to vector<1x32xf32>
    %127 = vector.shape_cast %126 : vector<1x32xf32> to vector<1x1x32xf32>
    %128 = vector.broadcast %127 : vector<1x1x32xf32> to vector<8x16x32xf32>
    %129 = arith.mulf %125, %128 : vector<8x16x32xf32>
    %130 = arith.addf %124, %129 : vector<8x16x32xf32>
    %131 = vector.extract_strided_slice %5 {offsets = [2, 2, 0], sizes = [8, 16, 32], strides = [1, 1, 1]} : vector<10x18x32xf32> to vector<8x16x32xf32>
    %132 = vector.extract_strided_slice %82 {offsets = [8, 0], sizes = [1, 32], strides = [1, 1]} : vector<9x32xf32> to vector<1x32xf32>
    %133 = vector.shape_cast %132 : vector<1x32xf32> to vector<1x1x32xf32>
    %134 = vector.broadcast %133 : vector<1x1x32xf32> to vector<8x16x32xf32>
    %135 = arith.mulf %131, %134 : vector<8x16x32xf32>
    %136 = arith.addf %130, %135 : vector<8x16x32xf32>
    %137 = vector.shape_cast %83 : vector<1x32xf32> to vector<1x1x32xf32>
    %138 = vector.broadcast %137 : vector<1x1x32xf32> to vector<8x16x32xf32>
    %139 = arith.addf %136, %138 : vector<8x16x32xf32>
    %140 = arith.mulf %139, %139 : vector<8x16x32xf32>
    %141 = arith.mulf %139, %140 : vector<8x16x32xf32>
    %cst_14 = arith.constant 4.471500e-02 : f32
    %142 = vector.broadcast %cst_14 : f32 to vector<8x16x32xf32>
    %143 = arith.mulf %142, %141 : vector<8x16x32xf32>
    %144 = arith.addf %139, %143 : vector<8x16x32xf32>
    %cst_15 = arith.constant 0.797884583 : f32
    %145 = vector.broadcast %cst_15 : f32 to vector<8x16x32xf32>
    %146 = arith.mulf %145, %144 : vector<8x16x32xf32>
    %147 = math.tanh %146 : vector<8x16x32xf32>
    %cst_16 = arith.constant 1.000000e+00 : f32
    %148 = vector.broadcast %cst_16 : f32 to vector<8x16x32xf32>
    %149 = arith.addf %148, %147 : vector<8x16x32xf32>
    %cst_17 = arith.constant 5.000000e-01 : f32
    %150 = vector.broadcast %cst_17 : f32 to vector<8x16x32xf32>
    %151 = arith.mulf %150, %149 : vector<8x16x32xf32>
    %152 = arith.mulf %139, %151 : vector<8x16x32xf32>
    %153 = arith.negf %152 : vector<8x16x32xf32>
    %154 = math.exp %153 : vector<8x16x32xf32>
    %cst_18 = arith.constant 1.000000e+00 : f32
    %155 = vector.broadcast %cst_18 : f32 to vector<8x16x32xf32>
    %156 = arith.addf %155, %154 : vector<8x16x32xf32>
    %157 = arith.divf %155, %156 : vector<8x16x32xf32>
    %c1_i32 = arith.constant 1 : i32
    %158 = arith.addi %1, %c1_i32 : i32
    %c0_19 = arith.constant 0 : index
    %159 = arith.index_cast %158 : i32 to index
    %c0_20 = arith.constant 0 : index
    %c0_21 = arith.constant 0 : index
    %160 = vector.load %arg3[%c0_19, %159, %c0_20, %c0_21] : memref<1x18x16x32xf32, #tpu.memory_space<vmem>>, vector<1x8x16x32xf32>
    %161 = vector.shape_cast %160 : vector<1x8x16x32xf32> to vector<8x16x32xf32>
    %c1_i32_22 = arith.constant 1 : i32
    %162 = arith.addi %1, %c1_i32_22 : i32
    %c0_23 = arith.constant 0 : index
    %163 = arith.index_cast %162 : i32 to index
    %c0_24 = arith.constant 0 : index
    %c0_25 = arith.constant 0 : index
    %164 = vector.load %arg4[%c0_23, %163, %c0_24, %c0_25] : memref<1x18x16x32xbf16, #tpu.memory_space<vmem>>, vector<1x8x16x32xbf16>
    %165 = vector.shape_cast %164 : vector<1x8x16x32xbf16> to vector<8x16x32xbf16>
    %166 = arith.extf %165 : vector<8x16x32xbf16> to vector<8x16x32xf32>
    %167 = arith.mulf %161, %81 : vector<8x16x32xf32>
    %168 = tpu.concatenate %167, %166 in 2 : vector<8x16x32xf32>, vector<8x16x32xf32> -> vector<8x16x64xf32>
    %169 = vector.shape_cast %168 : vector<8x16x64xf32> to vector<128x64xf32>
    %170 = arith.truncf %169 : vector<128x64xf32> to vector<128x64xbf16>
    %c0_26 = arith.constant 0 : index
    %c0_27 = arith.constant 0 : index
    %171 = vector.load %arg9[%c0_26, %c0_27] : memref<64x32xbf16, #tpu.memory_space<vmem>>, vector<64x32xbf16>
    %cst_28 = arith.constant dense<0.000000e+00> : vector<128x32xf32>
    %172 = tpu.matmul %170, %171, %cst_28 {dimension_numbers = #tpu.dot_dimension_numbers<[1], [0], [0], [1], [0, 0, 1, 1], [], []>} : vector<128x64xbf16>, vector<64x32xbf16>, vector<128x32xf32> -> vector<128x32xf32>
    %c0_29 = arith.constant 0 : index
    %c0_30 = arith.constant 0 : index
    %173 = vector.load %arg10[%c0_29, %c0_30] : memref<1x32xf32, #tpu.memory_space<vmem>>, vector<1x32xf32>
    %174 = vector.broadcast %173 : vector<1x32xf32> to vector<128x32xf32>
    %175 = arith.addf %172, %174 : vector<128x32xf32>
    %c0_31 = arith.constant 0 : index
    %c0_32 = arith.constant 0 : index
    %c0_33 = arith.constant 0 : index
    %c0_34 = arith.constant 0 : index
    %176 = vector.load %arg11[%c0_31, %c0_32, %c0_33, %c0_34] : memref<1x8x16x32xf32, #tpu.memory_space<vmem>>, vector<1x8x16x32xf32>
    %177 = vector.shape_cast %176 : vector<1x8x16x32xf32> to vector<8x16x32xf32>
    %178 = vector.shape_cast %157 : vector<8x16x32xf32> to vector<1x8x16x32xf32>
    tpu.vector_store %arg11[%c0_31, %c0_32, %c0_33, %c0_34], %178 {strides = array<i32>} : memref<1x8x16x32xf32, #tpu.memory_space<vmem>>, vector<1x8x16x32xf32>,
    %179 = arith.mulf %175, %175 : vector<128x32xf32>
    %180 = arith.mulf %175, %179 : vector<128x32xf32>
    %cst_35 = arith.constant 4.471500e-02 : f32
    %181 = vector.broadcast %cst_35 : f32 to vector<128x32xf32>
    %182 = arith.mulf %181, %180 : vector<128x32xf32>
    %183 = arith.addf %175, %182 : vector<128x32xf32>
    %cst_36 = arith.constant 0.797884583 : f32
    %184 = vector.broadcast %cst_36 : f32 to vector<128x32xf32>
    %185 = arith.mulf %184, %183 : vector<128x32xf32>
    %186 = math.tanh %185 : vector<128x32xf32>
    %cst_37 = arith.constant 1.000000e+00 : f32
    %187 = vector.broadcast %cst_37 : f32 to vector<128x32xf32>
    %188 = arith.addf %187, %186 : vector<128x32xf32>
    %cst_38 = arith.constant 5.000000e-01 : f32
    %189 = vector.broadcast %cst_38 : f32 to vector<128x32xf32>
    %190 = arith.mulf %189, %188 : vector<128x32xf32>
    %191 = arith.mulf %175, %190 : vector<128x32xf32>
    %192 = arith.truncf %191 : vector<128x32xf32> to vector<128x32xbf16>
    %193 = vector.shape_cast %192 : vector<128x32xbf16> to vector<8x16x32xbf16>
    %c0_39 = arith.constant 0 : index
    %c0_40 = arith.constant 0 : index
    %c0_41 = arith.constant 0 : index
    %c0_42 = arith.constant 0 : index
    %194 = vector.load %arg12[%c0_39, %c0_40, %c0_41, %c0_42] : memref<1x8x16x32xbf16, #tpu.memory_space<vmem>>, vector<1x8x16x32xbf16>
    %195 = vector.shape_cast %194 : vector<1x8x16x32xbf16> to vector<8x16x32xbf16>
    %196 = vector.shape_cast %193 : vector<8x16x32xbf16> to vector<1x8x16x32xbf16>
    tpu.vector_store %arg12[%c0_39, %c0_40, %c0_41, %c0_42], %196 {strides = array<i32>} : memref<1x8x16x32xbf16, #tpu.memory_space<vmem>>, vector<1x8x16x32xbf16>,
    return
  }
  func.func @transform_0(%arg0: i32, %arg1: i32) -> (i32, i32, i32, i32) {
    %c0_i32 = arith.constant 0 : i32
    %c0_i32_0 = arith.constant 0 : i32
    %c0_i32_1 = arith.constant 0 : i32
    %c0_i32_2 = arith.constant 0 : i32
    return %arg0, %c0_i32, %c0_i32_0, %c0_i32_1 : i32, i32, i32, i32
  }
  func.func @transform_1(%arg0: i32, %arg1: i32) -> (i32, i32, i32, i32) {
    %c0_i32 = arith.constant 0 : i32
    %c0_i32_0 = arith.constant 0 : i32
    %c0_i32_1 = arith.constant 0 : i32
    %c0_i32_2 = arith.constant 0 : i32
    return %arg0, %c0_i32, %c0_i32_0, %c0_i32_1 : i32, i32, i32, i32
  }
  func.func @transform_2(%arg0: i32, %arg1: i32) -> (i32, i32, i32, i32) {
    %c0_i32 = arith.constant 0 : i32
    %c0_i32_0 = arith.constant 0 : i32
    %c0_i32_1 = arith.constant 0 : i32
    %c0_i32_2 = arith.constant 0 : i32
    return %arg0, %c0_i32, %c0_i32_0, %c0_i32_1 : i32, i32, i32, i32
  }
  func.func @transform_3(%arg0: i32, %arg1: i32) -> (i32, i32) {
    %c0_i32 = arith.constant 0 : i32
    %c0_i32_0 = arith.constant 0 : i32
    %c0_i32_1 = arith.constant 0 : i32
    return %c0_i32, %c0_i32_0 : i32, i32
  }
  func.func @transform_4(%arg0: i32, %arg1: i32) -> (i32, i32) {
    %c0_i32 = arith.constant 0 : i32
    %c0_i32_0 = arith.constant 0 : i32
    %c0_i32_1 = arith.constant 0 : i32
    return %c0_i32, %c0_i32_0 : i32, i32
  }
  func.func @transform_5(%arg0: i32, %arg1: i32) -> (i32, i32) {
    %c0_i32 = arith.constant 0 : i32
    %c0_i32_0 = arith.constant 0 : i32
    %c0_i32_1 = arith.constant 0 : i32
    return %c0_i32, %c0_i32_0 : i32, i32
  }
  func.func @transform_6(%arg0: i32, %arg1: i32) -> (i32, i32) {
    %c0_i32 = arith.constant 0 : i32
    %c0_i32_0 = arith.constant 0 : i32
    %c0_i32_1 = arith.constant 0 : i32
    return %c0_i32, %c0_i32_0 : i32, i32
  }
  func.func @transform_7(%arg0: i32, %arg1: i32) -> (i32, i32) {
    %c0_i32 = arith.constant 0 : i32
    %c0_i32_0 = arith.constant 0 : i32
    %c0_i32_1 = arith.constant 0 : i32
    return %c0_i32, %c0_i32_0 : i32, i32
  }
  func.func @transform_8(%arg0: i32, %arg1: i32) -> (i32, i32) {
    %c0_i32 = arith.constant 0 : i32
    %c0_i32_0 = arith.constant 0 : i32
    %c0_i32_1 = arith.constant 0 : i32
    return %c0_i32, %c0_i32_0 : i32, i32
  }
  func.func @transform_9(%arg0: i32, %arg1: i32) -> (i32, i32, i32, i32) {
    %c0_i32 = arith.constant 0 : i32
    %c0_i32_0 = arith.constant 0 : i32
    %c0_i32_1 = arith.constant 0 : i32
    return %arg0, %arg1, %c0_i32, %c0_i32_0 : i32, i32, i32, i32
  }
  func.func @transform_10(%arg0: i32, %arg1: i32) -> (i32, i32, i32, i32) {
    %c0_i32 = arith.constant 0 : i32
    %c0_i32_0 = arith.constant 0 : i32
    %c0_i32_1 = arith.constant 0 : i32
    return %arg0, %arg1, %c0_i32, %c0_i32_0 : i32, i32, i32, i32
  }
}

module attributes {stable_mosaic.version = 11 : i64} {
  func.func @_update_kernel(%arg0: i32, %arg1: i32, %arg2: memref<1x20x18x32xbf16, #tpu.memory_space<vmem>>, %arg3: memref<1x8x16x32xf32, #tpu.memory_space<vmem>>, %arg4: memref<1x18x16x32xf32, #tpu.memory_space<vmem>>, %arg5: memref<288x32xbf16, #tpu.memory_space<vmem>>, %arg6: memref<1x32xf32, #tpu.memory_space<vmem>>, %arg7: memref<32x32xbf16, #tpu.memory_space<vmem>>, %arg8: memref<1x32xf32, #tpu.memory_space<vmem>>, %arg9: memref<9x32xf32, #tpu.memory_space<vmem>>, %arg10: memref<1x32xf32, #tpu.memory_space<vmem>>, %arg11: memref<1x8x16x32xf32, #tpu.memory_space<vmem>>, %arg12: memref<10x18x32xf32, #tpu.memory_space<vmem>>) attributes {dimension_semantics = [#tpu.dimension_semantics<parallel>, #tpu.dimension_semantics<arbitrary>], iteration_bounds = array<i64: 2, 2>, scalar_prefetch = 0 : i64, scratch_operands = 1 : i64, tpu.core_type = #tpu.core_type<tc>, window_params = [{transform_indices = @transform_0, window_bounds = array<i64: 1, 20, 18, 32>}, {transform_indices = @transform_1, window_bounds = array<i64: 1, 8, 16, 32>}, {transform_indices = @transform_2, window_bounds = array<i64: 1, 18, 16, 32>}, {pipeline_mode = #tpu.pipeline_mode<synchronous>, transform_indices = @transform_3, window_bounds = array<i64: 288, 32>}, {pipeline_mode = #tpu.pipeline_mode<synchronous>, transform_indices = @transform_4, window_bounds = array<i64: 1, 32>}, {pipeline_mode = #tpu.pipeline_mode<synchronous>, transform_indices = @transform_5, window_bounds = array<i64: 32, 32>}, {pipeline_mode = #tpu.pipeline_mode<synchronous>, transform_indices = @transform_6, window_bounds = array<i64: 1, 32>}, {pipeline_mode = #tpu.pipeline_mode<synchronous>, transform_indices = @transform_7, window_bounds = array<i64: 9, 32>}, {pipeline_mode = #tpu.pipeline_mode<synchronous>, transform_indices = @transform_8, window_bounds = array<i64: 1, 32>}, {transform_indices = @transform_9, window_bounds = array<i64: 1, 8, 16, 32>}]} {
    %c8_i32 = arith.constant 8 : i32
    %0 = arith.muli %arg1, %c8_i32 : i32
    %1 = tpu.assume_multiple %0, 8 : i32
    %c0 = arith.constant 0 : index
    %2 = arith.index_cast %1 : i32 to index
    %c0_0 = arith.constant 0 : index
    %c0_1 = arith.constant 0 : index
    %3 = vector.load %arg2[%c0, %2, %c0_0, %c0_1] : memref<1x20x18x32xbf16, #tpu.memory_space<vmem>>, vector<1x12x18x32xbf16>
    %4 = vector.shape_cast %3 : vector<1x12x18x32xbf16> to vector<12x18x32xbf16>
    %5 = arith.extf %4 : vector<12x18x32xbf16> to vector<12x18x32xf32>
    %6 = vector.extract_strided_slice %5 {offsets = [0, 0, 0], sizes = [10, 16, 32], strides = [1, 1, 1]} : vector<12x18x32xf32> to vector<10x16x32xf32>
    %7 = vector.shape_cast %6 : vector<10x16x32xf32> to vector<160x32xf32>
    %8 = vector.extract_strided_slice %5 {offsets = [0, 1, 0], sizes = [10, 16, 32], strides = [1, 1, 1]} : vector<12x18x32xf32> to vector<10x16x32xf32>
    %9 = vector.shape_cast %8 : vector<10x16x32xf32> to vector<160x32xf32>
    %10 = vector.extract_strided_slice %5 {offsets = [0, 2, 0], sizes = [10, 16, 32], strides = [1, 1, 1]} : vector<12x18x32xf32> to vector<10x16x32xf32>
    %11 = vector.shape_cast %10 : vector<10x16x32xf32> to vector<160x32xf32>
    %12 = vector.extract_strided_slice %5 {offsets = [1, 0, 0], sizes = [10, 16, 32], strides = [1, 1, 1]} : vector<12x18x32xf32> to vector<10x16x32xf32>
    %13 = vector.shape_cast %12 : vector<10x16x32xf32> to vector<160x32xf32>
    %14 = vector.extract_strided_slice %5 {offsets = [1, 1, 0], sizes = [10, 16, 32], strides = [1, 1, 1]} : vector<12x18x32xf32> to vector<10x16x32xf32>
    %15 = vector.shape_cast %14 : vector<10x16x32xf32> to vector<160x32xf32>
    %16 = vector.extract_strided_slice %5 {offsets = [1, 2, 0], sizes = [10, 16, 32], strides = [1, 1, 1]} : vector<12x18x32xf32> to vector<10x16x32xf32>
    %17 = vector.shape_cast %16 : vector<10x16x32xf32> to vector<160x32xf32>
    %18 = vector.extract_strided_slice %5 {offsets = [2, 0, 0], sizes = [10, 16, 32], strides = [1, 1, 1]} : vector<12x18x32xf32> to vector<10x16x32xf32>
    %19 = vector.shape_cast %18 : vector<10x16x32xf32> to vector<160x32xf32>
    %20 = vector.extract_strided_slice %5 {offsets = [2, 1, 0], sizes = [10, 16, 32], strides = [1, 1, 1]} : vector<12x18x32xf32> to vector<10x16x32xf32>
    %21 = vector.shape_cast %20 : vector<10x16x32xf32> to vector<160x32xf32>
    %22 = vector.extract_strided_slice %5 {offsets = [2, 2, 0], sizes = [10, 16, 32], strides = [1, 1, 1]} : vector<12x18x32xf32> to vector<10x16x32xf32>
    %23 = vector.shape_cast %22 : vector<10x16x32xf32> to vector<160x32xf32>
    %24 = tpu.concatenate %7, %9, %11, %13, %15, %17, %19, %21, %23 in 1 : vector<160x32xf32>, vector<160x32xf32>, vector<160x32xf32>, vector<160x32xf32>, vector<160x32xf32>, vector<160x32xf32>, vector<160x32xf32>, vector<160x32xf32>, vector<160x32xf32> -> vector<160x288xf32>
    %25 = arith.truncf %24 : vector<160x288xf32> to vector<160x288xbf16>
    %c0_2 = arith.constant 0 : index
    %c0_3 = arith.constant 0 : index
    %26 = vector.load %arg5[%c0_2, %c0_3] : memref<288x32xbf16, #tpu.memory_space<vmem>>, vector<288x32xbf16>
    %cst = arith.constant dense<0.000000e+00> : vector<160x32xf32>
    %27 = tpu.matmul %25, %26, %cst {dimension_numbers = #tpu.dot_dimension_numbers<[1], [0], [0], [1], [0, 0, 1, 1], [], []>} : vector<160x288xbf16>, vector<288x32xbf16>, vector<160x32xf32> -> vector<160x32xf32>
    %c0_4 = arith.constant 0 : index
    %c0_5 = arith.constant 0 : index
    %28 = vector.load %arg6[%c0_4, %c0_5] : memref<1x32xf32, #tpu.memory_space<vmem>>, vector<1x32xf32>
    %29 = vector.broadcast %28 : vector<1x32xf32> to vector<160x32xf32>
    %30 = arith.addf %27, %29 : vector<160x32xf32>
    %31 = arith.mulf %30, %30 : vector<160x32xf32>
    %32 = arith.mulf %30, %31 : vector<160x32xf32>
    %cst_6 = arith.constant 4.471500e-02 : f32
    %33 = vector.broadcast %cst_6 : f32 to vector<160x32xf32>
    %34 = arith.mulf %33, %32 : vector<160x32xf32>
    %35 = arith.addf %30, %34 : vector<160x32xf32>
    %cst_7 = arith.constant 0.797884583 : f32
    %36 = vector.broadcast %cst_7 : f32 to vector<160x32xf32>
    %37 = arith.mulf %36, %35 : vector<160x32xf32>
    %38 = math.tanh %37 : vector<160x32xf32>
    %cst_8 = arith.constant 1.000000e+00 : f32
    %39 = vector.broadcast %cst_8 : f32 to vector<160x32xf32>
    %40 = arith.addf %39, %38 : vector<160x32xf32>
    %cst_9 = arith.constant 5.000000e-01 : f32
    %41 = vector.broadcast %cst_9 : f32 to vector<160x32xf32>
    %42 = arith.mulf %41, %40 : vector<160x32xf32>
    %43 = arith.mulf %30, %42 : vector<160x32xf32>
    %44 = arith.truncf %43 : vector<160x32xf32> to vector<160x32xbf16>
    %c0_10 = arith.constant 0 : index
    %c0_11 = arith.constant 0 : index
    %45 = vector.load %arg7[%c0_10, %c0_11] : memref<32x32xbf16, #tpu.memory_space<vmem>>, vector<32x32xbf16>
    %cst_12 = arith.constant dense<0.000000e+00> : vector<160x32xf32>
    %46 = tpu.matmul %44, %45, %cst_12 {dimension_numbers = #tpu.dot_dimension_numbers<[1], [0], [0], [1], [0, 0, 1, 1], [], []>} : vector<160x32xbf16>, vector<32x32xbf16>, vector<160x32xf32> -> vector<160x32xf32>
    %c0_13 = arith.constant 0 : index
    %c0_14 = arith.constant 0 : index
    %47 = vector.load %arg8[%c0_13, %c0_14] : memref<1x32xf32, #tpu.memory_space<vmem>>, vector<1x32xf32>
    %48 = vector.broadcast %47 : vector<1x32xf32> to vector<160x32xf32>
    %49 = arith.addf %46, %48 : vector<160x32xf32>
    %50 = arith.mulf %49, %49 : vector<160x32xf32>
    %51 = arith.mulf %49, %50 : vector<160x32xf32>
    %cst_15 = arith.constant 4.471500e-02 : f32
    %52 = vector.broadcast %cst_15 : f32 to vector<160x32xf32>
    %53 = arith.mulf %52, %51 : vector<160x32xf32>
    %54 = arith.addf %49, %53 : vector<160x32xf32>
    %cst_16 = arith.constant 0.797884583 : f32
    %55 = vector.broadcast %cst_16 : f32 to vector<160x32xf32>
    %56 = arith.mulf %55, %54 : vector<160x32xf32>
    %57 = math.tanh %56 : vector<160x32xf32>
    %cst_17 = arith.constant 1.000000e+00 : f32
    %58 = vector.broadcast %cst_17 : f32 to vector<160x32xf32>
    %59 = arith.addf %58, %57 : vector<160x32xf32>
    %cst_18 = arith.constant 5.000000e-01 : f32
    %60 = vector.broadcast %cst_18 : f32 to vector<160x32xf32>
    %61 = arith.mulf %60, %59 : vector<160x32xf32>
    %62 = arith.mulf %49, %61 : vector<160x32xf32>
    %63 = vector.shape_cast %62 : vector<160x32xf32> to vector<10x16x32xf32>
    %c8_i32_19 = arith.constant 8 : i32
    %64 = arith.muli %arg1, %c8_i32_19 : i32
    %c1_i32 = arith.constant 1 : i32
    %65 = arith.subi %64, %c1_i32 : i32
    %66 = tpu.iota {dimensions = array<i32: 0>} : vector<10x1x1xi32>
    %67 = vector.broadcast %65 : i32 to vector<10x1x1xi32>
    %68 = arith.addi %66, %67 : vector<10x1x1xi32>
    %c0_i32 = arith.constant 0 : i32
    %69 = vector.broadcast %c0_i32 : i32 to vector<10x1x1xi32>
    %70 = arith.cmpi sge, %68, %69 : vector<10x1x1xi32>
    %c16_i32 = arith.constant 16 : i32
    %71 = vector.broadcast %c16_i32 : i32 to vector<10x1x1xi32>
    %72 = arith.cmpi slt, %68, %71 : vector<10x1x1xi32>
    %73 = arith.andi %70, %72 : vector<10x1x1xi1>
    %cst_20 = arith.constant 0.000000e+00 : f32
    %74 = vector.shape_cast %73 : vector<10x1x1xi1> to vector<10x1x1xi1>
    %75 = vector.broadcast %74 : vector<10x1x1xi1> to vector<10x16x32xi1>
    %76 = vector.broadcast %cst_20 : f32 to vector<10x16x32xf32>
    %77 = arith.select %75, %63, %76 : vector<10x16x32xi1>, vector<10x16x32xf32>
    %cst_21 = arith.constant 0.000000e+00 : f32
    %78 = vector.broadcast %cst_21 : f32 to vector<10x1x32xf32>
    %c0_22 = arith.constant 0 : index
    %c0_23 = arith.constant 0 : index
    %c0_24 = arith.constant 0 : index
    %79 = vector.load %arg12[%c0_22, %c0_23, %c0_24] : memref<10x18x32xf32, #tpu.memory_space<vmem>>, vector<10x1x32xf32>
    tpu.vector_store %arg12[%c0_22, %c0_23, %c0_24], %78 {strides = array<i32>} : memref<10x18x32xf32, #tpu.memory_space<vmem>>, vector<10x1x32xf32>,
    %c0_25 = arith.constant 0 : index
    %c17 = arith.constant 17 : index
    %c0_26 = arith.constant 0 : index
    %80 = vector.load %arg12[%c0_25, %c17, %c0_26] : memref<10x18x32xf32, #tpu.memory_space<vmem>>, vector<10x1x32xf32>
    tpu.vector_store %arg12[%c0_25, %c17, %c0_26], %78 {strides = array<i32>} : memref<10x18x32xf32, #tpu.memory_space<vmem>>, vector<10x1x32xf32>,
    %c0_27 = arith.constant 0 : index
    %c1 = arith.constant 1 : index
    %c0_28 = arith.constant 0 : index
    %81 = vector.load %arg12[%c0_27, %c1, %c0_28] : memref<10x18x32xf32, #tpu.memory_space<vmem>>, vector<10x16x32xf32>
    tpu.vector_store %arg12[%c0_27, %c1, %c0_28], %77 {strides = array<i32>} : memref<10x18x32xf32, #tpu.memory_space<vmem>>, vector<10x16x32xf32>,
    %c0_29 = arith.constant 0 : index
    %c0_30 = arith.constant 0 : index
    %82 = vector.load %arg9[%c0_29, %c0_30] : memref<9x32xf32, #tpu.memory_space<vmem>>, vector<9x32xf32>
    %c0_31 = arith.constant 0 : index
    %c0_32 = arith.constant 0 : index
    %83 = vector.load %arg10[%c0_31, %c0_32] : memref<1x32xf32, #tpu.memory_space<vmem>>, vector<1x32xf32>
    %c0_33 = arith.constant 0 : index
    %c0_34 = arith.constant 0 : index
    %c0_35 = arith.constant 0 : index
    %84 = vector.load %arg12[%c0_33, %c0_34, %c0_35] : memref<10x18x32xf32, #tpu.memory_space<vmem>>, vector<8x16x32xf32>
    %85 = vector.extract_strided_slice %82 {offsets = [0, 0], sizes = [1, 32], strides = [1, 1]} : vector<9x32xf32> to vector<1x32xf32>
    %86 = vector.shape_cast %85 : vector<1x32xf32> to vector<1x1x32xf32>
    %87 = vector.broadcast %86 : vector<1x1x32xf32> to vector<8x16x32xf32>
    %88 = arith.mulf %84, %87 : vector<8x16x32xf32>
    %c0_36 = arith.constant 0 : index
    %c1_37 = arith.constant 1 : index
    %c0_38 = arith.constant 0 : index
    %89 = vector.load %arg12[%c0_36, %c1_37, %c0_38] : memref<10x18x32xf32, #tpu.memory_space<vmem>>, vector<8x16x32xf32>
    %90 = vector.extract_strided_slice %82 {offsets = [1, 0], sizes = [1, 32], strides = [1, 1]} : vector<9x32xf32> to vector<1x32xf32>
    %91 = vector.shape_cast %90 : vector<1x32xf32> to vector<1x1x32xf32>
    %92 = vector.broadcast %91 : vector<1x1x32xf32> to vector<8x16x32xf32>
    %93 = arith.mulf %89, %92 : vector<8x16x32xf32>
    %94 = arith.addf %88, %93 : vector<8x16x32xf32>
    %c0_39 = arith.constant 0 : index
    %c2 = arith.constant 2 : index
    %c0_40 = arith.constant 0 : index
    %95 = vector.load %arg12[%c0_39, %c2, %c0_40] : memref<10x18x32xf32, #tpu.memory_space<vmem>>, vector<8x16x32xf32>
    %96 = vector.extract_strided_slice %82 {offsets = [2, 0], sizes = [1, 32], strides = [1, 1]} : vector<9x32xf32> to vector<1x32xf32>
    %97 = vector.shape_cast %96 : vector<1x32xf32> to vector<1x1x32xf32>
    %98 = vector.broadcast %97 : vector<1x1x32xf32> to vector<8x16x32xf32>
    %99 = arith.mulf %95, %98 : vector<8x16x32xf32>
    %100 = arith.addf %94, %99 : vector<8x16x32xf32>
    %c1_41 = arith.constant 1 : index
    %c0_42 = arith.constant 0 : index
    %c0_43 = arith.constant 0 : index
    %101 = vector.load %arg12[%c1_41, %c0_42, %c0_43] : memref<10x18x32xf32, #tpu.memory_space<vmem>>, vector<8x16x32xf32>
    %102 = vector.extract_strided_slice %82 {offsets = [3, 0], sizes = [1, 32], strides = [1, 1]} : vector<9x32xf32> to vector<1x32xf32>
    %103 = vector.shape_cast %102 : vector<1x32xf32> to vector<1x1x32xf32>
    %104 = vector.broadcast %103 : vector<1x1x32xf32> to vector<8x16x32xf32>
    %105 = arith.mulf %101, %104 : vector<8x16x32xf32>
    %106 = arith.addf %100, %105 : vector<8x16x32xf32>
    %c1_44 = arith.constant 1 : index
    %c1_45 = arith.constant 1 : index
    %c0_46 = arith.constant 0 : index
    %107 = vector.load %arg12[%c1_44, %c1_45, %c0_46] : memref<10x18x32xf32, #tpu.memory_space<vmem>>, vector<8x16x32xf32>
    %108 = vector.extract_strided_slice %82 {offsets = [4, 0], sizes = [1, 32], strides = [1, 1]} : vector<9x32xf32> to vector<1x32xf32>
    %109 = vector.shape_cast %108 : vector<1x32xf32> to vector<1x1x32xf32>
    %110 = vector.broadcast %109 : vector<1x1x32xf32> to vector<8x16x32xf32>
    %111 = arith.mulf %107, %110 : vector<8x16x32xf32>
    %112 = arith.addf %106, %111 : vector<8x16x32xf32>
    %c1_47 = arith.constant 1 : index
    %c2_48 = arith.constant 2 : index
    %c0_49 = arith.constant 0 : index
    %113 = vector.load %arg12[%c1_47, %c2_48, %c0_49] : memref<10x18x32xf32, #tpu.memory_space<vmem>>, vector<8x16x32xf32>
    %114 = vector.extract_strided_slice %82 {offsets = [5, 0], sizes = [1, 32], strides = [1, 1]} : vector<9x32xf32> to vector<1x32xf32>
    %115 = vector.shape_cast %114 : vector<1x32xf32> to vector<1x1x32xf32>
    %116 = vector.broadcast %115 : vector<1x1x32xf32> to vector<8x16x32xf32>
    %117 = arith.mulf %113, %116 : vector<8x16x32xf32>
    %118 = arith.addf %112, %117 : vector<8x16x32xf32>
    %c2_50 = arith.constant 2 : index
    %c0_51 = arith.constant 0 : index
    %c0_52 = arith.constant 0 : index
    %119 = vector.load %arg12[%c2_50, %c0_51, %c0_52] : memref<10x18x32xf32, #tpu.memory_space<vmem>>, vector<8x16x32xf32>
    %120 = vector.extract_strided_slice %82 {offsets = [6, 0], sizes = [1, 32], strides = [1, 1]} : vector<9x32xf32> to vector<1x32xf32>
    %121 = vector.shape_cast %120 : vector<1x32xf32> to vector<1x1x32xf32>
    %122 = vector.broadcast %121 : vector<1x1x32xf32> to vector<8x16x32xf32>
    %123 = arith.mulf %119, %122 : vector<8x16x32xf32>
    %124 = arith.addf %118, %123 : vector<8x16x32xf32>
    %c2_53 = arith.constant 2 : index
    %c1_54 = arith.constant 1 : index
    %c0_55 = arith.constant 0 : index
    %125 = vector.load %arg12[%c2_53, %c1_54, %c0_55] : memref<10x18x32xf32, #tpu.memory_space<vmem>>, vector<8x16x32xf32>
    %126 = vector.extract_strided_slice %82 {offsets = [7, 0], sizes = [1, 32], strides = [1, 1]} : vector<9x32xf32> to vector<1x32xf32>
    %127 = vector.shape_cast %126 : vector<1x32xf32> to vector<1x1x32xf32>
    %128 = vector.broadcast %127 : vector<1x1x32xf32> to vector<8x16x32xf32>
    %129 = arith.mulf %125, %128 : vector<8x16x32xf32>
    %130 = arith.addf %124, %129 : vector<8x16x32xf32>
    %c2_56 = arith.constant 2 : index
    %c2_57 = arith.constant 2 : index
    %c0_58 = arith.constant 0 : index
    %131 = vector.load %arg12[%c2_56, %c2_57, %c0_58] : memref<10x18x32xf32, #tpu.memory_space<vmem>>, vector<8x16x32xf32>
    %132 = vector.extract_strided_slice %82 {offsets = [8, 0], sizes = [1, 32], strides = [1, 1]} : vector<9x32xf32> to vector<1x32xf32>
    %133 = vector.shape_cast %132 : vector<1x32xf32> to vector<1x1x32xf32>
    %134 = vector.broadcast %133 : vector<1x1x32xf32> to vector<8x16x32xf32>
    %135 = arith.mulf %131, %134 : vector<8x16x32xf32>
    %136 = arith.addf %130, %135 : vector<8x16x32xf32>
    %137 = vector.shape_cast %83 : vector<1x32xf32> to vector<1x1x32xf32>
    %138 = vector.broadcast %137 : vector<1x1x32xf32> to vector<8x16x32xf32>
    %139 = arith.addf %136, %138 : vector<8x16x32xf32>
    %140 = arith.mulf %139, %139 : vector<8x16x32xf32>
    %141 = arith.mulf %139, %140 : vector<8x16x32xf32>
    %cst_59 = arith.constant 4.471500e-02 : f32
    %142 = vector.broadcast %cst_59 : f32 to vector<8x16x32xf32>
    %143 = arith.mulf %142, %141 : vector<8x16x32xf32>
    %144 = arith.addf %139, %143 : vector<8x16x32xf32>
    %cst_60 = arith.constant 0.797884583 : f32
    %145 = vector.broadcast %cst_60 : f32 to vector<8x16x32xf32>
    %146 = arith.mulf %145, %144 : vector<8x16x32xf32>
    %147 = math.tanh %146 : vector<8x16x32xf32>
    %cst_61 = arith.constant 1.000000e+00 : f32
    %148 = vector.broadcast %cst_61 : f32 to vector<8x16x32xf32>
    %149 = arith.addf %148, %147 : vector<8x16x32xf32>
    %cst_62 = arith.constant 5.000000e-01 : f32
    %150 = vector.broadcast %cst_62 : f32 to vector<8x16x32xf32>
    %151 = arith.mulf %150, %149 : vector<8x16x32xf32>
    %152 = arith.mulf %139, %151 : vector<8x16x32xf32>
    %153 = arith.negf %152 : vector<8x16x32xf32>
    %154 = math.exp %153 : vector<8x16x32xf32>
    %cst_63 = arith.constant 1.000000e+00 : f32
    %155 = vector.broadcast %cst_63 : f32 to vector<8x16x32xf32>
    %156 = arith.addf %155, %154 : vector<8x16x32xf32>
    %157 = arith.divf %155, %156 : vector<8x16x32xf32>
    %c0_64 = arith.constant 0 : index
    %c0_65 = arith.constant 0 : index
    %c0_66 = arith.constant 0 : index
    %c0_67 = arith.constant 0 : index
    %158 = vector.load %arg3[%c0_64, %c0_65, %c0_66, %c0_67] : memref<1x8x16x32xf32, #tpu.memory_space<vmem>>, vector<1x8x16x32xf32>
    %159 = vector.shape_cast %158 : vector<1x8x16x32xf32> to vector<8x16x32xf32>
    %c1_i32_68 = arith.constant 1 : i32
    %160 = arith.addi %1, %c1_i32_68 : i32
    %c0_69 = arith.constant 0 : index
    %161 = arith.index_cast %160 : i32 to index
    %c0_70 = arith.constant 0 : index
    %c0_71 = arith.constant 0 : index
    %162 = vector.load %arg4[%c0_69, %161, %c0_70, %c0_71] : memref<1x18x16x32xf32, #tpu.memory_space<vmem>>, vector<1x8x16x32xf32>
    %163 = vector.shape_cast %162 : vector<1x8x16x32xf32> to vector<8x16x32xf32>
    %164 = arith.mulf %159, %157 : vector<8x16x32xf32>
    %cst_72 = arith.constant 1.000000e+00 : f32
    %165 = vector.broadcast %cst_72 : f32 to vector<8x16x32xf32>
    %166 = arith.subf %165, %159 : vector<8x16x32xf32>
    %167 = arith.mulf %166, %163 : vector<8x16x32xf32>
    %168 = arith.addf %164, %167 : vector<8x16x32xf32>
    %c0_73 = arith.constant 0 : index
    %c0_74 = arith.constant 0 : index
    %c0_75 = arith.constant 0 : index
    %c0_76 = arith.constant 0 : index
    %169 = vector.load %arg11[%c0_73, %c0_74, %c0_75, %c0_76] : memref<1x8x16x32xf32, #tpu.memory_space<vmem>>, vector<1x8x16x32xf32>
    %170 = vector.shape_cast %169 : vector<1x8x16x32xf32> to vector<8x16x32xf32>
    %171 = vector.shape_cast %168 : vector<8x16x32xf32> to vector<1x8x16x32xf32>
    tpu.vector_store %arg11[%c0_73, %c0_74, %c0_75, %c0_76], %171 {strides = array<i32>} : memref<1x8x16x32xf32, #tpu.memory_space<vmem>>, vector<1x8x16x32xf32>,
    return
  }
  func.func @transform_0(%arg0: i32, %arg1: i32) -> (i32, i32, i32, i32) {
    %c0_i32 = arith.constant 0 : i32
    %c0_i32_0 = arith.constant 0 : i32
    %c0_i32_1 = arith.constant 0 : i32
    %c0_i32_2 = arith.constant 0 : i32
    return %arg0, %c0_i32, %c0_i32_0, %c0_i32_1 : i32, i32, i32, i32
  }
  func.func @transform_1(%arg0: i32, %arg1: i32) -> (i32, i32, i32, i32) {
    %c0_i32 = arith.constant 0 : i32
    %c0_i32_0 = arith.constant 0 : i32
    %c0_i32_1 = arith.constant 0 : i32
    return %arg0, %arg1, %c0_i32, %c0_i32_0 : i32, i32, i32, i32
  }
  func.func @transform_2(%arg0: i32, %arg1: i32) -> (i32, i32, i32, i32) {
    %c0_i32 = arith.constant 0 : i32
    %c0_i32_0 = arith.constant 0 : i32
    %c0_i32_1 = arith.constant 0 : i32
    %c0_i32_2 = arith.constant 0 : i32
    return %arg0, %c0_i32, %c0_i32_0, %c0_i32_1 : i32, i32, i32, i32
  }
  func.func @transform_3(%arg0: i32, %arg1: i32) -> (i32, i32) {
    %c0_i32 = arith.constant 0 : i32
    %c0_i32_0 = arith.constant 0 : i32
    %c0_i32_1 = arith.constant 0 : i32
    return %c0_i32, %c0_i32_0 : i32, i32
  }
  func.func @transform_4(%arg0: i32, %arg1: i32) -> (i32, i32) {
    %c0_i32 = arith.constant 0 : i32
    %c0_i32_0 = arith.constant 0 : i32
    %c0_i32_1 = arith.constant 0 : i32
    return %c0_i32, %c0_i32_0 : i32, i32
  }
  func.func @transform_5(%arg0: i32, %arg1: i32) -> (i32, i32) {
    %c0_i32 = arith.constant 0 : i32
    %c0_i32_0 = arith.constant 0 : i32
    %c0_i32_1 = arith.constant 0 : i32
    return %c0_i32, %c0_i32_0 : i32, i32
  }
  func.func @transform_6(%arg0: i32, %arg1: i32) -> (i32, i32) {
    %c0_i32 = arith.constant 0 : i32
    %c0_i32_0 = arith.constant 0 : i32
    %c0_i32_1 = arith.constant 0 : i32
    return %c0_i32, %c0_i32_0 : i32, i32
  }
  func.func @transform_7(%arg0: i32, %arg1: i32) -> (i32, i32) {
    %c0_i32 = arith.constant 0 : i32
    %c0_i32_0 = arith.constant 0 : i32
    %c0_i32_1 = arith.constant 0 : i32
    return %c0_i32, %c0_i32_0 : i32, i32
  }
  func.func @transform_8(%arg0: i32, %arg1: i32) -> (i32, i32) {
    %c0_i32 = arith.constant 0 : i32
    %c0_i32_0 = arith.constant 0 : i32
    %c0_i32_1 = arith.constant 0 : i32
    return %c0_i32, %c0_i32_0 : i32, i32
  }
  func.func @transform_9(%arg0: i32, %arg1: i32) -> (i32, i32, i32, i32) {
    %c0_i32 = arith.constant 0 : i32
    %c0_i32_0 = arith.constant 0 : i32
    %c0_i32_1 = arith.constant 0 : i32
    return %arg0, %arg1, %c0_i32, %c0_i32_0 : i32, i32, i32, i32
  }
}

</mosaic_0001>

<llo_original>
// kernel: rec_conv_cell_forward.3
$region0: #{rec_conv_cell_forward.3}
  #allocation0 [shape = 'u32[]', space=smem, size = 0x4, offset = 0x4, fixed_abs, tag = 'smem constant byte address 0x4 - core index']
  #allocation1 [shape = 'u32[144,128]{1,0:T(1,128)}', space=vmem, size = 0x12000, scoped, tag = 'internal scratch']
  #allocation2 [shape = 'f32[10,18,32]{2,1,0:T(8,128)}', space=vmem, size = 0x1e000, scoped, tag = 'scratch operand']
  %s0 = inlined_call_operand.vmem [shape: f32[2,18,16,32], index: 0, kind: input, shape index: {}]
  %s1 = inlined_call_operand.vmem [shape: bf16[2,18,16,32], index: 1, kind: input, shape index: {}]
  %s2 = inlined_call_operand.vmem [shape: bf16[64,32], index: 2, kind: input, shape index: {}]
  %s3 = inlined_call_operand.vmem [shape: f32[1,32], index: 3, kind: input, shape index: {}]
  %s4 = inlined_call_operand.vmem [shape: bf16[288,32], index: 4, kind: input, shape index: {}]
  %s5 = inlined_call_operand.vmem [shape: f32[1,32], index: 5, kind: input, shape index: {}]
  %s6 = inlined_call_operand.vmem [shape: bf16[32,32], index: 6, kind: input, shape index: {}]
  %s7 = inlined_call_operand.vmem [shape: f32[1,32], index: 7, kind: input, shape index: {}]
  %s8 = inlined_call_operand.vmem [shape: bf16[2,16,16,32], index: 8, kind: output, shape index: {}]
  %s9 = sld [smem:[#allocation0]]
  $region65: #{rec_conv_cell_forward.3} parent=0
    _
  %s11 = ssub.s32 1, %s9
  %s12 = scalar_select 0, %s11, %s9
  loop: start=0, step=1, limit=6
  $region2: #{rec_conv_cell_forward.3} parent=0 // loop_pre_header
    _
  $region3: #{rec_conv_cell_forward.3} parent=0 // loop_header
    %s14 = sphi 0, %s18
    %p15 = scmp.ge.s32.totalorder %s14, 6
    %s21 = sphi 0, %s33
    %s22 = sphi 0, %s29
    %s23 = sphi 0, %s21
    %s24 = sphi 0, %s22
    %s25 = sphi 0, %s23
    %s26 = sphi 0, %s24
    %s36 = sphi 0, %s38
    %s39 = sphi 0, %s36
    %s40 = sphi 0, %s39
    %s56 = sphi 0, %s40
    %s62 = sphi 0, %s64
    %s65 = sphi 0, %s62
    %s66 = sphi 0, %s65
    %s82 = sphi 0, %s66
    %s86 = sphi 0, %s86
    %s88 = sphi 0, %s86
    %s89 = sphi 0, %s88
    %s103 = sphi 0, %s89
    %s107 = sphi 0, %s107
    %s109 = sphi 0, %s107
    %s110 = sphi 0, %s109
    %s124 = sphi 0, %s110
    %s128 = sphi 0, %s128
    %s130 = sphi 0, %s128
    %s131 = sphi 0, %s130
    %s145 = sphi 0, %s131
    %s149 = sphi 0, %s149
    %s151 = sphi 0, %s149
    %s152 = sphi 0, %s151
    %s166 = sphi 0, %s152
    %s170 = sphi 0, %s170
    %s172 = sphi 0, %s170
    %s173 = sphi 0, %s172
    %s187 = sphi 0, %s173
    %s191 = sphi 0, %s191
    %s193 = sphi 0, %s191
    %s194 = sphi 0, %s193
    %s208 = sphi 0, %s194
    %s216 = sphi 0, %s218
    %s219 = sphi 0, %s216
    %s220 = sphi 0, %s219
    %s236 = sphi 0, %s220
  $region4: #{rec_conv_cell_forward.3} parent=0 // loop_header_branch
    %17 = sbr.rel (%p15) target = $region8
  $region5: #{rec_conv_cell_forward.3} parent=0 // loop_body
    %s19 = ssub.s32 %s14, 1
    %s20 = ssub.s32 %s14, 2
    %s27 = sadd.s32 1, %s22
    %p28 = scmp.ge.s32.totalorder %s27, 2
    %s29 = scalar_select %p28, 0, %s27
    %s30 = sadd.s32 1, %s21
    %s31 = scalar_select %p28, %s30, %s21
    %p32 = scmp.ge.s32.totalorder %s31, 2
    %s33 = scalar_select %p32, 0, %s31
    %s34 = ssub.s32 %s21, %s33
    %p35 = scmp.eq.s32.totalorder %s34, 0
    %s37 = sadd.s32 %s36, 1
    %s38 = scalar_select %p35, %s36, %s37
    %p41 = pneg %p35
    %p42 = scmp.eq.s32.totalorder %s14, 3
    %p43 = por %p41, %p42
    %p44 = scmp.ne.s32.totalorder %s36, %s39
    %p45 = scmp.eq.s32.totalorder %s14, 0
    %p46 = por %p44, %p45
    %p47 = scmp.ne.s32.totalorder %s36, %s39
    %p48 = scmp.eq.s32.totalorder %s19, 3
    %p49 = por %p47, %p48
    %p50 = scmp.ne.s32.totalorder %s39, %s40
    %p51 = scmp.eq.s32.totalorder %s19, 0
    %p52 = por %p50, %p51
    %p53 = scmp.ne.s32.totalorder %s39, %s40
    %p54 = scmp.eq.s32.totalorder %s20, 3
    %p55 = por %p53, %p54
    %p57 = scmp.ne.s32.totalorder %s40, %s56
    %p58 = scmp.eq.s32.totalorder %s20, 0
    %p59 = por %p57, %p58
    %s60 = ssub.s32 %s21, %s33
    %p61 = scmp.eq.s32.totalorder %s60, 0
    %s63 = sadd.s32 %s62, 1
    %s64 = scalar_select %p61, %s62, %s63
    %p67 = pneg %p61
    %p68 = scmp.eq.s32.totalorder %s14, 3
    %p69 = por %p67, %p68
    %p70 = scmp.ne.s32.totalorder %s62, %s65
    %p71 = scmp.eq.s32.totalorder %s14, 0
    %p72 = por %p70, %p71
    %p73 = scmp.ne.s32.totalorder %s62, %s65
    %p74 = scmp.eq.s32.totalorder %s19, 3
    %p75 = por %p73, %p74
    %p76 = scmp.ne.s32.totalorder %s65, %s66
    %p77 = scmp.eq.s32.totalorder %s19, 0
    %p78 = por %p76, %p77
    %p79 = scmp.ne.s32.totalorder %s65, %s66
    %p80 = scmp.eq.s32.totalorder %s20, 3
    %p81 = por %p79, %p80
    %p83 = scmp.ne.s32.totalorder %s66, %s82
    %p84 = scmp.eq.s32.totalorder %s20, 0
    %p85 = por %p83, %p84
    %s87 = sadd.s32 %s86, 1
    %p90 = scmp.eq.s32.totalorder %s14, 3
    %p91 = scmp.ne.s32.totalorder %s86, %s88
    %p92 = scmp.eq.s32.totalorder %s14, 0
    %p93 = por %p91, %p92
    %p94 = scmp.ne.s32.totalorder %s86, %s88
    %p95 = scmp.eq.s32.totalorder %s19, 3
    %p96 = por %p94, %p95
    %p97 = scmp.ne.s32.totalorder %s88, %s89
    %p98 = scmp.eq.s32.totalorder %s19, 0
    %p99 = por %p97, %p98
    %p100 = scmp.ne.s32.totalorder %s88, %s89
    %p101 = scmp.eq.s32.totalorder %s20, 3
    %p102 = por %p100, %p101
    %p104 = scmp.ne.s32.totalorder %s89, %s103
    %p105 = scmp.eq.s32.totalorder %s20, 0
    %p106 = por %p104, %p105
    %s108 = sadd.s32 %s107, 1
    %p111 = scmp.eq.s32.totalorder %s14, 3
    %p112 = scmp.ne.s32.totalorder %s107, %s109
    %p113 = scmp.eq.s32.totalorder %s14, 0
    %p114 = por %p112, %p113
    %p115 = scmp.ne.s32.totalorder %s107, %s109
    %p116 = scmp.eq.s32.totalorder %s19, 3
    %p117 = por %p115, %p116
    %p118 = scmp.ne.s32.totalorder %s109, %s110
    %p119 = scmp.eq.s32.totalorder %s19, 0
    %p120 = por %p118, %p119
    %p121 = scmp.ne.s32.totalorder %s109, %s110
    %p122 = scmp.eq.s32.totalorder %s20, 3
    %p123 = por %p121, %p122
    %p125 = scmp.ne.s32.totalorder %s110, %s124
    %p126 = scmp.eq.s32.totalorder %s20, 0
    %p127 = por %p125, %p126
    %s129 = sadd.s32 %s128, 1
    %p132 = scmp.eq.s32.totalorder %s14, 3
    %p133 = scmp.ne.s32.totalorder %s128, %s130
    %p134 = scmp.eq.s32.totalorder %s14, 0
    %p135 = por %p133, %p134
    %p136 = scmp.ne.s32.totalorder %s128, %s130
    %p137 = scmp.eq.s32.totalorder %s19, 3
    %p138 = por %p136, %p137
    %p139 = scmp.ne.s32.totalorder %s130, %s131
    %p140 = scmp.eq.s32.totalorder %s19, 0
    %p141 = por %p139, %p140
    %p142 = scmp.ne.s32.totalorder %s130, %s131
    %p143 = scmp.eq.s32.totalorder %s20, 3
    %p144 = por %p142, %p143
    %p146 = scmp.ne.s32.totalorder %s131, %s145
    %p147 = scmp.eq.s32.totalorder %s20, 0
    %p148 = por %p146, %p147
    %s150 = sadd.s32 %s149, 1
    %p153 = scmp.eq.s32.totalorder %s14, 3
    %p154 = scmp.ne.s32.totalorder %s149, %s151
    %p155 = scmp.eq.s32.totalorder %s14, 0
    %p156 = por %p154, %p155
    %p157 = scmp.ne.s32.totalorder %s149, %s151
    %p158 = scmp.eq.s32.totalorder %s19, 3
    %p159 = por %p157, %p158
    %p160 = scmp.ne.s32.totalorder %s151, %s152
    %p161 = scmp.eq.s32.totalorder %s19, 0
    %p162 = por %p160, %p161
    %p163 = scmp.ne.s32.totalorder %s151, %s152
    %p164 = scmp.eq.s32.totalorder %s20, 3
    %p165 = por %p163, %p164
    %p167 = scmp.ne.s32.totalorder %s152, %s166
    %p168 = scmp.eq.s32.totalorder %s20, 0
    %p169 = por %p167, %p168
    %s171 = sadd.s32 %s170, 1
    %p174 = scmp.eq.s32.totalorder %s14, 3
    %p175 = scmp.ne.s32.totalorder %s170, %s172
    %p176 = scmp.eq.s32.totalorder %s14, 0
    %p177 = por %p175, %p176
    %p178 = scmp.ne.s32.totalorder %s170, %s172
    %p179 = scmp.eq.s32.totalorder %s19, 3
    %p180 = por %p178, %p179
    %p181 = scmp.ne.s32.totalorder %s172, %s173
    %p182 = scmp.eq.s32.totalorder %s19, 0
    %p183 = por %p181, %p182
    %p184 = scmp.ne.s32.totalorder %s172, %s173
    %p185 = scmp.eq.s32.totalorder %s20, 3
    %p186 = por %p184, %p185
    %p188 = scmp.ne.s32.totalorder %s173, %s187
    %p189 = scmp.eq.s32.totalorder %s20, 0
    %p190 = por %p188, %p189
    %s192 = sadd.s32 %s191, 1
    %p195 = scmp.eq.s32.totalorder %s14, 3
    %p196 = scmp.ne.s32.totalorder %s191, %s193
    %p197 = scmp.eq.s32.totalorder %s14, 0
    %p198 = por %p196, %p197
    %p199 = scmp.ne.s32.totalorder %s191, %s193
    %p200 = scmp.eq.s32.totalorder %s19, 3
    %p201 = por %p199, %p200
    %p202 = scmp.ne.s32.totalorder %s193, %s194
    %p203 = scmp.eq.s32.totalorder %s19, 0
    %p204 = por %p202, %p203
    %p205 = scmp.ne.s32.totalorder %s193, %s194
    %p206 = scmp.eq.s32.totalorder %s20, 3
    %p207 = por %p205, %p206
    %p209 = scmp.ne.s32.totalorder %s194, %s208
    %p210 = scmp.eq.s32.totalorder %s20, 0
    %p211 = por %p209, %p210
    %s212 = ssub.s32 %s21, %s33
    %s213 = ssub.s32 %s22, %s29
    %s214 = sor.u32 %s212, %s213
    %p215 = scmp.eq.s32.totalorder %s214, 0
    %s217 = sadd.s32 %s216, 1
    %s218 = scalar_select %p215, %s216, %s217
    %p221 = pneg %p215
    %p222 = scmp.eq.s32.totalorder %s14, 3
    %p223 = por %p221, %p222
    %p224 = scmp.ne.s32.totalorder %s216, %s219
    %p225 = scmp.eq.s32.totalorder %s14, 0
    %p226 = por %p224, %p225
    %p227 = scmp.ne.s32.totalorder %s216, %s219
    %p228 = scmp.eq.s32.totalorder %s19, 3
    %p229 = por %p227, %p228
    %p230 = scmp.ne.s32.totalorder %s219, %s220
    %p231 = scmp.eq.s32.totalorder %s19, 0
    %p232 = por %p230, %p231
    %p233 = scmp.ne.s32.totalorder %s219, %s220
    %p234 = scmp.eq.s32.totalorder %s20, 3
    %p235 = por %p233, %p234
    %p237 = scmp.ne.s32.totalorder %s220, %s236
    %p238 = scmp.eq.s32.totalorder %s20, 0
    %p239 = por %p237, %p238
    %p240 = scmp.le.s32.totalorder 1, %s14
    %p241 = scmp.lt.s32.totalorder %s14, 5
    %p242 = pnand %p240, %p241
    %p243 = pneg %p242
    // Predicated region
    $region9: #{rec_conv_cell_forward.3} parent=5 // pred_check
      _
    $region10: #{rec_conv_cell_forward.3} parent=5 // pred_check_branch
      %245 = sbr.rel (%p242) target = $region12
    $region11: #{rec_conv_cell_forward.3} parent=5 // pred_region
      %s246 = ssub.s32 %s14, 1
      // Predicated region
      $region13: #{rec_conv_cell_forward.3} parent=11 // pred_check
        %p247 = pneg %p99
      $region14: #{rec_conv_cell_forward.3} parent=11 // pred_check_branch
        %249 = sbr.rel (%p247) target = $region16
      $region15: #{rec_conv_cell_forward.3} parent=11 // pred_region
        _
      $region16: #{rec_conv_cell_forward.3} parent=11 // pred_fallthru
        _
      // Predicated region
      $region17: #{rec_conv_cell_forward.3} parent=11 // pred_check
        %p250 = pneg %p120
      $region18: #{rec_conv_cell_forward.3} parent=11 // pred_check_branch
        %252 = sbr.rel (%p250) target = $region20
      $region19: #{rec_conv_cell_forward.3} parent=11 // pred_region
        _
      $region20: #{rec_conv_cell_forward.3} parent=11 // pred_fallthru
        _
      // Predicated region
      $region21: #{rec_conv_cell_forward.3} parent=11 // pred_check
        %p253 = pneg %p141
      $region22: #{rec_conv_cell_forward.3} parent=11 // pred_check_branch
        %255 = sbr.rel (%p253) target = $region24
      $region23: #{rec_conv_cell_forward.3} parent=11 // pred_region
        _
      $region24: #{rec_conv_cell_forward.3} parent=11 // pred_fallthru
        _
      // Predicated region
      $region25: #{rec_conv_cell_forward.3} parent=11 // pred_check
        %p256 = pneg %p162
      $region26: #{rec_conv_cell_forward.3} parent=11 // pred_check_branch
        %258 = sbr.rel (%p256) target = $region28
      $region27: #{rec_conv_cell_forward.3} parent=11 // pred_region
        _
      $region28: #{rec_conv_cell_forward.3} parent=11 // pred_fallthru
        _
      // Predicated region
      $region29: #{rec_conv_cell_forward.3} parent=11 // pred_check
        %p259 = pneg %p183
      $region30: #{rec_conv_cell_forward.3} parent=11 // pred_check_branch
        %261 = sbr.rel (%p259) target = $region32
      $region31: #{rec_conv_cell_forward.3} parent=11 // pred_region
        _
      $region32: #{rec_conv_cell_forward.3} parent=11 // pred_fallthru
        _
      // Predicated region
      $region33: #{rec_conv_cell_forward.3} parent=11 // pred_check
        %p262 = pneg %p204
      $region34: #{rec_conv_cell_forward.3} parent=11 // pred_check_branch
        %264 = sbr.rel (%p262) target = $region36
      $region35: #{rec_conv_cell_forward.3} parent=11 // pred_region
        _
      $region36: #{rec_conv_cell_forward.3} parent=11 // pred_fallthru
        _
    $region12: #{rec_conv_cell_forward.3} parent=5 // pred_fallthru
      _
    %p265 = scmp.lt.s32.totalorder %s14, 4
    // Predicated region
    $region37: #{rec_conv_cell_forward.3} parent=5 // pred_check
      %p266 = pneg %p265
    $region38: #{rec_conv_cell_forward.3} parent=5 // pred_check_branch
      %268 = sbr.rel (%p266) target = $region40
    $region39: #{rec_conv_cell_forward.3} parent=5 // pred_region
      // Predicated region
      $region41: #{rec_conv_cell_forward.3} parent=39 // pred_check
        %p269 = pneg %p46
      $region42: #{rec_conv_cell_forward.3} parent=39 // pred_check_branch
        %271 = sbr.rel (%p269) target = $region44
      $region43: #{rec_conv_cell_forward.3} parent=39 // pred_region
        %p272 = scmp.lt.s32.totalorder %s21, 1
        %s273 = scalar_select %p272, %s21, 1
        %s274 = smul.addr %s273, 36
        %s275 = smul.addr %s274, 8
        %s276 = scalar_lea.vmem %s0, %s275
      $region44: #{rec_conv_cell_forward.3} parent=39 // pred_fallthru
        _
      // Predicated region
      $region45: #{rec_conv_cell_forward.3} parent=39 // pred_check
        %p277 = pneg %p72
      $region46: #{rec_conv_cell_forward.3} parent=39 // pred_check_branch
        %279 = sbr.rel (%p277) target = $region48
      $region47: #{rec_conv_cell_forward.3} parent=39 // pred_region
        %p280 = scmp.lt.s32.totalorder %s21, 1
        %s281 = scalar_select %p280, %s21, 1
        %s282 = smul.addr %s281, 36
        %s283 = smul.addr %s282, 4
        %s284 = scalar_lea.vmem %s1, %s283
      $region48: #{rec_conv_cell_forward.3} parent=39 // pred_fallthru
        _
    $region40: #{rec_conv_cell_forward.3} parent=5 // pred_fallthru
      _
    %p285 = scmp.le.s32.totalorder 1, %s14
    %p286 = scmp.lt.s32.totalorder %s14, 5
    %p287 = pnand %p285, %p286
    %p288 = pneg %p287
    // Predicated region
    $region49: #{rec_conv_cell_forward.3} parent=5 // pred_check
      _
    $region50: #{rec_conv_cell_forward.3} parent=5 // pred_check_branch
      %290 = sbr.rel (%p287) target = $region52
    $region51: #{rec_conv_cell_forward.3} parent=5 // pred_region
      %s291 = ssub.s32 %s14, 1
      %p292 = scmp.lt.s32.totalorder %s23, 1
      %s293 = scalar_select %p292, %s23, 1
      %s294 = smul.addr %s293, 36
      %s295 = smul.addr %s294, 8
      %s296 = scalar_lea.vmem %s0, %s295
      %p297 = pneg %p52
      %p298 = pneg %p49
      %p299 = scmp.lt.s32.totalorder %s23, 1
      %s300 = scalar_select %p299, %s23, 1
      %s301 = smul.addr %s300, 36
      %s302 = smul.addr %s301, 4
      %s303 = scalar_lea.vmem %s1, %s302
      %p304 = pneg %p78
      %p305 = pneg %p75
      %p306 = pneg %p99
      %p307 = pneg %p96
      %p308 = pneg %p120
      %p309 = pneg %p117
      %p310 = pneg %p141
      %p311 = pneg %p138
      %p312 = pneg %p162
      %p313 = pneg %p159
      %p314 = pneg %p183
      %p315 = pneg %p180
      %p316 = pneg %p204
      %p317 = pneg %p201
      %p318 = pneg %p232
      %p319 = pneg %p229
      %s320 = smul.u32 8, %s24
      %p321 = scmp.lt.s32.totalorder %s23, 1
      %s322 = scalar_select %p321, %s23, 1
      %p323 = scmp.lt.s32.totalorder %s320, 15
      %s324 = scalar_select %p323, %s320, 15
      %s325 = smul.addr %s324, 2
      %s326 = smul.addr %s322, 32
      %s327 = sadd.s32 %s325, %s326
      %s328 = smul.addr %s327, 4
      %s329 = scalar_lea.vmem %s8, %s328
      %p330 = scmp.lt.s32.totalorder %s23, 1
      %s331 = scalar_select %p330, %s23, 1
      %s332 = smul.addr %s331, 36
      %s333 = smul.addr %s332, 8
      %s334 = scalar_lea.vmem %s0, %s333
      %p335 = scmp.lt.s32.totalorder %s23, 1
      %s336 = scalar_select %p335, %s23, 1
      %s337 = smul.addr %s336, 36
      %s338 = smul.addr %s337, 4
      %s339 = scalar_lea.vmem %s1, %s338
      %s340 = smul.u32 8, %s24
      %p341 = scmp.lt.s32.totalorder %s23, 1
      %s342 = scalar_select %p341, %s23, 1
      %p343 = scmp.lt.s32.totalorder %s340, 15
      %s344 = scalar_select %p343, %s340, 15
      %s345 = smul.addr %s344, 2
      %s346 = smul.addr %s342, 32
      %s347 = sadd.s32 %s345, %s346
      %s348 = smul.addr %s347, 4
      %s349 = scalar_lea.vmem %s8, %s348
      %s350 = smul.u32 8, %s24
      %s352 = smul.u32 %s24, 8
      %s353 = smul.u32 %s352, 16
      %s354 = scalar_lea.vmem %s334, %s353
      %v355 = vld [vmem:[%s354] sm:$0xff]
      %v356 = vld [vmem:[%s354 + $0x8] sm:$0xff]
      %v357 = vld [vmem:[%s354 + $0x10] sm:$0xff]
      %v358 = vld [vmem:[%s354 + $0x18] sm:$0xff]
      %v359 = vld [vmem:[%s354 + $0x20] sm:$0xff]
      %v360 = vld [vmem:[%s354 + $0x28] sm:$0xff]
      %v361 = vld [vmem:[%s354 + $0x30] sm:$0xff]
      %v362 = vld [vmem:[%s354 + $0x38] sm:$0xff]
      %v363 = vld [vmem:[%s354 + $0x40] sm:$0xff]
      %v364 = vld [vmem:[%s354 + $0x48] sm:$0xff]
      %v365 = vld [vmem:[%s354 + $0x50] sm:$0xff]
      %v366 = vld [vmem:[%s354 + $0x58] sm:$0xff]
      %v367 = vld [vmem:[%s354 + $0x60] sm:$0xff]
      %v368 = vld [vmem:[%s354 + $0x68] sm:$0xff]
      %v369 = vld [vmem:[%s354 + $0x70] sm:$0xff]
      %v370 = vld [vmem:[%s354 + $0x78] sm:$0xff]
      %v371 = vld [vmem:[%s354 + $0x80] sm:$0xff]
      %v372 = vld [vmem:[%s354 + $0x88] sm:$0xff]
      %v373 = vld [vmem:[%s354 + $0x90] sm:$0xff]
      %v374 = vld [vmem:[%s354 + $0x98] sm:$0xff]
      %s375 = smul.u32 %s352, 2
      %s376 = smul.addr %s375, 4
      %s377 = scalar_lea.vmem %s339, %s376
      %v378 = vld [vmem:[%s377] sm:$0xf]
      %v379 = vld [vmem:[%s377 + $0x4] sm:$0xf]
      %v380 = vld [vmem:[%s377 + $0x8] sm:$0xf]
      %v381 = vld [vmem:[%s377 + $0xc] sm:$0xf]
      %v382 = vld [vmem:[%s377 + $0x10] sm:$0xf]
      %v383 = vld [vmem:[%s377 + $0x14] sm:$0xf]
      %v384 = vld [vmem:[%s377 + $0x18] sm:$0xf]
      %v385 = vld [vmem:[%s377 + $0x1c] sm:$0xf]
      %v386 = vld [vmem:[%s377 + $0x20] sm:$0xf]
      %v387 = vld [vmem:[%s377 + $0x24] sm:$0xf]
      %v388 = vld [vmem:[%s377 + $0x28] sm:$0xf]
      %v389 = vld [vmem:[%s377 + $0x2c] sm:$0xf]
      %v390 = vld [vmem:[%s377 + $0x30] sm:$0xf]
      %v391 = vld [vmem:[%s377 + $0x34] sm:$0xf]
      %v392 = vld [vmem:[%s377 + $0x38] sm:$0xf]
      %v393 = vld [vmem:[%s377 + $0x3c] sm:$0xf]
      %v394 = vld [vmem:[%s377 + $0x40] sm:$0xf]
      %v395 = vld [vmem:[%s377 + $0x44] sm:$0xf]
      %v396 = vld [vmem:[%s377 + $0x48] sm:$0xf]
      %v397 = vld [vmem:[%s377 + $0x4c] sm:$0xf]
      %v398 = vunpack.c.l.bf16 %v378
      %v399 = vunpack.c.l.bf16 %v379
      %v400 = vunpack.c.l.bf16 %v380
      %v401 = vunpack.c.l.bf16 %v381
      %v402 = vunpack.c.l.bf16 %v382
      %v403 = vunpack.c.l.bf16 %v383
      %v404 = vunpack.c.l.bf16 %v384
      %v405 = vunpack.c.l.bf16 %v385
      %v406 = vunpack.c.l.bf16 %v386
      %v407 = vunpack.c.l.bf16 %v387
      %v408 = vunpack.c.l.bf16 %v388
      %v409 = vunpack.c.l.bf16 %v389
      %v410 = vunpack.c.l.bf16 %v390
      %v411 = vunpack.c.l.bf16 %v391
      %v412 = vunpack.c.l.bf16 %v392
      %v413 = vunpack.c.l.bf16 %v393
      %v414 = vunpack.c.l.bf16 %v394
      %v415 = vunpack.c.l.bf16 %v395
      %v416 = vunpack.c.l.bf16 %v396
      %v417 = vunpack.c.l.bf16 %v397
      %438 = vrot.lane.b32.xlu0 %v398, 32
      %v439 = vpop.permute.xlu0 %438
      %440 = vrot.lane.b32.xlu0 %v399, 32
      %v441 = vpop.permute.xlu0 %440
      %442 = vrot.lane.b32.xlu0 %v400, 32
      %v443 = vpop.permute.xlu0 %442
      %444 = vrot.lane.b32.xlu0 %v401, 32
      %v445 = vpop.permute.xlu0 %444
      %446 = vrot.lane.b32.xlu0 %v402, 32
      %v447 = vpop.permute.xlu0 %446
      %448 = vrot.lane.b32.xlu0 %v403, 32
      %v449 = vpop.permute.xlu0 %448
      %450 = vrot.lane.b32.xlu0 %v404, 32
      %v451 = vpop.permute.xlu0 %450
      %452 = vrot.lane.b32.xlu0 %v405, 32
      %v453 = vpop.permute.xlu0 %452
      %454 = vrot.lane.b32.xlu0 %v406, 32
      %v455 = vpop.permute.xlu0 %454
      %456 = vrot.lane.b32.xlu0 %v407, 32
      %v457 = vpop.permute.xlu0 %456
      %458 = vrot.lane.b32.xlu0 %v408, 32
      %v459 = vpop.permute.xlu0 %458
      %460 = vrot.lane.b32.xlu0 %v409, 32
      %v461 = vpop.permute.xlu0 %460
      %462 = vrot.lane.b32.xlu0 %v410, 32
      %v463 = vpop.permute.xlu0 %462
      %464 = vrot.lane.b32.xlu0 %v411, 32
      %v465 = vpop.permute.xlu0 %464
      %466 = vrot.lane.b32.xlu0 %v412, 32
      %v467 = vpop.permute.xlu0 %466
      %468 = vrot.lane.b32.xlu0 %v413, 32
      %v469 = vpop.permute.xlu0 %468
      %470 = vrot.lane.b32.xlu0 %v414, 32
      %v471 = vpop.permute.xlu0 %470
      %472 = vrot.lane.b32.xlu0 %v415, 32
      %v473 = vpop.permute.xlu0 %472
      %474 = vrot.lane.b32.xlu0 %v416, 32
      %v475 = vpop.permute.xlu0 %474
      %476 = vrot.lane.b32.xlu0 %v417, 32
      %v477 = vpop.permute.xlu0 %476
      %vm498 = vcmask 261120
      %v499 = vsel %vm498, %v355, %v439
      %v500 = vsel %vm498, %v356, %v441
      %v501 = vsel %vm498, %v357, %v443
      %v502 = vsel %vm498, %v358, %v445
      %v503 = vsel %vm498, %v359, %v447
      %v504 = vsel %vm498, %v360, %v449
      %v505 = vsel %vm498, %v361, %v451
      %v506 = vsel %vm498, %v362, %v453
      %v507 = vsel %vm498, %v363, %v455
      %v508 = vsel %vm498, %v364, %v457
      %v509 = vsel %vm498, %v365, %v459
      %v510 = vsel %vm498, %v366, %v461
      %v511 = vsel %vm498, %v367, %v463
      %v512 = vsel %vm498, %v368, %v465
      %v513 = vsel %vm498, %v369, %v467
      %v514 = vsel %vm498, %v370, %v469
      %v515 = vsel %vm498, %v371, %v471
      %v516 = vsel %vm498, %v372, %v473
      %v517 = vsel %vm498, %v373, %v475
      %v518 = vsel %vm498, %v374, %v477
      %v519 = vpack.c.bf16 %v500, %v499
      %v520 = vpack.c.bf16 %v502, %v501
      %v521 = vpack.c.bf16 %v504, %v503
      %v522 = vpack.c.bf16 %v506, %v505
      %v523 = vpack.c.bf16 %v508, %v507
      %v524 = vpack.c.bf16 %v510, %v509
      %v525 = vpack.c.bf16 %v512, %v511
      %v526 = vpack.c.bf16 %v514, %v513
      %v527 = vpack.c.bf16 %v516, %v515
      %v528 = vpack.c.bf16 %v518, %v517
      %v529 = vld [vmem:[%s2] sm:$0xf]
      %v530 = vld [vmem:[%s2 + $0x4] sm:$0xf]
      %v531 = vld [vmem:[%s2 + $0x8] sm:$0xf]
      %v532 = vld [vmem:[%s2 + $0xc] sm:$0xf]
      %v533 = vld [vmem:[%s2 + $0x10] sm:$0xf]
      %v534 = vld [vmem:[%s2 + $0x14] sm:$0xf]
      %v535 = vld [vmem:[%s2 + $0x18] sm:$0xf]
      %v536 = vld [vmem:[%s2 + $0x1c] sm:$0xf]
      %v537 = vld [vmem:[%s3] sm:$0x1]
      %v539 = vlaneseq
      %v540 = vshrl.u32 %v539, 7
      %v541 = vsub.s32 0, %v540
      %v542 = vrot.slane %v537, %v541
      %v552 = vunpack.c.l.b16 %v529
      %v553 = vunpack.c.l.b16 %v530
      %v554 = vunpack.c.l.b16 %v531
      %v555 = vunpack.c.l.b16 %v532
      %v556 = vunpack.c.l.b16 %v533
      %v557 = vunpack.c.l.b16 %v534
      %v558 = vunpack.c.l.b16 %v535
      %v559 = vunpack.c.l.b16 %v536
      %v560 = vpack.c.b16 %v553, %v552
      %v561 = vpack.c.b16 %v555, %v554
      %v562 = vpack.c.b16 %v557, %v556
      %v563 = vpack.c.b16 %v559, %v558
      %vm568 = vcmask 523264
      %v570 = vsel %vm568, %v519, 0
      %v573 = vsel %vm568, %v520, 0
      %v576 = vsel %vm568, %v521, 0
      %v579 = vsel %vm568, %v522, 0
      %v582 = vsel %vm568, %v523, 0
      %v585 = vsel %vm568, %v524, 0
      %v588 = vsel %vm568, %v525, 0
      %v591 = vsel %vm568, %v526, 0
      %v594 = vsel %vm568, %v527, 0
      %v597 = vsel %vm568, %v528, 0
      %599 = vmatprep.subr.bf16.mxu0 0
      %600 = vmatpush1.bf16.msra.mxu0 %v560
      %601 = vmatprep.subr.bf16.mxu0 0
      %602 = vmatpush1.bf16.msra.mxu0 %v561
      %603 = vmatprep.subr.bf16.mxu0 0
      %604 = vmatpush1.bf16.msra.mxu0 %v562
      %605 = vmatprep.subr.bf16.mxu0 0
      %606 = vmatpush1.bf16.msra.mxu0 %v563
      %607 = vmatprep.subr.bf16.mxu0 0
      %608 = vmatpush1.bf16.msra.mxu0 0
      %609 = vmatprep.subr.bf16.mxu0 0
      %610 = vmatpush1.bf16.msra.mxu0 0
      %611 = vmatprep.subr.bf16.mxu0 0
      %612 = vmatpush1.bf16.msra.mxu0 0
      %613 = vmatprep.subr.bf16.mxu0 0
      %614 = vmatpush1.bf16.msra.mxu0 0
      %615 = vmatprep.subr.bf16.mxu0 0
      %616 = vmatpush1.bf16.msra.mxu0 0
      %617 = vmatprep.subr.bf16.mxu0 0
      %618 = vmatpush1.bf16.msra.mxu0 0
      %619 = vmatprep.subr.bf16.mxu0 0
      %620 = vmatpush1.bf16.msra.mxu0 0
      %621 = vmatprep.subr.bf16.mxu0 0
      %622 = vmatpush1.bf16.msra.mxu0 0
      %623 = vmatprep.subr.bf16.mxu0 0
      %624 = vmatpush1.bf16.msra.mxu0 0
      %625 = vmatprep.subr.bf16.mxu0 0
      %626 = vmatpush1.bf16.msra.mxu0 0
      %627 = vmatprep.subr.bf16.mxu0 0
      %628 = vmatpush1.bf16.msra.mxu0 0
      %629 = vmatprep.subr.bf16.mxu0 0
      %630 = vmatpush1.bf16.msra.mxu0 0
      %631 = vmatprep.mubr.bf16.mxu0 0
      %632 = vmatmul.mubr.bf16.gmra.mrb[0].mxu0 %v570
      %v633 = vpop.f32.mrb[0].mxu0
      %v634 = vadd.f32 %v542, %v633
      %v635 = vpop.f32.mrb[0].mxu0
      %v636 = vpop.f32.mrb[0].mxu0
      %v637 = vadd.f32 %v542, %v636
      %v638 = vpop.f32.mrb[0].mxu0
      %639 = vmatprep.mubr.bf16.mxu0 0
      %640 = vmatmul.mubr.bf16.gmra.mrb[0].mxu0 %v573
      %v641 = vpop.f32.mrb[0].mxu0
      %v642 = vadd.f32 %v542, %v641
      %v643 = vpop.f32.mrb[0].mxu0
      %v644 = vpop.f32.mrb[0].mxu0
      %v645 = vadd.f32 %v542, %v644
      %v646 = vpop.f32.mrb[0].mxu0
      %647 = vmatprep.mubr.bf16.mxu0 0
      %648 = vmatmul.mubr.bf16.gmra.mrb[0].mxu0 %v576
      %v649 = vpop.f32.mrb[0].mxu0
      %v650 = vadd.f32 %v542, %v649
      %v651 = vpop.f32.mrb[0].mxu0
      %v652 = vpop.f32.mrb[0].mxu0
      %v653 = vadd.f32 %v542, %v652
      %v654 = vpop.f32.mrb[0].mxu0
      %655 = vmatprep.mubr.bf16.mxu0 0
      %656 = vmatmul.mubr.bf16.gmra.mrb[0].mxu0 %v579
      %v657 = vpop.f32.mrb[0].mxu0
      %v658 = vadd.f32 %v542, %v657
      %v659 = vpop.f32.mrb[0].mxu0
      %v660 = vpop.f32.mrb[0].mxu0
      %v661 = vadd.f32 %v542, %v660
      %v662 = vpop.f32.mrb[0].mxu0
      %663 = vmatprep.mubr.bf16.mxu0 0
      %664 = vmatmul.mubr.bf16.gmra.mrb[0].mxu0 %v582
      %v665 = vpop.f32.mrb[0].mxu0
      %v666 = vadd.f32 %v542, %v665
      %v667 = vpop.f32.mrb[0].mxu0
      %v668 = vpop.f32.mrb[0].mxu0
      %v669 = vadd.f32 %v542, %v668
      %v670 = vpop.f32.mrb[0].mxu0
      %671 = vmatprep.mubr.bf16.mxu0 0
      %672 = vmatmul.mubr.bf16.gmra.mrb[0].mxu0 %v585
      %v673 = vpop.f32.mrb[0].mxu0
      %v674 = vadd.f32 %v542, %v673
      %v675 = vpop.f32.mrb[0].mxu0
      %v676 = vpop.f32.mrb[0].mxu0
      %v677 = vadd.f32 %v542, %v676
      %v678 = vpop.f32.mrb[0].mxu0
      %679 = vmatprep.mubr.bf16.mxu0 0
      %680 = vmatmul.mubr.bf16.gmra.mrb[0].mxu0 %v588
      %v681 = vpop.f32.mrb[0].mxu0
      %v682 = vadd.f32 %v542, %v681
      %v683 = vpop.f32.mrb[0].mxu0
      %v684 = vpop.f32.mrb[0].mxu0
      %v685 = vadd.f32 %v542, %v684
      %v686 = vpop.f32.mrb[0].mxu0
      %687 = vmatprep.mubr.bf16.mxu0 0
      %688 = vmatmul.mubr.bf16.gmra.mrb[0].mxu0 %v591
      %v689 = vpop.f32.mrb[0].mxu0
      %v690 = vadd.f32 %v542, %v689
      %v691 = vpop.f32.mrb[0].mxu0
      %v692 = vpop.f32.mrb[0].mxu0
      %v693 = vadd.f32 %v542, %v692
      %v694 = vpop.f32.mrb[0].mxu0
      %695 = vmatprep.mubr.bf16.mxu0 0
      %696 = vmatmul.mubr.bf16.gmra.mrb[0].mxu0 %v594
      %v697 = vpop.f32.mrb[0].mxu0
      %v698 = vadd.f32 %v542, %v697
      %v699 = vpop.f32.mrb[0].mxu0
      %v700 = vpop.f32.mrb[0].mxu0
      %v701 = vadd.f32 %v542, %v700
      %v702 = vpop.f32.mrb[0].mxu0
      %703 = vmatprep.mubr.bf16.mxu0 0
      %704 = vmatmul.mubr.bf16.gmra.mrb[0].mxu0 %v597
      %v705 = vpop.f32.mrb[0].mxu0
      %v706 = vadd.f32 %v542, %v705
      %v707 = vpop.f32.mrb[0].mxu0
      %v708 = vpop.f32.mrb[0].mxu0
      %v709 = vadd.f32 %v542, %v708
      %v710 = vpop.f32.mrb[0].mxu0
      %711 = vdwg.mxu0
      %v712 = vmul.f32 %v634, %v634
      %v713 = vmul.f32 %v637, %v637
      %v714 = vmul.f32 %v642, %v642
      %v715 = vmul.f32 %v645, %v645
      %v716 = vmul.f32 %v650, %v650
      %v717 = vmul.f32 %v653, %v653
      %v718 = vmul.f32 %v658, %v658
      %v719 = vmul.f32 %v661, %v661
      %v720 = vmul.f32 %v666, %v666
      %v721 = vmul.f32 %v669, %v669
      %v722 = vmul.f32 %v674, %v674
      %v723 = vmul.f32 %v677, %v677
      %v724 = vmul.f32 %v682, %v682
      %v725 = vmul.f32 %v685, %v685
      %v726 = vmul.f32 %v690, %v690
      %v727 = vmul.f32 %v693, %v693
      %v728 = vmul.f32 %v698, %v698
      %v729 = vmul.f32 %v701, %v701
      %v730 = vmul.f32 %v706, %v706
      %v731 = vmul.f32 %v709, %v709
      %v732 = vmul.f32 %v634, %v712
      %v733 = vmul.f32 %v637, %v713
      %v734 = vmul.f32 %v642, %v714
      %v735 = vmul.f32 %v645, %v715
      %v736 = vmul.f32 %v650, %v716
      %v737 = vmul.f32 %v653, %v717
      %v738 = vmul.f32 %v658, %v718
      %v739 = vmul.f32 %v661, %v719
      %v740 = vmul.f32 %v666, %v720
      %v741 = vmul.f32 %v669, %v721
      %v742 = vmul.f32 %v674, %v722
      %v743 = vmul.f32 %v677, %v723
      %v744 = vmul.f32 %v682, %v724
      %v745 = vmul.f32 %v685, %v725
      %v746 = vmul.f32 %v690, %v726
      %v747 = vmul.f32 %v693, %v727
      %v748 = vmul.f32 %v698, %v728
      %v749 = vmul.f32 %v701, %v729
      %v750 = vmul.f32 %v706, %v730
      %v751 = vmul.f32 %v709, %v731
      %v752 = vmul.f32 %v732, 0.044715
      %v753 = vmul.f32 %v733, 0.044715
      %v754 = vmul.f32 %v734, 0.044715
      %v755 = vmul.f32 %v735, 0.044715
      %v756 = vmul.f32 %v736, 0.044715
      %v757 = vmul.f32 %v737, 0.044715
      %v758 = vmul.f32 %v738, 0.044715
      %v759 = vmul.f32 %v739, 0.044715
      %v760 = vmul.f32 %v740, 0.044715
      %v761 = vmul.f32 %v741, 0.044715
      %v762 = vmul.f32 %v742, 0.044715
      %v763 = vmul.f32 %v743, 0.044715
      %v764 = vmul.f32 %v744, 0.044715
      %v765 = vmul.f32 %v745, 0.044715
      %v766 = vmul.f32 %v746, 0.044715
      %v767 = vmul.f32 %v747, 0.044715
      %v768 = vmul.f32 %v748, 0.044715
      %v769 = vmul.f32 %v749, 0.044715
      %v770 = vmul.f32 %v750, 0.044715
      %v771 = vmul.f32 %v751, 0.044715
      %v772 = vadd.f32 %v634, %v752
      %v773 = vadd.f32 %v637, %v753
      %v774 = vadd.f32 %v642, %v754
      %v775 = vadd.f32 %v645, %v755
      %v776 = vadd.f32 %v650, %v756
      %v777 = vadd.f32 %v653, %v757
      %v778 = vadd.f32 %v658, %v758
      %v779 = vadd.f32 %v661, %v759
      %v780 = vadd.f32 %v666, %v760
      %v781 = vadd.f32 %v669, %v761
      %v782 = vadd.f32 %v674, %v762
      %v783 = vadd.f32 %v677, %v763
      %v784 = vadd.f32 %v682, %v764
      %v785 = vadd.f32 %v685, %v765
      %v786 = vadd.f32 %v690, %v766
      %v787 = vadd.f32 %v693, %v767
      %v788 = vadd.f32 %v698, %v768
      %v789 = vadd.f32 %v701, %v769
      %v790 = vadd.f32 %v706, %v770
      %v791 = vadd.f32 %v709, %v771
      %v792 = vmul.f32 %v772, 0.7978846
      %v793 = vmul.f32 %v773, 0.7978846
      %v794 = vmul.f32 %v774, 0.7978846
      %v795 = vmul.f32 %v775, 0.7978846
      %v796 = vmul.f32 %v776, 0.7978846
      %v797 = vmul.f32 %v777, 0.7978846
      %v798 = vmul.f32 %v778, 0.7978846
      %v799 = vmul.f32 %v779, 0.7978846
      %v800 = vmul.f32 %v780, 0.7978846
      %v801 = vmul.f32 %v781, 0.7978846
      %v802 = vmul.f32 %v782, 0.7978846
      %v803 = vmul.f32 %v783, 0.7978846
      %v804 = vmul.f32 %v784, 0.7978846
      %v805 = vmul.f32 %v785, 0.7978846
      %v806 = vmul.f32 %v786, 0.7978846
      %v807 = vmul.f32 %v787, 0.7978846
      %v808 = vmul.f32 %v788, 0.7978846
      %v809 = vmul.f32 %v789, 0.7978846
      %v810 = vmul.f32 %v790, 0.7978846
      %v811 = vmul.f32 %v791, 0.7978846
      %v812 = vtanh.pop %v792
      %v813 = vtanh.pop %v793
      %v814 = vtanh.pop %v794
      %v815 = vtanh.pop %v795
      %v816 = vtanh.pop %v796
      %v817 = vtanh.pop %v797
      %v818 = vtanh.pop %v798
      %v819 = vtanh.pop %v799
      %v820 = vtanh.pop %v800
      %v821 = vtanh.pop %v801
      %v822 = vtanh.pop %v802
      %v823 = vtanh.pop %v803
      %v824 = vtanh.pop %v804
      %v825 = vtanh.pop %v805
      %v826 = vtanh.pop %v806
      %v827 = vtanh.pop %v807
      %v828 = vtanh.pop %v808
      %v829 = vtanh.pop %v809
      %v830 = vtanh.pop %v810
      %v831 = vtanh.pop %v811
      %v832 = vadd.f32 %v812, 1.0
      %v833 = vadd.f32 %v813, 1.0
      %v834 = vadd.f32 %v814, 1.0
      %v835 = vadd.f32 %v815, 1.0
      %v836 = vadd.f32 %v816, 1.0
      %v837 = vadd.f32 %v817, 1.0
      %v838 = vadd.f32 %v818, 1.0
      %v839 = vadd.f32 %v819, 1.0
      %v840 = vadd.f32 %v820, 1.0
      %v841 = vadd.f32 %v821, 1.0
      %v842 = vadd.f32 %v822, 1.0
      %v843 = vadd.f32 %v823, 1.0
      %v844 = vadd.f32 %v824, 1.0
      %v845 = vadd.f32 %v825, 1.0
      %v846 = vadd.f32 %v826, 1.0
      %v847 = vadd.f32 %v827, 1.0
      %v848 = vadd.f32 %v828, 1.0
      %v849 = vadd.f32 %v829, 1.0
      %v850 = vadd.f32 %v830, 1.0
      %v851 = vadd.f32 %v831, 1.0
      %v852 = vmul.f32 %v832, 0.5
      %v853 = vmul.f32 %v833, 0.5
      %v854 = vmul.f32 %v834, 0.5
      %v855 = vmul.f32 %v835, 0.5
      %v856 = vmul.f32 %v836, 0.5
      %v857 = vmul.f32 %v837, 0.5
      %v858 = vmul.f32 %v838, 0.5
      %v859 = vmul.f32 %v839, 0.5
      %v860 = vmul.f32 %v840, 0.5
      %v861 = vmul.f32 %v841, 0.5
      %v862 = vmul.f32 %v842, 0.5
      %v863 = vmul.f32 %v843, 0.5
      %v864 = vmul.f32 %v844, 0.5
      %v865 = vmul.f32 %v845, 0.5
      %v866 = vmul.f32 %v846, 0.5
      %v867 = vmul.f32 %v847, 0.5
      %v868 = vmul.f32 %v848, 0.5
      %v869 = vmul.f32 %v849, 0.5
      %v870 = vmul.f32 %v850, 0.5
      %v871 = vmul.f32 %v851, 0.5
      %v872 = vmul.f32 %v634, %v852
      %v873 = vmul.f32 %v637, %v853
      %v874 = vmul.f32 %v642, %v854
      %v875 = vmul.f32 %v645, %v855
      %v876 = vmul.f32 %v650, %v856
      %v877 = vmul.f32 %v653, %v857
      %v878 = vmul.f32 %v658, %v858
      %v879 = vmul.f32 %v661, %v859
      %v880 = vmul.f32 %v666, %v860
      %v881 = vmul.f32 %v669, %v861
      %v882 = vmul.f32 %v674, %v862
      %v883 = vmul.f32 %v677, %v863
      %v884 = vmul.f32 %v682, %v864
      %v885 = vmul.f32 %v685, %v865
      %v886 = vmul.f32 %v690, %v866
      %v887 = vmul.f32 %v693, %v867
      %v888 = vmul.f32 %v698, %v868
      %v889 = vmul.f32 %v701, %v869
      %v890 = vmul.f32 %v706, %v870
      %v891 = vmul.f32 %v709, %v871
      %s892 = ssub.s32 %s352, 1
      %v893 = vstv %s892
      %v894 = vadd.s32 %v893, 1
      %v895 = vadd.s32 %v893, 2
      %v896 = vadd.s32 %v893, 3
      %v897 = vadd.s32 %v893, 4
      %v898 = vadd.s32 %v893, 5
      %v899 = vadd.s32 %v893, 6
      %v900 = vadd.s32 %v893, 7
      %v901 = vadd.s32 %v893, 8
      %v902 = vadd.s32 %v893, 9
      %vm903 = vcmp.ge.s32.totalorder %v893, 0
      %vm904 = vcmp.ge.s32.totalorder %v894, 0
      %vm905 = vcmp.ge.s32.totalorder %v895, 0
      %vm906 = vcmp.ge.s32.totalorder %v896, 0
      %vm907 = vcmp.ge.s32.totalorder %v897, 0
      %vm908 = vcmp.ge.s32.totalorder %v898, 0
      %vm909 = vcmp.ge.s32.totalorder %v899, 0
      %vm910 = vcmp.ge.s32.totalorder %v900, 0
      %vm911 = vcmp.ge.s32.totalorder %v901, 0
      %vm912 = vcmp.ge.s32.totalorder %v902, 0
      %vm913 = vcmp.lt.s32.totalorder %v893, 16
      %vm914 = vcmp.lt.s32.totalorder %v894, 16
      %vm915 = vcmp.lt.s32.totalorder %v895, 16
      %vm916 = vcmp.lt.s32.totalorder %v896, 16
      %vm917 = vcmp.lt.s32.totalorder %v897, 16
      %vm918 = vcmp.lt.s32.totalorder %v898, 16
      %vm919 = vcmp.lt.s32.totalorder %v899, 16
      %vm920 = vcmp.lt.s32.totalorder %v900, 16
      %vm921 = vcmp.lt.s32.totalorder %v901, 16
      %vm922 = vcmp.lt.s32.totalorder %v902, 16
      %vm923 = vmand %vm903, %vm913
      %vm924 = vmand %vm904, %vm914
      %vm925 = vmand %vm905, %vm915
      %vm926 = vmand %vm906, %vm916
      %vm927 = vmand %vm907, %vm917
      %vm928 = vmand %vm908, %vm918
      %vm929 = vmand %vm909, %vm919
      %vm930 = vmand %vm910, %vm920
      %vm931 = vmand %vm911, %vm921
      %vm932 = vmand %vm912, %vm922
      %v933 = vsel %vm923, 1, 0
      %v934 = vsel %vm924, 1, 0
      %v935 = vsel %vm925, 1, 0
      %v936 = vsel %vm926, 1, 0
      %v937 = vsel %vm927, 1, 0
      %v938 = vsel %vm928, 1, 0
      %v939 = vsel %vm929, 1, 0
      %v940 = vsel %vm930, 1, 0
      %v941 = vsel %vm931, 1, 0
      %v942 = vsel %vm932, 1, 0
      %vm943 = vcmp.eq.s32.totalorder %v933, 1
      %vm944 = vcmp.eq.s32.totalorder %v934, 1
      %vm945 = vcmp.eq.s32.totalorder %v935, 1
      %vm946 = vcmp.eq.s32.totalorder %v936, 1
      %vm947 = vcmp.eq.s32.totalorder %v937, 1
      %vm948 = vcmp.eq.s32.totalorder %v938, 1
      %vm949 = vcmp.eq.s32.totalorder %v939, 1
      %vm950 = vcmp.eq.s32.totalorder %v940, 1
      %vm951 = vcmp.eq.s32.totalorder %v941, 1
      %vm952 = vcmp.eq.s32.totalorder %v942, 1
      %v953 = vsel %vm943, %v872, 0.0
      %v954 = vsel %vm943, %v873, 0.0
      %v955 = vsel %vm944, %v874, 0.0
      %v956 = vsel %vm944, %v875, 0.0
      %v957 = vsel %vm945, %v876, 0.0
      %v958 = vsel %vm945, %v877, 0.0
      %v959 = vsel %vm946, %v878, 0.0
      %v960 = vsel %vm946, %v879, 0.0
      %v961 = vsel %vm947, %v880, 0.0
      %v962 = vsel %vm947, %v881, 0.0
      %v963 = vsel %vm948, %v882, 0.0
      %v964 = vsel %vm948, %v883, 0.0
      %v965 = vsel %vm949, %v884, 0.0
      %v966 = vsel %vm949, %v885, 0.0
      %v967 = vsel %vm950, %v886, 0.0
      %v968 = vsel %vm950, %v887, 0.0
      %v969 = vsel %vm951, %v888, 0.0
      %v970 = vsel %vm951, %v889, 0.0
      %v971 = vsel %vm952, %v890, 0.0
      %v972 = vsel %vm952, %v891, 0.0
      %vm973 = vcmask 253952
      %974 = vst.msk [vmem:[#allocation2] sm:$0x1] %vm973, 0.0
      %975 = vst.msk [vmem:[#allocation2 + $0x18] sm:$0x1] %vm973, 0.0
      %976 = vst.msk [vmem:[#allocation2 + $0x30] sm:$0x1] %vm973, 0.0
      %977 = vst.msk [vmem:[#allocation2 + $0x48] sm:$0x1] %vm973, 0.0
      %978 = vst.msk [vmem:[#allocation2 + $0x60] sm:$0x1] %vm973, 0.0
      %979 = vst.msk [vmem:[#allocation2 + $0x78] sm:$0x1] %vm973, 0.0
      %980 = vst.msk [vmem:[#allocation2 + $0x90] sm:$0x1] %vm973, 0.0
      %981 = vst.msk [vmem:[#allocation2 + $0xa8] sm:$0x1] %vm973, 0.0
      %982 = vst.msk [vmem:[#allocation2 + $0xc0] sm:$0x1] %vm973, 0.0
      %983 = vst.msk [vmem:[#allocation2 + $0xd8] sm:$0x1] %vm973, 0.0
      %984 = vst.msk [vmem:[#allocation2 + $0x11] sm:$0x1] %vm973, 0.0
      %985 = vst.msk [vmem:[#allocation2 + $0x29] sm:$0x1] %vm973, 0.0
      %986 = vst.msk [vmem:[#allocation2 + $0x41] sm:$0x1] %vm973, 0.0
      %987 = vst.msk [vmem:[#allocation2 + $0x59] sm:$0x1] %vm973, 0.0
      %988 = vst.msk [vmem:[#allocation2 + $0x71] sm:$0x1] %vm973, 0.0
      %989 = vst.msk [vmem:[#allocation2 + $0x89] sm:$0x1] %vm973, 0.0
      %990 = vst.msk [vmem:[#allocation2 + $0xa1] sm:$0x1] %vm973, 0.0
      %991 = vst.msk [vmem:[#allocation2 + $0xb9] sm:$0x1] %vm973, 0.0
      %992 = vst.msk [vmem:[#allocation2 + $0xd1] sm:$0x1] %vm973, 0.0
      %993 = vst.msk [vmem:[#allocation2 + $0xe9] sm:$0x1] %vm973, 0.0
      %994 = vst.msk [vmem:[#allocation2 + $0x1] sm:$0xff] %vm498, %v953
      %995 = vst.msk [vmem:[#allocation2 + $0x9] sm:$0xff] %vm498, %v954
      %996 = vst.msk [vmem:[#allocation2 + $0x19] sm:$0xff] %vm498, %v955
      %997 = vst.msk [vmem:[#allocation2 + $0x21] sm:$0xff] %vm498, %v956
      %998 = vst.msk [vmem:[#allocation2 + $0x31] sm:$0xff] %vm498, %v957
      %999 = vst.msk [vmem:[#allocation2 + $0x39] sm:$0xff] %vm498, %v958
      %1000 = vst.msk [vmem:[#allocation2 + $0x49] sm:$0xff] %vm498, %v959
      %1001 = vst.msk [vmem:[#allocation2 + $0x51] sm:$0xff] %vm498, %v960
      %1002 = vst.msk [vmem:[#allocation2 + $0x61] sm:$0xff] %vm498, %v961
      %1003 = vst.msk [vmem:[#allocation2 + $0x69] sm:$0xff] %vm498, %v962
      %1004 = vst.msk [vmem:[#allocation2 + $0x79] sm:$0xff] %vm498, %v963
      %1005 = vst.msk [vmem:[#allocation2 + $0x81] sm:$0xff] %vm498, %v964
      %1006 = vst.msk [vmem:[#allocation2 + $0x91] sm:$0xff] %vm498, %v965
      %1007 = vst.msk [vmem:[#allocation2 + $0x99] sm:$0xff] %vm498, %v966
      %1008 = vst.msk [vmem:[#allocation2 + $0xa9] sm:$0xff] %vm498, %v967
      %1009 = vst.msk [vmem:[#allocation2 + $0xb1] sm:$0xff] %vm498, %v968
      %1010 = vst.msk [vmem:[#allocation2 + $0xc1] sm:$0xff] %vm498, %v969
      %1011 = vst.msk [vmem:[#allocation2 + $0xc9] sm:$0xff] %vm498, %v970
      %1012 = vst.msk [vmem:[#allocation2 + $0xd9] sm:$0xff] %vm498, %v971
      %1013 = vst.msk [vmem:[#allocation2 + $0xe1] sm:$0xff] %vm498, %v972
      %v1014 = vld [vmem:[#allocation2] sm:$0xff]
      %v1015 = vld [vmem:[#allocation2 + $0x8] sm:$0xff]
      %v1016 = vld [vmem:[#allocation2 + $0x18] sm:$0xff]
      %v1017 = vld [vmem:[#allocation2 + $0x20] sm:$0xff]
      %v1018 = vld [vmem:[#allocation2 + $0x30] sm:$0xff]
      %v1019 = vld [vmem:[#allocation2 + $0x38] sm:$0xff]
      %v1020 = vld [vmem:[#allocation2 + $0x48] sm:$0xff]
      %v1021 = vld [vmem:[#allocation2 + $0x50] sm:$0xff]
      %v1022 = vld [vmem:[#allocation2 + $0x60] sm:$0xff]
      %v1023 = vld [vmem:[#allocation2 + $0x68] sm:$0xff]
      %v1024 = vld [vmem:[#allocation2 + $0x78] sm:$0xff]
      %v1025 = vld [vmem:[#allocation2 + $0x80] sm:$0xff]
      %v1026 = vld [vmem:[#allocation2 + $0x90] sm:$0xff]
      %v1027 = vld [vmem:[#allocation2 + $0x98] sm:$0xff]
      %v1028 = vld [vmem:[#allocation2 + $0xa8] sm:$0xff]
      %v1029 = vld [vmem:[#allocation2 + $0xb0] sm:$0xff]
      %v1030 = vld [vmem:[#allocation2 + $0x1] sm:$0xff]
      %v1031 = vld [vmem:[#allocation2 + $0x9] sm:$0xff]
      %v1032 = vld [vmem:[#allocation2 + $0x19] sm:$0xff]
      %v1033 = vld [vmem:[#allocation2 + $0x21] sm:$0xff]
      %v1034 = vld [vmem:[#allocation2 + $0x31] sm:$0xff]
      %v1035 = vld [vmem:[#allocation2 + $0x39] sm:$0xff]
      %v1036 = vld [vmem:[#allocation2 + $0x49] sm:$0xff]
      %v1037 = vld [vmem:[#allocation2 + $0x51] sm:$0xff]
      %v1038 = vld [vmem:[#allocation2 + $0x61] sm:$0xff]
      %v1039 = vld [vmem:[#allocation2 + $0x69] sm:$0xff]
      %v1040 = vld [vmem:[#allocation2 + $0x79] sm:$0xff]
      %v1041 = vld [vmem:[#allocation2 + $0x81] sm:$0xff]
      %v1042 = vld [vmem:[#allocation2 + $0x91] sm:$0xff]
      %v1043 = vld [vmem:[#allocation2 + $0x99] sm:$0xff]
      %v1044 = vld [vmem:[#allocation2 + $0xa9] sm:$0xff]
      %v1045 = vld [vmem:[#allocation2 + $0xb1] sm:$0xff]
      %v1046 = vld [vmem:[#allocation2 + $0x2] sm:$0xff]
      %v1047 = vld [vmem:[#allocation2 + $0xa] sm:$0xff]
      %v1048 = vld [vmem:[#allocation2 + $0x1a] sm:$0xff]
      %v1049 = vld [vmem:[#allocation2 + $0x22] sm:$0xff]
      %v1050 = vld [vmem:[#allocation2 + $0x32] sm:$0xff]
      %v1051 = vld [vmem:[#allocation2 + $0x3a] sm:$0xff]
      %v1052 = vld [vmem:[#allocation2 + $0x4a] sm:$0xff]
      %v1053 = vld [vmem:[#allocation2 + $0x52] sm:$0xff]
      %v1054 = vld [vmem:[#allocation2 + $0x62] sm:$0xff]
      %v1055 = vld [vmem:[#allocation2 + $0x6a] sm:$0xff]
      %v1056 = vld [vmem:[#allocation2 + $0x7a] sm:$0xff]
      %v1057 = vld [vmem:[#allocation2 + $0x82] sm:$0xff]
      %v1058 = vld [vmem:[#allocation2 + $0x92] sm:$0xff]
      %v1059 = vld [vmem:[#allocation2 + $0x9a] sm:$0xff]
      %v1060 = vld [vmem:[#allocation2 + $0xaa] sm:$0xff]
      %v1061 = vld [vmem:[#allocation2 + $0xb2] sm:$0xff]
      %s1062 = scalar_lea.vmem [#allocation2], 24
      %v1063 = vld [vmem:[%s1062] sm:$0xff]
      %v1064 = vld [vmem:[%s1062 + $0x8] sm:$0xff]
      %v1065 = vld [vmem:[%s1062 + $0x18] sm:$0xff]
      %v1066 = vld [vmem:[%s1062 + $0x20] sm:$0xff]
      %v1067 = vld [vmem:[%s1062 + $0x30] sm:$0xff]
      %v1068 = vld [vmem:[%s1062 + $0x38] sm:$0xff]
      %v1069 = vld [vmem:[%s1062 + $0x48] sm:$0xff]
      %v1070 = vld [vmem:[%s1062 + $0x50] sm:$0xff]
      %v1071 = vld [vmem:[%s1062 + $0x60] sm:$0xff]
      %v1072 = vld [vmem:[%s1062 + $0x68] sm:$0xff]
      %v1073 = vld [vmem:[%s1062 + $0x78] sm:$0xff]
      %v1074 = vld [vmem:[%s1062 + $0x80] sm:$0xff]
      %v1075 = vld [vmem:[%s1062 + $0x90] sm:$0xff]
      %v1076 = vld [vmem:[%s1062 + $0x98] sm:$0xff]
      %v1077 = vld [vmem:[%s1062 + $0xa8] sm:$0xff]
      %v1078 = vld [vmem:[%s1062 + $0xb0] sm:$0xff]
      %v1079 = vld [vmem:[%s1062 + $0x1] sm:$0xff]
      %v1080 = vld [vmem:[%s1062 + $0x9] sm:$0xff]
      %v1081 = vld [vmem:[%s1062 + $0x19] sm:$0xff]
      %v1082 = vld [vmem:[%s1062 + $0x21] sm:$0xff]
      %v1083 = vld [vmem:[%s1062 + $0x31] sm:$0xff]
      %v1084 = vld [vmem:[%s1062 + $0x39] sm:$0xff]
      %v1085 = vld [vmem:[%s1062 + $0x49] sm:$0xff]
      %v1086 = vld [vmem:[%s1062 + $0x51] sm:$0xff]
      %v1087 = vld [vmem:[%s1062 + $0x61] sm:$0xff]
      %v1088 = vld [vmem:[%s1062 + $0x69] sm:$0xff]
      %v1089 = vld [vmem:[%s1062 + $0x79] sm:$0xff]
      %v1090 = vld [vmem:[%s1062 + $0x81] sm:$0xff]
      %v1091 = vld [vmem:[%s1062 + $0x91] sm:$0xff]
      %v1092 = vld [vmem:[%s1062 + $0x99] sm:$0xff]
      %v1093 = vld [vmem:[%s1062 + $0xa9] sm:$0xff]
      %v1094 = vld [vmem:[%s1062 + $0xb1] sm:$0xff]
      %v1095 = vld [vmem:[%s1062 + $0x2] sm:$0xff]
      %v1096 = vld [vmem:[%s1062 + $0xa] sm:$0xff]
      %v1097 = vld [vmem:[%s1062 + $0x1a] sm:$0xff]
      %v1098 = vld [vmem:[%s1062 + $0x22] sm:$0xff]
      %v1099 = vld [vmem:[%s1062 + $0x32] sm:$0xff]
      %v1100 = vld [vmem:[%s1062 + $0x3a] sm:$0xff]
      %v1101 = vld [vmem:[%s1062 + $0x4a] sm:$0xff]
      %v1102 = vld [vmem:[%s1062 + $0x52] sm:$0xff]
      %v1103 = vld [vmem:[%s1062 + $0x62] sm:$0xff]
      %v1104 = vld [vmem:[%s1062 + $0x6a] sm:$0xff]
      %v1105 = vld [vmem:[%s1062 + $0x7a] sm:$0xff]
      %v1106 = vld [vmem:[%s1062 + $0x82] sm:$0xff]
      %v1107 = vld [vmem:[%s1062 + $0x92] sm:$0xff]
      %v1108 = vld [vmem:[%s1062 + $0x9a] sm:$0xff]
      %v1109 = vld [vmem:[%s1062 + $0xaa] sm:$0xff]
      %v1110 = vld [vmem:[%s1062 + $0xb2] sm:$0xff]
      %s1111 = scalar_lea.vmem [#allocation2], 48
      %v1112 = vld [vmem:[%s1111] sm:$0xff]
      %v1113 = vld [vmem:[%s1111 + $0x8] sm:$0xff]
      %v1114 = vld [vmem:[%s1111 + $0x18] sm:$0xff]
      %v1115 = vld [vmem:[%s1111 + $0x20] sm:$0xff]
      %v1116 = vld [vmem:[%s1111 + $0x30] sm:$0xff]
      %v1117 = vld [vmem:[%s1111 + $0x38] sm:$0xff]
      %v1118 = vld [vmem:[%s1111 + $0x48] sm:$0xff]
      %v1119 = vld [vmem:[%s1111 + $0x50] sm:$0xff]
      %v1120 = vld [vmem:[%s1111 + $0x60] sm:$0xff]
      %v1121 = vld [vmem:[%s1111 + $0x68] sm:$0xff]
      %v1122 = vld [vmem:[%s1111 + $0x78] sm:$0xff]
      %v1123 = vld [vmem:[%s1111 + $0x80] sm:$0xff]
      %v1124 = vld [vmem:[%s1111 + $0x90] sm:$0xff]
      %v1125 = vld [vmem:[%s1111 + $0x98] sm:$0xff]
      %v1126 = vld [vmem:[%s1111 + $0xa8] sm:$0xff]
      %v1127 = vld [vmem:[%s1111 + $0xb0] sm:$0xff]
      %v1128 = vld [vmem:[%s1111 + $0x1] sm:$0xff]
      %v1129 = vld [vmem:[%s1111 + $0x9] sm:$0xff]
      %v1130 = vld [vmem:[%s1111 + $0x19] sm:$0xff]
      %v1131 = vld [vmem:[%s1111 + $0x21] sm:$0xff]
      %v1132 = vld [vmem:[%s1111 + $0x31] sm:$0xff]
      %v1133 = vld [vmem:[%s1111 + $0x39] sm:$0xff]
      %v1134 = vld [vmem:[%s1111 + $0x49] sm:$0xff]
      %v1135 = vld [vmem:[%s1111 + $0x51] sm:$0xff]
      %v1136 = vld [vmem:[%s1111 + $0x61] sm:$0xff]
      %v1137 = vld [vmem:[%s1111 + $0x69] sm:$0xff]
      %v1138 = vld [vmem:[%s1111 + $0x79] sm:$0xff]
      %v1139 = vld [vmem:[%s1111 + $0x81] sm:$0xff]
      %v1140 = vld [vmem:[%s1111 + $0x91] sm:$0xff]
      %v1141 = vld [vmem:[%s1111 + $0x99] sm:$0xff]
      %v1142 = vld [vmem:[%s1111 + $0xa9] sm:$0xff]
      %v1143 = vld [vmem:[%s1111 + $0xb1] sm:$0xff]
      %v1144 = vld [vmem:[%s1111 + $0x2] sm:$0xff]
      %v1145 = vld [vmem:[%s1111 + $0xa] sm:$0xff]
      %v1146 = vld [vmem:[%s1111 + $0x1a] sm:$0xff]
      %v1147 = vld [vmem:[%s1111 + $0x22] sm:$0xff]
      %v1148 = vld [vmem:[%s1111 + $0x32] sm:$0xff]
      %v1149 = vld [vmem:[%s1111 + $0x3a] sm:$0xff]
      %v1150 = vld [vmem:[%s1111 + $0x4a] sm:$0xff]
      %v1151 = vld [vmem:[%s1111 + $0x52] sm:$0xff]
      %v1152 = vld [vmem:[%s1111 + $0x62] sm:$0xff]
      %v1153 = vld [vmem:[%s1111 + $0x6a] sm:$0xff]
      %v1154 = vld [vmem:[%s1111 + $0x7a] sm:$0xff]
      %v1155 = vld [vmem:[%s1111 + $0x82] sm:$0xff]
      %v1156 = vld [vmem:[%s1111 + $0x92] sm:$0xff]
      %v1157 = vld [vmem:[%s1111 + $0x9a] sm:$0xff]
      %v1158 = vld [vmem:[%s1111 + $0xaa] sm:$0xff]
      %v1159 = vld [vmem:[%s1111 + $0xb2] sm:$0xff]
      %1176 = vrot.lane.b32.xlu0 %v1030, 32
      %v1177 = vpop.permute.xlu0 %1176
      %1178 = vrot.lane.b32.xlu0 %v1031, 32
      %v1179 = vpop.permute.xlu0 %1178
      %1180 = vrot.lane.b32.xlu0 %v1032, 32
      %v1181 = vpop.permute.xlu0 %1180
      %1182 = vrot.lane.b32.xlu0 %v1033, 32
      %v1183 = vpop.permute.xlu0 %1182
      %1184 = vrot.lane.b32.xlu0 %v1034, 32
      %v1185 = vpop.permute.xlu0 %1184
      %1186 = vrot.lane.b32.xlu0 %v1035, 32
      %v1187 = vpop.permute.xlu0 %1186
      %1188 = vrot.lane.b32.xlu0 %v1036, 32
      %v1189 = vpop.permute.xlu0 %1188
      %1190 = vrot.lane.b32.xlu0 %v1037, 32
      %v1191 = vpop.permute.xlu0 %1190
      %1192 = vrot.lane.b32.xlu0 %v1038, 32
      %v1193 = vpop.permute.xlu0 %1192
      %1194 = vrot.lane.b32.xlu0 %v1039, 32
      %v1195 = vpop.permute.xlu0 %1194
      %1196 = vrot.lane.b32.xlu0 %v1040, 32
      %v1197 = vpop.permute.xlu0 %1196
      %1198 = vrot.lane.b32.xlu0 %v1041, 32
      %v1199 = vpop.permute.xlu0 %1198
      %1200 = vrot.lane.b32.xlu0 %v1042, 32
      %v1201 = vpop.permute.xlu0 %1200
      %1202 = vrot.lane.b32.xlu0 %v1043, 32
      %v1203 = vpop.permute.xlu0 %1202
      %1204 = vrot.lane.b32.xlu0 %v1044, 32
      %v1205 = vpop.permute.xlu0 %1204
      %1206 = vrot.lane.b32.xlu0 %v1045, 32
      %v1207 = vpop.permute.xlu0 %1206
      %1240 = vrot.lane.b32.xlu0 %v1046, 64
      %v1241 = vpop.permute.xlu0 %1240
      %1242 = vrot.lane.b32.xlu0 %v1047, 64
      %v1243 = vpop.permute.xlu0 %1242
      %1244 = vrot.lane.b32.xlu0 %v1048, 64
      %v1245 = vpop.permute.xlu0 %1244
      %1246 = vrot.lane.b32.xlu0 %v1049, 64
      %v1247 = vpop.permute.xlu0 %1246
      %1248 = vrot.lane.b32.xlu0 %v1050, 64
      %v1249 = vpop.permute.xlu0 %1248
      %1250 = vrot.lane.b32.xlu0 %v1051, 64
      %v1251 = vpop.permute.xlu0 %1250
      %1252 = vrot.lane.b32.xlu0 %v1052, 64
      %v1253 = vpop.permute.xlu0 %1252
      %1254 = vrot.lane.b32.xlu0 %v1053, 64
      %v1255 = vpop.permute.xlu0 %1254
      %1256 = vrot.lane.b32.xlu0 %v1054, 64
      %v1257 = vpop.permute.xlu0 %1256
      %1258 = vrot.lane.b32.xlu0 %v1055, 64
      %v1259 = vpop.permute.xlu0 %1258
      %1260 = vrot.lane.b32.xlu0 %v1056, 64
      %v1261 = vpop.permute.xlu0 %1260
      %1262 = vrot.lane.b32.xlu0 %v1057, 64
      %v1263 = vpop.permute.xlu0 %1262
      %1264 = vrot.lane.b32.xlu0 %v1058, 64
      %v1265 = vpop.permute.xlu0 %1264
      %1266 = vrot.lane.b32.xlu0 %v1059, 64
      %v1267 = vpop.permute.xlu0 %1266
      %1268 = vrot.lane.b32.xlu0 %v1060, 64
      %v1269 = vpop.permute.xlu0 %1268
      %1270 = vrot.lane.b32.xlu0 %v1061, 64
      %v1271 = vpop.permute.xlu0 %1270
      %1304 = vrot.lane.b32.xlu0 %v1063, 96
      %v1305 = vpop.permute.xlu0 %1304
      %1306 = vrot.lane.b32.xlu0 %v1064, 96
      %v1307 = vpop.permute.xlu0 %1306
      %1308 = vrot.lane.b32.xlu0 %v1065, 96
      %v1309 = vpop.permute.xlu0 %1308
      %1310 = vrot.lane.b32.xlu0 %v1066, 96
      %v1311 = vpop.permute.xlu0 %1310
      %1312 = vrot.lane.b32.xlu0 %v1067, 96
      %v1313 = vpop.permute.xlu0 %1312
      %1314 = vrot.lane.b32.xlu0 %v1068, 96
      %v1315 = vpop.permute.xlu0 %1314
      %1316 = vrot.lane.b32.xlu0 %v1069, 96
      %v1317 = vpop.permute.xlu0 %1316
      %1318 = vrot.lane.b32.xlu0 %v1070, 96
      %v1319 = vpop.permute.xlu0 %1318
      %1320 = vrot.lane.b32.xlu0 %v1071, 96
      %v1321 = vpop.permute.xlu0 %1320
      %1322 = vrot.lane.b32.xlu0 %v1072, 96
      %v1323 = vpop.permute.xlu0 %1322
      %1324 = vrot.lane.b32.xlu0 %v1073, 96
      %v1325 = vpop.permute.xlu0 %1324
      %1326 = vrot.lane.b32.xlu0 %v1074, 96
      %v1327 = vpop.permute.xlu0 %1326
      %1328 = vrot.lane.b32.xlu0 %v1075, 96
      %v1329 = vpop.permute.xlu0 %1328
      %1330 = vrot.lane.b32.xlu0 %v1076, 96
      %v1331 = vpop.permute.xlu0 %1330
      %1332 = vrot.lane.b32.xlu0 %v1077, 96
      %v1333 = vpop.permute.xlu0 %1332
      %1334 = vrot.lane.b32.xlu0 %v1078, 96
      %v1335 = vpop.permute.xlu0 %1334
      %1368 = vrot.lane.b32.xlu0 %v1095, 32
      %v1369 = vpop.permute.xlu0 %1368
      %1370 = vrot.lane.b32.xlu0 %v1096, 32
      %v1371 = vpop.permute.xlu0 %1370
      %1372 = vrot.lane.b32.xlu0 %v1097, 32
      %v1373 = vpop.permute.xlu0 %1372
      %1374 = vrot.lane.b32.xlu0 %v1098, 32
      %v1375 = vpop.permute.xlu0 %1374
      %1376 = vrot.lane.b32.xlu0 %v1099, 32
      %v1377 = vpop.permute.xlu0 %1376
      %1378 = vrot.lane.b32.xlu0 %v1100, 32
      %v1379 = vpop.permute.xlu0 %1378
      %1380 = vrot.lane.b32.xlu0 %v1101, 32
      %v1381 = vpop.permute.xlu0 %1380
      %1382 = vrot.lane.b32.xlu0 %v1102, 32
      %v1383 = vpop.permute.xlu0 %1382
      %1384 = vrot.lane.b32.xlu0 %v1103, 32
      %v1385 = vpop.permute.xlu0 %1384
      %1386 = vrot.lane.b32.xlu0 %v1104, 32
      %v1387 = vpop.permute.xlu0 %1386
      %1388 = vrot.lane.b32.xlu0 %v1105, 32
      %v1389 = vpop.permute.xlu0 %1388
      %1390 = vrot.lane.b32.xlu0 %v1106, 32
      %v1391 = vpop.permute.xlu0 %1390
      %1392 = vrot.lane.b32.xlu0 %v1107, 32
      %v1393 = vpop.permute.xlu0 %1392
      %1394 = vrot.lane.b32.xlu0 %v1108, 32
      %v1395 = vpop.permute.xlu0 %1394
      %1396 = vrot.lane.b32.xlu0 %v1109, 32
      %v1397 = vpop.permute.xlu0 %1396
      %1398 = vrot.lane.b32.xlu0 %v1110, 32
      %v1399 = vpop.permute.xlu0 %1398
      %1432 = vrot.lane.b32.xlu0 %v1112, 64
      %v1433 = vpop.permute.xlu0 %1432
      %1434 = vrot.lane.b32.xlu0 %v1113, 64
      %v1435 = vpop.permute.xlu0 %1434
      %1436 = vrot.lane.b32.xlu0 %v1114, 64
      %v1437 = vpop.permute.xlu0 %1436
      %1438 = vrot.lane.b32.xlu0 %v1115, 64
      %v1439 = vpop.permute.xlu0 %1438
      %1440 = vrot.lane.b32.xlu0 %v1116, 64
      %v1441 = vpop.permute.xlu0 %1440
      %1442 = vrot.lane.b32.xlu0 %v1117, 64
      %v1443 = vpop.permute.xlu0 %1442
      %1444 = vrot.lane.b32.xlu0 %v1118, 64
      %v1445 = vpop.permute.xlu0 %1444
      %1446 = vrot.lane.b32.xlu0 %v1119, 64
      %v1447 = vpop.permute.xlu0 %1446
      %1448 = vrot.lane.b32.xlu0 %v1120, 64
      %v1449 = vpop.permute.xlu0 %1448
      %1450 = vrot.lane.b32.xlu0 %v1121, 64
      %v1451 = vpop.permute.xlu0 %1450
      %1452 = vrot.lane.b32.xlu0 %v1122, 64
      %v1453 = vpop.permute.xlu0 %1452
      %1454 = vrot.lane.b32.xlu0 %v1123, 64
      %v1455 = vpop.permute.xlu0 %1454
      %1456 = vrot.lane.b32.xlu0 %v1124, 64
      %v1457 = vpop.permute.xlu0 %1456
      %1458 = vrot.lane.b32.xlu0 %v1125, 64
      %v1459 = vpop.permute.xlu0 %1458
      %1460 = vrot.lane.b32.xlu0 %v1126, 64
      %v1461 = vpop.permute.xlu0 %1460
      %1462 = vrot.lane.b32.xlu0 %v1127, 64
      %v1463 = vpop.permute.xlu0 %1462
      %1496 = vrot.lane.b32.xlu0 %v1128, 96
      %v1497 = vpop.permute.xlu0 %1496
      %1498 = vrot.lane.b32.xlu0 %v1129, 96
      %v1499 = vpop.permute.xlu0 %1498
      %1500 = vrot.lane.b32.xlu0 %v1130, 96
      %v1501 = vpop.permute.xlu0 %1500
      %1502 = vrot.lane.b32.xlu0 %v1131, 96
      %v1503 = vpop.permute.xlu0 %1502
      %1504 = vrot.lane.b32.xlu0 %v1132, 96
      %v1505 = vpop.permute.xlu0 %1504
      %1506 = vrot.lane.b32.xlu0 %v1133, 96
      %v1507 = vpop.permute.xlu0 %1506
      %1508 = vrot.lane.b32.xlu0 %v1134, 96
      %v1509 = vpop.permute.xlu0 %1508
      %1510 = vrot.lane.b32.xlu0 %v1135, 96
      %v1511 = vpop.permute.xlu0 %1510
      %1512 = vrot.lane.b32.xlu0 %v1136, 96
      %v1513 = vpop.permute.xlu0 %1512
      %1514 = vrot.lane.b32.xlu0 %v1137, 96
      %v1515 = vpop.permute.xlu0 %1514
      %1516 = vrot.lane.b32.xlu0 %v1138, 96
      %v1517 = vpop.permute.xlu0 %1516
      %1518 = vrot.lane.b32.xlu0 %v1139, 96
      %v1519 = vpop.permute.xlu0 %1518
      %1520 = vrot.lane.b32.xlu0 %v1140, 96
      %v1521 = vpop.permute.xlu0 %1520
      %1522 = vrot.lane.b32.xlu0 %v1141, 96
      %v1523 = vpop.permute.xlu0 %1522
      %1524 = vrot.lane.b32.xlu0 %v1142, 96
      %v1525 = vpop.permute.xlu0 %1524
      %1526 = vrot.lane.b32.xlu0 %v1143, 96
      %v1527 = vpop.permute.xlu0 %1526
      %v1544 = vsel %vm498, %v1014, %v1177
      %v1545 = vsel %vm498, %v1015, %v1179
      %v1546 = vsel %vm498, %v1016, %v1181
      %v1547 = vsel %vm498, %v1017, %v1183
      %v1548 = vsel %vm498, %v1018, %v1185
      %v1549 = vsel %vm498, %v1019, %v1187
      %v1550 = vsel %vm498, %v1020, %v1189
      %v1551 = vsel %vm498, %v1021, %v1191
      %v1552 = vsel %vm498, %v1022, %v1193
      %v1553 = vsel %vm498, %v1023, %v1195
      %v1554 = vsel %vm498, %v1024, %v1197
      %v1555 = vsel %vm498, %v1025, %v1199
      %v1556 = vsel %vm498, %v1026, %v1201
      %v1557 = vsel %vm498, %v1027, %v1203
      %v1558 = vsel %vm498, %v1028, %v1205
      %v1559 = vsel %vm498, %v1029, %v1207
      %v1560 = vsel %vm568, %v1544, %v1241
      %v1561 = vsel %vm568, %v1545, %v1243
      %v1562 = vsel %vm568, %v1546, %v1245
      %v1563 = vsel %vm568, %v1547, %v1247
      %v1564 = vsel %vm568, %v1548, %v1249
      %v1565 = vsel %vm568, %v1549, %v1251
      %v1566 = vsel %vm568, %v1550, %v1253
      %v1567 = vsel %vm568, %v1551, %v1255
      %v1568 = vsel %vm568, %v1552, %v1257
      %v1569 = vsel %vm568, %v1553, %v1259
      %v1570 = vsel %vm568, %v1554, %v1261
      %v1571 = vsel %vm568, %v1555, %v1263
      %v1572 = vsel %vm568, %v1556, %v1265
      %v1573 = vsel %vm568, %v1557, %v1267
      %v1574 = vsel %vm568, %v1558, %v1269
      %v1575 = vsel %vm568, %v1559, %v1271
      %vm1576 = vcmask 785408
      %v1577 = vsel %vm1576, %v1560, %v1305
      %v1578 = vsel %vm1576, %v1561, %v1307
      %v1579 = vsel %vm1576, %v1562, %v1309
      %v1580 = vsel %vm1576, %v1563, %v1311
      %v1581 = vsel %vm1576, %v1564, %v1313
      %v1582 = vsel %vm1576, %v1565, %v1315
      %v1583 = vsel %vm1576, %v1566, %v1317
      %v1584 = vsel %vm1576, %v1567, %v1319
      %v1585 = vsel %vm1576, %v1568, %v1321
      %v1586 = vsel %vm1576, %v1569, %v1323
      %v1587 = vsel %vm1576, %v1570, %v1325
      %v1588 = vsel %vm1576, %v1571, %v1327
      %v1589 = vsel %vm1576, %v1572, %v1329
      %v1590 = vsel %vm1576, %v1573, %v1331
      %v1591 = vsel %vm1576, %v1574, %v1333
      %v1592 = vsel %vm1576, %v1575, %v1335
      %v1593 = vsel %vm498, %v1079, %v1369
      %v1594 = vsel %vm498, %v1080, %v1371
      %v1595 = vsel %vm498, %v1081, %v1373
      %v1596 = vsel %vm498, %v1082, %v1375
      %v1597 = vsel %vm498, %v1083, %v1377
      %v1598 = vsel %vm498, %v1084, %v1379
      %v1599 = vsel %vm498, %v1085, %v1381
      %v1600 = vsel %vm498, %v1086, %v1383
      %v1601 = vsel %vm498, %v1087, %v1385
      %v1602 = vsel %vm498, %v1088, %v1387
      %v1603 = vsel %vm498, %v1089, %v1389
      %v1604 = vsel %vm498, %v1090, %v1391
      %v1605 = vsel %vm498, %v1091, %v1393
      %v1606 = vsel %vm498, %v1092, %v1395
      %v1607 = vsel %vm498, %v1093, %v1397
      %v1608 = vsel %vm498, %v1094, %v1399
      %v1609 = vsel %vm568, %v1593, %v1433
      %v1610 = vsel %vm568, %v1594, %v1435
      %v1611 = vsel %vm568, %v1595, %v1437
      %v1612 = vsel %vm568, %v1596, %v1439
      %v1613 = vsel %vm568, %v1597, %v1441
      %v1614 = vsel %vm568, %v1598, %v1443
      %v1615 = vsel %vm568, %v1599, %v1445
      %v1616 = vsel %vm568, %v1600, %v1447
      %v1617 = vsel %vm568, %v1601, %v1449
      %v1618 = vsel %vm568, %v1602, %v1451
      %v1619 = vsel %vm568, %v1603, %v1453
      %v1620 = vsel %vm568, %v1604, %v1455
      %v1621 = vsel %vm568, %v1605, %v1457
      %v1622 = vsel %vm568, %v1606, %v1459
      %v1623 = vsel %vm568, %v1607, %v1461
      %v1624 = vsel %vm568, %v1608, %v1463
      %v1625 = vsel %vm1576, %v1609, %v1497
      %v1626 = vsel %vm1576, %v1610, %v1499
      %v1627 = vsel %vm1576, %v1611, %v1501
      %v1628 = vsel %vm1576, %v1612, %v1503
      %v1629 = vsel %vm1576, %v1613, %v1505
      %v1630 = vsel %vm1576, %v1614, %v1507
      %v1631 = vsel %vm1576, %v1615, %v1509
      %v1632 = vsel %vm1576, %v1616, %v1511
      %v1633 = vsel %vm1576, %v1617, %v1513
      %v1634 = vsel %vm1576, %v1618, %v1515
      %v1635 = vsel %vm1576, %v1619, %v1517
      %v1636 = vsel %vm1576, %v1620, %v1519
      %v1637 = vsel %vm1576, %v1621, %v1521
      %v1638 = vsel %vm1576, %v1622, %v1523
      %v1639 = vsel %vm1576, %v1623, %v1525
      %v1640 = vsel %vm1576, %v1624, %v1527
      %v1641 = vpack.c.bf16 %v1578, %v1577
      %v1642 = vpack.c.bf16 %v1626, %v1625
      %v1643 = vpack.c.bf16 %v1145, %v1144
      %v1644 = vpack.c.bf16 %v1580, %v1579
      %v1645 = vpack.c.bf16 %v1628, %v1627
      %v1646 = vpack.c.bf16 %v1147, %v1146
      %v1647 = vpack.c.bf16 %v1582, %v1581
      %v1648 = vpack.c.bf16 %v1630, %v1629
      %v1649 = vpack.c.bf16 %v1149, %v1148
      %v1650 = vpack.c.bf16 %v1584, %v1583
      %v1651 = vpack.c.bf16 %v1632, %v1631
      %v1652 = vpack.c.bf16 %v1151, %v1150
      %v1653 = vpack.c.bf16 %v1586, %v1585
      %v1654 = vpack.c.bf16 %v1634, %v1633
      %v1655 = vpack.c.bf16 %v1153, %v1152
      %v1656 = vpack.c.bf16 %v1588, %v1587
      %v1657 = vpack.c.bf16 %v1636, %v1635
      %v1658 = vpack.c.bf16 %v1155, %v1154
      %v1659 = vpack.c.bf16 %v1590, %v1589
      %v1660 = vpack.c.bf16 %v1638, %v1637
      %v1661 = vpack.c.bf16 %v1157, %v1156
      %v1662 = vpack.c.bf16 %v1592, %v1591
      %v1663 = vpack.c.bf16 %v1640, %v1639
      %v1664 = vpack.c.bf16 %v1159, %v1158
      %v1665 = vld [vmem:[%s4] sm:$0xf]
      %v1666 = vld [vmem:[%s4 + $0x4] sm:$0xf]
      %v1667 = vld [vmem:[%s4 + $0x8] sm:$0xf]
      %v1668 = vld [vmem:[%s4 + $0xc] sm:$0xf]
      %v1669 = vld [vmem:[%s4 + $0x10] sm:$0xf]
      %v1670 = vld [vmem:[%s4 + $0x14] sm:$0xf]
      %v1671 = vld [vmem:[%s4 + $0x18] sm:$0xf]
      %v1672 = vld [vmem:[%s4 + $0x1c] sm:$0xf]
      %v1673 = vld [vmem:[%s4 + $0x20] sm:$0xf]
      %v1674 = vld [vmem:[%s4 + $0x24] sm:$0xf]
      %v1675 = vld [vmem:[%s4 + $0x28] sm:$0xf]
      %v1676 = vld [vmem:[%s4 + $0x2c] sm:$0xf]
      %v1677 = vld [vmem:[%s4 + $0x30] sm:$0xf]
      %v1678 = vld [vmem:[%s4 + $0x34] sm:$0xf]
      %v1679 = vld [vmem:[%s4 + $0x38] sm:$0xf]
      %v1680 = vld [vmem:[%s4 + $0x3c] sm:$0xf]
      %v1681 = vld [vmem:[%s4 + $0x40] sm:$0xf]
      %v1682 = vld [vmem:[%s4 + $0x44] sm:$0xf]
      %v1683 = vld [vmem:[%s4 + $0x48] sm:$0xf]
      %v1684 = vld [vmem:[%s4 + $0x4c] sm:$0xf]
      %v1685 = vld [vmem:[%s4 + $0x50] sm:$0xf]
      %v1686 = vld [vmem:[%s4 + $0x54] sm:$0xf]
      %v1687 = vld [vmem:[%s4 + $0x58] sm:$0xf]
      %v1688 = vld [vmem:[%s4 + $0x5c] sm:$0xf]
      %v1689 = vld [vmem:[%s4 + $0x60] sm:$0xf]
      %v1690 = vld [vmem:[%s4 + $0x64] sm:$0xf]
      %v1691 = vld [vmem:[%s4 + $0x68] sm:$0xf]
      %v1692 = vld [vmem:[%s4 + $0x6c] sm:$0xf]
      %v1693 = vld [vmem:[%s4 + $0x70] sm:$0xf]
      %v1694 = vld [vmem:[%s4 + $0x74] sm:$0xf]
      %v1695 = vld [vmem:[%s4 + $0x78] sm:$0xf]
      %v1696 = vld [vmem:[%s4 + $0x7c] sm:$0xf]
      %v1697 = vld [vmem:[%s4 + $0x80] sm:$0xf]
      %v1698 = vld [vmem:[%s4 + $0x84] sm:$0xf]
      %v1699 = vld [vmem:[%s4 + $0x88] sm:$0xf]
      %v1700 = vld [vmem:[%s4 + $0x8c] sm:$0xf]
      %v1701 = vld [vmem:[%s5] sm:$0x1]
      %v1703 = vlaneseq
      %v1704 = vshrl.u32 %v1703, 7
      %v1705 = vsub.s32 0, %v1704
      %v1706 = vrot.slane %v1701, %v1705
      %v1744 = vunpack.c.l.b16 %v1665
      %v1745 = vunpack.c.l.b16 %v1666
      %v1746 = vunpack.c.l.b16 %v1667
      %v1747 = vunpack.c.l.b16 %v1668
      %v1748 = vunpack.c.l.b16 %v1669
      %v1749 = vunpack.c.l.b16 %v1670
      %v1750 = vunpack.c.l.b16 %v1671
      %v1751 = vunpack.c.l.b16 %v1672
      %v1752 = vunpack.c.l.b16 %v1673
      %v1753 = vunpack.c.l.b16 %v1674
      %v1754 = vunpack.c.l.b16 %v1675
      %v1755 = vunpack.c.l.b16 %v1676
      %v1756 = vunpack.c.l.b16 %v1677
      %v1757 = vunpack.c.l.b16 %v1678
      %v1758 = vunpack.c.l.b16 %v1679
      %v1759 = vunpack.c.l.b16 %v1680
      %v1760 = vunpack.c.l.b16 %v1681
      %v1761 = vunpack.c.l.b16 %v1682
      %v1762 = vunpack.c.l.b16 %v1683
      %v1763 = vunpack.c.l.b16 %v1684
      %v1764 = vunpack.c.l.b16 %v1685
      %v1765 = vunpack.c.l.b16 %v1686
      %v1766 = vunpack.c.l.b16 %v1687
      %v1767 = vunpack.c.l.b16 %v1688
      %v1768 = vunpack.c.l.b16 %v1689
      %v1769 = vunpack.c.l.b16 %v1690
      %v1770 = vunpack.c.l.b16 %v1691
      %v1771 = vunpack.c.l.b16 %v1692
      %v1772 = vunpack.c.l.b16 %v1693
      %v1773 = vunpack.c.l.b16 %v1694
      %v1774 = vunpack.c.l.b16 %v1695
      %v1775 = vunpack.c.l.b16 %v1696
      %v1776 = vunpack.c.l.b16 %v1697
      %v1777 = vunpack.c.l.b16 %v1698
      %v1778 = vunpack.c.l.b16 %v1699
      %v1779 = vunpack.c.l.b16 %v1700
      %v1780 = vpack.c.b16 %v1745, %v1744
      %v1781 = vpack.c.b16 %v1747, %v1746
      %v1782 = vpack.c.b16 %v1749, %v1748
      %v1783 = vpack.c.b16 %v1751, %v1750
      %v1784 = vpack.c.b16 %v1753, %v1752
      %v1785 = vpack.c.b16 %v1755, %v1754
      %v1786 = vpack.c.b16 %v1757, %v1756
      %v1787 = vpack.c.b16 %v1759, %v1758
      %v1788 = vpack.c.b16 %v1761, %v1760
      %v1789 = vpack.c.b16 %v1763, %v1762
      %v1790 = vpack.c.b16 %v1765, %v1764
      %v1791 = vpack.c.b16 %v1767, %v1766
      %v1792 = vpack.c.b16 %v1769, %v1768
      %v1793 = vpack.c.b16 %v1771, %v1770
      %v1794 = vpack.c.b16 %v1773, %v1772
      %v1795 = vpack.c.b16 %v1775, %v1774
      %v1796 = vpack.c.b16 %v1777, %v1776
      %v1797 = vpack.c.b16 %v1779, %v1778
      %v1817 = vsel %vm498, %v1643, 0
      %v1820 = vsel %vm498, %v1646, 0
      %v1823 = vsel %vm498, %v1649, 0
      %v1826 = vsel %vm498, %v1652, 0
      %v1829 = vsel %vm498, %v1655, 0
      %v1832 = vsel %vm498, %v1658, 0
      %v1835 = vsel %vm498, %v1661, 0
      %v1838 = vsel %vm498, %v1664, 0
      %1840 = vmatprep.subr.bf16.mxu0 0
      %1841 = vmatpush1.bf16.msra.mxu0 %v1780
      %1842 = vmatprep.subr.bf16.mxu0 0
      %1843 = vmatpush1.bf16.msra.mxu0 %v1781
      %1844 = vmatprep.subr.bf16.mxu0 0
      %1845 = vmatpush1.bf16.msra.mxu0 %v1782
      %1846 = vmatprep.subr.bf16.mxu0 0
      %1847 = vmatpush1.bf16.msra.mxu0 %v1783
      %1848 = vmatprep.subr.bf16.mxu0 0
      %1849 = vmatpush1.bf16.msra.mxu0 %v1784
      %1850 = vmatprep.subr.bf16.mxu0 0
      %1851 = vmatpush1.bf16.msra.mxu0 %v1785
      %1852 = vmatprep.subr.bf16.mxu0 0
      %1853 = vmatpush1.bf16.msra.mxu0 %v1786
      %1854 = vmatprep.subr.bf16.mxu0 0
      %1855 = vmatpush1.bf16.msra.mxu0 %v1787
      %1856 = vmatprep.subr.bf16.mxu0 0
      %1857 = vmatpush1.bf16.msra.mxu0 %v1788
      %1858 = vmatprep.subr.bf16.mxu0 0
      %1859 = vmatpush1.bf16.msra.mxu0 %v1789
      %1860 = vmatprep.subr.bf16.mxu0 0
      %1861 = vmatpush1.bf16.msra.mxu0 %v1790
      %1862 = vmatprep.subr.bf16.mxu0 0
      %1863 = vmatpush1.bf16.msra.mxu0 %v1791
      %1864 = vmatprep.subr.bf16.mxu0 0
      %1865 = vmatpush1.bf16.msra.mxu0 %v1792
      %1866 = vmatprep.subr.bf16.mxu0 0
      %1867 = vmatpush1.bf16.msra.mxu0 %v1793
      %1868 = vmatprep.subr.bf16.mxu0 0
      %1869 = vmatpush1.bf16.msra.mxu0 %v1794
      %1870 = vmatprep.subr.bf16.mxu0 0
      %1871 = vmatpush1.bf16.msra.mxu0 %v1795
      %1872 = vmatprep.mubr.bf16.mxu0 %v1642
      %1873 = vmatmul.mubr.bf16.gmra.mrb[0].mxu0 %v1641
      %v1874 = vpop.f32.mrb[0].mxu0
      %v1875 = vadd.f32 %v1706, %v1874
      %v1876 = vpop.f32.mrb[0].mxu0
      %v1877 = vpop.f32.mrb[0].mxu0
      %v1878 = vadd.f32 %v1706, %v1877
      %v1879 = vpop.f32.mrb[0].mxu0
      %1880 = vmatprep.mubr.bf16.mxu0 %v1645
      %1881 = vmatmul.mubr.bf16.gmra.mrb[0].mxu0 %v1644
      %v1882 = vpop.f32.mrb[0].mxu0
      %v1883 = vadd.f32 %v1706, %v1882
      %v1884 = vpop.f32.mrb[0].mxu0
      %v1885 = vpop.f32.mrb[0].mxu0
      %v1886 = vadd.f32 %v1706, %v1885
      %v1887 = vpop.f32.mrb[0].mxu0
      %1888 = vmatprep.mubr.bf16.mxu0 %v1648
      %1889 = vmatmul.mubr.bf16.gmra.mrb[0].mxu0 %v1647
      %v1890 = vpop.f32.mrb[0].mxu0
      %v1891 = vadd.f32 %v1706, %v1890
      %v1892 = vpop.f32.mrb[0].mxu0
      %v1893 = vpop.f32.mrb[0].mxu0
      %v1894 = vadd.f32 %v1706, %v1893
      %v1895 = vpop.f32.mrb[0].mxu0
      %1896 = vmatprep.mubr.bf16.mxu0 %v1651
      %1897 = vmatmul.mubr.bf16.gmra.mrb[0].mxu0 %v1650
      %v1898 = vpop.f32.mrb[0].mxu0
      %v1899 = vadd.f32 %v1706, %v1898
      %v1900 = vpop.f32.mrb[0].mxu0
      %v1901 = vpop.f32.mrb[0].mxu0
      %v1902 = vadd.f32 %v1706, %v1901
      %v1903 = vpop.f32.mrb[0].mxu0
      %1904 = vmatprep.mubr.bf16.mxu0 %v1654
      %1905 = vmatmul.mubr.bf16.gmra.mrb[0].mxu0 %v1653
      %v1906 = vpop.f32.mrb[0].mxu0
      %v1907 = vadd.f32 %v1706, %v1906
      %v1908 = vpop.f32.mrb[0].mxu0
      %v1909 = vpop.f32.mrb[0].mxu0
      %v1910 = vadd.f32 %v1706, %v1909
      %v1911 = vpop.f32.mrb[0].mxu0
      %1912 = vmatprep.mubr.bf16.mxu0 %v1657
      %1913 = vmatmul.mubr.bf16.gmra.mrb[0].mxu0 %v1656
      %v1914 = vpop.f32.mrb[0].mxu0
      %v1915 = vadd.f32 %v1706, %v1914
      %v1916 = vpop.f32.mrb[0].mxu0
      %v1917 = vpop.f32.mrb[0].mxu0
      %v1918 = vadd.f32 %v1706, %v1917
      %v1919 = vpop.f32.mrb[0].mxu0
      %1920 = vmatprep.mubr.bf16.mxu0 %v1660
      %1921 = vmatmul.mubr.bf16.gmra.mrb[0].mxu0 %v1659
      %v1922 = vpop.f32.mrb[0].mxu0
      %v1923 = vadd.f32 %v1706, %v1922
      %v1924 = vpop.f32.mrb[0].mxu0
      %v1925 = vpop.f32.mrb[0].mxu0
      %v1926 = vadd.f32 %v1706, %v1925
      %v1927 = vpop.f32.mrb[0].mxu0
      %1928 = vmatprep.mubr.bf16.mxu0 %v1663
      %1929 = vmatmul.mubr.bf16.gmra.mrb[0].mxu0 %v1662
      %v1930 = vpop.f32.mrb[0].mxu0
      %v1931 = vadd.f32 %v1706, %v1930
      %v1932 = vpop.f32.mrb[0].mxu0
      %v1933 = vpop.f32.mrb[0].mxu0
      %v1934 = vadd.f32 %v1706, %v1933
      %v1935 = vpop.f32.mrb[0].mxu0
      %1936 = vdwg.mxu0
      %1937 = vmatprep.subr.bf16.mxu0 0
      %1938 = vmatpush1.bf16.msra.mxu0 %v1796
      %1939 = vmatprep.subr.bf16.mxu0 0
      %1940 = vmatpush1.bf16.msra.mxu0 %v1797
      %1941 = vmatprep.subr.bf16.mxu0 0
      %1942 = vmatpush1.bf16.msra.mxu0 0
      %1943 = vmatprep.subr.bf16.mxu0 0
      %1944 = vmatpush1.bf16.msra.mxu0 0
      %1945 = vmatprep.subr.bf16.mxu0 0
      %1946 = vmatpush1.bf16.msra.mxu0 0
      %1947 = vmatprep.subr.bf16.mxu0 0
      %1948 = vmatpush1.bf16.msra.mxu0 0
      %1949 = vmatprep.subr.bf16.mxu0 0
      %1950 = vmatpush1.bf16.msra.mxu0 0
      %1951 = vmatprep.subr.bf16.mxu0 0
      %1952 = vmatpush1.bf16.msra.mxu0 0
      %1953 = vmatprep.subr.bf16.mxu0 0
      %1954 = vmatpush1.bf16.msra.mxu0 0
      %1955 = vmatprep.subr.bf16.mxu0 0
      %1956 = vmatpush1.bf16.msra.mxu0 0
      %1957 = vmatprep.subr.bf16.mxu0 0
      %1958 = vmatpush1.bf16.msra.mxu0 0
      %1959 = vmatprep.subr.bf16.mxu0 0
      %1960 = vmatpush1.bf16.msra.mxu0 0
      %1961 = vmatprep.subr.bf16.mxu0 0
      %1962 = vmatpush1.bf16.msra.mxu0 0
      %1963 = vmatprep.subr.bf16.mxu0 0
      %1964 = vmatpush1.bf16.msra.mxu0 0
      %1965 = vmatprep.subr.bf16.mxu0 0
      %1966 = vmatpush1.bf16.msra.mxu0 0
      %1967 = vmatprep.subr.bf16.mxu0 0
      %1968 = vmatpush1.bf16.msra.mxu0 0
      %1969 = vmatprep.mubr.bf16.mxu0 0
      %1970 = vmatmul.mubr.bf16.gmra.mrb[0].mxu0 %v1817
      %v1971 = vpop.f32.mrb[0].mxu0
      %v1972 = vadd.f32 %v1875, %v1971
      %v1973 = vpop.f32.mrb[0].mxu0
      %v1974 = vpop.f32.mrb[0].mxu0
      %v1975 = vadd.f32 %v1878, %v1974
      %v1976 = vpop.f32.mrb[0].mxu0
      %1977 = vmatprep.mubr.bf16.mxu0 0
      %1978 = vmatmul.mubr.bf16.gmra.mrb[0].mxu0 %v1820
      %v1979 = vpop.f32.mrb[0].mxu0
      %v1980 = vadd.f32 %v1883, %v1979
      %v1981 = vpop.f32.mrb[0].mxu0
      %v1982 = vpop.f32.mrb[0].mxu0
      %v1983 = vadd.f32 %v1886, %v1982
      %v1984 = vpop.f32.mrb[0].mxu0
      %1985 = vmatprep.mubr.bf16.mxu0 0
      %1986 = vmatmul.mubr.bf16.gmra.mrb[0].mxu0 %v1823
      %v1987 = vpop.f32.mrb[0].mxu0
      %v1988 = vadd.f32 %v1891, %v1987
      %v1989 = vpop.f32.mrb[0].mxu0
      %v1990 = vpop.f32.mrb[0].mxu0
      %v1991 = vadd.f32 %v1894, %v1990
      %v1992 = vpop.f32.mrb[0].mxu0
      %1993 = vmatprep.mubr.bf16.mxu0 0
      %1994 = vmatmul.mubr.bf16.gmra.mrb[0].mxu0 %v1826
      %v1995 = vpop.f32.mrb[0].mxu0
      %v1996 = vadd.f32 %v1899, %v1995
      %v1997 = vpop.f32.mrb[0].mxu0
      %v1998 = vpop.f32.mrb[0].mxu0
      %v1999 = vadd.f32 %v1902, %v1998
      %v2000 = vpop.f32.mrb[0].mxu0
      %2001 = vmatprep.mubr.bf16.mxu0 0
      %2002 = vmatmul.mubr.bf16.gmra.mrb[0].mxu0 %v1829
      %v2003 = vpop.f32.mrb[0].mxu0
      %v2004 = vadd.f32 %v1907, %v2003
      %v2005 = vpop.f32.mrb[0].mxu0
      %v2006 = vpop.f32.mrb[0].mxu0
      %v2007 = vadd.f32 %v1910, %v2006
      %v2008 = vpop.f32.mrb[0].mxu0
      %2009 = vmatprep.mubr.bf16.mxu0 0
      %2010 = vmatmul.mubr.bf16.gmra.mrb[0].mxu0 %v1832
      %v2011 = vpop.f32.mrb[0].mxu0
      %v2012 = vadd.f32 %v1915, %v2011
      %v2013 = vpop.f32.mrb[0].mxu0
      %v2014 = vpop.f32.mrb[0].mxu0
      %v2015 = vadd.f32 %v1918, %v2014
      %v2016 = vpop.f32.mrb[0].mxu0
      %2017 = vmatprep.mubr.bf16.mxu0 0
      %2018 = vmatmul.mubr.bf16.gmra.mrb[0].mxu0 %v1835
      %v2019 = vpop.f32.mrb[0].mxu0
      %v2020 = vadd.f32 %v1923, %v2019
      %v2021 = vpop.f32.mrb[0].mxu0
      %v2022 = vpop.f32.mrb[0].mxu0
      %v2023 = vadd.f32 %v1926, %v2022
      %v2024 = vpop.f32.mrb[0].mxu0
      %2025 = vmatprep.mubr.bf16.mxu0 0
      %2026 = vmatmul.mubr.bf16.gmra.mrb[0].mxu0 %v1838
      %v2027 = vpop.f32.mrb[0].mxu0
      %v2028 = vadd.f32 %v1931, %v2027
      %v2029 = vpop.f32.mrb[0].mxu0
      %v2030 = vpop.f32.mrb[0].mxu0
      %v2031 = vadd.f32 %v1934, %v2030
      %v2032 = vpop.f32.mrb[0].mxu0
      %2033 = vdwg.mxu0
      %v2034 = vmul.f32 %v1972, %v1972
      %v2035 = vmul.f32 %v1975, %v1975
      %v2036 = vmul.f32 %v1980, %v1980
      %v2037 = vmul.f32 %v1983, %v1983
      %v2038 = vmul.f32 %v1988, %v1988
      %v2039 = vmul.f32 %v1991, %v1991
      %v2040 = vmul.f32 %v1996, %v1996
      %v2041 = vmul.f32 %v1999, %v1999
      %v2042 = vmul.f32 %v2004, %v2004
      %v2043 = vmul.f32 %v2007, %v2007
      %v2044 = vmul.f32 %v2012, %v2012
      %v2045 = vmul.f32 %v2015, %v2015
      %v2046 = vmul.f32 %v2020, %v2020
      %v2047 = vmul.f32 %v2023, %v2023
      %v2048 = vmul.f32 %v2028, %v2028
      %v2049 = vmul.f32 %v2031, %v2031
      %v2050 = vmul.f32 %v1972, %v2034
      %v2051 = vmul.f32 %v1975, %v2035
      %v2052 = vmul.f32 %v1980, %v2036
      %v2053 = vmul.f32 %v1983, %v2037
      %v2054 = vmul.f32 %v1988, %v2038
      %v2055 = vmul.f32 %v1991, %v2039
      %v2056 = vmul.f32 %v1996, %v2040
      %v2057 = vmul.f32 %v1999, %v2041
      %v2058 = vmul.f32 %v2004, %v2042
      %v2059 = vmul.f32 %v2007, %v2043
      %v2060 = vmul.f32 %v2012, %v2044
      %v2061 = vmul.f32 %v2015, %v2045
      %v2062 = vmul.f32 %v2020, %v2046
      %v2063 = vmul.f32 %v2023, %v2047
      %v2064 = vmul.f32 %v2028, %v2048
      %v2065 = vmul.f32 %v2031, %v2049
      %v2066 = vmul.f32 %v2050, 0.044715
      %v2067 = vmul.f32 %v2051, 0.044715
      %v2068 = vmul.f32 %v2052, 0.044715
      %v2069 = vmul.f32 %v2053, 0.044715
      %v2070 = vmul.f32 %v2054, 0.044715
      %v2071 = vmul.f32 %v2055, 0.044715
      %v2072 = vmul.f32 %v2056, 0.044715
      %v2073 = vmul.f32 %v2057, 0.044715
      %v2074 = vmul.f32 %v2058, 0.044715
      %v2075 = vmul.f32 %v2059, 0.044715
      %v2076 = vmul.f32 %v2060, 0.044715
      %v2077 = vmul.f32 %v2061, 0.044715
      %v2078 = vmul.f32 %v2062, 0.044715
      %v2079 = vmul.f32 %v2063, 0.044715
      %v2080 = vmul.f32 %v2064, 0.044715
      %v2081 = vmul.f32 %v2065, 0.044715
      %v2082 = vadd.f32 %v1972, %v2066
      %v2083 = vadd.f32 %v1975, %v2067
      %v2084 = vadd.f32 %v1980, %v2068
      %v2085 = vadd.f32 %v1983, %v2069
      %v2086 = vadd.f32 %v1988, %v2070
      %v2087 = vadd.f32 %v1991, %v2071
      %v2088 = vadd.f32 %v1996, %v2072
      %v2089 = vadd.f32 %v1999, %v2073
      %v2090 = vadd.f32 %v2004, %v2074
      %v2091 = vadd.f32 %v2007, %v2075
      %v2092 = vadd.f32 %v2012, %v2076
      %v2093 = vadd.f32 %v2015, %v2077
      %v2094 = vadd.f32 %v2020, %v2078
      %v2095 = vadd.f32 %v2023, %v2079
      %v2096 = vadd.f32 %v2028, %v2080
      %v2097 = vadd.f32 %v2031, %v2081
      %v2098 = vmul.f32 %v2082, 0.7978846
      %v2099 = vmul.f32 %v2083, 0.7978846
      %v2100 = vmul.f32 %v2084, 0.7978846
      %v2101 = vmul.f32 %v2085, 0.7978846
      %v2102 = vmul.f32 %v2086, 0.7978846
      %v2103 = vmul.f32 %v2087, 0.7978846
      %v2104 = vmul.f32 %v2088, 0.7978846
      %v2105 = vmul.f32 %v2089, 0.7978846
      %v2106 = vmul.f32 %v2090, 0.7978846
      %v2107 = vmul.f32 %v2091, 0.7978846
      %v2108 = vmul.f32 %v2092, 0.7978846
      %v2109 = vmul.f32 %v2093, 0.7978846
      %v2110 = vmul.f32 %v2094, 0.7978846
      %v2111 = vmul.f32 %v2095, 0.7978846
      %v2112 = vmul.f32 %v2096, 0.7978846
      %v2113 = vmul.f32 %v2097, 0.7978846
      %v2114 = vtanh.pop %v2098
      %v2115 = vtanh.pop %v2099
      %v2116 = vtanh.pop %v2100
      %v2117 = vtanh.pop %v2101
      %v2118 = vtanh.pop %v2102
      %v2119 = vtanh.pop %v2103
      %v2120 = vtanh.pop %v2104
      %v2121 = vtanh.pop %v2105
      %v2122 = vtanh.pop %v2106
      %v2123 = vtanh.pop %v2107
      %v2124 = vtanh.pop %v2108
      %v2125 = vtanh.pop %v2109
      %v2126 = vtanh.pop %v2110
      %v2127 = vtanh.pop %v2111
      %v2128 = vtanh.pop %v2112
      %v2129 = vtanh.pop %v2113
      %v2130 = vadd.f32 %v2114, 1.0
      %v2131 = vadd.f32 %v2115, 1.0
      %v2132 = vadd.f32 %v2116, 1.0
      %v2133 = vadd.f32 %v2117, 1.0
      %v2134 = vadd.f32 %v2118, 1.0
      %v2135 = vadd.f32 %v2119, 1.0
      %v2136 = vadd.f32 %v2120, 1.0
      %v2137 = vadd.f32 %v2121, 1.0
      %v2138 = vadd.f32 %v2122, 1.0
      %v2139 = vadd.f32 %v2123, 1.0
      %v2140 = vadd.f32 %v2124, 1.0
      %v2141 = vadd.f32 %v2125, 1.0
      %v2142 = vadd.f32 %v2126, 1.0
      %v2143 = vadd.f32 %v2127, 1.0
      %v2144 = vadd.f32 %v2128, 1.0
      %v2145 = vadd.f32 %v2129, 1.0
      %v2146 = vmul.f32 %v2130, 0.5
      %v2147 = vmul.f32 %v2131, 0.5
      %v2148 = vmul.f32 %v2132, 0.5
      %v2149 = vmul.f32 %v2133, 0.5
      %v2150 = vmul.f32 %v2134, 0.5
      %v2151 = vmul.f32 %v2135, 0.5
      %v2152 = vmul.f32 %v2136, 0.5
      %v2153 = vmul.f32 %v2137, 0.5
      %v2154 = vmul.f32 %v2138, 0.5
      %v2155 = vmul.f32 %v2139, 0.5
      %v2156 = vmul.f32 %v2140, 0.5
      %v2157 = vmul.f32 %v2141, 0.5
      %v2158 = vmul.f32 %v2142, 0.5
      %v2159 = vmul.f32 %v2143, 0.5
      %v2160 = vmul.f32 %v2144, 0.5
      %v2161 = vmul.f32 %v2145, 0.5
      %v2162 = vmul.f32 %v1972, %v2146
      %v2163 = vmul.f32 %v1975, %v2147
      %v2164 = vmul.f32 %v1980, %v2148
      %v2165 = vmul.f32 %v1983, %v2149
      %v2166 = vmul.f32 %v1988, %v2150
      %v2167 = vmul.f32 %v1991, %v2151
      %v2168 = vmul.f32 %v1996, %v2152
      %v2169 = vmul.f32 %v1999, %v2153
      %v2170 = vmul.f32 %v2004, %v2154
      %v2171 = vmul.f32 %v2007, %v2155
      %v2172 = vmul.f32 %v2012, %v2156
      %v2173 = vmul.f32 %v2015, %v2157
      %v2174 = vmul.f32 %v2020, %v2158
      %v2175 = vmul.f32 %v2023, %v2159
      %v2176 = vmul.f32 %v2028, %v2160
      %v2177 = vmul.f32 %v2031, %v2161
      %v2178 = vpack.c.bf16 %v2163, %v2162
      %v2179 = vpack.c.bf16 %v2165, %v2164
      %v2180 = vpack.c.bf16 %v2167, %v2166
      %v2181 = vpack.c.bf16 %v2169, %v2168
      %v2182 = vpack.c.bf16 %v2171, %v2170
      %v2183 = vpack.c.bf16 %v2173, %v2172
      %v2184 = vpack.c.bf16 %v2175, %v2174
      %v2185 = vpack.c.bf16 %v2177, %v2176
      %v2186 = vld [vmem:[%s6] sm:$0xf]
      %v2187 = vld [vmem:[%s6 + $0x4] sm:$0xf]
      %v2188 = vld [vmem:[%s6 + $0x8] sm:$0xf]
      %v2189 = vld [vmem:[%s6 + $0xc] sm:$0xf]
      %v2190 = vld [vmem:[%s7] sm:$0x1]
      %v2192 = vlaneseq
      %v2193 = vshrl.u32 %v2192, 7
      %v2194 = vsub.s32 0, %v2193
      %v2195 = vrot.slane %v2190, %v2194
      %v2201 = vunpack.c.l.b16 %v2186
      %v2202 = vunpack.c.l.b16 %v2187
      %v2203 = vunpack.c.l.b16 %v2188
      %v2204 = vunpack.c.l.b16 %v2189
      %v2205 = vpack.c.b16 %v2202, %v2201
      %v2206 = vpack.c.b16 %v2204, %v2203
      %v2210 = vsel %vm498, %v2178, 0
      %v2213 = vsel %vm498, %v2179, 0
      %v2216 = vsel %vm498, %v2180, 0
      %v2219 = vsel %vm498, %v2181, 0
      %v2222 = vsel %vm498, %v2182, 0
      %v2225 = vsel %vm498, %v2183, 0
      %v2228 = vsel %vm498, %v2184, 0
      %v2231 = vsel %vm498, %v2185, 0
      %2233 = vmatprep.subr.bf16.mxu0 0
      %2234 = vmatpush1.bf16.msra.mxu0 %v2205
      %2235 = vmatprep.subr.bf16.mxu0 0
      %2236 = vmatpush1.bf16.msra.mxu0 %v2206
      %2237 = vmatprep.subr.bf16.mxu0 0
      %2238 = vmatpush1.bf16.msra.mxu0 0
      %2239 = vmatprep.subr.bf16.mxu0 0
      %2240 = vmatpush1.bf16.msra.mxu0 0
      %2241 = vmatprep.subr.bf16.mxu0 0
      %2242 = vmatpush1.bf16.msra.mxu0 0
      %2243 = vmatprep.subr.bf16.mxu0 0
      %2244 = vmatpush1.bf16.msra.mxu0 0
      %2245 = vmatprep.subr.bf16.mxu0 0
      %2246 = vmatpush1.bf16.msra.mxu0 0
      %2247 = vmatprep.subr.bf16.mxu0 0
      %2248 = vmatpush1.bf16.msra.mxu0 0
      %2249 = vmatprep.subr.bf16.mxu0 0
      %2250 = vmatpush1.bf16.msra.mxu0 0
      %2251 = vmatprep.subr.bf16.mxu0 0
      %2252 = vmatpush1.bf16.msra.mxu0 0
      %2253 = vmatprep.subr.bf16.mxu0 0
      %2254 = vmatpush1.bf16.msra.mxu0 0
      %2255 = vmatprep.subr.bf16.mxu0 0
      %2256 = vmatpush1.bf16.msra.mxu0 0
      %2257 = vmatprep.subr.bf16.mxu0 0
      %2258 = vmatpush1.bf16.msra.mxu0 0
      %2259 = vmatprep.subr.bf16.mxu0 0
      %2260 = vmatpush1.bf16.msra.mxu0 0
      %2261 = vmatprep.subr.bf16.mxu0 0
      %2262 = vmatpush1.bf16.msra.mxu0 0
      %2263 = vmatprep.subr.bf16.mxu0 0
      %2264 = vmatpush1.bf16.msra.mxu0 0
      %2265 = vmatprep.mubr.bf16.mxu0 0
      %2266 = vmatmul.mubr.bf16.gmra.mrb[0].mxu0 %v2210
      %v2267 = vpop.f32.mrb[0].mxu0
      %v2268 = vadd.f32 %v2195, %v2267
      %v2269 = vpop.f32.mrb[0].mxu0
      %v2270 = vpop.f32.mrb[0].mxu0
      %v2271 = vadd.f32 %v2195, %v2270
      %v2272 = vpop.f32.mrb[0].mxu0
      %2273 = vmatprep.mubr.bf16.mxu0 0
      %2274 = vmatmul.mubr.bf16.gmra.mrb[0].mxu0 %v2213
      %v2275 = vpop.f32.mrb[0].mxu0
      %v2276 = vadd.f32 %v2195, %v2275
      %v2277 = vpop.f32.mrb[0].mxu0
      %v2278 = vpop.f32.mrb[0].mxu0
      %v2279 = vadd.f32 %v2195, %v2278
      %v2280 = vpop.f32.mrb[0].mxu0
      %2281 = vmatprep.mubr.bf16.mxu0 0
      %2282 = vmatmul.mubr.bf16.gmra.mrb[0].mxu0 %v2216
      %v2283 = vpop.f32.mrb[0].mxu0
      %v2284 = vadd.f32 %v2195, %v2283
      %v2285 = vpop.f32.mrb[0].mxu0
      %v2286 = vpop.f32.mrb[0].mxu0
      %v2287 = vadd.f32 %v2195, %v2286
      %v2288 = vpop.f32.mrb[0].mxu0
      %2289 = vmatprep.mubr.bf16.mxu0 0
      %2290 = vmatmul.mubr.bf16.gmra.mrb[0].mxu0 %v2219
      %v2291 = vpop.f32.mrb[0].mxu0
      %v2292 = vadd.f32 %v2195, %v2291
      %v2293 = vpop.f32.mrb[0].mxu0
      %v2294 = vpop.f32.mrb[0].mxu0
      %v2295 = vadd.f32 %v2195, %v2294
      %v2296 = vpop.f32.mrb[0].mxu0
      %2297 = vmatprep.mubr.bf16.mxu0 0
      %2298 = vmatmul.mubr.bf16.gmra.mrb[0].mxu0 %v2222
      %v2299 = vpop.f32.mrb[0].mxu0
      %v2300 = vadd.f32 %v2195, %v2299
      %v2301 = vpop.f32.mrb[0].mxu0
      %v2302 = vpop.f32.mrb[0].mxu0
      %v2303 = vadd.f32 %v2195, %v2302
      %v2304 = vpop.f32.mrb[0].mxu0
      %2305 = vmatprep.mubr.bf16.mxu0 0
      %2306 = vmatmul.mubr.bf16.gmra.mrb[0].mxu0 %v2225
      %v2307 = vpop.f32.mrb[0].mxu0
      %v2308 = vadd.f32 %v2195, %v2307
      %v2309 = vpop.f32.mrb[0].mxu0
      %v2310 = vpop.f32.mrb[0].mxu0
      %v2311 = vadd.f32 %v2195, %v2310
      %v2312 = vpop.f32.mrb[0].mxu0
      %2313 = vmatprep.mubr.bf16.mxu0 0
      %2314 = vmatmul.mubr.bf16.gmra.mrb[0].mxu0 %v2228
      %v2315 = vpop.f32.mrb[0].mxu0
      %v2316 = vadd.f32 %v2195, %v2315
      %v2317 = vpop.f32.mrb[0].mxu0
      %v2318 = vpop.f32.mrb[0].mxu0
      %v2319 = vadd.f32 %v2195, %v2318
      %v2320 = vpop.f32.mrb[0].mxu0
      %2321 = vmatprep.mubr.bf16.mxu0 0
      %2322 = vmatmul.mubr.bf16.gmra.mrb[0].mxu0 %v2231
      %v2323 = vpop.f32.mrb[0].mxu0
      %v2324 = vadd.f32 %v2195, %v2323
      %v2325 = vpop.f32.mrb[0].mxu0
      %v2326 = vpop.f32.mrb[0].mxu0
      %v2327 = vadd.f32 %v2195, %v2326
      %v2328 = vpop.f32.mrb[0].mxu0
      %2329 = vdwg.mxu0
      %v2330 = vmul.f32 %v2268, %v2268
      %v2331 = vmul.f32 %v2271, %v2271
      %v2332 = vmul.f32 %v2276, %v2276
      %v2333 = vmul.f32 %v2279, %v2279
      %v2334 = vmul.f32 %v2284, %v2284
      %v2335 = vmul.f32 %v2287, %v2287
      %v2336 = vmul.f32 %v2292, %v2292
      %v2337 = vmul.f32 %v2295, %v2295
      %v2338 = vmul.f32 %v2300, %v2300
      %v2339 = vmul.f32 %v2303, %v2303
      %v2340 = vmul.f32 %v2308, %v2308
      %v2341 = vmul.f32 %v2311, %v2311
      %v2342 = vmul.f32 %v2316, %v2316
      %v2343 = vmul.f32 %v2319, %v2319
      %v2344 = vmul.f32 %v2324, %v2324
      %v2345 = vmul.f32 %v2327, %v2327
      %v2346 = vmul.f32 %v2268, %v2330
      %v2347 = vmul.f32 %v2271, %v2331
      %v2348 = vmul.f32 %v2276, %v2332
      %v2349 = vmul.f32 %v2279, %v2333
      %v2350 = vmul.f32 %v2284, %v2334
      %v2351 = vmul.f32 %v2287, %v2335
      %v2352 = vmul.f32 %v2292, %v2336
      %v2353 = vmul.f32 %v2295, %v2337
      %v2354 = vmul.f32 %v2300, %v2338
      %v2355 = vmul.f32 %v2303, %v2339
      %v2356 = vmul.f32 %v2308, %v2340
      %v2357 = vmul.f32 %v2311, %v2341
      %v2358 = vmul.f32 %v2316, %v2342
      %v2359 = vmul.f32 %v2319, %v2343
      %v2360 = vmul.f32 %v2324, %v2344
      %v2361 = vmul.f32 %v2327, %v2345
      %v2362 = vmul.f32 %v2346, 0.044715
      %v2363 = vmul.f32 %v2347, 0.044715
      %v2364 = vmul.f32 %v2348, 0.044715
      %v2365 = vmul.f32 %v2349, 0.044715
      %v2366 = vmul.f32 %v2350, 0.044715
      %v2367 = vmul.f32 %v2351, 0.044715
      %v2368 = vmul.f32 %v2352, 0.044715
      %v2369 = vmul.f32 %v2353, 0.044715
      %v2370 = vmul.f32 %v2354, 0.044715
      %v2371 = vmul.f32 %v2355, 0.044715
      %v2372 = vmul.f32 %v2356, 0.044715
      %v2373 = vmul.f32 %v2357, 0.044715
      %v2374 = vmul.f32 %v2358, 0.044715
      %v2375 = vmul.f32 %v2359, 0.044715
      %v2376 = vmul.f32 %v2360, 0.044715
      %v2377 = vmul.f32 %v2361, 0.044715
      %v2378 = vadd.f32 %v2268, %v2362
      %v2379 = vadd.f32 %v2271, %v2363
      %v2380 = vadd.f32 %v2276, %v2364
      %v2381 = vadd.f32 %v2279, %v2365
      %v2382 = vadd.f32 %v2284, %v2366
      %v2383 = vadd.f32 %v2287, %v2367
      %v2384 = vadd.f32 %v2292, %v2368
      %v2385 = vadd.f32 %v2295, %v2369
      %v2386 = vadd.f32 %v2300, %v2370
      %v2387 = vadd.f32 %v2303, %v2371
      %v2388 = vadd.f32 %v2308, %v2372
      %v2389 = vadd.f32 %v2311, %v2373
      %v2390 = vadd.f32 %v2316, %v2374
      %v2391 = vadd.f32 %v2319, %v2375
      %v2392 = vadd.f32 %v2324, %v2376
      %v2393 = vadd.f32 %v2327, %v2377
      %v2394 = vmul.f32 %v2378, 0.7978846
      %v2395 = vmul.f32 %v2379, 0.7978846
      %v2396 = vmul.f32 %v2380, 0.7978846
      %v2397 = vmul.f32 %v2381, 0.7978846
      %v2398 = vmul.f32 %v2382, 0.7978846
      %v2399 = vmul.f32 %v2383, 0.7978846
      %v2400 = vmul.f32 %v2384, 0.7978846
      %v2401 = vmul.f32 %v2385, 0.7978846
      %v2402 = vmul.f32 %v2386, 0.7978846
      %v2403 = vmul.f32 %v2387, 0.7978846
      %v2404 = vmul.f32 %v2388, 0.7978846
      %v2405 = vmul.f32 %v2389, 0.7978846
      %v2406 = vmul.f32 %v2390, 0.7978846
      %v2407 = vmul.f32 %v2391, 0.7978846
      %v2408 = vmul.f32 %v2392, 0.7978846
      %v2409 = vmul.f32 %v2393, 0.7978846
      %v2410 = vtanh.pop %v2394
      %v2411 = vtanh.pop %v2395
      %v2412 = vtanh.pop %v2396
      %v2413 = vtanh.pop %v2397
      %v2414 = vtanh.pop %v2398
      %v2415 = vtanh.pop %v2399
      %v2416 = vtanh.pop %v2400
      %v2417 = vtanh.pop %v2401
      %v2418 = vtanh.pop %v2402
      %v2419 = vtanh.pop %v2403
      %v2420 = vtanh.pop %v2404
      %v2421 = vtanh.pop %v2405
      %v2422 = vtanh.pop %v2406
      %v2423 = vtanh.pop %v2407
      %v2424 = vtanh.pop %v2408
      %v2425 = vtanh.pop %v2409
      %v2426 = vadd.f32 %v2410, 1.0
      %v2427 = vadd.f32 %v2411, 1.0
      %v2428 = vadd.f32 %v2412, 1.0
      %v2429 = vadd.f32 %v2413, 1.0
      %v2430 = vadd.f32 %v2414, 1.0
      %v2431 = vadd.f32 %v2415, 1.0
      %v2432 = vadd.f32 %v2416, 1.0
      %v2433 = vadd.f32 %v2417, 1.0
      %v2434 = vadd.f32 %v2418, 1.0
      %v2435 = vadd.f32 %v2419, 1.0
      %v2436 = vadd.f32 %v2420, 1.0
      %v2437 = vadd.f32 %v2421, 1.0
      %v2438 = vadd.f32 %v2422, 1.0
      %v2439 = vadd.f32 %v2423, 1.0
      %v2440 = vadd.f32 %v2424, 1.0
      %v2441 = vadd.f32 %v2425, 1.0
      %v2442 = vmul.f32 %v2426, 0.5
      %v2443 = vmul.f32 %v2427, 0.5
      %v2444 = vmul.f32 %v2428, 0.5
      %v2445 = vmul.f32 %v2429, 0.5
      %v2446 = vmul.f32 %v2430, 0.5
      %v2447 = vmul.f32 %v2431, 0.5
      %v2448 = vmul.f32 %v2432, 0.5
      %v2449 = vmul.f32 %v2433, 0.5
      %v2450 = vmul.f32 %v2434, 0.5
      %v2451 = vmul.f32 %v2435, 0.5
      %v2452 = vmul.f32 %v2436, 0.5
      %v2453 = vmul.f32 %v2437, 0.5
      %v2454 = vmul.f32 %v2438, 0.5
      %v2455 = vmul.f32 %v2439, 0.5
      %v2456 = vmul.f32 %v2440, 0.5
      %v2457 = vmul.f32 %v2441, 0.5
      %v2458 = vmul.f32 %v2268, %v2442
      %v2459 = vmul.f32 %v2271, %v2443
      %v2460 = vmul.f32 %v2276, %v2444
      %v2461 = vmul.f32 %v2279, %v2445
      %v2462 = vmul.f32 %v2284, %v2446
      %v2463 = vmul.f32 %v2287, %v2447
      %v2464 = vmul.f32 %v2292, %v2448
      %v2465 = vmul.f32 %v2295, %v2449
      %v2466 = vmul.f32 %v2300, %v2450
      %v2467 = vmul.f32 %v2303, %v2451
      %v2468 = vmul.f32 %v2308, %v2452
      %v2469 = vmul.f32 %v2311, %v2453
      %v2470 = vmul.f32 %v2316, %v2454
      %v2471 = vmul.f32 %v2319, %v2455
      %v2472 = vmul.f32 %v2324, %v2456
      %v2473 = vmul.f32 %v2327, %v2457
      %v2474 = vpack.c.bf16 %v2459, %v2458
      %v2475 = vpack.c.bf16 %v2461, %v2460
      %v2476 = vpack.c.bf16 %v2463, %v2462
      %v2477 = vpack.c.bf16 %v2465, %v2464
      %v2478 = vpack.c.bf16 %v2467, %v2466
      %v2479 = vpack.c.bf16 %v2469, %v2468
      %v2480 = vpack.c.bf16 %v2471, %v2470
      %v2481 = vpack.c.bf16 %v2473, %v2472
      %v2490 = vunpack.c.l.b16 %v2474
      %v2491 = vunpack.c.h.b16 %v2474
      %v2492 = vunpack.c.l.b16 %v2475
      %v2493 = vunpack.c.h.b16 %v2475
      %v2494 = vunpack.c.l.b16 %v2476
      %v2495 = vunpack.c.h.b16 %v2476
      %v2496 = vunpack.c.l.b16 %v2477
      %v2497 = vunpack.c.h.b16 %v2477
      %v2498 = vunpack.c.l.b16 %v2478
      %v2499 = vunpack.c.h.b16 %v2478
      %v2500 = vunpack.c.l.b16 %v2479
      %v2501 = vunpack.c.h.b16 %v2479
      %v2502 = vunpack.c.l.b16 %v2480
      %v2503 = vunpack.c.h.b16 %v2480
      %v2504 = vunpack.c.l.b16 %v2481
      %v2505 = vunpack.c.h.b16 %v2481
      %v2506 = vpack.c.b16 %v2490, %v2490
      %v2507 = vpack.c.b16 %v2491, %v2491
      %v2508 = vpack.c.b16 %v2492, %v2492
      %v2509 = vpack.c.b16 %v2493, %v2493
      %v2510 = vpack.c.b16 %v2494, %v2494
      %v2511 = vpack.c.b16 %v2495, %v2495
      %v2512 = vpack.c.b16 %v2496, %v2496
      %v2513 = vpack.c.b16 %v2497, %v2497
      %v2514 = vpack.c.b16 %v2498, %v2498
      %v2515 = vpack.c.b16 %v2499, %v2499
      %v2516 = vpack.c.b16 %v2500, %v2500
      %v2517 = vpack.c.b16 %v2501, %v2501
      %v2518 = vpack.c.b16 %v2502, %v2502
      %v2519 = vpack.c.b16 %v2503, %v2503
      %v2520 = vpack.c.b16 %v2504, %v2504
      %v2521 = vpack.c.b16 %v2505, %v2505
      %vm2538 = vcmask 257024
      %2539 = vst.msk [vmem:[%s349] sm:$0xf] %vm2538, %v2506
      %2540 = vst.msk [vmem:[%s349 + $0x4] sm:$0xf] %vm2538, %v2507
      %2541 = vst.msk [vmem:[%s349 + $0x8] sm:$0xf] %vm2538, %v2508
      %2542 = vst.msk [vmem:[%s349 + $0xc] sm:$0xf] %vm2538, %v2509
      %2543 = vst.msk [vmem:[%s349 + $0x10] sm:$0xf] %vm2538, %v2510
      %2544 = vst.msk [vmem:[%s349 + $0x14] sm:$0xf] %vm2538, %v2511
      %2545 = vst.msk [vmem:[%s349 + $0x18] sm:$0xf] %vm2538, %v2512
      %2546 = vst.msk [vmem:[%s349 + $0x1c] sm:$0xf] %vm2538, %v2513
      %2547 = vst.msk [vmem:[%s349 + $0x20] sm:$0xf] %vm2538, %v2514
      %2548 = vst.msk [vmem:[%s349 + $0x24] sm:$0xf] %vm2538, %v2515
      %2549 = vst.msk [vmem:[%s349 + $0x28] sm:$0xf] %vm2538, %v2516
      %2550 = vst.msk [vmem:[%s349 + $0x2c] sm:$0xf] %vm2538, %v2517
      %2551 = vst.msk [vmem:[%s349 + $0x30] sm:$0xf] %vm2538, %v2518
      %2552 = vst.msk [vmem:[%s349 + $0x34] sm:$0xf] %vm2538, %v2519
      %2553 = vst.msk [vmem:[%s349 + $0x38] sm:$0xf] %vm2538, %v2520
      %2554 = vst.msk [vmem:[%s349 + $0x3c] sm:$0xf] %vm2538, %v2521
      %s2555 = smul.u32 8, %s24
      %p2556 = scmp.lt.s32.totalorder %s23, 1
      %s2557 = scalar_select %p2556, %s23, 1
      %p2558 = scmp.lt.s32.totalorder %s2555, 15
      %s2559 = scalar_select %p2558, %s2555, 15
      %s2560 = smul.addr %s2559, 2
      %s2561 = smul.addr %s2557, 32
      %s2562 = sadd.s32 %s2560, %s2561
      %s2563 = smul.addr %s2562, 4
      %s2564 = scalar_lea.vmem %s8, %s2563
      // Predicated region
      $region53: #{rec_conv_cell_forward.3} parent=51 // pred_check
        %p2565 = pneg %p229
      $region54: #{rec_conv_cell_forward.3} parent=51 // pred_check_branch
        %2567 = sbr.rel (%p2565) target = $region56
      $region55: #{rec_conv_cell_forward.3} parent=51 // pred_region
        %s2568 = smul.u32 8, %s24
      $region56: #{rec_conv_cell_forward.3} parent=51 // pred_fallthru
        _
    $region52: #{rec_conv_cell_forward.3} parent=5 // pred_fallthru
      _
    %p2569 = scmp.le.s32.totalorder 2, %s14
    // Predicated region
    $region57: #{rec_conv_cell_forward.3} parent=5 // pred_check
      %p2570 = pneg %p2569
    $region58: #{rec_conv_cell_forward.3} parent=5 // pred_check_branch
      %2572 = sbr.rel (%p2570) target = $region60
    $region59: #{rec_conv_cell_forward.3} parent=5 // pred_region
      %s2573 = ssub.s32 %s14, 2
      // Predicated region
      $region61: #{rec_conv_cell_forward.3} parent=59 // pred_check
        %p2574 = pneg %p235
      $region62: #{rec_conv_cell_forward.3} parent=59 // pred_check_branch
        %2576 = sbr.rel (%p2574) target = $region64
      $region63: #{rec_conv_cell_forward.3} parent=59 // pred_region
        %s2577 = smul.u32 8, %s26
        %p2578 = scmp.lt.s32.totalorder %s25, 1
        %s2579 = scalar_select %p2578, %s25, 1
        %p2580 = scmp.lt.s32.totalorder %s2577, 15
        %s2581 = scalar_select %p2580, %s2577, 15
        %s2582 = smul.addr %s2581, 2
        %s2583 = smul.addr %s2579, 32
        %s2584 = sadd.s32 %s2582, %s2583
        %s2585 = smul.addr %s2584, 4
        %s2586 = scalar_lea.vmem %s8, %s2585
      $region64: #{rec_conv_cell_forward.3} parent=59 // pred_fallthru
        _
    $region60: #{rec_conv_cell_forward.3} parent=5 // pred_fallthru
      _
  $region6: #{rec_conv_cell_forward.3} parent=0 // loop_footer
    %s18 = sadd.s32 1, %s14
  $region7: #{rec_conv_cell_forward.3} parent=0 // loop_footer_branch
    %13 = sbr.rel target = $region3
  $region8: #{rec_conv_cell_forward.3} parent=0 // loop_exit
    _

// kernel: rec_conv_cell_forward.4
$region0: #{rec_conv_cell_forward.4}
  #allocation0 [shape = 'u32[]', space=smem, size = 0x4, offset = 0x4, fixed_abs, tag = 'smem constant byte address 0x4 - core index']
  #allocation1 [shape = 'u32[144,128]{1,0:T(1,128)}', space=vmem, size = 0x12000, scoped, tag = 'internal scratch']
  %s0 = inlined_call_operand.vmem [shape: bf16[2,18,18,32], index: 0, kind: input, shape index: {}]
  %s1 = inlined_call_operand.vmem [shape: f32[2,18,16,32], index: 1, kind: input, shape index: {}]
  %s2 = inlined_call_operand.vmem [shape: bf16[2,18,16,32], index: 2, kind: input, shape index: {}]
  %s3 = inlined_call_operand.vmem [shape: f32[9,32], index: 3, kind: input, shape index: {}]
  %s4 = inlined_call_operand.vmem [shape: f32[1,32], index: 4, kind: input, shape index: {}]
  %s5 = inlined_call_operand.vmem [shape: f32[9,32], index: 5, kind: input, shape index: {}]
  %s6 = inlined_call_operand.vmem [shape: f32[1,32], index: 6, kind: input, shape index: {}]
  %s7 = inlined_call_operand.vmem [shape: bf16[64,32], index: 7, kind: input, shape index: {}]
  %s8 = inlined_call_operand.vmem [shape: f32[1,32], index: 8, kind: input, shape index: {}]
  %s9 = inlined_call_operand.vmem [shape: f32[2,16,16,32], index: 9, kind: output, shape index: {0}]
  %s10 = inlined_call_operand.vmem [shape: bf16[2,16,16,32], index: 10, kind: output, shape index: {1}]
  %11 = xla_tuple %s9, %s10
  %s12 = sld [smem:[#allocation0]]
  $region77: #{rec_conv_cell_forward.4} parent=0
    _
  %s14 = ssub.s32 1, %s12
  %s15 = scalar_select 0, %s14, %s12
  loop: start=0, step=1, limit=6
  $region2: #{rec_conv_cell_forward.4} parent=0 // loop_pre_header
    _
  $region3: #{rec_conv_cell_forward.4} parent=0 // loop_header
    %s17 = sphi 0, %s21
    %p18 = scmp.ge.s32.totalorder %s17, 6
    %s24 = sphi 0, %s36
    %s25 = sphi 0, %s32
    %s26 = sphi 0, %s24
    %s27 = sphi 0, %s25
    %s28 = sphi 0, %s26
    %s29 = sphi 0, %s27
    %s39 = sphi 0, %s41
    %s42 = sphi 0, %s39
    %s43 = sphi 0, %s42
    %s59 = sphi 0, %s43
    %s65 = sphi 0, %s67
    %s68 = sphi 0, %s65
    %s69 = sphi 0, %s68
    %s85 = sphi 0, %s69
    %s91 = sphi 0, %s93
    %s94 = sphi 0, %s91
    %s95 = sphi 0, %s94
    %s111 = sphi 0, %s95
    %s115 = sphi 0, %s115
    %s117 = sphi 0, %s115
    %s118 = sphi 0, %s117
    %s132 = sphi 0, %s118
    %s136 = sphi 0, %s136
    %s138 = sphi 0, %s136
    %s139 = sphi 0, %s138
    %s153 = sphi 0, %s139
    %s157 = sphi 0, %s157
    %s159 = sphi 0, %s157
    %s160 = sphi 0, %s159
    %s174 = sphi 0, %s160
    %s178 = sphi 0, %s178
    %s180 = sphi 0, %s178
    %s181 = sphi 0, %s180
    %s195 = sphi 0, %s181
    %s199 = sphi 0, %s199
    %s201 = sphi 0, %s199
    %s202 = sphi 0, %s201
    %s216 = sphi 0, %s202
    %s220 = sphi 0, %s220
    %s222 = sphi 0, %s220
    %s223 = sphi 0, %s222
    %s237 = sphi 0, %s223
    %s245 = sphi 0, %s247
    %s248 = sphi 0, %s245
    %s249 = sphi 0, %s248
    %s265 = sphi 0, %s249
    %s273 = sphi 0, %s275
    %s276 = sphi 0, %s273
    %s277 = sphi 0, %s276
    %s293 = sphi 0, %s277
  $region4: #{rec_conv_cell_forward.4} parent=0 // loop_header_branch
    %20 = sbr.rel (%p18) target = $region8
  $region5: #{rec_conv_cell_forward.4} parent=0 // loop_body
    %s22 = ssub.s32 %s17, 1
    %s23 = ssub.s32 %s17, 2
    %s30 = sadd.s32 1, %s25
    %p31 = scmp.ge.s32.totalorder %s30, 2
    %s32 = scalar_select %p31, 0, %s30
    %s33 = sadd.s32 1, %s24
    %s34 = scalar_select %p31, %s33, %s24
    %p35 = scmp.ge.s32.totalorder %s34, 2
    %s36 = scalar_select %p35, 0, %s34
    %s37 = ssub.s32 %s24, %s36
    %p38 = scmp.eq.s32.totalorder %s37, 0
    %s40 = sadd.s32 %s39, 1
    %s41 = scalar_select %p38, %s39, %s40
    %p44 = pneg %p38
    %p45 = scmp.eq.s32.totalorder %s17, 3
    %p46 = por %p44, %p45
    %p47 = scmp.ne.s32.totalorder %s39, %s42
    %p48 = scmp.eq.s32.totalorder %s17, 0
    %p49 = por %p47, %p48
    %p50 = scmp.ne.s32.totalorder %s39, %s42
    %p51 = scmp.eq.s32.totalorder %s22, 3
    %p52 = por %p50, %p51
    %p53 = scmp.ne.s32.totalorder %s42, %s43
    %p54 = scmp.eq.s32.totalorder %s22, 0
    %p55 = por %p53, %p54
    %p56 = scmp.ne.s32.totalorder %s42, %s43
    %p57 = scmp.eq.s32.totalorder %s23, 3
    %p58 = por %p56, %p57
    %p60 = scmp.ne.s32.totalorder %s43, %s59
    %p61 = scmp.eq.s32.totalorder %s23, 0
    %p62 = por %p60, %p61
    %s63 = ssub.s32 %s24, %s36
    %p64 = scmp.eq.s32.totalorder %s63, 0
    %s66 = sadd.s32 %s65, 1
    %s67 = scalar_select %p64, %s65, %s66
    %p70 = pneg %p64
    %p71 = scmp.eq.s32.totalorder %s17, 3
    %p72 = por %p70, %p71
    %p73 = scmp.ne.s32.totalorder %s65, %s68
    %p74 = scmp.eq.s32.totalorder %s17, 0
    %p75 = por %p73, %p74
    %p76 = scmp.ne.s32.totalorder %s65, %s68
    %p77 = scmp.eq.s32.totalorder %s22, 3
    %p78 = por %p76, %p77
    %p79 = scmp.ne.s32.totalorder %s68, %s69
    %p80 = scmp.eq.s32.totalorder %s22, 0
    %p81 = por %p79, %p80
    %p82 = scmp.ne.s32.totalorder %s68, %s69
    %p83 = scmp.eq.s32.totalorder %s23, 3
    %p84 = por %p82, %p83
    %p86 = scmp.ne.s32.totalorder %s69, %s85
    %p87 = scmp.eq.s32.totalorder %s23, 0
    %p88 = por %p86, %p87
    %s89 = ssub.s32 %s24, %s36
    %p90 = scmp.eq.s32.totalorder %s89, 0
    %s92 = sadd.s32 %s91, 1
    %s93 = scalar_select %p90, %s91, %s92
    %p96 = pneg %p90
    %p97 = scmp.eq.s32.totalorder %s17, 3
    %p98 = por %p96, %p97
    %p99 = scmp.ne.s32.totalorder %s91, %s94
    %p100 = scmp.eq.s32.totalorder %s17, 0
    %p101 = por %p99, %p100
    %p102 = scmp.ne.s32.totalorder %s91, %s94
    %p103 = scmp.eq.s32.totalorder %s22, 3
    %p104 = por %p102, %p103
    %p105 = scmp.ne.s32.totalorder %s94, %s95
    %p106 = scmp.eq.s32.totalorder %s22, 0
    %p107 = por %p105, %p106
    %p108 = scmp.ne.s32.totalorder %s94, %s95
    %p109 = scmp.eq.s32.totalorder %s23, 3
    %p110 = por %p108, %p109
    %p112 = scmp.ne.s32.totalorder %s95, %s111
    %p113 = scmp.eq.s32.totalorder %s23, 0
    %p114 = por %p112, %p113
    %s116 = sadd.s32 %s115, 1
    %p119 = scmp.eq.s32.totalorder %s17, 3
    %p120 = scmp.ne.s32.totalorder %s115, %s117
    %p121 = scmp.eq.s32.totalorder %s17, 0
    %p122 = por %p120, %p121
    %p123 = scmp.ne.s32.totalorder %s115, %s117
    %p124 = scmp.eq.s32.totalorder %s22, 3
    %p125 = por %p123, %p124
    %p126 = scmp.ne.s32.totalorder %s117, %s118
    %p127 = scmp.eq.s32.totalorder %s22, 0
    %p128 = por %p126, %p127
    %p129 = scmp.ne.s32.totalorder %s117, %s118
    %p130 = scmp.eq.s32.totalorder %s23, 3
    %p131 = por %p129, %p130
    %p133 = scmp.ne.s32.totalorder %s118, %s132
    %p134 = scmp.eq.s32.totalorder %s23, 0
    %p135 = por %p133, %p134
    %s137 = sadd.s32 %s136, 1
    %p140 = scmp.eq.s32.totalorder %s17, 3
    %p141 = scmp.ne.s32.totalorder %s136, %s138
    %p142 = scmp.eq.s32.totalorder %s17, 0
    %p143 = por %p141, %p142
    %p144 = scmp.ne.s32.totalorder %s136, %s138
    %p145 = scmp.eq.s32.totalorder %s22, 3
    %p146 = por %p144, %p145
    %p147 = scmp.ne.s32.totalorder %s138, %s139
    %p148 = scmp.eq.s32.totalorder %s22, 0
    %p149 = por %p147, %p148
    %p150 = scmp.ne.s32.totalorder %s138, %s139
    %p151 = scmp.eq.s32.totalorder %s23, 3
    %p152 = por %p150, %p151
    %p154 = scmp.ne.s32.totalorder %s139, %s153
    %p155 = scmp.eq.s32.totalorder %s23, 0
    %p156 = por %p154, %p155
    %s158 = sadd.s32 %s157, 1
    %p161 = scmp.eq.s32.totalorder %s17, 3
    %p162 = scmp.ne.s32.totalorder %s157, %s159
    %p163 = scmp.eq.s32.totalorder %s17, 0
    %p164 = por %p162, %p163
    %p165 = scmp.ne.s32.totalorder %s157, %s159
    %p166 = scmp.eq.s32.totalorder %s22, 3
    %p167 = por %p165, %p166
    %p168 = scmp.ne.s32.totalorder %s159, %s160
    %p169 = scmp.eq.s32.totalorder %s22, 0
    %p170 = por %p168, %p169
    %p171 = scmp.ne.s32.totalorder %s159, %s160
    %p172 = scmp.eq.s32.totalorder %s23, 3
    %p173 = por %p171, %p172
    %p175 = scmp.ne.s32.totalorder %s160, %s174
    %p176 = scmp.eq.s32.totalorder %s23, 0
    %p177 = por %p175, %p176
    %s179 = sadd.s32 %s178, 1
    %p182 = scmp.eq.s32.totalorder %s17, 3
    %p183 = scmp.ne.s32.totalorder %s178, %s180
    %p184 = scmp.eq.s32.totalorder %s17, 0
    %p185 = por %p183, %p184
    %p186 = scmp.ne.s32.totalorder %s178, %s180
    %p187 = scmp.eq.s32.totalorder %s22, 3
    %p188 = por %p186, %p187
    %p189 = scmp.ne.s32.totalorder %s180, %s181
    %p190 = scmp.eq.s32.totalorder %s22, 0
    %p191 = por %p189, %p190
    %p192 = scmp.ne.s32.totalorder %s180, %s181
    %p193 = scmp.eq.s32.totalorder %s23, 3
    %p194 = por %p192, %p193
    %p196 = scmp.ne.s32.totalorder %s181, %s195
    %p197 = scmp.eq.s32.totalorder %s23, 0
    %p198 = por %p196, %p197
    %s200 = sadd.s32 %s199, 1
    %p203 = scmp.eq.s32.totalorder %s17, 3
    %p204 = scmp.ne.s32.totalorder %s199, %s201
    %p205 = scmp.eq.s32.totalorder %s17, 0
    %p206 = por %p204, %p205
    %p207 = scmp.ne.s32.totalorder %s199, %s201
    %p208 = scmp.eq.s32.totalorder %s22, 3
    %p209 = por %p207, %p208
    %p210 = scmp.ne.s32.totalorder %s201, %s202
    %p211 = scmp.eq.s32.totalorder %s22, 0
    %p212 = por %p210, %p211
    %p213 = scmp.ne.s32.totalorder %s201, %s202
    %p214 = scmp.eq.s32.totalorder %s23, 3
    %p215 = por %p213, %p214
    %p217 = scmp.ne.s32.totalorder %s202, %s216
    %p218 = scmp.eq.s32.totalorder %s23, 0
    %p219 = por %p217, %p218
    %s221 = sadd.s32 %s220, 1
    %p224 = scmp.eq.s32.totalorder %s17, 3
    %p225 = scmp.ne.s32.totalorder %s220, %s222
    %p226 = scmp.eq.s32.totalorder %s17, 0
    %p227 = por %p225, %p226
    %p228 = scmp.ne.s32.totalorder %s220, %s222
    %p229 = scmp.eq.s32.totalorder %s22, 3
    %p230 = por %p228, %p229
    %p231 = scmp.ne.s32.totalorder %s222, %s223
    %p232 = scmp.eq.s32.totalorder %s22, 0
    %p233 = por %p231, %p232
    %p234 = scmp.ne.s32.totalorder %s222, %s223
    %p235 = scmp.eq.s32.totalorder %s23, 3
    %p236 = por %p234, %p235
    %p238 = scmp.ne.s32.totalorder %s223, %s237
    %p239 = scmp.eq.s32.totalorder %s23, 0
    %p240 = por %p238, %p239
    %s241 = ssub.s32 %s24, %s36
    %s242 = ssub.s32 %s25, %s32
    %s243 = sor.u32 %s241, %s242
    %p244 = scmp.eq.s32.totalorder %s243, 0
    %s246 = sadd.s32 %s245, 1
    %s247 = scalar_select %p244, %s245, %s246
    %p250 = pneg %p244
    %p251 = scmp.eq.s32.totalorder %s17, 3
    %p252 = por %p250, %p251
    %p253 = scmp.ne.s32.totalorder %s245, %s248
    %p254 = scmp.eq.s32.totalorder %s17, 0
    %p255 = por %p253, %p254
    %p256 = scmp.ne.s32.totalorder %s245, %s248
    %p257 = scmp.eq.s32.totalorder %s22, 3
    %p258 = por %p256, %p257
    %p259 = scmp.ne.s32.totalorder %s248, %s249
    %p260 = scmp.eq.s32.totalorder %s22, 0
    %p261 = por %p259, %p260
    %p262 = scmp.ne.s32.totalorder %s248, %s249
    %p263 = scmp.eq.s32.totalorder %s23, 3
    %p264 = por %p262, %p263
    %p266 = scmp.ne.s32.totalorder %s249, %s265
    %p267 = scmp.eq.s32.totalorder %s23, 0
    %p268 = por %p266, %p267
    %s269 = ssub.s32 %s24, %s36
    %s270 = ssub.s32 %s25, %s32
    %s271 = sor.u32 %s269, %s270
    %p272 = scmp.eq.s32.totalorder %s271, 0
    %s274 = sadd.s32 %s273, 1
    %s275 = scalar_select %p272, %s273, %s274
    %p278 = pneg %p272
    %p279 = scmp.eq.s32.totalorder %s17, 3
    %p280 = por %p278, %p279
    %p281 = scmp.ne.s32.totalorder %s273, %s276
    %p282 = scmp.eq.s32.totalorder %s17, 0
    %p283 = por %p281, %p282
    %p284 = scmp.ne.s32.totalorder %s273, %s276
    %p285 = scmp.eq.s32.totalorder %s22, 3
    %p286 = por %p284, %p285
    %p287 = scmp.ne.s32.totalorder %s276, %s277
    %p288 = scmp.eq.s32.totalorder %s22, 0
    %p289 = por %p287, %p288
    %p290 = scmp.ne.s32.totalorder %s276, %s277
    %p291 = scmp.eq.s32.totalorder %s23, 3
    %p292 = por %p290, %p291
    %p294 = scmp.ne.s32.totalorder %s277, %s293
    %p295 = scmp.eq.s32.totalorder %s23, 0
    %p296 = por %p294, %p295
    %p297 = scmp.le.s32.totalorder 1, %s17
    %p298 = scmp.lt.s32.totalorder %s17, 5
    %p299 = pnand %p297, %p298
    %p300 = pneg %p299
    // Predicated region
    $region9: #{rec_conv_cell_forward.4} parent=5 // pred_check
      _
    $region10: #{rec_conv_cell_forward.4} parent=5 // pred_check_branch
      %302 = sbr.rel (%p299) target = $region12
    $region11: #{rec_conv_cell_forward.4} parent=5 // pred_region
      %s303 = ssub.s32 %s17, 1
      // Predicated region
      $region13: #{rec_conv_cell_forward.4} parent=11 // pred_check
        %p304 = pneg %p128
      $region14: #{rec_conv_cell_forward.4} parent=11 // pred_check_branch
        %306 = sbr.rel (%p304) target = $region16
      $region15: #{rec_conv_cell_forward.4} parent=11 // pred_region
        _
      $region16: #{rec_conv_cell_forward.4} parent=11 // pred_fallthru
        _
      // Predicated region
      $region17: #{rec_conv_cell_forward.4} parent=11 // pred_check
        %p307 = pneg %p149
      $region18: #{rec_conv_cell_forward.4} parent=11 // pred_check_branch
        %309 = sbr.rel (%p307) target = $region20
      $region19: #{rec_conv_cell_forward.4} parent=11 // pred_region
        _
      $region20: #{rec_conv_cell_forward.4} parent=11 // pred_fallthru
        _
      // Predicated region
      $region21: #{rec_conv_cell_forward.4} parent=11 // pred_check
        %p310 = pneg %p170
      $region22: #{rec_conv_cell_forward.4} parent=11 // pred_check_branch
        %312 = sbr.rel (%p310) target = $region24
      $region23: #{rec_conv_cell_forward.4} parent=11 // pred_region
        _
      $region24: #{rec_conv_cell_forward.4} parent=11 // pred_fallthru
        _
      // Predicated region
      $region25: #{rec_conv_cell_forward.4} parent=11 // pred_check
        %p313 = pneg %p191
      $region26: #{rec_conv_cell_forward.4} parent=11 // pred_check_branch
        %315 = sbr.rel (%p313) target = $region28
      $region27: #{rec_conv_cell_forward.4} parent=11 // pred_region
        _
      $region28: #{rec_conv_cell_forward.4} parent=11 // pred_fallthru
        _
      // Predicated region
      $region29: #{rec_conv_cell_forward.4} parent=11 // pred_check
        %p316 = pneg %p212
      $region30: #{rec_conv_cell_forward.4} parent=11 // pred_check_branch
        %318 = sbr.rel (%p316) target = $region32
      $region31: #{rec_conv_cell_forward.4} parent=11 // pred_region
        _
      $region32: #{rec_conv_cell_forward.4} parent=11 // pred_fallthru
        _
      // Predicated region
      $region33: #{rec_conv_cell_forward.4} parent=11 // pred_check
        %p319 = pneg %p233
      $region34: #{rec_conv_cell_forward.4} parent=11 // pred_check_branch
        %321 = sbr.rel (%p319) target = $region36
      $region35: #{rec_conv_cell_forward.4} parent=11 // pred_region
        _
      $region36: #{rec_conv_cell_forward.4} parent=11 // pred_fallthru
        _
    $region12: #{rec_conv_cell_forward.4} parent=5 // pred_fallthru
      _
    %p322 = scmp.lt.s32.totalorder %s17, 4
    // Predicated region
    $region37: #{rec_conv_cell_forward.4} parent=5 // pred_check
      %p323 = pneg %p322
    $region38: #{rec_conv_cell_forward.4} parent=5 // pred_check_branch
      %325 = sbr.rel (%p323) target = $region40
    $region39: #{rec_conv_cell_forward.4} parent=5 // pred_region
      // Predicated region
      $region41: #{rec_conv_cell_forward.4} parent=39 // pred_check
        %p326 = pneg %p49
      $region42: #{rec_conv_cell_forward.4} parent=39 // pred_check_branch
        %328 = sbr.rel (%p326) target = $region44
      $region43: #{rec_conv_cell_forward.4} parent=39 // pred_region
        %p329 = scmp.lt.s32.totalorder %s24, 1
        %s330 = scalar_select %p329, %s24, 1
        %s331 = smul.addr %s330, 54
        %s332 = smul.addr %s331, 4
        %s333 = scalar_lea.vmem %s0, %s332
      $region44: #{rec_conv_cell_forward.4} parent=39 // pred_fallthru
        _
      // Predicated region
      $region45: #{rec_conv_cell_forward.4} parent=39 // pred_check
        %p334 = pneg %p75
      $region46: #{rec_conv_cell_forward.4} parent=39 // pred_check_branch
        %336 = sbr.rel (%p334) target = $region48
      $region47: #{rec_conv_cell_forward.4} parent=39 // pred_region
        %p337 = scmp.lt.s32.totalorder %s24, 1
        %s338 = scalar_select %p337, %s24, 1
        %s339 = smul.addr %s338, 36
        %s340 = smul.addr %s339, 8
        %s341 = scalar_lea.vmem %s1, %s340
      $region48: #{rec_conv_cell_forward.4} parent=39 // pred_fallthru
        _
      // Predicated region
      $region49: #{rec_conv_cell_forward.4} parent=39 // pred_check
        %p342 = pneg %p101
      $region50: #{rec_conv_cell_forward.4} parent=39 // pred_check_branch
        %344 = sbr.rel (%p342) target = $region52
      $region51: #{rec_conv_cell_forward.4} parent=39 // pred_region
        %p345 = scmp.lt.s32.totalorder %s24, 1
        %s346 = scalar_select %p345, %s24, 1
        %s347 = smul.addr %s346, 36
        %s348 = smul.addr %s347, 4
        %s349 = scalar_lea.vmem %s2, %s348
      $region52: #{rec_conv_cell_forward.4} parent=39 // pred_fallthru
        _
    $region40: #{rec_conv_cell_forward.4} parent=5 // pred_fallthru
      _
    %p350 = scmp.le.s32.totalorder 1, %s17
    %p351 = scmp.lt.s32.totalorder %s17, 5
    %p352 = pnand %p350, %p351
    %p353 = pneg %p352
    // Predicated region
    $region53: #{rec_conv_cell_forward.4} parent=5 // pred_check
      _
    $region54: #{rec_conv_cell_forward.4} parent=5 // pred_check_branch
      %355 = sbr.rel (%p352) target = $region56
    $region55: #{rec_conv_cell_forward.4} parent=5 // pred_region
      %s356 = ssub.s32 %s17, 1
      %p357 = scmp.lt.s32.totalorder %s26, 1
      %s358 = scalar_select %p357, %s26, 1
      %s359 = smul.addr %s358, 54
      %s360 = smul.addr %s359, 4
      %s361 = scalar_lea.vmem %s0, %s360
      %p362 = pneg %p55
      %p363 = pneg %p52
      %p364 = scmp.lt.s32.totalorder %s26, 1
      %s365 = scalar_select %p364, %s26, 1
      %s366 = smul.addr %s365, 36
      %s367 = smul.addr %s366, 8
      %s368 = scalar_lea.vmem %s1, %s367
      %p369 = pneg %p81
      %p370 = pneg %p78
      %p371 = scmp.lt.s32.totalorder %s26, 1
      %s372 = scalar_select %p371, %s26, 1
      %s373 = smul.addr %s372, 36
      %s374 = smul.addr %s373, 4
      %s375 = scalar_lea.vmem %s2, %s374
      %p376 = pneg %p107
      %p377 = pneg %p104
      %p378 = pneg %p128
      %p379 = pneg %p125
      %p380 = pneg %p149
      %p381 = pneg %p146
      %p382 = pneg %p170
      %p383 = pneg %p167
      %p384 = pneg %p191
      %p385 = pneg %p188
      %p386 = pneg %p212
      %p387 = pneg %p209
      %p388 = pneg %p233
      %p389 = pneg %p230
      %p390 = pneg %p261
      %p391 = pneg %p258
      %s392 = smul.u32 8, %s27
      %p393 = scmp.lt.s32.totalorder %s26, 1
      %s394 = scalar_select %p393, %s26, 1
      %p395 = scmp.lt.s32.totalorder %s392, 15
      %s396 = scalar_select %p395, %s392, 15
      %s397 = smul.addr %s396, 2
      %s398 = smul.addr %s394, 32
      %s399 = sadd.s32 %s397, %s398
      %s400 = smul.addr %s399, 8
      %s401 = scalar_lea.vmem %s9, %s400
      %p402 = pneg %p289
      %p403 = pneg %p286
      %s404 = smul.u32 8, %s27
      %p405 = scmp.lt.s32.totalorder %s26, 1
      %s406 = scalar_select %p405, %s26, 1
      %p407 = scmp.lt.s32.totalorder %s404, 15
      %s408 = scalar_select %p407, %s404, 15
      %s409 = smul.addr %s408, 2
      %s410 = smul.addr %s406, 32
      %s411 = sadd.s32 %s409, %s410
      %s412 = smul.addr %s411, 4
      %s413 = scalar_lea.vmem %s10, %s412
      %p414 = scmp.lt.s32.totalorder %s26, 1
      %s415 = scalar_select %p414, %s26, 1
      %s416 = smul.addr %s415, 54
      %s417 = smul.addr %s416, 4
      %s418 = scalar_lea.vmem %s0, %s417
      %p419 = scmp.lt.s32.totalorder %s26, 1
      %s420 = scalar_select %p419, %s26, 1
      %s421 = smul.addr %s420, 36
      %s422 = smul.addr %s421, 8
      %s423 = scalar_lea.vmem %s1, %s422
      %p424 = scmp.lt.s32.totalorder %s26, 1
      %s425 = scalar_select %p424, %s26, 1
      %s426 = smul.addr %s425, 36
      %s427 = smul.addr %s426, 4
      %s428 = scalar_lea.vmem %s2, %s427
      %s429 = smul.u32 8, %s27
      %p430 = scmp.lt.s32.totalorder %s26, 1
      %s431 = scalar_select %p430, %s26, 1
      %p432 = scmp.lt.s32.totalorder %s429, 15
      %s433 = scalar_select %p432, %s429, 15
      %s434 = smul.addr %s433, 2
      %s435 = smul.addr %s431, 32
      %s436 = sadd.s32 %s434, %s435
      %s437 = smul.addr %s436, 8
      %s438 = scalar_lea.vmem %s9, %s437
      %s439 = smul.u32 8, %s27
      %s440 = smul.u32 8, %s27
      %p441 = scmp.lt.s32.totalorder %s26, 1
      %s442 = scalar_select %p441, %s26, 1
      %p443 = scmp.lt.s32.totalorder %s440, 15
      %s444 = scalar_select %p443, %s440, 15
      %s445 = smul.addr %s444, 2
      %s446 = smul.addr %s442, 32
      %s447 = sadd.s32 %s445, %s446
      %s448 = smul.addr %s447, 4
      %s449 = scalar_lea.vmem %s10, %s448
      %s450 = smul.u32 8, %s27
      %s452 = smul.u32 %s27, 8
      %s453 = smul.u32 %s452, 3
      %s454 = smul.addr %s453, 4
      %s455 = scalar_lea.vmem %s418, %s454
      %v456 = vld [vmem:[%s455] sm:$0xf]
      %v457 = vld [vmem:[%s455 + $0x4] sm:$0xf]
      %v458 = vld [vmem:[%s455 + $0x8] sm:$0x1]
      %v459 = vld [vmem:[%s455 + $0xc] sm:$0xf]
      %v460 = vld [vmem:[%s455 + $0x10] sm:$0xf]
      %v461 = vld [vmem:[%s455 + $0x14] sm:$0x1]
      %v462 = vld [vmem:[%s455 + $0x18] sm:$0xf]
      %v463 = vld [vmem:[%s455 + $0x1c] sm:$0xf]
      %v464 = vld [vmem:[%s455 + $0x20] sm:$0x1]
      %v465 = vld [vmem:[%s455 + $0x24] sm:$0xf]
      %v466 = vld [vmem:[%s455 + $0x28] sm:$0xf]
      %v467 = vld [vmem:[%s455 + $0x2c] sm:$0x1]
      %v468 = vld [vmem:[%s455 + $0x30] sm:$0xf]
      %v469 = vld [vmem:[%s455 + $0x34] sm:$0xf]
      %v470 = vld [vmem:[%s455 + $0x38] sm:$0x1]
      %v471 = vld [vmem:[%s455 + $0x3c] sm:$0xf]
      %v472 = vld [vmem:[%s455 + $0x40] sm:$0xf]
      %v473 = vld [vmem:[%s455 + $0x44] sm:$0x1]
      %v474 = vld [vmem:[%s455 + $0x48] sm:$0xf]
      %v475 = vld [vmem:[%s455 + $0x4c] sm:$0xf]
      %v476 = vld [vmem:[%s455 + $0x50] sm:$0x1]
      %v477 = vld [vmem:[%s455 + $0x54] sm:$0xf]
      %v478 = vld [vmem:[%s455 + $0x58] sm:$0xf]
      %v479 = vld [vmem:[%s455 + $0x5c] sm:$0x1]
      %v480 = vld [vmem:[%s455 + $0x60] sm:$0xf]
      %v481 = vld [vmem:[%s455 + $0x64] sm:$0xf]
      %v482 = vld [vmem:[%s455 + $0x68] sm:$0x1]
      %v483 = vld [vmem:[%s455 + $0x6c] sm:$0xf]
      %v484 = vld [vmem:[%s455 + $0x70] sm:$0xf]
      %v485 = vld [vmem:[%s455 + $0x74] sm:$0x1]
      %v486 = vunpack.c.l.bf16 %v456
      %v487 = vunpack.c.l.bf16 %v457
      %v488 = vunpack.c.l.bf16 %v458
      %v489 = vunpack.c.l.bf16 %v459
      %v490 = vunpack.c.l.bf16 %v460
      %v491 = vunpack.c.l.bf16 %v461
      %v492 = vunpack.c.l.bf16 %v462
      %v493 = vunpack.c.l.bf16 %v463
      %v494 = vunpack.c.l.bf16 %v464
      %v495 = vunpack.c.l.bf16 %v465
      %v496 = vunpack.c.l.bf16 %v466
      %v497 = vunpack.c.l.bf16 %v467
      %v498 = vunpack.c.l.bf16 %v468
      %v499 = vunpack.c.l.bf16 %v469
      %v500 = vunpack.c.l.bf16 %v470
      %v501 = vunpack.c.l.bf16 %v471
      %v502 = vunpack.c.l.bf16 %v472
      %v503 = vunpack.c.l.bf16 %v473
      %v504 = vunpack.c.l.bf16 %v474
      %v505 = vunpack.c.l.bf16 %v475
      %v506 = vunpack.c.l.bf16 %v476
      %v507 = vunpack.c.l.bf16 %v477
      %v508 = vunpack.c.l.bf16 %v478
      %v509 = vunpack.c.l.bf16 %v479
      %v510 = vunpack.c.l.bf16 %v480
      %v511 = vunpack.c.l.bf16 %v481
      %v512 = vunpack.c.l.bf16 %v482
      %v513 = vunpack.c.l.bf16 %v483
      %v514 = vunpack.c.l.bf16 %v484
      %v515 = vunpack.c.l.bf16 %v485
      %v516 = vld [vmem:[%s3] sm:$0xff]
      %v517 = vld [vmem:[%s3 + $0x8] sm:$0x1]
      %v518 = vld [vmem:[%s4] sm:$0x1]
      %v519 = vlaneseq
      %v520 = vshrl.u32 %v519, 7
      %v521 = vsub.s32 0, %v520
      %v522 = vrot.slane %v516, %v521
      %v523 = vmul.f32 %v486, %v522
      %v524 = vmul.f32 %v487, %v522
      %v525 = vmul.f32 %v489, %v522
      %v526 = vmul.f32 %v490, %v522
      %v527 = vmul.f32 %v492, %v522
      %v528 = vmul.f32 %v493, %v522
      %v529 = vmul.f32 %v495, %v522
      %v530 = vmul.f32 %v496, %v522
      %v531 = vmul.f32 %v498, %v522
      %v532 = vmul.f32 %v499, %v522
      %v533 = vmul.f32 %v501, %v522
      %v534 = vmul.f32 %v502, %v522
      %v535 = vmul.f32 %v504, %v522
      %v536 = vmul.f32 %v505, %v522
      %v537 = vmul.f32 %v507, %v522
      %v538 = vmul.f32 %v508, %v522
      %v539 = vlaneseq
      %v540 = vshrl.u32 %v539, 7
      %v541 = vsub.s32 1, %v540
      %v542 = vrot.slane %v516, %v541
      %v543 = vmul.f32 %v486, %v542
      %v544 = vmul.f32 %v487, %v542
      %v545 = vmul.f32 %v488, %v542
      %v546 = vmul.f32 %v489, %v542
      %v547 = vmul.f32 %v490, %v542
      %v548 = vmul.f32 %v491, %v542
      %v549 = vmul.f32 %v492, %v542
      %v550 = vmul.f32 %v493, %v542
      %v551 = vmul.f32 %v494, %v542
      %v552 = vmul.f32 %v495, %v542
      %v553 = vmul.f32 %v496, %v542
      %v554 = vmul.f32 %v497, %v542
      %v555 = vmul.f32 %v498, %v542
      %v556 = vmul.f32 %v499, %v542
      %v557 = vmul.f32 %v500, %v542
      %v558 = vmul.f32 %v501, %v542
      %v559 = vmul.f32 %v502, %v542
      %v560 = vmul.f32 %v503, %v542
      %v561 = vmul.f32 %v504, %v542
      %v562 = vmul.f32 %v505, %v542
      %v563 = vmul.f32 %v506, %v542
      %v564 = vmul.f32 %v507, %v542
      %v565 = vmul.f32 %v508, %v542
      %v566 = vmul.f32 %v509, %v542
      %vm591 = vcmask 1046528
      %v592 = vrot.slane %v543, 1
      %v593 = vrot.slane %v544, 1
      %v594 = vsel %vm591, %v592, %v593
      %v595 = vrot.slane %v545, 1
      %v596 = vsel %vm591, %v593, %v595
      %v597 = vrot.slane %v546, 1
      %v598 = vrot.slane %v547, 1
      %v599 = vsel %vm591, %v597, %v598
      %v600 = vrot.slane %v548, 1
      %v601 = vsel %vm591, %v598, %v600
      %v602 = vrot.slane %v549, 1
      %v603 = vrot.slane %v550, 1
      %v604 = vsel %vm591, %v602, %v603
      %v605 = vrot.slane %v551, 1
      %v606 = vsel %vm591, %v603, %v605
      %v607 = vrot.slane %v552, 1
      %v608 = vrot.slane %v553, 1
      %v609 = vsel %vm591, %v607, %v608
      %v610 = vrot.slane %v554, 1
      %v611 = vsel %vm591, %v608, %v610
      %v612 = vrot.slane %v555, 1
      %v613 = vrot.slane %v556, 1
      %v614 = vsel %vm591, %v612, %v613
      %v615 = vrot.slane %v557, 1
      %v616 = vsel %vm591, %v613, %v615
      %v617 = vrot.slane %v558, 1
      %v618 = vrot.slane %v559, 1
      %v619 = vsel %vm591, %v617, %v618
      %v620 = vrot.slane %v560, 1
      %v621 = vsel %vm591, %v618, %v620
      %v622 = vrot.slane %v561, 1
      %v623 = vrot.slane %v562, 1
      %v624 = vsel %vm591, %v622, %v623
      %v625 = vrot.slane %v563, 1
      %v626 = vsel %vm591, %v623, %v625
      %v627 = vrot.slane %v564, 1
      %v628 = vrot.slane %v565, 1
      %v629 = vsel %vm591, %v627, %v628
      %v630 = vrot.slane %v566, 1
      %v631 = vsel %vm591, %v628, %v630
      %v648 = vadd.f32 %v523, %v594
      %v649 = vadd.f32 %v524, %v596
      %v650 = vadd.f32 %v525, %v599
      %v651 = vadd.f32 %v526, %v601
      %v652 = vadd.f32 %v527, %v604
      %v653 = vadd.f32 %v528, %v606
      %v654 = vadd.f32 %v529, %v609
      %v655 = vadd.f32 %v530, %v611
      %v656 = vadd.f32 %v531, %v614
      %v657 = vadd.f32 %v532, %v616
      %v658 = vadd.f32 %v533, %v619
      %v659 = vadd.f32 %v534, %v621
      %v660 = vadd.f32 %v535, %v624
      %v661 = vadd.f32 %v536, %v626
      %v662 = vadd.f32 %v537, %v629
      %v663 = vadd.f32 %v538, %v631
      %v664 = vlaneseq
      %v665 = vshrl.u32 %v664, 7
      %v666 = vsub.s32 2, %v665
      %v667 = vrot.slane %v516, %v666
      %v668 = vmul.f32 %v486, %v667
      %v669 = vmul.f32 %v487, %v667
      %v670 = vmul.f32 %v488, %v667
      %v671 = vmul.f32 %v489, %v667
      %v672 = vmul.f32 %v490, %v667
      %v673 = vmul.f32 %v491, %v667
      %v674 = vmul.f32 %v492, %v667
      %v675 = vmul.f32 %v493, %v667
      %v676 = vmul.f32 %v494, %v667
      %v677 = vmul.f32 %v495, %v667
      %v678 = vmul.f32 %v496, %v667
      %v679 = vmul.f32 %v497, %v667
      %v680 = vmul.f32 %v498, %v667
      %v681 = vmul.f32 %v499, %v667
      %v682 = vmul.f32 %v500, %v667
      %v683 = vmul.f32 %v501, %v667
      %v684 = vmul.f32 %v502, %v667
      %v685 = vmul.f32 %v503, %v667
      %v686 = vmul.f32 %v504, %v667
      %v687 = vmul.f32 %v505, %v667
      %v688 = vmul.f32 %v506, %v667
      %v689 = vmul.f32 %v507, %v667
      %v690 = vmul.f32 %v508, %v667
      %v691 = vmul.f32 %v509, %v667
      %vm716 = vcmask 1045504
      %v717 = vrot.slane %v668, 2
      %v718 = vrot.slane %v669, 2
      %v719 = vsel %vm716, %v717, %v718
      %v720 = vrot.slane %v670, 2
      %v721 = vsel %vm716, %v718, %v720
      %v722 = vrot.slane %v671, 2
      %v723 = vrot.slane %v672, 2
      %v724 = vsel %vm716, %v722, %v723
      %v725 = vrot.slane %v673, 2
      %v726 = vsel %vm716, %v723, %v725
      %v727 = vrot.slane %v674, 2
      %v728 = vrot.slane %v675, 2
      %v729 = vsel %vm716, %v727, %v728
      %v730 = vrot.slane %v676, 2
      %v731 = vsel %vm716, %v728, %v730
      %v732 = vrot.slane %v677, 2
      %v733 = vrot.slane %v678, 2
      %v734 = vsel %vm716, %v732, %v733
      %v735 = vrot.slane %v679, 2
      %v736 = vsel %vm716, %v733, %v735
      %v737 = vrot.slane %v680, 2
      %v738 = vrot.slane %v681, 2
      %v739 = vsel %vm716, %v737, %v738
      %v740 = vrot.slane %v682, 2
      %v741 = vsel %vm716, %v738, %v740
      %v742 = vrot.slane %v683, 2
      %v743 = vrot.slane %v684, 2
      %v744 = vsel %vm716, %v742, %v743
      %v745 = vrot.slane %v685, 2
      %v746 = vsel %vm716, %v743, %v745
      %v747 = vrot.slane %v686, 2
      %v748 = vrot.slane %v687, 2
      %v749 = vsel %vm716, %v747, %v748
      %v750 = vrot.slane %v688, 2
      %v751 = vsel %vm716, %v748, %v750
      %v752 = vrot.slane %v689, 2
      %v753 = vrot.slane %v690, 2
      %v754 = vsel %vm716, %v752, %v753
      %v755 = vrot.slane %v691, 2
      %v756 = vsel %vm716, %v753, %v755
      %v773 = vadd.f32 %v648, %v719
      %v774 = vadd.f32 %v649, %v721
      %v775 = vadd.f32 %v650, %v724
      %v776 = vadd.f32 %v651, %v726
      %v777 = vadd.f32 %v652, %v729
      %v778 = vadd.f32 %v653, %v731
      %v779 = vadd.f32 %v654, %v734
      %v780 = vadd.f32 %v655, %v736
      %v781 = vadd.f32 %v656, %v739
      %v782 = vadd.f32 %v657, %v741
      %v783 = vadd.f32 %v658, %v744
      %v784 = vadd.f32 %v659, %v746
      %v785 = vadd.f32 %v660, %v749
      %v786 = vadd.f32 %v661, %v751
      %v787 = vadd.f32 %v662, %v754
      %v788 = vadd.f32 %v663, %v756
      %v789 = vlaneseq
      %v790 = vshrl.u32 %v789, 7
      %v791 = vsub.s32 3, %v790
      %v792 = vrot.slane %v516, %v791
      %v793 = vmul.f32 %v489, %v792
      %v794 = vmul.f32 %v490, %v792
      %v795 = vmul.f32 %v492, %v792
      %v796 = vmul.f32 %v493, %v792
      %v797 = vmul.f32 %v495, %v792
      %v798 = vmul.f32 %v496, %v792
      %v799 = vmul.f32 %v498, %v792
      %v800 = vmul.f32 %v499, %v792
      %v801 = vmul.f32 %v501, %v792
      %v802 = vmul.f32 %v502, %v792
      %v803 = vmul.f32 %v504, %v792
      %v804 = vmul.f32 %v505, %v792
      %v805 = vmul.f32 %v507, %v792
      %v806 = vmul.f32 %v508, %v792
      %v807 = vmul.f32 %v510, %v792
      %v808 = vmul.f32 %v511, %v792
      %v809 = vadd.f32 %v773, %v793
      %v810 = vadd.f32 %v774, %v794
      %v811 = vadd.f32 %v775, %v795
      %v812 = vadd.f32 %v776, %v796
      %v813 = vadd.f32 %v777, %v797
      %v814 = vadd.f32 %v778, %v798
      %v815 = vadd.f32 %v779, %v799
      %v816 = vadd.f32 %v780, %v800
      %v817 = vadd.f32 %v781, %v801
      %v818 = vadd.f32 %v782, %v802
      %v819 = vadd.f32 %v783, %v803
      %v820 = vadd.f32 %v784, %v804
      %v821 = vadd.f32 %v785, %v805
      %v822 = vadd.f32 %v786, %v806
      %v823 = vadd.f32 %v787, %v807
      %v824 = vadd.f32 %v788, %v808
      %v825 = vlaneseq
      %v826 = vshrl.u32 %v825, 7
      %v827 = vsub.s32 4, %v826
      %v828 = vrot.slane %v516, %v827
      %v829 = vmul.f32 %v489, %v828
      %v830 = vmul.f32 %v490, %v828
      %v831 = vmul.f32 %v491, %v828
      %v832 = vmul.f32 %v492, %v828
      %v833 = vmul.f32 %v493, %v828
      %v834 = vmul.f32 %v494, %v828
      %v835 = vmul.f32 %v495, %v828
      %v836 = vmul.f32 %v496, %v828
      %v837 = vmul.f32 %v497, %v828
      %v838 = vmul.f32 %v498, %v828
      %v839 = vmul.f32 %v499, %v828
      %v840 = vmul.f32 %v500, %v828
      %v841 = vmul.f32 %v501, %v828
      %v842 = vmul.f32 %v502, %v828
      %v843 = vmul.f32 %v503, %v828
      %v844 = vmul.f32 %v504, %v828
      %v845 = vmul.f32 %v505, %v828
      %v846 = vmul.f32 %v506, %v828
      %v847 = vmul.f32 %v507, %v828
      %v848 = vmul.f32 %v508, %v828
      %v849 = vmul.f32 %v509, %v828
      %v850 = vmul.f32 %v510, %v828
      %v851 = vmul.f32 %v511, %v828
      %v852 = vmul.f32 %v512, %v828
      %v877 = vrot.slane %v829, 1
      %v878 = vrot.slane %v830, 1
      %v879 = vsel %vm591, %v877, %v878
      %v880 = vrot.slane %v831, 1
      %v881 = vsel %vm591, %v878, %v880
      %v882 = vrot.slane %v832, 1
      %v883 = vrot.slane %v833, 1
      %v884 = vsel %vm591, %v882, %v883
      %v885 = vrot.slane %v834, 1
      %v886 = vsel %vm591, %v883, %v885
      %v887 = vrot.slane %v835, 1
      %v888 = vrot.slane %v836, 1
      %v889 = vsel %vm591, %v887, %v888
      %v890 = vrot.slane %v837, 1
      %v891 = vsel %vm591, %v888, %v890
      %v892 = vrot.slane %v838, 1
      %v893 = vrot.slane %v839, 1
      %v894 = vsel %vm591, %v892, %v893
      %v895 = vrot.slane %v840, 1
      %v896 = vsel %vm591, %v893, %v895
      %v897 = vrot.slane %v841, 1
      %v898 = vrot.slane %v842, 1
      %v899 = vsel %vm591, %v897, %v898
      %v900 = vrot.slane %v843, 1
      %v901 = vsel %vm591, %v898, %v900
      %v902 = vrot.slane %v844, 1
      %v903 = vrot.slane %v845, 1
      %v904 = vsel %vm591, %v902, %v903
      %v905 = vrot.slane %v846, 1
      %v906 = vsel %vm591, %v903, %v905
      %v907 = vrot.slane %v847, 1
      %v908 = vrot.slane %v848, 1
      %v909 = vsel %vm591, %v907, %v908
      %v910 = vrot.slane %v849, 1
      %v911 = vsel %vm591, %v908, %v910
      %v912 = vrot.slane %v850, 1
      %v913 = vrot.slane %v851, 1
      %v914 = vsel %vm591, %v912, %v913
      %v915 = vrot.slane %v852, 1
      %v916 = vsel %vm591, %v913, %v915
      %v933 = vadd.f32 %v809, %v879
      %v934 = vadd.f32 %v810, %v881
      %v935 = vadd.f32 %v811, %v884
      %v936 = vadd.f32 %v812, %v886
      %v937 = vadd.f32 %v813, %v889
      %v938 = vadd.f32 %v814, %v891
      %v939 = vadd.f32 %v815, %v894
      %v940 = vadd.f32 %v816, %v896
      %v941 = vadd.f32 %v817, %v899
      %v942 = vadd.f32 %v818, %v901
      %v943 = vadd.f32 %v819, %v904
      %v944 = vadd.f32 %v820, %v906
      %v945 = vadd.f32 %v821, %v909
      %v946 = vadd.f32 %v822, %v911
      %v947 = vadd.f32 %v823, %v914
      %v948 = vadd.f32 %v824, %v916
      %v949 = vlaneseq
      %v950 = vshrl.u32 %v949, 7
      %v951 = vsub.s32 5, %v950
      %v952 = vrot.slane %v516, %v951
      %v953 = vmul.f32 %v489, %v952
      %v954 = vmul.f32 %v490, %v952
      %v955 = vmul.f32 %v491, %v952
      %v956 = vmul.f32 %v492, %v952
      %v957 = vmul.f32 %v493, %v952
      %v958 = vmul.f32 %v494, %v952
      %v959 = vmul.f32 %v495, %v952
      %v960 = vmul.f32 %v496, %v952
      %v961 = vmul.f32 %v497, %v952
      %v962 = vmul.f32 %v498, %v952
      %v963 = vmul.f32 %v499, %v952
      %v964 = vmul.f32 %v500, %v952
      %v965 = vmul.f32 %v501, %v952
      %v966 = vmul.f32 %v502, %v952
      %v967 = vmul.f32 %v503, %v952
      %v968 = vmul.f32 %v504, %v952
      %v969 = vmul.f32 %v505, %v952
      %v970 = vmul.f32 %v506, %v952
      %v971 = vmul.f32 %v507, %v952
      %v972 = vmul.f32 %v508, %v952
      %v973 = vmul.f32 %v509, %v952
      %v974 = vmul.f32 %v510, %v952
      %v975 = vmul.f32 %v511, %v952
      %v976 = vmul.f32 %v512, %v952
      %v1001 = vrot.slane %v953, 2
      %v1002 = vrot.slane %v954, 2
      %v1003 = vsel %vm716, %v1001, %v1002
      %v1004 = vrot.slane %v955, 2
      %v1005 = vsel %vm716, %v1002, %v1004
      %v1006 = vrot.slane %v956, 2
      %v1007 = vrot.slane %v957, 2
      %v1008 = vsel %vm716, %v1006, %v1007
      %v1009 = vrot.slane %v958, 2
      %v1010 = vsel %vm716, %v1007, %v1009
      %v1011 = vrot.slane %v959, 2
      %v1012 = vrot.slane %v960, 2
      %v1013 = vsel %vm716, %v1011, %v1012
      %v1014 = vrot.slane %v961, 2
      %v1015 = vsel %vm716, %v1012, %v1014
      %v1016 = vrot.slane %v962, 2
      %v1017 = vrot.slane %v963, 2
      %v1018 = vsel %vm716, %v1016, %v1017
      %v1019 = vrot.slane %v964, 2
      %v1020 = vsel %vm716, %v1017, %v1019
      %v1021 = vrot.slane %v965, 2
      %v1022 = vrot.slane %v966, 2
      %v1023 = vsel %vm716, %v1021, %v1022
      %v1024 = vrot.slane %v967, 2
      %v1025 = vsel %vm716, %v1022, %v1024
      %v1026 = vrot.slane %v968, 2
      %v1027 = vrot.slane %v969, 2
      %v1028 = vsel %vm716, %v1026, %v1027
      %v1029 = vrot.slane %v970, 2
      %v1030 = vsel %vm716, %v1027, %v1029
      %v1031 = vrot.slane %v971, 2
      %v1032 = vrot.slane %v972, 2
      %v1033 = vsel %vm716, %v1031, %v1032
      %v1034 = vrot.slane %v973, 2
      %v1035 = vsel %vm716, %v1032, %v1034
      %v1036 = vrot.slane %v974, 2
      %v1037 = vrot.slane %v975, 2
      %v1038 = vsel %vm716, %v1036, %v1037
      %v1039 = vrot.slane %v976, 2
      %v1040 = vsel %vm716, %v1037, %v1039
      %v1057 = vadd.f32 %v933, %v1003
      %v1058 = vadd.f32 %v934, %v1005
      %v1059 = vadd.f32 %v935, %v1008
      %v1060 = vadd.f32 %v936, %v1010
      %v1061 = vadd.f32 %v937, %v1013
      %v1062 = vadd.f32 %v938, %v1015
      %v1063 = vadd.f32 %v939, %v1018
      %v1064 = vadd.f32 %v940, %v1020
      %v1065 = vadd.f32 %v941, %v1023
      %v1066 = vadd.f32 %v942, %v1025
      %v1067 = vadd.f32 %v943, %v1028
      %v1068 = vadd.f32 %v944, %v1030
      %v1069 = vadd.f32 %v945, %v1033
      %v1070 = vadd.f32 %v946, %v1035
      %v1071 = vadd.f32 %v947, %v1038
      %v1072 = vadd.f32 %v948, %v1040
      %v1073 = vlaneseq
      %v1074 = vshrl.u32 %v1073, 7
      %v1075 = vsub.s32 6, %v1074
      %v1076 = vrot.slane %v516, %v1075
      %v1077 = vmul.f32 %v492, %v1076
      %v1078 = vmul.f32 %v493, %v1076
      %v1079 = vmul.f32 %v495, %v1076
      %v1080 = vmul.f32 %v496, %v1076
      %v1081 = vmul.f32 %v498, %v1076
      %v1082 = vmul.f32 %v499, %v1076
      %v1083 = vmul.f32 %v501, %v1076
      %v1084 = vmul.f32 %v502, %v1076
      %v1085 = vmul.f32 %v504, %v1076
      %v1086 = vmul.f32 %v505, %v1076
      %v1087 = vmul.f32 %v507, %v1076
      %v1088 = vmul.f32 %v508, %v1076
      %v1089 = vmul.f32 %v510, %v1076
      %v1090 = vmul.f32 %v511, %v1076
      %v1091 = vmul.f32 %v513, %v1076
      %v1092 = vmul.f32 %v514, %v1076
      %v1093 = vadd.f32 %v1057, %v1077
      %v1094 = vadd.f32 %v1058, %v1078
      %v1095 = vadd.f32 %v1059, %v1079
      %v1096 = vadd.f32 %v1060, %v1080
      %v1097 = vadd.f32 %v1061, %v1081
      %v1098 = vadd.f32 %v1062, %v1082
      %v1099 = vadd.f32 %v1063, %v1083
      %v1100 = vadd.f32 %v1064, %v1084
      %v1101 = vadd.f32 %v1065, %v1085
      %v1102 = vadd.f32 %v1066, %v1086
      %v1103 = vadd.f32 %v1067, %v1087
      %v1104 = vadd.f32 %v1068, %v1088
      %v1105 = vadd.f32 %v1069, %v1089
      %v1106 = vadd.f32 %v1070, %v1090
      %v1107 = vadd.f32 %v1071, %v1091
      %v1108 = vadd.f32 %v1072, %v1092
      %v1109 = vlaneseq
      %v1110 = vshrl.u32 %v1109, 7
      %v1111 = vsub.s32 7, %v1110
      %v1112 = vrot.slane %v516, %v1111
      %v1113 = vmul.f32 %v492, %v1112
      %v1114 = vmul.f32 %v493, %v1112
      %v1115 = vmul.f32 %v494, %v1112
      %v1116 = vmul.f32 %v495, %v1112
      %v1117 = vmul.f32 %v496, %v1112
      %v1118 = vmul.f32 %v497, %v1112
      %v1119 = vmul.f32 %v498, %v1112
      %v1120 = vmul.f32 %v499, %v1112
      %v1121 = vmul.f32 %v500, %v1112
      %v1122 = vmul.f32 %v501, %v1112
      %v1123 = vmul.f32 %v502, %v1112
      %v1124 = vmul.f32 %v503, %v1112
      %v1125 = vmul.f32 %v504, %v1112
      %v1126 = vmul.f32 %v505, %v1112
      %v1127 = vmul.f32 %v506, %v1112
      %v1128 = vmul.f32 %v507, %v1112
      %v1129 = vmul.f32 %v508, %v1112
      %v1130 = vmul.f32 %v509, %v1112
      %v1131 = vmul.f32 %v510, %v1112
      %v1132 = vmul.f32 %v511, %v1112
      %v1133 = vmul.f32 %v512, %v1112
      %v1134 = vmul.f32 %v513, %v1112
      %v1135 = vmul.f32 %v514, %v1112
      %v1136 = vmul.f32 %v515, %v1112
      %v1161 = vrot.slane %v1113, 1
      %v1162 = vrot.slane %v1114, 1
      %v1163 = vsel %vm591, %v1161, %v1162
      %v1164 = vrot.slane %v1115, 1
      %v1165 = vsel %vm591, %v1162, %v1164
      %v1166 = vrot.slane %v1116, 1
      %v1167 = vrot.slane %v1117, 1
      %v1168 = vsel %vm591, %v1166, %v1167
      %v1169 = vrot.slane %v1118, 1
      %v1170 = vsel %vm591, %v1167, %v1169
      %v1171 = vrot.slane %v1119, 1
      %v1172 = vrot.slane %v1120, 1
      %v1173 = vsel %vm591, %v1171, %v1172
      %v1174 = vrot.slane %v1121, 1
      %v1175 = vsel %vm591, %v1172, %v1174
      %v1176 = vrot.slane %v1122, 1
      %v1177 = vrot.slane %v1123, 1
      %v1178 = vsel %vm591, %v1176, %v1177
      %v1179 = vrot.slane %v1124, 1
      %v1180 = vsel %vm591, %v1177, %v1179
      %v1181 = vrot.slane %v1125, 1
      %v1182 = vrot.slane %v1126, 1
      %v1183 = vsel %vm591, %v1181, %v1182
      %v1184 = vrot.slane %v1127, 1
      %v1185 = vsel %vm591, %v1182, %v1184
      %v1186 = vrot.slane %v1128, 1
      %v1187 = vrot.slane %v1129, 1
      %v1188 = vsel %vm591, %v1186, %v1187
      %v1189 = vrot.slane %v1130, 1
      %v1190 = vsel %vm591, %v1187, %v1189
      %v1191 = vrot.slane %v1131, 1
      %v1192 = vrot.slane %v1132, 1
      %v1193 = vsel %vm591, %v1191, %v1192
      %v1194 = vrot.slane %v1133, 1
      %v1195 = vsel %vm591, %v1192, %v1194
      %v1196 = vrot.slane %v1134, 1
      %v1197 = vrot.slane %v1135, 1
      %v1198 = vsel %vm591, %v1196, %v1197
      %v1199 = vrot.slane %v1136, 1
      %v1200 = vsel %vm591, %v1197, %v1199
      %v1217 = vadd.f32 %v1093, %v1163
      %v1218 = vadd.f32 %v1094, %v1165
      %v1219 = vadd.f32 %v1095, %v1168
      %v1220 = vadd.f32 %v1096, %v1170
      %v1221 = vadd.f32 %v1097, %v1173
      %v1222 = vadd.f32 %v1098, %v1175
      %v1223 = vadd.f32 %v1099, %v1178
      %v1224 = vadd.f32 %v1100, %v1180
      %v1225 = vadd.f32 %v1101, %v1183
      %v1226 = vadd.f32 %v1102, %v1185
      %v1227 = vadd.f32 %v1103, %v1188
      %v1228 = vadd.f32 %v1104, %v1190
      %v1229 = vadd.f32 %v1105, %v1193
      %v1230 = vadd.f32 %v1106, %v1195
      %v1231 = vadd.f32 %v1107, %v1198
      %v1232 = vadd.f32 %v1108, %v1200
      %v1233 = vlaneseq
      %v1234 = vshrl.u32 %v1233, 7
      %v1235 = vsub.s32 0, %v1234
      %v1236 = vrot.slane %v517, %v1235
      %v1237 = vmul.f32 %v492, %v1236
      %v1238 = vmul.f32 %v493, %v1236
      %v1239 = vmul.f32 %v494, %v1236
      %v1240 = vmul.f32 %v495, %v1236
      %v1241 = vmul.f32 %v496, %v1236
      %v1242 = vmul.f32 %v497, %v1236
      %v1243 = vmul.f32 %v498, %v1236
      %v1244 = vmul.f32 %v499, %v1236
      %v1245 = vmul.f32 %v500, %v1236
      %v1246 = vmul.f32 %v501, %v1236
      %v1247 = vmul.f32 %v502, %v1236
      %v1248 = vmul.f32 %v503, %v1236
      %v1249 = vmul.f32 %v504, %v1236
      %v1250 = vmul.f32 %v505, %v1236
      %v1251 = vmul.f32 %v506, %v1236
      %v1252 = vmul.f32 %v507, %v1236
      %v1253 = vmul.f32 %v508, %v1236
      %v1254 = vmul.f32 %v509, %v1236
      %v1255 = vmul.f32 %v510, %v1236
      %v1256 = vmul.f32 %v511, %v1236
      %v1257 = vmul.f32 %v512, %v1236
      %v1258 = vmul.f32 %v513, %v1236
      %v1259 = vmul.f32 %v514, %v1236
      %v1260 = vmul.f32 %v515, %v1236
      %v1285 = vrot.slane %v1237, 2
      %v1286 = vrot.slane %v1238, 2
      %v1287 = vsel %vm716, %v1285, %v1286
      %v1288 = vrot.slane %v1239, 2
      %v1289 = vsel %vm716, %v1286, %v1288
      %v1290 = vrot.slane %v1240, 2
      %v1291 = vrot.slane %v1241, 2
      %v1292 = vsel %vm716, %v1290, %v1291
      %v1293 = vrot.slane %v1242, 2
      %v1294 = vsel %vm716, %v1291, %v1293
      %v1295 = vrot.slane %v1243, 2
      %v1296 = vrot.slane %v1244, 2
      %v1297 = vsel %vm716, %v1295, %v1296
      %v1298 = vrot.slane %v1245, 2
      %v1299 = vsel %vm716, %v1296, %v1298
      %v1300 = vrot.slane %v1246, 2
      %v1301 = vrot.slane %v1247, 2
      %v1302 = vsel %vm716, %v1300, %v1301
      %v1303 = vrot.slane %v1248, 2
      %v1304 = vsel %vm716, %v1301, %v1303
      %v1305 = vrot.slane %v1249, 2
      %v1306 = vrot.slane %v1250, 2
      %v1307 = vsel %vm716, %v1305, %v1306
      %v1308 = vrot.slane %v1251, 2
      %v1309 = vsel %vm716, %v1306, %v1308
      %v1310 = vrot.slane %v1252, 2
      %v1311 = vrot.slane %v1253, 2
      %v1312 = vsel %vm716, %v1310, %v1311
      %v1313 = vrot.slane %v1254, 2
      %v1314 = vsel %vm716, %v1311, %v1313
      %v1315 = vrot.slane %v1255, 2
      %v1316 = vrot.slane %v1256, 2
      %v1317 = vsel %vm716, %v1315, %v1316
      %v1318 = vrot.slane %v1257, 2
      %v1319 = vsel %vm716, %v1316, %v1318
      %v1320 = vrot.slane %v1258, 2
      %v1321 = vrot.slane %v1259, 2
      %v1322 = vsel %vm716, %v1320, %v1321
      %v1323 = vrot.slane %v1260, 2
      %v1324 = vsel %vm716, %v1321, %v1323
      %v1341 = vadd.f32 %v1217, %v1287
      %v1342 = vadd.f32 %v1218, %v1289
      %v1343 = vadd.f32 %v1219, %v1292
      %v1344 = vadd.f32 %v1220, %v1294
      %v1345 = vadd.f32 %v1221, %v1297
      %v1346 = vadd.f32 %v1222, %v1299
      %v1347 = vadd.f32 %v1223, %v1302
      %v1348 = vadd.f32 %v1224, %v1304
      %v1349 = vadd.f32 %v1225, %v1307
      %v1350 = vadd.f32 %v1226, %v1309
      %v1351 = vadd.f32 %v1227, %v1312
      %v1352 = vadd.f32 %v1228, %v1314
      %v1353 = vadd.f32 %v1229, %v1317
      %v1354 = vadd.f32 %v1230, %v1319
      %v1355 = vadd.f32 %v1231, %v1322
      %v1356 = vadd.f32 %v1232, %v1324
      %v1358 = vlaneseq
      %v1359 = vshrl.u32 %v1358, 7
      %v1360 = vsub.s32 0, %v1359
      %v1361 = vrot.slane %v518, %v1360
      %v1363 = vadd.f32 %v1341, %v1361
      %v1364 = vadd.f32 %v1342, %v1361
      %v1365 = vadd.f32 %v1343, %v1361
      %v1366 = vadd.f32 %v1344, %v1361
      %v1367 = vadd.f32 %v1345, %v1361
      %v1368 = vadd.f32 %v1346, %v1361
      %v1369 = vadd.f32 %v1347, %v1361
      %v1370 = vadd.f32 %v1348, %v1361
      %v1371 = vadd.f32 %v1349, %v1361
      %v1372 = vadd.f32 %v1350, %v1361
      %v1373 = vadd.f32 %v1351, %v1361
      %v1374 = vadd.f32 %v1352, %v1361
      %v1375 = vadd.f32 %v1353, %v1361
      %v1376 = vadd.f32 %v1354, %v1361
      %v1377 = vadd.f32 %v1355, %v1361
      %v1378 = vadd.f32 %v1356, %v1361
      %v1379 = vmul.f32 %v1363, %v1363
      %v1380 = vmul.f32 %v1364, %v1364
      %v1381 = vmul.f32 %v1365, %v1365
      %v1382 = vmul.f32 %v1366, %v1366
      %v1383 = vmul.f32 %v1367, %v1367
      %v1384 = vmul.f32 %v1368, %v1368
      %v1385 = vmul.f32 %v1369, %v1369
      %v1386 = vmul.f32 %v1370, %v1370
      %v1387 = vmul.f32 %v1371, %v1371
      %v1388 = vmul.f32 %v1372, %v1372
      %v1389 = vmul.f32 %v1373, %v1373
      %v1390 = vmul.f32 %v1374, %v1374
      %v1391 = vmul.f32 %v1375, %v1375
      %v1392 = vmul.f32 %v1376, %v1376
      %v1393 = vmul.f32 %v1377, %v1377
      %v1394 = vmul.f32 %v1378, %v1378
      %v1395 = vmul.f32 %v1363, %v1379
      %v1396 = vmul.f32 %v1364, %v1380
      %v1397 = vmul.f32 %v1365, %v1381
      %v1398 = vmul.f32 %v1366, %v1382
      %v1399 = vmul.f32 %v1367, %v1383
      %v1400 = vmul.f32 %v1368, %v1384
      %v1401 = vmul.f32 %v1369, %v1385
      %v1402 = vmul.f32 %v1370, %v1386
      %v1403 = vmul.f32 %v1371, %v1387
      %v1404 = vmul.f32 %v1372, %v1388
      %v1405 = vmul.f32 %v1373, %v1389
      %v1406 = vmul.f32 %v1374, %v1390
      %v1407 = vmul.f32 %v1375, %v1391
      %v1408 = vmul.f32 %v1376, %v1392
      %v1409 = vmul.f32 %v1377, %v1393
      %v1410 = vmul.f32 %v1378, %v1394
      %v1411 = vmul.f32 %v1395, 0.044715
      %v1412 = vmul.f32 %v1396, 0.044715
      %v1413 = vmul.f32 %v1397, 0.044715
      %v1414 = vmul.f32 %v1398, 0.044715
      %v1415 = vmul.f32 %v1399, 0.044715
      %v1416 = vmul.f32 %v1400, 0.044715
      %v1417 = vmul.f32 %v1401, 0.044715
      %v1418 = vmul.f32 %v1402, 0.044715
      %v1419 = vmul.f32 %v1403, 0.044715
      %v1420 = vmul.f32 %v1404, 0.044715
      %v1421 = vmul.f32 %v1405, 0.044715
      %v1422 = vmul.f32 %v1406, 0.044715
      %v1423 = vmul.f32 %v1407, 0.044715
      %v1424 = vmul.f32 %v1408, 0.044715
      %v1425 = vmul.f32 %v1409, 0.044715
      %v1426 = vmul.f32 %v1410, 0.044715
      %v1427 = vadd.f32 %v1363, %v1411
      %v1428 = vadd.f32 %v1364, %v1412
      %v1429 = vadd.f32 %v1365, %v1413
      %v1430 = vadd.f32 %v1366, %v1414
      %v1431 = vadd.f32 %v1367, %v1415
      %v1432 = vadd.f32 %v1368, %v1416
      %v1433 = vadd.f32 %v1369, %v1417
      %v1434 = vadd.f32 %v1370, %v1418
      %v1435 = vadd.f32 %v1371, %v1419
      %v1436 = vadd.f32 %v1372, %v1420
      %v1437 = vadd.f32 %v1373, %v1421
      %v1438 = vadd.f32 %v1374, %v1422
      %v1439 = vadd.f32 %v1375, %v1423
      %v1440 = vadd.f32 %v1376, %v1424
      %v1441 = vadd.f32 %v1377, %v1425
      %v1442 = vadd.f32 %v1378, %v1426
      %v1443 = vmul.f32 %v1427, 0.7978846
      %v1444 = vmul.f32 %v1428, 0.7978846
      %v1445 = vmul.f32 %v1429, 0.7978846
      %v1446 = vmul.f32 %v1430, 0.7978846
      %v1447 = vmul.f32 %v1431, 0.7978846
      %v1448 = vmul.f32 %v1432, 0.7978846
      %v1449 = vmul.f32 %v1433, 0.7978846
      %v1450 = vmul.f32 %v1434, 0.7978846
      %v1451 = vmul.f32 %v1435, 0.7978846
      %v1452 = vmul.f32 %v1436, 0.7978846
      %v1453 = vmul.f32 %v1437, 0.7978846
      %v1454 = vmul.f32 %v1438, 0.7978846
      %v1455 = vmul.f32 %v1439, 0.7978846
      %v1456 = vmul.f32 %v1440, 0.7978846
      %v1457 = vmul.f32 %v1441, 0.7978846
      %v1458 = vmul.f32 %v1442, 0.7978846
      %v1459 = vtanh.pop %v1443
      %v1460 = vtanh.pop %v1444
      %v1461 = vtanh.pop %v1445
      %v1462 = vtanh.pop %v1446
      %v1463 = vtanh.pop %v1447
      %v1464 = vtanh.pop %v1448
      %v1465 = vtanh.pop %v1449
      %v1466 = vtanh.pop %v1450
      %v1467 = vtanh.pop %v1451
      %v1468 = vtanh.pop %v1452
      %v1469 = vtanh.pop %v1453
      %v1470 = vtanh.pop %v1454
      %v1471 = vtanh.pop %v1455
      %v1472 = vtanh.pop %v1456
      %v1473 = vtanh.pop %v1457
      %v1474 = vtanh.pop %v1458
      %v1475 = vadd.f32 %v1459, 1.0
      %v1476 = vadd.f32 %v1460, 1.0
      %v1477 = vadd.f32 %v1461, 1.0
      %v1478 = vadd.f32 %v1462, 1.0
      %v1479 = vadd.f32 %v1463, 1.0
      %v1480 = vadd.f32 %v1464, 1.0
      %v1481 = vadd.f32 %v1465, 1.0
      %v1482 = vadd.f32 %v1466, 1.0
      %v1483 = vadd.f32 %v1467, 1.0
      %v1484 = vadd.f32 %v1468, 1.0
      %v1485 = vadd.f32 %v1469, 1.0
      %v1486 = vadd.f32 %v1470, 1.0
      %v1487 = vadd.f32 %v1471, 1.0
      %v1488 = vadd.f32 %v1472, 1.0
      %v1489 = vadd.f32 %v1473, 1.0
      %v1490 = vadd.f32 %v1474, 1.0
      %v1491 = vmul.f32 %v1475, 0.5
      %v1492 = vmul.f32 %v1476, 0.5
      %v1493 = vmul.f32 %v1477, 0.5
      %v1494 = vmul.f32 %v1478, 0.5
      %v1495 = vmul.f32 %v1479, 0.5
      %v1496 = vmul.f32 %v1480, 0.5
      %v1497 = vmul.f32 %v1481, 0.5
      %v1498 = vmul.f32 %v1482, 0.5
      %v1499 = vmul.f32 %v1483, 0.5
      %v1500 = vmul.f32 %v1484, 0.5
      %v1501 = vmul.f32 %v1485, 0.5
      %v1502 = vmul.f32 %v1486, 0.5
      %v1503 = vmul.f32 %v1487, 0.5
      %v1504 = vmul.f32 %v1488, 0.5
      %v1505 = vmul.f32 %v1489, 0.5
      %v1506 = vmul.f32 %v1490, 0.5
      %v1507 = vmul.f32 %v1363, %v1491
      %v1508 = vmul.f32 %v1364, %v1492
      %v1509 = vmul.f32 %v1365, %v1493
      %v1510 = vmul.f32 %v1366, %v1494
      %v1511 = vmul.f32 %v1367, %v1495
      %v1512 = vmul.f32 %v1368, %v1496
      %v1513 = vmul.f32 %v1369, %v1497
      %v1514 = vmul.f32 %v1370, %v1498
      %v1515 = vmul.f32 %v1371, %v1499
      %v1516 = vmul.f32 %v1372, %v1500
      %v1517 = vmul.f32 %v1373, %v1501
      %v1518 = vmul.f32 %v1374, %v1502
      %v1519 = vmul.f32 %v1375, %v1503
      %v1520 = vmul.f32 %v1376, %v1504
      %v1521 = vmul.f32 %v1377, %v1505
      %v1522 = vmul.f32 %v1378, %v1506
      %v1523 = vxor.u32 %v1507, 2147483648
      %v1524 = vxor.u32 %v1508, 2147483648
      %v1525 = vxor.u32 %v1509, 2147483648
      %v1526 = vxor.u32 %v1510, 2147483648
      %v1527 = vxor.u32 %v1511, 2147483648
      %v1528 = vxor.u32 %v1512, 2147483648
      %v1529 = vxor.u32 %v1513, 2147483648
      %v1530 = vxor.u32 %v1514, 2147483648
      %v1531 = vxor.u32 %v1515, 2147483648
      %v1532 = vxor.u32 %v1516, 2147483648
      %v1533 = vxor.u32 %v1517, 2147483648
      %v1534 = vxor.u32 %v1518, 2147483648
      %v1535 = vxor.u32 %v1519, 2147483648
      %v1536 = vxor.u32 %v1520, 2147483648
      %v1537 = vxor.u32 %v1521, 2147483648
      %v1538 = vxor.u32 %v1522, 2147483648
      %v1539 = vmul.f32 %v1523, 1.442695
      %v1540 = vpow.pop %v1539
      %v1541 = vmul.f32 %v1524, 1.442695
      %v1542 = vpow.pop %v1541
      %v1543 = vmul.f32 %v1525, 1.442695
      %v1544 = vpow.pop %v1543
      %v1545 = vmul.f32 %v1526, 1.442695
      %v1546 = vpow.pop %v1545
      %v1547 = vmul.f32 %v1527, 1.442695
      %v1548 = vpow.pop %v1547
      %v1549 = vmul.f32 %v1528, 1.442695
      %v1550 = vpow.pop %v1549
      %v1551 = vmul.f32 %v1529, 1.442695
      %v1552 = vpow.pop %v1551
      %v1553 = vmul.f32 %v1530, 1.442695
      %v1554 = vpow.pop %v1553
      %v1555 = vmul.f32 %v1531, 1.442695
      %v1556 = vpow.pop %v1555
      %v1557 = vmul.f32 %v1532, 1.442695
      %v1558 = vpow.pop %v1557
      %v1559 = vmul.f32 %v1533, 1.442695
      %v1560 = vpow.pop %v1559
      %v1561 = vmul.f32 %v1534, 1.442695
      %v1562 = vpow.pop %v1561
      %v1563 = vmul.f32 %v1535, 1.442695
      %v1564 = vpow.pop %v1563
      %v1565 = vmul.f32 %v1536, 1.442695
      %v1566 = vpow.pop %v1565
      %v1567 = vmul.f32 %v1537, 1.442695
      %v1568 = vpow.pop %v1567
      %v1569 = vmul.f32 %v1538, 1.442695
      %v1570 = vpow.pop %v1569
      %v1571 = vadd.f32 %v1540, 1.0
      %v1572 = vadd.f32 %v1542, 1.0
      %v1573 = vadd.f32 %v1544, 1.0
      %v1574 = vadd.f32 %v1546, 1.0
      %v1575 = vadd.f32 %v1548, 1.0
      %v1576 = vadd.f32 %v1550, 1.0
      %v1577 = vadd.f32 %v1552, 1.0
      %v1578 = vadd.f32 %v1554, 1.0
      %v1579 = vadd.f32 %v1556, 1.0
      %v1580 = vadd.f32 %v1558, 1.0
      %v1581 = vadd.f32 %v1560, 1.0
      %v1582 = vadd.f32 %v1562, 1.0
      %v1583 = vadd.f32 %v1564, 1.0
      %v1584 = vadd.f32 %v1566, 1.0
      %v1585 = vadd.f32 %v1568, 1.0
      %v1586 = vadd.f32 %v1570, 1.0
      %v1587 = vrcp.pop %v1571
      %v1588 = vmul.f32 1.0, %v1587
      %v1589 = vrcp.pop %v1572
      %v1590 = vmul.f32 1.0, %v1589
      %v1591 = vrcp.pop %v1573
      %v1592 = vmul.f32 1.0, %v1591
      %v1593 = vrcp.pop %v1574
      %v1594 = vmul.f32 1.0, %v1593
      %v1595 = vrcp.pop %v1575
      %v1596 = vmul.f32 1.0, %v1595
      %v1597 = vrcp.pop %v1576
      %v1598 = vmul.f32 1.0, %v1597
      %v1599 = vrcp.pop %v1577
      %v1600 = vmul.f32 1.0, %v1599
      %v1601 = vrcp.pop %v1578
      %v1602 = vmul.f32 1.0, %v1601
      %v1603 = vrcp.pop %v1579
      %v1604 = vmul.f32 1.0, %v1603
      %v1605 = vrcp.pop %v1580
      %v1606 = vmul.f32 1.0, %v1605
      %v1607 = vrcp.pop %v1581
      %v1608 = vmul.f32 1.0, %v1607
      %v1609 = vrcp.pop %v1582
      %v1610 = vmul.f32 1.0, %v1609
      %v1611 = vrcp.pop %v1583
      %v1612 = vmul.f32 1.0, %v1611
      %v1613 = vrcp.pop %v1584
      %v1614 = vmul.f32 1.0, %v1613
      %v1615 = vrcp.pop %v1585
      %v1616 = vmul.f32 1.0, %v1615
      %v1617 = vrcp.pop %v1586
      %v1618 = vmul.f32 1.0, %v1617
      %v1619 = vld [vmem:[%s5] sm:$0xff]
      %v1620 = vld [vmem:[%s5 + $0x8] sm:$0x1]
      %v1621 = vld [vmem:[%s6] sm:$0x1]
      %v1622 = vlaneseq
      %v1623 = vshrl.u32 %v1622, 7
      %v1624 = vsub.s32 0, %v1623
      %v1625 = vrot.slane %v1619, %v1624
      %v1626 = vmul.f32 %v486, %v1625
      %v1627 = vmul.f32 %v487, %v1625
      %v1628 = vmul.f32 %v489, %v1625
      %v1629 = vmul.f32 %v490, %v1625
      %v1630 = vmul.f32 %v492, %v1625
      %v1631 = vmul.f32 %v493, %v1625
      %v1632 = vmul.f32 %v495, %v1625
      %v1633 = vmul.f32 %v496, %v1625
      %v1634 = vmul.f32 %v498, %v1625
      %v1635 = vmul.f32 %v499, %v1625
      %v1636 = vmul.f32 %v501, %v1625
      %v1637 = vmul.f32 %v502, %v1625
      %v1638 = vmul.f32 %v504, %v1625
      %v1639 = vmul.f32 %v505, %v1625
      %v1640 = vmul.f32 %v507, %v1625
      %v1641 = vmul.f32 %v508, %v1625
      %v1642 = vlaneseq
      %v1643 = vshrl.u32 %v1642, 7
      %v1644 = vsub.s32 1, %v1643
      %v1645 = vrot.slane %v1619, %v1644
      %v1646 = vmul.f32 %v486, %v1645
      %v1647 = vmul.f32 %v487, %v1645
      %v1648 = vmul.f32 %v488, %v1645
      %v1649 = vmul.f32 %v489, %v1645
      %v1650 = vmul.f32 %v490, %v1645
      %v1651 = vmul.f32 %v491, %v1645
      %v1652 = vmul.f32 %v492, %v1645
      %v1653 = vmul.f32 %v493, %v1645
      %v1654 = vmul.f32 %v494, %v1645
      %v1655 = vmul.f32 %v495, %v1645
      %v1656 = vmul.f32 %v496, %v1645
      %v1657 = vmul.f32 %v497, %v1645
      %v1658 = vmul.f32 %v498, %v1645
      %v1659 = vmul.f32 %v499, %v1645
      %v1660 = vmul.f32 %v500, %v1645
      %v1661 = vmul.f32 %v501, %v1645
      %v1662 = vmul.f32 %v502, %v1645
      %v1663 = vmul.f32 %v503, %v1645
      %v1664 = vmul.f32 %v504, %v1645
      %v1665 = vmul.f32 %v505, %v1645
      %v1666 = vmul.f32 %v506, %v1645
      %v1667 = vmul.f32 %v507, %v1645
      %v1668 = vmul.f32 %v508, %v1645
      %v1669 = vmul.f32 %v509, %v1645
      %v1694 = vrot.slane %v1646, 1
      %v1695 = vrot.slane %v1647, 1
      %v1696 = vsel %vm591, %v1694, %v1695
      %v1697 = vrot.slane %v1648, 1
      %v1698 = vsel %vm591, %v1695, %v1697
      %v1699 = vrot.slane %v1649, 1
      %v1700 = vrot.slane %v1650, 1
      %v1701 = vsel %vm591, %v1699, %v1700
      %v1702 = vrot.slane %v1651, 1
      %v1703 = vsel %vm591, %v1700, %v1702
      %v1704 = vrot.slane %v1652, 1
      %v1705 = vrot.slane %v1653, 1
      %v1706 = vsel %vm591, %v1704, %v1705
      %v1707 = vrot.slane %v1654, 1
      %v1708 = vsel %vm591, %v1705, %v1707
      %v1709 = vrot.slane %v1655, 1
      %v1710 = vrot.slane %v1656, 1
      %v1711 = vsel %vm591, %v1709, %v1710
      %v1712 = vrot.slane %v1657, 1
      %v1713 = vsel %vm591, %v1710, %v1712
      %v1714 = vrot.slane %v1658, 1
      %v1715 = vrot.slane %v1659, 1
      %v1716 = vsel %vm591, %v1714, %v1715
      %v1717 = vrot.slane %v1660, 1
      %v1718 = vsel %vm591, %v1715, %v1717
      %v1719 = vrot.slane %v1661, 1
      %v1720 = vrot.slane %v1662, 1
      %v1721 = vsel %vm591, %v1719, %v1720
      %v1722 = vrot.slane %v1663, 1
      %v1723 = vsel %vm591, %v1720, %v1722
      %v1724 = vrot.slane %v1664, 1
      %v1725 = vrot.slane %v1665, 1
      %v1726 = vsel %vm591, %v1724, %v1725
      %v1727 = vrot.slane %v1666, 1
      %v1728 = vsel %vm591, %v1725, %v1727
      %v1729 = vrot.slane %v1667, 1
      %v1730 = vrot.slane %v1668, 1
      %v1731 = vsel %vm591, %v1729, %v1730
      %v1732 = vrot.slane %v1669, 1
      %v1733 = vsel %vm591, %v1730, %v1732
      %v1750 = vadd.f32 %v1626, %v1696
      %v1751 = vadd.f32 %v1627, %v1698
      %v1752 = vadd.f32 %v1628, %v1701
      %v1753 = vadd.f32 %v1629, %v1703
      %v1754 = vadd.f32 %v1630, %v1706
      %v1755 = vadd.f32 %v1631, %v1708
      %v1756 = vadd.f32 %v1632, %v1711
      %v1757 = vadd.f32 %v1633, %v1713
      %v1758 = vadd.f32 %v1634, %v1716
      %v1759 = vadd.f32 %v1635, %v1718
      %v1760 = vadd.f32 %v1636, %v1721
      %v1761 = vadd.f32 %v1637, %v1723
      %v1762 = vadd.f32 %v1638, %v1726
      %v1763 = vadd.f32 %v1639, %v1728
      %v1764 = vadd.f32 %v1640, %v1731
      %v1765 = vadd.f32 %v1641, %v1733
      %v1766 = vlaneseq
      %v1767 = vshrl.u32 %v1766, 7
      %v1768 = vsub.s32 2, %v1767
      %v1769 = vrot.slane %v1619, %v1768
      %v1770 = vmul.f32 %v486, %v1769
      %v1771 = vmul.f32 %v487, %v1769
      %v1772 = vmul.f32 %v488, %v1769
      %v1773 = vmul.f32 %v489, %v1769
      %v1774 = vmul.f32 %v490, %v1769
      %v1775 = vmul.f32 %v491, %v1769
      %v1776 = vmul.f32 %v492, %v1769
      %v1777 = vmul.f32 %v493, %v1769
      %v1778 = vmul.f32 %v494, %v1769
      %v1779 = vmul.f32 %v495, %v1769
      %v1780 = vmul.f32 %v496, %v1769
      %v1781 = vmul.f32 %v497, %v1769
      %v1782 = vmul.f32 %v498, %v1769
      %v1783 = vmul.f32 %v499, %v1769
      %v1784 = vmul.f32 %v500, %v1769
      %v1785 = vmul.f32 %v501, %v1769
      %v1786 = vmul.f32 %v502, %v1769
      %v1787 = vmul.f32 %v503, %v1769
      %v1788 = vmul.f32 %v504, %v1769
      %v1789 = vmul.f32 %v505, %v1769
      %v1790 = vmul.f32 %v506, %v1769
      %v1791 = vmul.f32 %v507, %v1769
      %v1792 = vmul.f32 %v508, %v1769
      %v1793 = vmul.f32 %v509, %v1769
      %v1818 = vrot.slane %v1770, 2
      %v1819 = vrot.slane %v1771, 2
      %v1820 = vsel %vm716, %v1818, %v1819
      %v1821 = vrot.slane %v1772, 2
      %v1822 = vsel %vm716, %v1819, %v1821
      %v1823 = vrot.slane %v1773, 2
      %v1824 = vrot.slane %v1774, 2
      %v1825 = vsel %vm716, %v1823, %v1824
      %v1826 = vrot.slane %v1775, 2
      %v1827 = vsel %vm716, %v1824, %v1826
      %v1828 = vrot.slane %v1776, 2
      %v1829 = vrot.slane %v1777, 2
      %v1830 = vsel %vm716, %v1828, %v1829
      %v1831 = vrot.slane %v1778, 2
      %v1832 = vsel %vm716, %v1829, %v1831
      %v1833 = vrot.slane %v1779, 2
      %v1834 = vrot.slane %v1780, 2
      %v1835 = vsel %vm716, %v1833, %v1834
      %v1836 = vrot.slane %v1781, 2
      %v1837 = vsel %vm716, %v1834, %v1836
      %v1838 = vrot.slane %v1782, 2
      %v1839 = vrot.slane %v1783, 2
      %v1840 = vsel %vm716, %v1838, %v1839
      %v1841 = vrot.slane %v1784, 2
      %v1842 = vsel %vm716, %v1839, %v1841
      %v1843 = vrot.slane %v1785, 2
      %v1844 = vrot.slane %v1786, 2
      %v1845 = vsel %vm716, %v1843, %v1844
      %v1846 = vrot.slane %v1787, 2
      %v1847 = vsel %vm716, %v1844, %v1846
      %v1848 = vrot.slane %v1788, 2
      %v1849 = vrot.slane %v1789, 2
      %v1850 = vsel %vm716, %v1848, %v1849
      %v1851 = vrot.slane %v1790, 2
      %v1852 = vsel %vm716, %v1849, %v1851
      %v1853 = vrot.slane %v1791, 2
      %v1854 = vrot.slane %v1792, 2
      %v1855 = vsel %vm716, %v1853, %v1854
      %v1856 = vrot.slane %v1793, 2
      %v1857 = vsel %vm716, %v1854, %v1856
      %v1874 = vadd.f32 %v1750, %v1820
      %v1875 = vadd.f32 %v1751, %v1822
      %v1876 = vadd.f32 %v1752, %v1825
      %v1877 = vadd.f32 %v1753, %v1827
      %v1878 = vadd.f32 %v1754, %v1830
      %v1879 = vadd.f32 %v1755, %v1832
      %v1880 = vadd.f32 %v1756, %v1835
      %v1881 = vadd.f32 %v1757, %v1837
      %v1882 = vadd.f32 %v1758, %v1840
      %v1883 = vadd.f32 %v1759, %v1842
      %v1884 = vadd.f32 %v1760, %v1845
      %v1885 = vadd.f32 %v1761, %v1847
      %v1886 = vadd.f32 %v1762, %v1850
      %v1887 = vadd.f32 %v1763, %v1852
      %v1888 = vadd.f32 %v1764, %v1855
      %v1889 = vadd.f32 %v1765, %v1857
      %v1890 = vlaneseq
      %v1891 = vshrl.u32 %v1890, 7
      %v1892 = vsub.s32 3, %v1891
      %v1893 = vrot.slane %v1619, %v1892
      %v1894 = vmul.f32 %v489, %v1893
      %v1895 = vmul.f32 %v490, %v1893
      %v1896 = vmul.f32 %v492, %v1893
      %v1897 = vmul.f32 %v493, %v1893
      %v1898 = vmul.f32 %v495, %v1893
      %v1899 = vmul.f32 %v496, %v1893
      %v1900 = vmul.f32 %v498, %v1893
      %v1901 = vmul.f32 %v499, %v1893
      %v1902 = vmul.f32 %v501, %v1893
      %v1903 = vmul.f32 %v502, %v1893
      %v1904 = vmul.f32 %v504, %v1893
      %v1905 = vmul.f32 %v505, %v1893
      %v1906 = vmul.f32 %v507, %v1893
      %v1907 = vmul.f32 %v508, %v1893
      %v1908 = vmul.f32 %v510, %v1893
      %v1909 = vmul.f32 %v511, %v1893
      %v1910 = vadd.f32 %v1874, %v1894
      %v1911 = vadd.f32 %v1875, %v1895
      %v1912 = vadd.f32 %v1876, %v1896
      %v1913 = vadd.f32 %v1877, %v1897
      %v1914 = vadd.f32 %v1878, %v1898
      %v1915 = vadd.f32 %v1879, %v1899
      %v1916 = vadd.f32 %v1880, %v1900
      %v1917 = vadd.f32 %v1881, %v1901
      %v1918 = vadd.f32 %v1882, %v1902
      %v1919 = vadd.f32 %v1883, %v1903
      %v1920 = vadd.f32 %v1884, %v1904
      %v1921 = vadd.f32 %v1885, %v1905
      %v1922 = vadd.f32 %v1886, %v1906
      %v1923 = vadd.f32 %v1887, %v1907
      %v1924 = vadd.f32 %v1888, %v1908
      %v1925 = vadd.f32 %v1889, %v1909
      %v1926 = vlaneseq
      %v1927 = vshrl.u32 %v1926, 7
      %v1928 = vsub.s32 4, %v1927
      %v1929 = vrot.slane %v1619, %v1928
      %v1930 = vmul.f32 %v489, %v1929
      %v1931 = vmul.f32 %v490, %v1929
      %v1932 = vmul.f32 %v491, %v1929
      %v1933 = vmul.f32 %v492, %v1929
      %v1934 = vmul.f32 %v493, %v1929
      %v1935 = vmul.f32 %v494, %v1929
      %v1936 = vmul.f32 %v495, %v1929
      %v1937 = vmul.f32 %v496, %v1929
      %v1938 = vmul.f32 %v497, %v1929
      %v1939 = vmul.f32 %v498, %v1929
      %v1940 = vmul.f32 %v499, %v1929
      %v1941 = vmul.f32 %v500, %v1929
      %v1942 = vmul.f32 %v501, %v1929
      %v1943 = vmul.f32 %v502, %v1929
      %v1944 = vmul.f32 %v503, %v1929
      %v1945 = vmul.f32 %v504, %v1929
      %v1946 = vmul.f32 %v505, %v1929
      %v1947 = vmul.f32 %v506, %v1929
      %v1948 = vmul.f32 %v507, %v1929
      %v1949 = vmul.f32 %v508, %v1929
      %v1950 = vmul.f32 %v509, %v1929
      %v1951 = vmul.f32 %v510, %v1929
      %v1952 = vmul.f32 %v511, %v1929
      %v1953 = vmul.f32 %v512, %v1929
      %v1978 = vrot.slane %v1930, 1
      %v1979 = vrot.slane %v1931, 1
      %v1980 = vsel %vm591, %v1978, %v1979
      %v1981 = vrot.slane %v1932, 1
      %v1982 = vsel %vm591, %v1979, %v1981
      %v1983 = vrot.slane %v1933, 1
      %v1984 = vrot.slane %v1934, 1
      %v1985 = vsel %vm591, %v1983, %v1984
      %v1986 = vrot.slane %v1935, 1
      %v1987 = vsel %vm591, %v1984, %v1986
      %v1988 = vrot.slane %v1936, 1
      %v1989 = vrot.slane %v1937, 1
      %v1990 = vsel %vm591, %v1988, %v1989
      %v1991 = vrot.slane %v1938, 1
      %v1992 = vsel %vm591, %v1989, %v1991
      %v1993 = vrot.slane %v1939, 1
      %v1994 = vrot.slane %v1940, 1
      %v1995 = vsel %vm591, %v1993, %v1994
      %v1996 = vrot.slane %v1941, 1
      %v1997 = vsel %vm591, %v1994, %v1996
      %v1998 = vrot.slane %v1942, 1
      %v1999 = vrot.slane %v1943, 1
      %v2000 = vsel %vm591, %v1998, %v1999
      %v2001 = vrot.slane %v1944, 1
      %v2002 = vsel %vm591, %v1999, %v2001
      %v2003 = vrot.slane %v1945, 1
      %v2004 = vrot.slane %v1946, 1
      %v2005 = vsel %vm591, %v2003, %v2004
      %v2006 = vrot.slane %v1947, 1
      %v2007 = vsel %vm591, %v2004, %v2006
      %v2008 = vrot.slane %v1948, 1
      %v2009 = vrot.slane %v1949, 1
      %v2010 = vsel %vm591, %v2008, %v2009
      %v2011 = vrot.slane %v1950, 1
      %v2012 = vsel %vm591, %v2009, %v2011
      %v2013 = vrot.slane %v1951, 1
      %v2014 = vrot.slane %v1952, 1
      %v2015 = vsel %vm591, %v2013, %v2014
      %v2016 = vrot.slane %v1953, 1
      %v2017 = vsel %vm591, %v2014, %v2016
      %v2034 = vadd.f32 %v1910, %v1980
      %v2035 = vadd.f32 %v1911, %v1982
      %v2036 = vadd.f32 %v1912, %v1985
      %v2037 = vadd.f32 %v1913, %v1987
      %v2038 = vadd.f32 %v1914, %v1990
      %v2039 = vadd.f32 %v1915, %v1992
      %v2040 = vadd.f32 %v1916, %v1995
      %v2041 = vadd.f32 %v1917, %v1997
      %v2042 = vadd.f32 %v1918, %v2000
      %v2043 = vadd.f32 %v1919, %v2002
      %v2044 = vadd.f32 %v1920, %v2005
      %v2045 = vadd.f32 %v1921, %v2007
      %v2046 = vadd.f32 %v1922, %v2010
      %v2047 = vadd.f32 %v1923, %v2012
      %v2048 = vadd.f32 %v1924, %v2015
      %v2049 = vadd.f32 %v1925, %v2017
      %v2050 = vlaneseq
      %v2051 = vshrl.u32 %v2050, 7
      %v2052 = vsub.s32 5, %v2051
      %v2053 = vrot.slane %v1619, %v2052
      %v2054 = vmul.f32 %v489, %v2053
      %v2055 = vmul.f32 %v490, %v2053
      %v2056 = vmul.f32 %v491, %v2053
      %v2057 = vmul.f32 %v492, %v2053
      %v2058 = vmul.f32 %v493, %v2053
      %v2059 = vmul.f32 %v494, %v2053
      %v2060 = vmul.f32 %v495, %v2053
      %v2061 = vmul.f32 %v496, %v2053
      %v2062 = vmul.f32 %v497, %v2053
      %v2063 = vmul.f32 %v498, %v2053
      %v2064 = vmul.f32 %v499, %v2053
      %v2065 = vmul.f32 %v500, %v2053
      %v2066 = vmul.f32 %v501, %v2053
      %v2067 = vmul.f32 %v502, %v2053
      %v2068 = vmul.f32 %v503, %v2053
      %v2069 = vmul.f32 %v504, %v2053
      %v2070 = vmul.f32 %v505, %v2053
      %v2071 = vmul.f32 %v506, %v2053
      %v2072 = vmul.f32 %v507, %v2053
      %v2073 = vmul.f32 %v508, %v2053
      %v2074 = vmul.f32 %v509, %v2053
      %v2075 = vmul.f32 %v510, %v2053
      %v2076 = vmul.f32 %v511, %v2053
      %v2077 = vmul.f32 %v512, %v2053
      %v2102 = vrot.slane %v2054, 2
      %v2103 = vrot.slane %v2055, 2
      %v2104 = vsel %vm716, %v2102, %v2103
      %v2105 = vrot.slane %v2056, 2
      %v2106 = vsel %vm716, %v2103, %v2105
      %v2107 = vrot.slane %v2057, 2
      %v2108 = vrot.slane %v2058, 2
      %v2109 = vsel %vm716, %v2107, %v2108
      %v2110 = vrot.slane %v2059, 2
      %v2111 = vsel %vm716, %v2108, %v2110
      %v2112 = vrot.slane %v2060, 2
      %v2113 = vrot.slane %v2061, 2
      %v2114 = vsel %vm716, %v2112, %v2113
      %v2115 = vrot.slane %v2062, 2
      %v2116 = vsel %vm716, %v2113, %v2115
      %v2117 = vrot.slane %v2063, 2
      %v2118 = vrot.slane %v2064, 2
      %v2119 = vsel %vm716, %v2117, %v2118
      %v2120 = vrot.slane %v2065, 2
      %v2121 = vsel %vm716, %v2118, %v2120
      %v2122 = vrot.slane %v2066, 2
      %v2123 = vrot.slane %v2067, 2
      %v2124 = vsel %vm716, %v2122, %v2123
      %v2125 = vrot.slane %v2068, 2
      %v2126 = vsel %vm716, %v2123, %v2125
      %v2127 = vrot.slane %v2069, 2
      %v2128 = vrot.slane %v2070, 2
      %v2129 = vsel %vm716, %v2127, %v2128
      %v2130 = vrot.slane %v2071, 2
      %v2131 = vsel %vm716, %v2128, %v2130
      %v2132 = vrot.slane %v2072, 2
      %v2133 = vrot.slane %v2073, 2
      %v2134 = vsel %vm716, %v2132, %v2133
      %v2135 = vrot.slane %v2074, 2
      %v2136 = vsel %vm716, %v2133, %v2135
      %v2137 = vrot.slane %v2075, 2
      %v2138 = vrot.slane %v2076, 2
      %v2139 = vsel %vm716, %v2137, %v2138
      %v2140 = vrot.slane %v2077, 2
      %v2141 = vsel %vm716, %v2138, %v2140
      %v2158 = vadd.f32 %v2034, %v2104
      %v2159 = vadd.f32 %v2035, %v2106
      %v2160 = vadd.f32 %v2036, %v2109
      %v2161 = vadd.f32 %v2037, %v2111
      %v2162 = vadd.f32 %v2038, %v2114
      %v2163 = vadd.f32 %v2039, %v2116
      %v2164 = vadd.f32 %v2040, %v2119
      %v2165 = vadd.f32 %v2041, %v2121
      %v2166 = vadd.f32 %v2042, %v2124
      %v2167 = vadd.f32 %v2043, %v2126
      %v2168 = vadd.f32 %v2044, %v2129
      %v2169 = vadd.f32 %v2045, %v2131
      %v2170 = vadd.f32 %v2046, %v2134
      %v2171 = vadd.f32 %v2047, %v2136
      %v2172 = vadd.f32 %v2048, %v2139
      %v2173 = vadd.f32 %v2049, %v2141
      %v2174 = vlaneseq
      %v2175 = vshrl.u32 %v2174, 7
      %v2176 = vsub.s32 6, %v2175
      %v2177 = vrot.slane %v1619, %v2176
      %v2178 = vmul.f32 %v492, %v2177
      %v2179 = vmul.f32 %v493, %v2177
      %v2180 = vmul.f32 %v495, %v2177
      %v2181 = vmul.f32 %v496, %v2177
      %v2182 = vmul.f32 %v498, %v2177
      %v2183 = vmul.f32 %v499, %v2177
      %v2184 = vmul.f32 %v501, %v2177
      %v2185 = vmul.f32 %v502, %v2177
      %v2186 = vmul.f32 %v504, %v2177
      %v2187 = vmul.f32 %v505, %v2177
      %v2188 = vmul.f32 %v507, %v2177
      %v2189 = vmul.f32 %v508, %v2177
      %v2190 = vmul.f32 %v510, %v2177
      %v2191 = vmul.f32 %v511, %v2177
      %v2192 = vmul.f32 %v513, %v2177
      %v2193 = vmul.f32 %v514, %v2177
      %v2194 = vadd.f32 %v2158, %v2178
      %v2195 = vadd.f32 %v2159, %v2179
      %v2196 = vadd.f32 %v2160, %v2180
      %v2197 = vadd.f32 %v2161, %v2181
      %v2198 = vadd.f32 %v2162, %v2182
      %v2199 = vadd.f32 %v2163, %v2183
      %v2200 = vadd.f32 %v2164, %v2184
      %v2201 = vadd.f32 %v2165, %v2185
      %v2202 = vadd.f32 %v2166, %v2186
      %v2203 = vadd.f32 %v2167, %v2187
      %v2204 = vadd.f32 %v2168, %v2188
      %v2205 = vadd.f32 %v2169, %v2189
      %v2206 = vadd.f32 %v2170, %v2190
      %v2207 = vadd.f32 %v2171, %v2191
      %v2208 = vadd.f32 %v2172, %v2192
      %v2209 = vadd.f32 %v2173, %v2193
      %v2210 = vlaneseq
      %v2211 = vshrl.u32 %v2210, 7
      %v2212 = vsub.s32 7, %v2211
      %v2213 = vrot.slane %v1619, %v2212
      %v2214 = vmul.f32 %v492, %v2213
      %v2215 = vmul.f32 %v493, %v2213
      %v2216 = vmul.f32 %v494, %v2213
      %v2217 = vmul.f32 %v495, %v2213
      %v2218 = vmul.f32 %v496, %v2213
      %v2219 = vmul.f32 %v497, %v2213
      %v2220 = vmul.f32 %v498, %v2213
      %v2221 = vmul.f32 %v499, %v2213
      %v2222 = vmul.f32 %v500, %v2213
      %v2223 = vmul.f32 %v501, %v2213
      %v2224 = vmul.f32 %v502, %v2213
      %v2225 = vmul.f32 %v503, %v2213
      %v2226 = vmul.f32 %v504, %v2213
      %v2227 = vmul.f32 %v505, %v2213
      %v2228 = vmul.f32 %v506, %v2213
      %v2229 = vmul.f32 %v507, %v2213
      %v2230 = vmul.f32 %v508, %v2213
      %v2231 = vmul.f32 %v509, %v2213
      %v2232 = vmul.f32 %v510, %v2213
      %v2233 = vmul.f32 %v511, %v2213
      %v2234 = vmul.f32 %v512, %v2213
      %v2235 = vmul.f32 %v513, %v2213
      %v2236 = vmul.f32 %v514, %v2213
      %v2237 = vmul.f32 %v515, %v2213
      %v2262 = vrot.slane %v2214, 1
      %v2263 = vrot.slane %v2215, 1
      %v2264 = vsel %vm591, %v2262, %v2263
      %v2265 = vrot.slane %v2216, 1
      %v2266 = vsel %vm591, %v2263, %v2265
      %v2267 = vrot.slane %v2217, 1
      %v2268 = vrot.slane %v2218, 1
      %v2269 = vsel %vm591, %v2267, %v2268
      %v2270 = vrot.slane %v2219, 1
      %v2271 = vsel %vm591, %v2268, %v2270
      %v2272 = vrot.slane %v2220, 1
      %v2273 = vrot.slane %v2221, 1
      %v2274 = vsel %vm591, %v2272, %v2273
      %v2275 = vrot.slane %v2222, 1
      %v2276 = vsel %vm591, %v2273, %v2275
      %v2277 = vrot.slane %v2223, 1
      %v2278 = vrot.slane %v2224, 1
      %v2279 = vsel %vm591, %v2277, %v2278
      %v2280 = vrot.slane %v2225, 1
      %v2281 = vsel %vm591, %v2278, %v2280
      %v2282 = vrot.slane %v2226, 1
      %v2283 = vrot.slane %v2227, 1
      %v2284 = vsel %vm591, %v2282, %v2283
      %v2285 = vrot.slane %v2228, 1
      %v2286 = vsel %vm591, %v2283, %v2285
      %v2287 = vrot.slane %v2229, 1
      %v2288 = vrot.slane %v2230, 1
      %v2289 = vsel %vm591, %v2287, %v2288
      %v2290 = vrot.slane %v2231, 1
      %v2291 = vsel %vm591, %v2288, %v2290
      %v2292 = vrot.slane %v2232, 1
      %v2293 = vrot.slane %v2233, 1
      %v2294 = vsel %vm591, %v2292, %v2293
      %v2295 = vrot.slane %v2234, 1
      %v2296 = vsel %vm591, %v2293, %v2295
      %v2297 = vrot.slane %v2235, 1
      %v2298 = vrot.slane %v2236, 1
      %v2299 = vsel %vm591, %v2297, %v2298
      %v2300 = vrot.slane %v2237, 1
      %v2301 = vsel %vm591, %v2298, %v2300
      %v2318 = vadd.f32 %v2194, %v2264
      %v2319 = vadd.f32 %v2195, %v2266
      %v2320 = vadd.f32 %v2196, %v2269
      %v2321 = vadd.f32 %v2197, %v2271
      %v2322 = vadd.f32 %v2198, %v2274
      %v2323 = vadd.f32 %v2199, %v2276
      %v2324 = vadd.f32 %v2200, %v2279
      %v2325 = vadd.f32 %v2201, %v2281
      %v2326 = vadd.f32 %v2202, %v2284
      %v2327 = vadd.f32 %v2203, %v2286
      %v2328 = vadd.f32 %v2204, %v2289
      %v2329 = vadd.f32 %v2205, %v2291
      %v2330 = vadd.f32 %v2206, %v2294
      %v2331 = vadd.f32 %v2207, %v2296
      %v2332 = vadd.f32 %v2208, %v2299
      %v2333 = vadd.f32 %v2209, %v2301
      %v2334 = vlaneseq
      %v2335 = vshrl.u32 %v2334, 7
      %v2336 = vsub.s32 0, %v2335
      %v2337 = vrot.slane %v1620, %v2336
      %v2338 = vmul.f32 %v492, %v2337
      %v2339 = vmul.f32 %v493, %v2337
      %v2340 = vmul.f32 %v494, %v2337
      %v2341 = vmul.f32 %v495, %v2337
      %v2342 = vmul.f32 %v496, %v2337
      %v2343 = vmul.f32 %v497, %v2337
      %v2344 = vmul.f32 %v498, %v2337
      %v2345 = vmul.f32 %v499, %v2337
      %v2346 = vmul.f32 %v500, %v2337
      %v2347 = vmul.f32 %v501, %v2337
      %v2348 = vmul.f32 %v502, %v2337
      %v2349 = vmul.f32 %v503, %v2337
      %v2350 = vmul.f32 %v504, %v2337
      %v2351 = vmul.f32 %v505, %v2337
      %v2352 = vmul.f32 %v506, %v2337
      %v2353 = vmul.f32 %v507, %v2337
      %v2354 = vmul.f32 %v508, %v2337
      %v2355 = vmul.f32 %v509, %v2337
      %v2356 = vmul.f32 %v510, %v2337
      %v2357 = vmul.f32 %v511, %v2337
      %v2358 = vmul.f32 %v512, %v2337
      %v2359 = vmul.f32 %v513, %v2337
      %v2360 = vmul.f32 %v514, %v2337
      %v2361 = vmul.f32 %v515, %v2337
      %v2386 = vrot.slane %v2338, 2
      %v2387 = vrot.slane %v2339, 2
      %v2388 = vsel %vm716, %v2386, %v2387
      %v2389 = vrot.slane %v2340, 2
      %v2390 = vsel %vm716, %v2387, %v2389
      %v2391 = vrot.slane %v2341, 2
      %v2392 = vrot.slane %v2342, 2
      %v2393 = vsel %vm716, %v2391, %v2392
      %v2394 = vrot.slane %v2343, 2
      %v2395 = vsel %vm716, %v2392, %v2394
      %v2396 = vrot.slane %v2344, 2
      %v2397 = vrot.slane %v2345, 2
      %v2398 = vsel %vm716, %v2396, %v2397
      %v2399 = vrot.slane %v2346, 2
      %v2400 = vsel %vm716, %v2397, %v2399
      %v2401 = vrot.slane %v2347, 2
      %v2402 = vrot.slane %v2348, 2
      %v2403 = vsel %vm716, %v2401, %v2402
      %v2404 = vrot.slane %v2349, 2
      %v2405 = vsel %vm716, %v2402, %v2404
      %v2406 = vrot.slane %v2350, 2
      %v2407 = vrot.slane %v2351, 2
      %v2408 = vsel %vm716, %v2406, %v2407
      %v2409 = vrot.slane %v2352, 2
      %v2410 = vsel %vm716, %v2407, %v2409
      %v2411 = vrot.slane %v2353, 2
      %v2412 = vrot.slane %v2354, 2
      %v2413 = vsel %vm716, %v2411, %v2412
      %v2414 = vrot.slane %v2355, 2
      %v2415 = vsel %vm716, %v2412, %v2414
      %v2416 = vrot.slane %v2356, 2
      %v2417 = vrot.slane %v2357, 2
      %v2418 = vsel %vm716, %v2416, %v2417
      %v2419 = vrot.slane %v2358, 2
      %v2420 = vsel %vm716, %v2417, %v2419
      %v2421 = vrot.slane %v2359, 2
      %v2422 = vrot.slane %v2360, 2
      %v2423 = vsel %vm716, %v2421, %v2422
      %v2424 = vrot.slane %v2361, 2
      %v2425 = vsel %vm716, %v2422, %v2424
      %v2442 = vadd.f32 %v2318, %v2388
      %v2443 = vadd.f32 %v2319, %v2390
      %v2444 = vadd.f32 %v2320, %v2393
      %v2445 = vadd.f32 %v2321, %v2395
      %v2446 = vadd.f32 %v2322, %v2398
      %v2447 = vadd.f32 %v2323, %v2400
      %v2448 = vadd.f32 %v2324, %v2403
      %v2449 = vadd.f32 %v2325, %v2405
      %v2450 = vadd.f32 %v2326, %v2408
      %v2451 = vadd.f32 %v2327, %v2410
      %v2452 = vadd.f32 %v2328, %v2413
      %v2453 = vadd.f32 %v2329, %v2415
      %v2454 = vadd.f32 %v2330, %v2418
      %v2455 = vadd.f32 %v2331, %v2420
      %v2456 = vadd.f32 %v2332, %v2423
      %v2457 = vadd.f32 %v2333, %v2425
      %v2459 = vlaneseq
      %v2460 = vshrl.u32 %v2459, 7
      %v2461 = vsub.s32 0, %v2460
      %v2462 = vrot.slane %v1621, %v2461
      %v2464 = vadd.f32 %v2442, %v2462
      %v2465 = vadd.f32 %v2443, %v2462
      %v2466 = vadd.f32 %v2444, %v2462
      %v2467 = vadd.f32 %v2445, %v2462
      %v2468 = vadd.f32 %v2446, %v2462
      %v2469 = vadd.f32 %v2447, %v2462
      %v2470 = vadd.f32 %v2448, %v2462
      %v2471 = vadd.f32 %v2449, %v2462
      %v2472 = vadd.f32 %v2450, %v2462
      %v2473 = vadd.f32 %v2451, %v2462
      %v2474 = vadd.f32 %v2452, %v2462
      %v2475 = vadd.f32 %v2453, %v2462
      %v2476 = vadd.f32 %v2454, %v2462
      %v2477 = vadd.f32 %v2455, %v2462
      %v2478 = vadd.f32 %v2456, %v2462
      %v2479 = vadd.f32 %v2457, %v2462
      %v2480 = vmul.f32 %v2464, %v2464
      %v2481 = vmul.f32 %v2465, %v2465
      %v2482 = vmul.f32 %v2466, %v2466
      %v2483 = vmul.f32 %v2467, %v2467
      %v2484 = vmul.f32 %v2468, %v2468
      %v2485 = vmul.f32 %v2469, %v2469
      %v2486 = vmul.f32 %v2470, %v2470
      %v2487 = vmul.f32 %v2471, %v2471
      %v2488 = vmul.f32 %v2472, %v2472
      %v2489 = vmul.f32 %v2473, %v2473
      %v2490 = vmul.f32 %v2474, %v2474
      %v2491 = vmul.f32 %v2475, %v2475
      %v2492 = vmul.f32 %v2476, %v2476
      %v2493 = vmul.f32 %v2477, %v2477
      %v2494 = vmul.f32 %v2478, %v2478
      %v2495 = vmul.f32 %v2479, %v2479
      %v2496 = vmul.f32 %v2464, %v2480
      %v2497 = vmul.f32 %v2465, %v2481
      %v2498 = vmul.f32 %v2466, %v2482
      %v2499 = vmul.f32 %v2467, %v2483
      %v2500 = vmul.f32 %v2468, %v2484
      %v2501 = vmul.f32 %v2469, %v2485
      %v2502 = vmul.f32 %v2470, %v2486
      %v2503 = vmul.f32 %v2471, %v2487
      %v2504 = vmul.f32 %v2472, %v2488
      %v2505 = vmul.f32 %v2473, %v2489
      %v2506 = vmul.f32 %v2474, %v2490
      %v2507 = vmul.f32 %v2475, %v2491
      %v2508 = vmul.f32 %v2476, %v2492
      %v2509 = vmul.f32 %v2477, %v2493
      %v2510 = vmul.f32 %v2478, %v2494
      %v2511 = vmul.f32 %v2479, %v2495
      %v2512 = vmul.f32 %v2496, 0.044715
      %v2513 = vmul.f32 %v2497, 0.044715
      %v2514 = vmul.f32 %v2498, 0.044715
      %v2515 = vmul.f32 %v2499, 0.044715
      %v2516 = vmul.f32 %v2500, 0.044715
      %v2517 = vmul.f32 %v2501, 0.044715
      %v2518 = vmul.f32 %v2502, 0.044715
      %v2519 = vmul.f32 %v2503, 0.044715
      %v2520 = vmul.f32 %v2504, 0.044715
      %v2521 = vmul.f32 %v2505, 0.044715
      %v2522 = vmul.f32 %v2506, 0.044715
      %v2523 = vmul.f32 %v2507, 0.044715
      %v2524 = vmul.f32 %v2508, 0.044715
      %v2525 = vmul.f32 %v2509, 0.044715
      %v2526 = vmul.f32 %v2510, 0.044715
      %v2527 = vmul.f32 %v2511, 0.044715
      %v2528 = vadd.f32 %v2464, %v2512
      %v2529 = vadd.f32 %v2465, %v2513
      %v2530 = vadd.f32 %v2466, %v2514
      %v2531 = vadd.f32 %v2467, %v2515
      %v2532 = vadd.f32 %v2468, %v2516
      %v2533 = vadd.f32 %v2469, %v2517
      %v2534 = vadd.f32 %v2470, %v2518
      %v2535 = vadd.f32 %v2471, %v2519
      %v2536 = vadd.f32 %v2472, %v2520
      %v2537 = vadd.f32 %v2473, %v2521
      %v2538 = vadd.f32 %v2474, %v2522
      %v2539 = vadd.f32 %v2475, %v2523
      %v2540 = vadd.f32 %v2476, %v2524
      %v2541 = vadd.f32 %v2477, %v2525
      %v2542 = vadd.f32 %v2478, %v2526
      %v2543 = vadd.f32 %v2479, %v2527
      %v2544 = vmul.f32 %v2528, 0.7978846
      %v2545 = vmul.f32 %v2529, 0.7978846
      %v2546 = vmul.f32 %v2530, 0.7978846
      %v2547 = vmul.f32 %v2531, 0.7978846
      %v2548 = vmul.f32 %v2532, 0.7978846
      %v2549 = vmul.f32 %v2533, 0.7978846
      %v2550 = vmul.f32 %v2534, 0.7978846
      %v2551 = vmul.f32 %v2535, 0.7978846
      %v2552 = vmul.f32 %v2536, 0.7978846
      %v2553 = vmul.f32 %v2537, 0.7978846
      %v2554 = vmul.f32 %v2538, 0.7978846
      %v2555 = vmul.f32 %v2539, 0.7978846
      %v2556 = vmul.f32 %v2540, 0.7978846
      %v2557 = vmul.f32 %v2541, 0.7978846
      %v2558 = vmul.f32 %v2542, 0.7978846
      %v2559 = vmul.f32 %v2543, 0.7978846
      %v2560 = vtanh.pop %v2544
      %v2561 = vtanh.pop %v2545
      %v2562 = vtanh.pop %v2546
      %v2563 = vtanh.pop %v2547
      %v2564 = vtanh.pop %v2548
      %v2565 = vtanh.pop %v2549
      %v2566 = vtanh.pop %v2550
      %v2567 = vtanh.pop %v2551
      %v2568 = vtanh.pop %v2552
      %v2569 = vtanh.pop %v2553
      %v2570 = vtanh.pop %v2554
      %v2571 = vtanh.pop %v2555
      %v2572 = vtanh.pop %v2556
      %v2573 = vtanh.pop %v2557
      %v2574 = vtanh.pop %v2558
      %v2575 = vtanh.pop %v2559
      %v2576 = vadd.f32 %v2560, 1.0
      %v2577 = vadd.f32 %v2561, 1.0
      %v2578 = vadd.f32 %v2562, 1.0
      %v2579 = vadd.f32 %v2563, 1.0
      %v2580 = vadd.f32 %v2564, 1.0
      %v2581 = vadd.f32 %v2565, 1.0
      %v2582 = vadd.f32 %v2566, 1.0
      %v2583 = vadd.f32 %v2567, 1.0
      %v2584 = vadd.f32 %v2568, 1.0
      %v2585 = vadd.f32 %v2569, 1.0
      %v2586 = vadd.f32 %v2570, 1.0
      %v2587 = vadd.f32 %v2571, 1.0
      %v2588 = vadd.f32 %v2572, 1.0
      %v2589 = vadd.f32 %v2573, 1.0
      %v2590 = vadd.f32 %v2574, 1.0
      %v2591 = vadd.f32 %v2575, 1.0
      %v2592 = vmul.f32 %v2576, 0.5
      %v2593 = vmul.f32 %v2577, 0.5
      %v2594 = vmul.f32 %v2578, 0.5
      %v2595 = vmul.f32 %v2579, 0.5
      %v2596 = vmul.f32 %v2580, 0.5
      %v2597 = vmul.f32 %v2581, 0.5
      %v2598 = vmul.f32 %v2582, 0.5
      %v2599 = vmul.f32 %v2583, 0.5
      %v2600 = vmul.f32 %v2584, 0.5
      %v2601 = vmul.f32 %v2585, 0.5
      %v2602 = vmul.f32 %v2586, 0.5
      %v2603 = vmul.f32 %v2587, 0.5
      %v2604 = vmul.f32 %v2588, 0.5
      %v2605 = vmul.f32 %v2589, 0.5
      %v2606 = vmul.f32 %v2590, 0.5
      %v2607 = vmul.f32 %v2591, 0.5
      %v2608 = vmul.f32 %v2464, %v2592
      %v2609 = vmul.f32 %v2465, %v2593
      %v2610 = vmul.f32 %v2466, %v2594
      %v2611 = vmul.f32 %v2467, %v2595
      %v2612 = vmul.f32 %v2468, %v2596
      %v2613 = vmul.f32 %v2469, %v2597
      %v2614 = vmul.f32 %v2470, %v2598
      %v2615 = vmul.f32 %v2471, %v2599
      %v2616 = vmul.f32 %v2472, %v2600
      %v2617 = vmul.f32 %v2473, %v2601
      %v2618 = vmul.f32 %v2474, %v2602
      %v2619 = vmul.f32 %v2475, %v2603
      %v2620 = vmul.f32 %v2476, %v2604
      %v2621 = vmul.f32 %v2477, %v2605
      %v2622 = vmul.f32 %v2478, %v2606
      %v2623 = vmul.f32 %v2479, %v2607
      %v2624 = vxor.u32 %v2608, 2147483648
      %v2625 = vxor.u32 %v2609, 2147483648
      %v2626 = vxor.u32 %v2610, 2147483648
      %v2627 = vxor.u32 %v2611, 2147483648
      %v2628 = vxor.u32 %v2612, 2147483648
      %v2629 = vxor.u32 %v2613, 2147483648
      %v2630 = vxor.u32 %v2614, 2147483648
      %v2631 = vxor.u32 %v2615, 2147483648
      %v2632 = vxor.u32 %v2616, 2147483648
      %v2633 = vxor.u32 %v2617, 2147483648
      %v2634 = vxor.u32 %v2618, 2147483648
      %v2635 = vxor.u32 %v2619, 2147483648
      %v2636 = vxor.u32 %v2620, 2147483648
      %v2637 = vxor.u32 %v2621, 2147483648
      %v2638 = vxor.u32 %v2622, 2147483648
      %v2639 = vxor.u32 %v2623, 2147483648
      %v2640 = vmul.f32 %v2624, 1.442695
      %v2641 = vpow.pop %v2640
      %v2642 = vmul.f32 %v2625, 1.442695
      %v2643 = vpow.pop %v2642
      %v2644 = vmul.f32 %v2626, 1.442695
      %v2645 = vpow.pop %v2644
      %v2646 = vmul.f32 %v2627, 1.442695
      %v2647 = vpow.pop %v2646
      %v2648 = vmul.f32 %v2628, 1.442695
      %v2649 = vpow.pop %v2648
      %v2650 = vmul.f32 %v2629, 1.442695
      %v2651 = vpow.pop %v2650
      %v2652 = vmul.f32 %v2630, 1.442695
      %v2653 = vpow.pop %v2652
      %v2654 = vmul.f32 %v2631, 1.442695
      %v2655 = vpow.pop %v2654
      %v2656 = vmul.f32 %v2632, 1.442695
      %v2657 = vpow.pop %v2656
      %v2658 = vmul.f32 %v2633, 1.442695
      %v2659 = vpow.pop %v2658
      %v2660 = vmul.f32 %v2634, 1.442695
      %v2661 = vpow.pop %v2660
      %v2662 = vmul.f32 %v2635, 1.442695
      %v2663 = vpow.pop %v2662
      %v2664 = vmul.f32 %v2636, 1.442695
      %v2665 = vpow.pop %v2664
      %v2666 = vmul.f32 %v2637, 1.442695
      %v2667 = vpow.pop %v2666
      %v2668 = vmul.f32 %v2638, 1.442695
      %v2669 = vpow.pop %v2668
      %v2670 = vmul.f32 %v2639, 1.442695
      %v2671 = vpow.pop %v2670
      %v2672 = vadd.f32 %v2641, 1.0
      %v2673 = vadd.f32 %v2643, 1.0
      %v2674 = vadd.f32 %v2645, 1.0
      %v2675 = vadd.f32 %v2647, 1.0
      %v2676 = vadd.f32 %v2649, 1.0
      %v2677 = vadd.f32 %v2651, 1.0
      %v2678 = vadd.f32 %v2653, 1.0
      %v2679 = vadd.f32 %v2655, 1.0
      %v2680 = vadd.f32 %v2657, 1.0
      %v2681 = vadd.f32 %v2659, 1.0
      %v2682 = vadd.f32 %v2661, 1.0
      %v2683 = vadd.f32 %v2663, 1.0
      %v2684 = vadd.f32 %v2665, 1.0
      %v2685 = vadd.f32 %v2667, 1.0
      %v2686 = vadd.f32 %v2669, 1.0
      %v2687 = vadd.f32 %v2671, 1.0
      %v2688 = vrcp.pop %v2672
      %v2689 = vmul.f32 1.0, %v2688
      %v2690 = vrcp.pop %v2673
      %v2691 = vmul.f32 1.0, %v2690
      %v2692 = vrcp.pop %v2674
      %v2693 = vmul.f32 1.0, %v2692
      %v2694 = vrcp.pop %v2675
      %v2695 = vmul.f32 1.0, %v2694
      %v2696 = vrcp.pop %v2676
      %v2697 = vmul.f32 1.0, %v2696
      %v2698 = vrcp.pop %v2677
      %v2699 = vmul.f32 1.0, %v2698
      %v2700 = vrcp.pop %v2678
      %v2701 = vmul.f32 1.0, %v2700
      %v2702 = vrcp.pop %v2679
      %v2703 = vmul.f32 1.0, %v2702
      %v2704 = vrcp.pop %v2680
      %v2705 = vmul.f32 1.0, %v2704
      %v2706 = vrcp.pop %v2681
      %v2707 = vmul.f32 1.0, %v2706
      %v2708 = vrcp.pop %v2682
      %v2709 = vmul.f32 1.0, %v2708
      %v2710 = vrcp.pop %v2683
      %v2711 = vmul.f32 1.0, %v2710
      %v2712 = vrcp.pop %v2684
      %v2713 = vmul.f32 1.0, %v2712
      %v2714 = vrcp.pop %v2685
      %v2715 = vmul.f32 1.0, %v2714
      %v2716 = vrcp.pop %v2686
      %v2717 = vmul.f32 1.0, %v2716
      %v2718 = vrcp.pop %v2687
      %v2719 = vmul.f32 1.0, %v2718
      %s2720 = sadd.s32 %s452, 1
      %s2721 = smul.u32 %s2720, 16
      %s2722 = scalar_lea.vmem %s423, %s2721
      %v2723 = vld [vmem:[%s2722] sm:$0xff]
      %v2724 = vld [vmem:[%s2722 + $0x8] sm:$0xff]
      %v2725 = vld [vmem:[%s2722 + $0x10] sm:$0xff]
      %v2726 = vld [vmem:[%s2722 + $0x18] sm:$0xff]
      %v2727 = vld [vmem:[%s2722 + $0x20] sm:$0xff]
      %v2728 = vld [vmem:[%s2722 + $0x28] sm:$0xff]
      %v2729 = vld [vmem:[%s2722 + $0x30] sm:$0xff]
      %v2730 = vld [vmem:[%s2722 + $0x38] sm:$0xff]
      %v2731 = vld [vmem:[%s2722 + $0x40] sm:$0xff]
      %v2732 = vld [vmem:[%s2722 + $0x48] sm:$0xff]
      %v2733 = vld [vmem:[%s2722 + $0x50] sm:$0xff]
      %v2734 = vld [vmem:[%s2722 + $0x58] sm:$0xff]
      %v2735 = vld [vmem:[%s2722 + $0x60] sm:$0xff]
      %v2736 = vld [vmem:[%s2722 + $0x68] sm:$0xff]
      %v2737 = vld [vmem:[%s2722 + $0x70] sm:$0xff]
      %v2738 = vld [vmem:[%s2722 + $0x78] sm:$0xff]
      %s2739 = smul.u32 %s2720, 2
      %s2740 = smul.addr %s2739, 4
      %s2741 = scalar_lea.vmem %s428, %s2740
      %v2742 = vld [vmem:[%s2741] sm:$0xf]
      %v2743 = vld [vmem:[%s2741 + $0x4] sm:$0xf]
      %v2744 = vld [vmem:[%s2741 + $0x8] sm:$0xf]
      %v2745 = vld [vmem:[%s2741 + $0xc] sm:$0xf]
      %v2746 = vld [vmem:[%s2741 + $0x10] sm:$0xf]
      %v2747 = vld [vmem:[%s2741 + $0x14] sm:$0xf]
      %v2748 = vld [vmem:[%s2741 + $0x18] sm:$0xf]
      %v2749 = vld [vmem:[%s2741 + $0x1c] sm:$0xf]
      %v2750 = vld [vmem:[%s2741 + $0x20] sm:$0xf]
      %v2751 = vld [vmem:[%s2741 + $0x24] sm:$0xf]
      %v2752 = vld [vmem:[%s2741 + $0x28] sm:$0xf]
      %v2753 = vld [vmem:[%s2741 + $0x2c] sm:$0xf]
      %v2754 = vld [vmem:[%s2741 + $0x30] sm:$0xf]
      %v2755 = vld [vmem:[%s2741 + $0x34] sm:$0xf]
      %v2756 = vld [vmem:[%s2741 + $0x38] sm:$0xf]
      %v2757 = vld [vmem:[%s2741 + $0x3c] sm:$0xf]
      %v2758 = vunpack.c.l.bf16 %v2742
      %v2759 = vunpack.c.l.bf16 %v2743
      %v2760 = vunpack.c.l.bf16 %v2744
      %v2761 = vunpack.c.l.bf16 %v2745
      %v2762 = vunpack.c.l.bf16 %v2746
      %v2763 = vunpack.c.l.bf16 %v2747
      %v2764 = vunpack.c.l.bf16 %v2748
      %v2765 = vunpack.c.l.bf16 %v2749
      %v2766 = vunpack.c.l.bf16 %v2750
      %v2767 = vunpack.c.l.bf16 %v2751
      %v2768 = vunpack.c.l.bf16 %v2752
      %v2769 = vunpack.c.l.bf16 %v2753
      %v2770 = vunpack.c.l.bf16 %v2754
      %v2771 = vunpack.c.l.bf16 %v2755
      %v2772 = vunpack.c.l.bf16 %v2756
      %v2773 = vunpack.c.l.bf16 %v2757
      %v2774 = vmul.f32 %v2723, %v1588
      %v2775 = vmul.f32 %v2724, %v1590
      %v2776 = vmul.f32 %v2725, %v1592
      %v2777 = vmul.f32 %v2726, %v1594
      %v2778 = vmul.f32 %v2727, %v1596
      %v2779 = vmul.f32 %v2728, %v1598
      %v2780 = vmul.f32 %v2729, %v1600
      %v2781 = vmul.f32 %v2730, %v1602
      %v2782 = vmul.f32 %v2731, %v1604
      %v2783 = vmul.f32 %v2732, %v1606
      %v2784 = vmul.f32 %v2733, %v1608
      %v2785 = vmul.f32 %v2734, %v1610
      %v2786 = vmul.f32 %v2735, %v1612
      %v2787 = vmul.f32 %v2736, %v1614
      %v2788 = vmul.f32 %v2737, %v1616
      %v2789 = vmul.f32 %v2738, %v1618
      %2806 = vrot.lane.b32.xlu0 %v2758, 32
      %v2807 = vpop.permute.xlu0 %2806
      %2808 = vrot.lane.b32.xlu0 %v2759, 32
      %v2809 = vpop.permute.xlu0 %2808
      %2810 = vrot.lane.b32.xlu0 %v2760, 32
      %v2811 = vpop.permute.xlu0 %2810
      %2812 = vrot.lane.b32.xlu0 %v2761, 32
      %v2813 = vpop.permute.xlu0 %2812
      %2814 = vrot.lane.b32.xlu0 %v2762, 32
      %v2815 = vpop.permute.xlu0 %2814
      %2816 = vrot.lane.b32.xlu0 %v2763, 32
      %v2817 = vpop.permute.xlu0 %2816
      %2818 = vrot.lane.b32.xlu0 %v2764, 32
      %v2819 = vpop.permute.xlu0 %2818
      %2820 = vrot.lane.b32.xlu0 %v2765, 32
      %v2821 = vpop.permute.xlu0 %2820
      %2822 = vrot.lane.b32.xlu0 %v2766, 32
      %v2823 = vpop.permute.xlu0 %2822
      %2824 = vrot.lane.b32.xlu0 %v2767, 32
      %v2825 = vpop.permute.xlu0 %2824
      %2826 = vrot.lane.b32.xlu0 %v2768, 32
      %v2827 = vpop.permute.xlu0 %2826
      %2828 = vrot.lane.b32.xlu0 %v2769, 32
      %v2829 = vpop.permute.xlu0 %2828
      %2830 = vrot.lane.b32.xlu0 %v2770, 32
      %v2831 = vpop.permute.xlu0 %2830
      %2832 = vrot.lane.b32.xlu0 %v2771, 32
      %v2833 = vpop.permute.xlu0 %2832
      %2834 = vrot.lane.b32.xlu0 %v2772, 32
      %v2835 = vpop.permute.xlu0 %2834
      %2836 = vrot.lane.b32.xlu0 %v2773, 32
      %v2837 = vpop.permute.xlu0 %2836
      %vm2854 = vcmask 261120
      %v2855 = vsel %vm2854, %v2774, %v2807
      %v2856 = vsel %vm2854, %v2775, %v2809
      %v2857 = vsel %vm2854, %v2776, %v2811
      %v2858 = vsel %vm2854, %v2777, %v2813
      %v2859 = vsel %vm2854, %v2778, %v2815
      %v2860 = vsel %vm2854, %v2779, %v2817
      %v2861 = vsel %vm2854, %v2780, %v2819
      %v2862 = vsel %vm2854, %v2781, %v2821
      %v2863 = vsel %vm2854, %v2782, %v2823
      %v2864 = vsel %vm2854, %v2783, %v2825
      %v2865 = vsel %vm2854, %v2784, %v2827
      %v2866 = vsel %vm2854, %v2785, %v2829
      %v2867 = vsel %vm2854, %v2786, %v2831
      %v2868 = vsel %vm2854, %v2787, %v2833
      %v2869 = vsel %vm2854, %v2788, %v2835
      %v2870 = vsel %vm2854, %v2789, %v2837
      %v2871 = vpack.c.bf16 %v2856, %v2855
      %v2872 = vpack.c.bf16 %v2858, %v2857
      %v2873 = vpack.c.bf16 %v2860, %v2859
      %v2874 = vpack.c.bf16 %v2862, %v2861
      %v2875 = vpack.c.bf16 %v2864, %v2863
      %v2876 = vpack.c.bf16 %v2866, %v2865
      %v2877 = vpack.c.bf16 %v2868, %v2867
      %v2878 = vpack.c.bf16 %v2870, %v2869
      %v2879 = vld [vmem:[%s7] sm:$0xf]
      %v2880 = vld [vmem:[%s7 + $0x4] sm:$0xf]
      %v2881 = vld [vmem:[%s7 + $0x8] sm:$0xf]
      %v2882 = vld [vmem:[%s7 + $0xc] sm:$0xf]
      %v2883 = vld [vmem:[%s7 + $0x10] sm:$0xf]
      %v2884 = vld [vmem:[%s7 + $0x14] sm:$0xf]
      %v2885 = vld [vmem:[%s7 + $0x18] sm:$0xf]
      %v2886 = vld [vmem:[%s7 + $0x1c] sm:$0xf]
      %v2887 = vld [vmem:[%s8] sm:$0x1]
      %v2889 = vlaneseq
      %v2890 = vshrl.u32 %v2889, 7
      %v2891 = vsub.s32 0, %v2890
      %v2892 = vrot.slane %v2887, %v2891
      %v2902 = vunpack.c.l.b16 %v2879
      %v2903 = vunpack.c.l.b16 %v2880
      %v2904 = vunpack.c.l.b16 %v2881
      %v2905 = vunpack.c.l.b16 %v2882
      %v2906 = vunpack.c.l.b16 %v2883
      %v2907 = vunpack.c.l.b16 %v2884
      %v2908 = vunpack.c.l.b16 %v2885
      %v2909 = vunpack.c.l.b16 %v2886
      %v2910 = vpack.c.b16 %v2903, %v2902
      %v2911 = vpack.c.b16 %v2905, %v2904
      %v2912 = vpack.c.b16 %v2907, %v2906
      %v2913 = vpack.c.b16 %v2909, %v2908
      %vm2918 = vcmask 523264
      %v2920 = vsel %vm2918, %v2871, 0
      %v2923 = vsel %vm2918, %v2872, 0
      %v2926 = vsel %vm2918, %v2873, 0
      %v2929 = vsel %vm2918, %v2874, 0
      %v2932 = vsel %vm2918, %v2875, 0
      %v2935 = vsel %vm2918, %v2876, 0
      %v2938 = vsel %vm2918, %v2877, 0
      %v2941 = vsel %vm2918, %v2878, 0
      %2943 = vmatprep.subr.bf16.mxu0 0
      %2944 = vmatpush1.bf16.msra.mxu0 %v2910
      %2945 = vmatprep.subr.bf16.mxu0 0
      %2946 = vmatpush1.bf16.msra.mxu0 %v2911
      %2947 = vmatprep.subr.bf16.mxu0 0
      %2948 = vmatpush1.bf16.msra.mxu0 %v2912
      %2949 = vmatprep.subr.bf16.mxu0 0
      %2950 = vmatpush1.bf16.msra.mxu0 %v2913
      %2951 = vmatprep.subr.bf16.mxu0 0
      %2952 = vmatpush1.bf16.msra.mxu0 0
      %2953 = vmatprep.subr.bf16.mxu0 0
      %2954 = vmatpush1.bf16.msra.mxu0 0
      %2955 = vmatprep.subr.bf16.mxu0 0
      %2956 = vmatpush1.bf16.msra.mxu0 0
      %2957 = vmatprep.subr.bf16.mxu0 0
      %2958 = vmatpush1.bf16.msra.mxu0 0
      %2959 = vmatprep.subr.bf16.mxu0 0
      %2960 = vmatpush1.bf16.msra.mxu0 0
      %2961 = vmatprep.subr.bf16.mxu0 0
      %2962 = vmatpush1.bf16.msra.mxu0 0
      %2963 = vmatprep.subr.bf16.mxu0 0
      %2964 = vmatpush1.bf16.msra.mxu0 0
      %2965 = vmatprep.subr.bf16.mxu0 0
      %2966 = vmatpush1.bf16.msra.mxu0 0
      %2967 = vmatprep.subr.bf16.mxu0 0
      %2968 = vmatpush1.bf16.msra.mxu0 0
      %2969 = vmatprep.subr.bf16.mxu0 0
      %2970 = vmatpush1.bf16.msra.mxu0 0
      %2971 = vmatprep.subr.bf16.mxu0 0
      %2972 = vmatpush1.bf16.msra.mxu0 0
      %2973 = vmatprep.subr.bf16.mxu0 0
      %2974 = vmatpush1.bf16.msra.mxu0 0
      %2975 = vmatprep.mubr.bf16.mxu0 0
      %2976 = vmatmul.mubr.bf16.gmra.mrb[0].mxu0 %v2920
      %v2977 = vpop.f32.mrb[0].mxu0
      %v2978 = vadd.f32 %v2892, %v2977
      %v2979 = vpop.f32.mrb[0].mxu0
      %v2980 = vpop.f32.mrb[0].mxu0
      %v2981 = vadd.f32 %v2892, %v2980
      %v2982 = vpop.f32.mrb[0].mxu0
      %2983 = vmatprep.mubr.bf16.mxu0 0
      %2984 = vmatmul.mubr.bf16.gmra.mrb[0].mxu0 %v2923
      %v2985 = vpop.f32.mrb[0].mxu0
      %v2986 = vadd.f32 %v2892, %v2985
      %v2987 = vpop.f32.mrb[0].mxu0
      %v2988 = vpop.f32.mrb[0].mxu0
      %v2989 = vadd.f32 %v2892, %v2988
      %v2990 = vpop.f32.mrb[0].mxu0
      %2991 = vmatprep.mubr.bf16.mxu0 0
      %2992 = vmatmul.mubr.bf16.gmra.mrb[0].mxu0 %v2926
      %v2993 = vpop.f32.mrb[0].mxu0
      %v2994 = vadd.f32 %v2892, %v2993
      %v2995 = vpop.f32.mrb[0].mxu0
      %v2996 = vpop.f32.mrb[0].mxu0
      %v2997 = vadd.f32 %v2892, %v2996
      %v2998 = vpop.f32.mrb[0].mxu0
      %2999 = vmatprep.mubr.bf16.mxu0 0
      %3000 = vmatmul.mubr.bf16.gmra.mrb[0].mxu0 %v2929
      %v3001 = vpop.f32.mrb[0].mxu0
      %v3002 = vadd.f32 %v2892, %v3001
      %v3003 = vpop.f32.mrb[0].mxu0
      %v3004 = vpop.f32.mrb[0].mxu0
      %v3005 = vadd.f32 %v2892, %v3004
      %v3006 = vpop.f32.mrb[0].mxu0
      %3007 = vmatprep.mubr.bf16.mxu0 0
      %3008 = vmatmul.mubr.bf16.gmra.mrb[0].mxu0 %v2932
      %v3009 = vpop.f32.mrb[0].mxu0
      %v3010 = vadd.f32 %v2892, %v3009
      %v3011 = vpop.f32.mrb[0].mxu0
      %v3012 = vpop.f32.mrb[0].mxu0
      %v3013 = vadd.f32 %v2892, %v3012
      %v3014 = vpop.f32.mrb[0].mxu0
      %3015 = vmatprep.mubr.bf16.mxu0 0
      %3016 = vmatmul.mubr.bf16.gmra.mrb[0].mxu0 %v2935
      %v3017 = vpop.f32.mrb[0].mxu0
      %v3018 = vadd.f32 %v2892, %v3017
      %v3019 = vpop.f32.mrb[0].mxu0
      %v3020 = vpop.f32.mrb[0].mxu0
      %v3021 = vadd.f32 %v2892, %v3020
      %v3022 = vpop.f32.mrb[0].mxu0
      %3023 = vmatprep.mubr.bf16.mxu0 0
      %3024 = vmatmul.mubr.bf16.gmra.mrb[0].mxu0 %v2938
      %v3025 = vpop.f32.mrb[0].mxu0
      %v3026 = vadd.f32 %v2892, %v3025
      %v3027 = vpop.f32.mrb[0].mxu0
      %v3028 = vpop.f32.mrb[0].mxu0
      %v3029 = vadd.f32 %v2892, %v3028
      %v3030 = vpop.f32.mrb[0].mxu0
      %3031 = vmatprep.mubr.bf16.mxu0 0
      %3032 = vmatmul.mubr.bf16.gmra.mrb[0].mxu0 %v2941
      %v3033 = vpop.f32.mrb[0].mxu0
      %v3034 = vadd.f32 %v2892, %v3033
      %v3035 = vpop.f32.mrb[0].mxu0
      %v3036 = vpop.f32.mrb[0].mxu0
      %v3037 = vadd.f32 %v2892, %v3036
      %v3038 = vpop.f32.mrb[0].mxu0
      %3039 = vdwg.mxu0
      %3040 = vst.msk [vmem:[%s438] sm:$0xff] %vm2854, %v2689
      %3041 = vst.msk [vmem:[%s438 + $0x8] sm:$0xff] %vm2854, %v2691
      %3042 = vst.msk [vmem:[%s438 + $0x10] sm:$0xff] %vm2854, %v2693
      %3043 = vst.msk [vmem:[%s438 + $0x18] sm:$0xff] %vm2854, %v2695
      %3044 = vst.msk [vmem:[%s438 + $0x20] sm:$0xff] %vm2854, %v2697
      %3045 = vst.msk [vmem:[%s438 + $0x28] sm:$0xff] %vm2854, %v2699
      %3046 = vst.msk [vmem:[%s438 + $0x30] sm:$0xff] %vm2854, %v2701
      %3047 = vst.msk [vmem:[%s438 + $0x38] sm:$0xff] %vm2854, %v2703
      %3048 = vst.msk [vmem:[%s438 + $0x40] sm:$0xff] %vm2854, %v2705
      %3049 = vst.msk [vmem:[%s438 + $0x48] sm:$0xff] %vm2854, %v2707
      %3050 = vst.msk [vmem:[%s438 + $0x50] sm:$0xff] %vm2854, %v2709
      %3051 = vst.msk [vmem:[%s438 + $0x58] sm:$0xff] %vm2854, %v2711
      %3052 = vst.msk [vmem:[%s438 + $0x60] sm:$0xff] %vm2854, %v2713
      %3053 = vst.msk [vmem:[%s438 + $0x68] sm:$0xff] %vm2854, %v2715
      %3054 = vst.msk [vmem:[%s438 + $0x70] sm:$0xff] %vm2854, %v2717
      %3055 = vst.msk [vmem:[%s438 + $0x78] sm:$0xff] %vm2854, %v2719
      %v3056 = vmul.f32 %v2978, %v2978
      %v3057 = vmul.f32 %v2981, %v2981
      %v3058 = vmul.f32 %v2986, %v2986
      %v3059 = vmul.f32 %v2989, %v2989
      %v3060 = vmul.f32 %v2994, %v2994
      %v3061 = vmul.f32 %v2997, %v2997
      %v3062 = vmul.f32 %v3002, %v3002
      %v3063 = vmul.f32 %v3005, %v3005
      %v3064 = vmul.f32 %v3010, %v3010
      %v3065 = vmul.f32 %v3013, %v3013
      %v3066 = vmul.f32 %v3018, %v3018
      %v3067 = vmul.f32 %v3021, %v3021
      %v3068 = vmul.f32 %v3026, %v3026
      %v3069 = vmul.f32 %v3029, %v3029
      %v3070 = vmul.f32 %v3034, %v3034
      %v3071 = vmul.f32 %v3037, %v3037
      %v3072 = vmul.f32 %v2978, %v3056
      %v3073 = vmul.f32 %v2981, %v3057
      %v3074 = vmul.f32 %v2986, %v3058
      %v3075 = vmul.f32 %v2989, %v3059
      %v3076 = vmul.f32 %v2994, %v3060
      %v3077 = vmul.f32 %v2997, %v3061
      %v3078 = vmul.f32 %v3002, %v3062
      %v3079 = vmul.f32 %v3005, %v3063
      %v3080 = vmul.f32 %v3010, %v3064
      %v3081 = vmul.f32 %v3013, %v3065
      %v3082 = vmul.f32 %v3018, %v3066
      %v3083 = vmul.f32 %v3021, %v3067
      %v3084 = vmul.f32 %v3026, %v3068
      %v3085 = vmul.f32 %v3029, %v3069
      %v3086 = vmul.f32 %v3034, %v3070
      %v3087 = vmul.f32 %v3037, %v3071
      %v3088 = vmul.f32 %v3072, 0.044715
      %v3089 = vmul.f32 %v3073, 0.044715
      %v3090 = vmul.f32 %v3074, 0.044715
      %v3091 = vmul.f32 %v3075, 0.044715
      %v3092 = vmul.f32 %v3076, 0.044715
      %v3093 = vmul.f32 %v3077, 0.044715
      %v3094 = vmul.f32 %v3078, 0.044715
      %v3095 = vmul.f32 %v3079, 0.044715
      %v3096 = vmul.f32 %v3080, 0.044715
      %v3097 = vmul.f32 %v3081, 0.044715
      %v3098 = vmul.f32 %v3082, 0.044715
      %v3099 = vmul.f32 %v3083, 0.044715
      %v3100 = vmul.f32 %v3084, 0.044715
      %v3101 = vmul.f32 %v3085, 0.044715
      %v3102 = vmul.f32 %v3086, 0.044715
      %v3103 = vmul.f32 %v3087, 0.044715
      %v3104 = vadd.f32 %v2978, %v3088
      %v3105 = vadd.f32 %v2981, %v3089
      %v3106 = vadd.f32 %v2986, %v3090
      %v3107 = vadd.f32 %v2989, %v3091
      %v3108 = vadd.f32 %v2994, %v3092
      %v3109 = vadd.f32 %v2997, %v3093
      %v3110 = vadd.f32 %v3002, %v3094
      %v3111 = vadd.f32 %v3005, %v3095
      %v3112 = vadd.f32 %v3010, %v3096
      %v3113 = vadd.f32 %v3013, %v3097
      %v3114 = vadd.f32 %v3018, %v3098
      %v3115 = vadd.f32 %v3021, %v3099
      %v3116 = vadd.f32 %v3026, %v3100
      %v3117 = vadd.f32 %v3029, %v3101
      %v3118 = vadd.f32 %v3034, %v3102
      %v3119 = vadd.f32 %v3037, %v3103
      %v3120 = vmul.f32 %v3104, 0.7978846
      %v3121 = vmul.f32 %v3105, 0.7978846
      %v3122 = vmul.f32 %v3106, 0.7978846
      %v3123 = vmul.f32 %v3107, 0.7978846
      %v3124 = vmul.f32 %v3108, 0.7978846
      %v3125 = vmul.f32 %v3109, 0.7978846
      %v3126 = vmul.f32 %v3110, 0.7978846
      %v3127 = vmul.f32 %v3111, 0.7978846
      %v3128 = vmul.f32 %v3112, 0.7978846
      %v3129 = vmul.f32 %v3113, 0.7978846
      %v3130 = vmul.f32 %v3114, 0.7978846
      %v3131 = vmul.f32 %v3115, 0.7978846
      %v3132 = vmul.f32 %v3116, 0.7978846
      %v3133 = vmul.f32 %v3117, 0.7978846
      %v3134 = vmul.f32 %v3118, 0.7978846
      %v3135 = vmul.f32 %v3119, 0.7978846
      %v3136 = vtanh.pop %v3120
      %v3137 = vtanh.pop %v3121
      %v3138 = vtanh.pop %v3122
      %v3139 = vtanh.pop %v3123
      %v3140 = vtanh.pop %v3124
      %v3141 = vtanh.pop %v3125
      %v3142 = vtanh.pop %v3126
      %v3143 = vtanh.pop %v3127
      %v3144 = vtanh.pop %v3128
      %v3145 = vtanh.pop %v3129
      %v3146 = vtanh.pop %v3130
      %v3147 = vtanh.pop %v3131
      %v3148 = vtanh.pop %v3132
      %v3149 = vtanh.pop %v3133
      %v3150 = vtanh.pop %v3134
      %v3151 = vtanh.pop %v3135
      %v3152 = vadd.f32 %v3136, 1.0
      %v3153 = vadd.f32 %v3137, 1.0
      %v3154 = vadd.f32 %v3138, 1.0
      %v3155 = vadd.f32 %v3139, 1.0
      %v3156 = vadd.f32 %v3140, 1.0
      %v3157 = vadd.f32 %v3141, 1.0
      %v3158 = vadd.f32 %v3142, 1.0
      %v3159 = vadd.f32 %v3143, 1.0
      %v3160 = vadd.f32 %v3144, 1.0
      %v3161 = vadd.f32 %v3145, 1.0
      %v3162 = vadd.f32 %v3146, 1.0
      %v3163 = vadd.f32 %v3147, 1.0
      %v3164 = vadd.f32 %v3148, 1.0
      %v3165 = vadd.f32 %v3149, 1.0
      %v3166 = vadd.f32 %v3150, 1.0
      %v3167 = vadd.f32 %v3151, 1.0
      %v3168 = vmul.f32 %v3152, 0.5
      %v3169 = vmul.f32 %v3153, 0.5
      %v3170 = vmul.f32 %v3154, 0.5
      %v3171 = vmul.f32 %v3155, 0.5
      %v3172 = vmul.f32 %v3156, 0.5
      %v3173 = vmul.f32 %v3157, 0.5
      %v3174 = vmul.f32 %v3158, 0.5
      %v3175 = vmul.f32 %v3159, 0.5
      %v3176 = vmul.f32 %v3160, 0.5
      %v3177 = vmul.f32 %v3161, 0.5
      %v3178 = vmul.f32 %v3162, 0.5
      %v3179 = vmul.f32 %v3163, 0.5
      %v3180 = vmul.f32 %v3164, 0.5
      %v3181 = vmul.f32 %v3165, 0.5
      %v3182 = vmul.f32 %v3166, 0.5
      %v3183 = vmul.f32 %v3167, 0.5
      %v3184 = vmul.f32 %v2978, %v3168
      %v3185 = vmul.f32 %v2981, %v3169
      %v3186 = vmul.f32 %v2986, %v3170
      %v3187 = vmul.f32 %v2989, %v3171
      %v3188 = vmul.f32 %v2994, %v3172
      %v3189 = vmul.f32 %v2997, %v3173
      %v3190 = vmul.f32 %v3002, %v3174
      %v3191 = vmul.f32 %v3005, %v3175
      %v3192 = vmul.f32 %v3010, %v3176
      %v3193 = vmul.f32 %v3013, %v3177
      %v3194 = vmul.f32 %v3018, %v3178
      %v3195 = vmul.f32 %v3021, %v3179
      %v3196 = vmul.f32 %v3026, %v3180
      %v3197 = vmul.f32 %v3029, %v3181
      %v3198 = vmul.f32 %v3034, %v3182
      %v3199 = vmul.f32 %v3037, %v3183
      %v3200 = vpack.c.bf16 %v3185, %v3184
      %v3201 = vpack.c.bf16 %v3187, %v3186
      %v3202 = vpack.c.bf16 %v3189, %v3188
      %v3203 = vpack.c.bf16 %v3191, %v3190
      %v3204 = vpack.c.bf16 %v3193, %v3192
      %v3205 = vpack.c.bf16 %v3195, %v3194
      %v3206 = vpack.c.bf16 %v3197, %v3196
      %v3207 = vpack.c.bf16 %v3199, %v3198
      %v3216 = vunpack.c.l.b16 %v3200
      %v3217 = vunpack.c.h.b16 %v3200
      %v3218 = vunpack.c.l.b16 %v3201
      %v3219 = vunpack.c.h.b16 %v3201
      %v3220 = vunpack.c.l.b16 %v3202
      %v3221 = vunpack.c.h.b16 %v3202
      %v3222 = vunpack.c.l.b16 %v3203
      %v3223 = vunpack.c.h.b16 %v3203
      %v3224 = vunpack.c.l.b16 %v3204
      %v3225 = vunpack.c.h.b16 %v3204
      %v3226 = vunpack.c.l.b16 %v3205
      %v3227 = vunpack.c.h.b16 %v3205
      %v3228 = vunpack.c.l.b16 %v3206
      %v3229 = vunpack.c.h.b16 %v3206
      %v3230 = vunpack.c.l.b16 %v3207
      %v3231 = vunpack.c.h.b16 %v3207
      %v3232 = vpack.c.b16 %v3216, %v3216
      %v3233 = vpack.c.b16 %v3217, %v3217
      %v3234 = vpack.c.b16 %v3218, %v3218
      %v3235 = vpack.c.b16 %v3219, %v3219
      %v3236 = vpack.c.b16 %v3220, %v3220
      %v3237 = vpack.c.b16 %v3221, %v3221
      %v3238 = vpack.c.b16 %v3222, %v3222
      %v3239 = vpack.c.b16 %v3223, %v3223
      %v3240 = vpack.c.b16 %v3224, %v3224
      %v3241 = vpack.c.b16 %v3225, %v3225
      %v3242 = vpack.c.b16 %v3226, %v3226
      %v3243 = vpack.c.b16 %v3227, %v3227
      %v3244 = vpack.c.b16 %v3228, %v3228
      %v3245 = vpack.c.b16 %v3229, %v3229
      %v3246 = vpack.c.b16 %v3230, %v3230
      %v3247 = vpack.c.b16 %v3231, %v3231
      %vm3264 = vcmask 257024
      %3265 = vst.msk [vmem:[%s449] sm:$0xf] %vm3264, %v3232
      %3266 = vst.msk [vmem:[%s449 + $0x4] sm:$0xf] %vm3264, %v3233
      %3267 = vst.msk [vmem:[%s449 + $0x8] sm:$0xf] %vm3264, %v3234
      %3268 = vst.msk [vmem:[%s449 + $0xc] sm:$0xf] %vm3264, %v3235
      %3269 = vst.msk [vmem:[%s449 + $0x10] sm:$0xf] %vm3264, %v3236
      %3270 = vst.msk [vmem:[%s449 + $0x14] sm:$0xf] %vm3264, %v3237
      %3271 = vst.msk [vmem:[%s449 + $0x18] sm:$0xf] %vm3264, %v3238
      %3272 = vst.msk [vmem:[%s449 + $0x1c] sm:$0xf] %vm3264, %v3239
      %3273 = vst.msk [vmem:[%s449 + $0x20] sm:$0xf] %vm3264, %v3240
      %3274 = vst.msk [vmem:[%s449 + $0x24] sm:$0xf] %vm3264, %v3241
      %3275 = vst.msk [vmem:[%s449 + $0x28] sm:$0xf] %vm3264, %v3242
      %3276 = vst.msk [vmem:[%s449 + $0x2c] sm:$0xf] %vm3264, %v3243
      %3277 = vst.msk [vmem:[%s449 + $0x30] sm:$0xf] %vm3264, %v3244
      %3278 = vst.msk [vmem:[%s449 + $0x34] sm:$0xf] %vm3264, %v3245
      %3279 = vst.msk [vmem:[%s449 + $0x38] sm:$0xf] %vm3264, %v3246
      %3280 = vst.msk [vmem:[%s449 + $0x3c] sm:$0xf] %vm3264, %v3247
      %s3281 = smul.u32 8, %s27
      %p3282 = scmp.lt.s32.totalorder %s26, 1
      %s3283 = scalar_select %p3282, %s26, 1
      %p3284 = scmp.lt.s32.totalorder %s3281, 15
      %s3285 = scalar_select %p3284, %s3281, 15
      %s3286 = smul.addr %s3285, 2
      %s3287 = smul.addr %s3283, 32
      %s3288 = sadd.s32 %s3286, %s3287
      %s3289 = smul.addr %s3288, 8
      %s3290 = scalar_lea.vmem %s9, %s3289
      %s3291 = smul.u32 8, %s27
      %p3292 = scmp.lt.s32.totalorder %s26, 1
      %s3293 = scalar_select %p3292, %s26, 1
      %p3294 = scmp.lt.s32.totalorder %s3291, 15
      %s3295 = scalar_select %p3294, %s3291, 15
      %s3296 = smul.addr %s3295, 2
      %s3297 = smul.addr %s3293, 32
      %s3298 = sadd.s32 %s3296, %s3297
      %s3299 = smul.addr %s3298, 4
      %s3300 = scalar_lea.vmem %s10, %s3299
      // Predicated region
      $region57: #{rec_conv_cell_forward.4} parent=55 // pred_check
        %p3301 = pneg %p258
      $region58: #{rec_conv_cell_forward.4} parent=55 // pred_check_branch
        %3303 = sbr.rel (%p3301) target = $region60
      $region59: #{rec_conv_cell_forward.4} parent=55 // pred_region
        %s3304 = smul.u32 8, %s27
      $region60: #{rec_conv_cell_forward.4} parent=55 // pred_fallthru
        _
      // Predicated region
      $region61: #{rec_conv_cell_forward.4} parent=55 // pred_check
        %p3305 = pneg %p286
      $region62: #{rec_conv_cell_forward.4} parent=55 // pred_check_branch
        %3307 = sbr.rel (%p3305) target = $region64
      $region63: #{rec_conv_cell_forward.4} parent=55 // pred_region
        %s3308 = smul.u32 8, %s27
      $region64: #{rec_conv_cell_forward.4} parent=55 // pred_fallthru
        _
    $region56: #{rec_conv_cell_forward.4} parent=5 // pred_fallthru
      _
    %p3309 = scmp.le.s32.totalorder 2, %s17
    // Predicated region
    $region65: #{rec_conv_cell_forward.4} parent=5 // pred_check
      %p3310 = pneg %p3309
    $region66: #{rec_conv_cell_forward.4} parent=5 // pred_check_branch
      %3312 = sbr.rel (%p3310) target = $region68
    $region67: #{rec_conv_cell_forward.4} parent=5 // pred_region
      %s3313 = ssub.s32 %s17, 2
      // Predicated region
      $region69: #{rec_conv_cell_forward.4} parent=67 // pred_check
        %p3314 = pneg %p264
      $region70: #{rec_conv_cell_forward.4} parent=67 // pred_check_branch
        %3316 = sbr.rel (%p3314) target = $region72
      $region71: #{rec_conv_cell_forward.4} parent=67 // pred_region
        %s3317 = smul.u32 8, %s29
        %p3318 = scmp.lt.s32.totalorder %s28, 1
        %s3319 = scalar_select %p3318, %s28, 1
        %p3320 = scmp.lt.s32.totalorder %s3317, 15
        %s3321 = scalar_select %p3320, %s3317, 15
        %s3322 = smul.addr %s3321, 2
        %s3323 = smul.addr %s3319, 32
        %s3324 = sadd.s32 %s3322, %s3323
        %s3325 = smul.addr %s3324, 8
        %s3326 = scalar_lea.vmem %s9, %s3325
      $region72: #{rec_conv_cell_forward.4} parent=67 // pred_fallthru
        _
      // Predicated region
      $region73: #{rec_conv_cell_forward.4} parent=67 // pred_check
        %p3327 = pneg %p292
      $region74: #{rec_conv_cell_forward.4} parent=67 // pred_check_branch
        %3329 = sbr.rel (%p3327) target = $region76
      $region75: #{rec_conv_cell_forward.4} parent=67 // pred_region
        %s3330 = smul.u32 8, %s29
        %p3331 = scmp.lt.s32.totalorder %s28, 1
        %s3332 = scalar_select %p3331, %s28, 1
        %p3333 = scmp.lt.s32.totalorder %s3330, 15
        %s3334 = scalar_select %p3333, %s3330, 15
        %s3335 = smul.addr %s3334, 2
        %s3336 = smul.addr %s3332, 32
        %s3337 = sadd.s32 %s3335, %s3336
        %s3338 = smul.addr %s3337, 4
        %s3339 = scalar_lea.vmem %s10, %s3338
      $region76: #{rec_conv_cell_forward.4} parent=67 // pred_fallthru
        _
    $region68: #{rec_conv_cell_forward.4} parent=5 // pred_fallthru
      _
  $region6: #{rec_conv_cell_forward.4} parent=0 // loop_footer
    %s21 = sadd.s32 1, %s17
  $region7: #{rec_conv_cell_forward.4} parent=0 // loop_footer_branch
    %16 = sbr.rel target = $region3
  $region8: #{rec_conv_cell_forward.4} parent=0 // loop_exit
    _

// kernel: rec_conv_cell_forward.5
$region0: #{rec_conv_cell_forward.5}
  #allocation0 [shape = 'u32[]', space=smem, size = 0x4, offset = 0x4, fixed_abs, tag = 'smem constant byte address 0x4 - core index']
  #allocation1 [shape = 'u32[144,128]{1,0:T(1,128)}', space=vmem, size = 0x12000, scoped, tag = 'internal scratch']
  #allocation2 [shape = 'f32[10,18,32]{2,1,0:T(8,128)}', space=vmem, size = 0x1e000, scoped, tag = 'scratch operand']
  %s0 = inlined_call_operand.vmem [shape: bf16[2,20,18,32], index: 0, kind: input, shape index: {}]
  %s1 = inlined_call_operand.vmem [shape: f32[2,16,16,32], index: 1, kind: input, shape index: {}]
  %s2 = inlined_call_operand.vmem [shape: f32[2,18,16,32], index: 2, kind: input, shape index: {}]
  %s3 = inlined_call_operand.vmem [shape: bf16[288,32], index: 3, kind: input, shape index: {}]
  %s4 = inlined_call_operand.vmem [shape: f32[1,32], index: 4, kind: input, shape index: {}]
  %s5 = inlined_call_operand.vmem [shape: bf16[32,32], index: 5, kind: input, shape index: {}]
  %s6 = inlined_call_operand.vmem [shape: f32[1,32], index: 6, kind: input, shape index: {}]
  %s7 = inlined_call_operand.vmem [shape: f32[9,32], index: 7, kind: input, shape index: {}]
  %s8 = inlined_call_operand.vmem [shape: f32[1,32], index: 8, kind: input, shape index: {}]
  %s9 = inlined_call_operand.hbm [shape: f32[2,16,16,32], index: 9, kind: output, shape index: {}]
  %s10 = sld [smem:[#allocation0]]
  $region69: #{rec_conv_cell_forward.5} parent=0
    _
  %s12 = ssub.s32 1, %s10
  %s13 = scalar_select 0, %s12, %s10
  $region1: #{rec_conv_cell_forward.5} parent=0
    #allocation3 [shape = 'u8[131072]{0}', space=vmem, size = 0x20000, scoped, tag = 'output window, operand 0']
    #allocation4 [shape = 's32[2]{0}', space=sflag, size = 0x8, scoped, tag = 'scoped memory for rec_conv_cell_forward.5']
    %14 = vsyncpa [#allocation4], 0
    %s15 = scalar_lea.sflag [#allocation4], 1
    %16 = vsyncpa %s15, 0
    loop: start=0, step=1, limit=6
    $region2: #{rec_conv_cell_forward.5} parent=1 // loop_pre_header
      _
    $region3: #{rec_conv_cell_forward.5} parent=1 // loop_header
      %s18 = sphi 0, %s22
      %p19 = scmp.ge.s32.totalorder %s18, 6
      %s25 = sphi 0, %s37
      %s26 = sphi 0, %s33
      %s27 = sphi 0, %s25
      %s28 = sphi 0, %s26
      %s29 = sphi 0, %s27
      %s30 = sphi 0, %s28
      %s40 = sphi 0, %s42
      %s43 = sphi 0, %s40
      %s44 = sphi 0, %s43
      %s60 = sphi 0, %s44
      %s68 = sphi 0, %s70
      %s71 = sphi 0, %s68
      %s72 = sphi 0, %s71
      %s88 = sphi 0, %s72
      %s94 = sphi 0, %s96
      %s97 = sphi 0, %s94
      %s98 = sphi 0, %s97
      %s114 = sphi 0, %s98
      %s118 = sphi 0, %s118
      %s120 = sphi 0, %s118
      %s121 = sphi 0, %s120
      %s135 = sphi 0, %s121
      %s139 = sphi 0, %s139
      %s141 = sphi 0, %s139
      %s142 = sphi 0, %s141
      %s156 = sphi 0, %s142
      %s160 = sphi 0, %s160
      %s162 = sphi 0, %s160
      %s163 = sphi 0, %s162
      %s177 = sphi 0, %s163
      %s181 = sphi 0, %s181
      %s183 = sphi 0, %s181
      %s184 = sphi 0, %s183
      %s198 = sphi 0, %s184
      %s202 = sphi 0, %s202
      %s204 = sphi 0, %s202
      %s205 = sphi 0, %s204
      %s219 = sphi 0, %s205
      %s223 = sphi 0, %s223
      %s225 = sphi 0, %s223
      %s226 = sphi 0, %s225
      %s240 = sphi 0, %s226
      %s248 = sphi 0, %s250
      %s251 = sphi 0, %s248
      %s252 = sphi 0, %s251
      %s268 = sphi 0, %s252
    $region4: #{rec_conv_cell_forward.5} parent=1 // loop_header_branch
      %21 = sbr.rel (%p19) target = $region8
    $region5: #{rec_conv_cell_forward.5} parent=1 // loop_body
      %s23 = ssub.s32 %s18, 1
      %s24 = ssub.s32 %s18, 2
      %s31 = sadd.s32 1, %s26
      %p32 = scmp.ge.s32.totalorder %s31, 2
      %s33 = scalar_select %p32, 0, %s31
      %s34 = sadd.s32 1, %s25
      %s35 = scalar_select %p32, %s34, %s25
      %p36 = scmp.ge.s32.totalorder %s35, 2
      %s37 = scalar_select %p36, 0, %s35
      %s38 = ssub.s32 %s25, %s37
      %p39 = scmp.eq.s32.totalorder %s38, 0
      %s41 = sadd.s32 %s40, 1
      %s42 = scalar_select %p39, %s40, %s41
      %p45 = pneg %p39
      %p46 = scmp.eq.s32.totalorder %s18, 3
      %p47 = por %p45, %p46
      %p48 = scmp.ne.s32.totalorder %s40, %s43
      %p49 = scmp.eq.s32.totalorder %s18, 0
      %p50 = por %p48, %p49
      %p51 = scmp.ne.s32.totalorder %s40, %s43
      %p52 = scmp.eq.s32.totalorder %s23, 3
      %p53 = por %p51, %p52
      %p54 = scmp.ne.s32.totalorder %s43, %s44
      %p55 = scmp.eq.s32.totalorder %s23, 0
      %p56 = por %p54, %p55
      %p57 = scmp.ne.s32.totalorder %s43, %s44
      %p58 = scmp.eq.s32.totalorder %s24, 3
      %p59 = por %p57, %p58
      %p61 = scmp.ne.s32.totalorder %s44, %s60
      %p62 = scmp.eq.s32.totalorder %s24, 0
      %p63 = por %p61, %p62
      %s64 = ssub.s32 %s25, %s37
      %s65 = ssub.s32 %s26, %s33
      %s66 = sor.u32 %s64, %s65
      %p67 = scmp.eq.s32.totalorder %s66, 0
      %s69 = sadd.s32 %s68, 1
      %s70 = scalar_select %p67, %s68, %s69
      %p73 = pneg %p67
      %p74 = scmp.eq.s32.totalorder %s18, 3
      %p75 = por %p73, %p74
      %p76 = scmp.ne.s32.totalorder %s68, %s71
      %p77 = scmp.eq.s32.totalorder %s18, 0
      %p78 = por %p76, %p77
      %p79 = scmp.ne.s32.totalorder %s68, %s71
      %p80 = scmp.eq.s32.totalorder %s23, 3
      %p81 = por %p79, %p80
      %p82 = scmp.ne.s32.totalorder %s71, %s72
      %p83 = scmp.eq.s32.totalorder %s23, 0
      %p84 = por %p82, %p83
      %p85 = scmp.ne.s32.totalorder %s71, %s72
      %p86 = scmp.eq.s32.totalorder %s24, 3
      %p87 = por %p85, %p86
      %p89 = scmp.ne.s32.totalorder %s72, %s88
      %p90 = scmp.eq.s32.totalorder %s24, 0
      %p91 = por %p89, %p90
      %s92 = ssub.s32 %s25, %s37
      %p93 = scmp.eq.s32.totalorder %s92, 0
      %s95 = sadd.s32 %s94, 1
      %s96 = scalar_select %p93, %s94, %s95
      %p99 = pneg %p93
      %p100 = scmp.eq.s32.totalorder %s18, 3
      %p101 = por %p99, %p100
      %p102 = scmp.ne.s32.totalorder %s94, %s97
      %p103 = scmp.eq.s32.totalorder %s18, 0
      %p104 = por %p102, %p103
      %p105 = scmp.ne.s32.totalorder %s94, %s97
      %p106 = scmp.eq.s32.totalorder %s23, 3
      %p107 = por %p105, %p106
      %p108 = scmp.ne.s32.totalorder %s97, %s98
      %p109 = scmp.eq.s32.totalorder %s23, 0
      %p110 = por %p108, %p109
      %p111 = scmp.ne.s32.totalorder %s97, %s98
      %p112 = scmp.eq.s32.totalorder %s24, 3
      %p113 = por %p111, %p112
      %p115 = scmp.ne.s32.totalorder %s98, %s114
      %p116 = scmp.eq.s32.totalorder %s24, 0
      %p117 = por %p115, %p116
      %s119 = sadd.s32 %s118, 1
      %p122 = scmp.eq.s32.totalorder %s18, 3
      %p123 = scmp.ne.s32.totalorder %s118, %s120
      %p124 = scmp.eq.s32.totalorder %s18, 0
      %p125 = por %p123, %p124
      %p126 = scmp.ne.s32.totalorder %s118, %s120
      %p127 = scmp.eq.s32.totalorder %s23, 3
      %p128 = por %p126, %p127
      %p129 = scmp.ne.s32.totalorder %s120, %s121
      %p130 = scmp.eq.s32.totalorder %s23, 0
      %p131 = por %p129, %p130
      %p132 = scmp.ne.s32.totalorder %s120, %s121
      %p133 = scmp.eq.s32.totalorder %s24, 3
      %p134 = por %p132, %p133
      %p136 = scmp.ne.s32.totalorder %s121, %s135
      %p137 = scmp.eq.s32.totalorder %s24, 0
      %p138 = por %p136, %p137
      %s140 = sadd.s32 %s139, 1
      %p143 = scmp.eq.s32.totalorder %s18, 3
      %p144 = scmp.ne.s32.totalorder %s139, %s141
      %p145 = scmp.eq.s32.totalorder %s18, 0
      %p146 = por %p144, %p145
      %p147 = scmp.ne.s32.totalorder %s139, %s141
      %p148 = scmp.eq.s32.totalorder %s23, 3
      %p149 = por %p147, %p148
      %p150 = scmp.ne.s32.totalorder %s141, %s142
      %p151 = scmp.eq.s32.totalorder %s23, 0
      %p152 = por %p150, %p151
      %p153 = scmp.ne.s32.totalorder %s141, %s142
      %p154 = scmp.eq.s32.totalorder %s24, 3
      %p155 = por %p153, %p154
      %p157 = scmp.ne.s32.totalorder %s142, %s156
      %p158 = scmp.eq.s32.totalorder %s24, 0
      %p159 = por %p157, %p158
      %s161 = sadd.s32 %s160, 1
      %p164 = scmp.eq.s32.totalorder %s18, 3
      %p165 = scmp.ne.s32.totalorder %s160, %s162
      %p166 = scmp.eq.s32.totalorder %s18, 0
      %p167 = por %p165, %p166
      %p168 = scmp.ne.s32.totalorder %s160, %s162
      %p169 = scmp.eq.s32.totalorder %s23, 3
      %p170 = por %p168, %p169
      %p171 = scmp.ne.s32.totalorder %s162, %s163
      %p172 = scmp.eq.s32.totalorder %s23, 0
      %p173 = por %p171, %p172
      %p174 = scmp.ne.s32.totalorder %s162, %s163
      %p175 = scmp.eq.s32.totalorder %s24, 3
      %p176 = por %p174, %p175
      %p178 = scmp.ne.s32.totalorder %s163, %s177
      %p179 = scmp.eq.s32.totalorder %s24, 0
      %p180 = por %p178, %p179
      %s182 = sadd.s32 %s181, 1
      %p185 = scmp.eq.s32.totalorder %s18, 3
      %p186 = scmp.ne.s32.totalorder %s181, %s183
      %p187 = scmp.eq.s32.totalorder %s18, 0
      %p188 = por %p186, %p187
      %p189 = scmp.ne.s32.totalorder %s181, %s183
      %p190 = scmp.eq.s32.totalorder %s23, 3
      %p191 = por %p189, %p190
      %p192 = scmp.ne.s32.totalorder %s183, %s184
      %p193 = scmp.eq.s32.totalorder %s23, 0
      %p194 = por %p192, %p193
      %p195 = scmp.ne.s32.totalorder %s183, %s184
      %p196 = scmp.eq.s32.totalorder %s24, 3
      %p197 = por %p195, %p196
      %p199 = scmp.ne.s32.totalorder %s184, %s198
      %p200 = scmp.eq.s32.totalorder %s24, 0
      %p201 = por %p199, %p200
      %s203 = sadd.s32 %s202, 1
      %p206 = scmp.eq.s32.totalorder %s18, 3
      %p207 = scmp.ne.s32.totalorder %s202, %s204
      %p208 = scmp.eq.s32.totalorder %s18, 0
      %p209 = por %p207, %p208
      %p210 = scmp.ne.s32.totalorder %s202, %s204
      %p211 = scmp.eq.s32.totalorder %s23, 3
      %p212 = por %p210, %p211
      %p213 = scmp.ne.s32.totalorder %s204, %s205
      %p214 = scmp.eq.s32.totalorder %s23, 0
      %p215 = por %p213, %p214
      %p216 = scmp.ne.s32.totalorder %s204, %s205
      %p217 = scmp.eq.s32.totalorder %s24, 3
      %p218 = por %p216, %p217
      %p220 = scmp.ne.s32.totalorder %s205, %s219
      %p221 = scmp.eq.s32.totalorder %s24, 0
      %p222 = por %p220, %p221
      %s224 = sadd.s32 %s223, 1
      %p227 = scmp.eq.s32.totalorder %s18, 3
      %p228 = scmp.ne.s32.totalorder %s223, %s225
      %p229 = scmp.eq.s32.totalorder %s18, 0
      %p230 = por %p228, %p229
      %p231 = scmp.ne.s32.totalorder %s223, %s225
      %p232 = scmp.eq.s32.totalorder %s23, 3
      %p233 = por %p231, %p232
      %p234 = scmp.ne.s32.totalorder %s225, %s226
      %p235 = scmp.eq.s32.totalorder %s23, 0
      %p236 = por %p234, %p235
      %p237 = scmp.ne.s32.totalorder %s225, %s226
      %p238 = scmp.eq.s32.totalorder %s24, 3
      %p239 = por %p237, %p238
      %p241 = scmp.ne.s32.totalorder %s226, %s240
      %p242 = scmp.eq.s32.totalorder %s24, 0
      %p243 = por %p241, %p242
      %s244 = ssub.s32 %s25, %s37
      %s245 = ssub.s32 %s26, %s33
      %s246 = sor.u32 %s244, %s245
      %p247 = scmp.eq.s32.totalorder %s246, 0
      %s249 = sadd.s32 %s248, 1
      %s250 = scalar_select %p247, %s248, %s249
      %p253 = pneg %p247
      %p254 = scmp.eq.s32.totalorder %s18, 3
      %p255 = por %p253, %p254
      %p256 = scmp.ne.s32.totalorder %s248, %s251
      %p257 = scmp.eq.s32.totalorder %s18, 0
      %p258 = por %p256, %p257
      %p259 = scmp.ne.s32.totalorder %s248, %s251
      %p260 = scmp.eq.s32.totalorder %s23, 3
      %p261 = por %p259, %p260
      %p262 = scmp.ne.s32.totalorder %s251, %s252
      %p263 = scmp.eq.s32.totalorder %s23, 0
      %p264 = por %p262, %p263
      %p265 = scmp.ne.s32.totalorder %s251, %s252
      %p266 = scmp.eq.s32.totalorder %s24, 3
      %p267 = por %p265, %p266
      %p269 = scmp.ne.s32.totalorder %s252, %s268
      %p270 = scmp.eq.s32.totalorder %s24, 0
      %p271 = por %p269, %p270
      %p272 = scmp.le.s32.totalorder 1, %s18
      %p273 = scmp.lt.s32.totalorder %s18, 5
      %p274 = pnand %p272, %p273
      %p275 = pneg %p274
      // Predicated region
      $region9: #{rec_conv_cell_forward.5} parent=5 // pred_check
        _
      $region10: #{rec_conv_cell_forward.5} parent=5 // pred_check_branch
        %277 = sbr.rel (%p274) target = $region12
      $region11: #{rec_conv_cell_forward.5} parent=5 // pred_region
        %s278 = ssub.s32 %s18, 1
        // Predicated region
        $region13: #{rec_conv_cell_forward.5} parent=11 // pred_check
          %p279 = pneg %p131
        $region14: #{rec_conv_cell_forward.5} parent=11 // pred_check_branch
          %281 = sbr.rel (%p279) target = $region16
        $region15: #{rec_conv_cell_forward.5} parent=11 // pred_region
          _
        $region16: #{rec_conv_cell_forward.5} parent=11 // pred_fallthru
          _
        // Predicated region
        $region17: #{rec_conv_cell_forward.5} parent=11 // pred_check
          %p282 = pneg %p152
        $region18: #{rec_conv_cell_forward.5} parent=11 // pred_check_branch
          %284 = sbr.rel (%p282) target = $region20
        $region19: #{rec_conv_cell_forward.5} parent=11 // pred_region
          _
        $region20: #{rec_conv_cell_forward.5} parent=11 // pred_fallthru
          _
        // Predicated region
        $region21: #{rec_conv_cell_forward.5} parent=11 // pred_check
          %p285 = pneg %p173
        $region22: #{rec_conv_cell_forward.5} parent=11 // pred_check_branch
          %287 = sbr.rel (%p285) target = $region24
        $region23: #{rec_conv_cell_forward.5} parent=11 // pred_region
          _
        $region24: #{rec_conv_cell_forward.5} parent=11 // pred_fallthru
          _
        // Predicated region
        $region25: #{rec_conv_cell_forward.5} parent=11 // pred_check
          %p288 = pneg %p194
        $region26: #{rec_conv_cell_forward.5} parent=11 // pred_check_branch
          %290 = sbr.rel (%p288) target = $region28
        $region27: #{rec_conv_cell_forward.5} parent=11 // pred_region
          _
        $region28: #{rec_conv_cell_forward.5} parent=11 // pred_fallthru
          _
        // Predicated region
        $region29: #{rec_conv_cell_forward.5} parent=11 // pred_check
          %p291 = pneg %p215
        $region30: #{rec_conv_cell_forward.5} parent=11 // pred_check_branch
          %293 = sbr.rel (%p291) target = $region32
        $region31: #{rec_conv_cell_forward.5} parent=11 // pred_region
          _
        $region32: #{rec_conv_cell_forward.5} parent=11 // pred_fallthru
          _
        // Predicated region
        $region33: #{rec_conv_cell_forward.5} parent=11 // pred_check
          %p294 = pneg %p236
        $region34: #{rec_conv_cell_forward.5} parent=11 // pred_check_branch
          %296 = sbr.rel (%p294) target = $region36
        $region35: #{rec_conv_cell_forward.5} parent=11 // pred_region
          _
        $region36: #{rec_conv_cell_forward.5} parent=11 // pred_fallthru
          _
      $region12: #{rec_conv_cell_forward.5} parent=5 // pred_fallthru
        _
      %p297 = scmp.lt.s32.totalorder %s18, 4
      // Predicated region
      $region37: #{rec_conv_cell_forward.5} parent=5 // pred_check
        %p298 = pneg %p297
      $region38: #{rec_conv_cell_forward.5} parent=5 // pred_check_branch
        %300 = sbr.rel (%p298) target = $region40
      $region39: #{rec_conv_cell_forward.5} parent=5 // pred_region
        // Predicated region
        $region41: #{rec_conv_cell_forward.5} parent=39 // pred_check
          %p301 = pneg %p50
        $region42: #{rec_conv_cell_forward.5} parent=39 // pred_check_branch
          %303 = sbr.rel (%p301) target = $region44
        $region43: #{rec_conv_cell_forward.5} parent=39 // pred_region
          %p304 = scmp.lt.s32.totalorder %s25, 1
          %s305 = scalar_select %p304, %s25, 1
          %s306 = smul.addr %s305, 60
          %s307 = smul.addr %s306, 4
          %s308 = scalar_lea.vmem %s0, %s307
        $region44: #{rec_conv_cell_forward.5} parent=39 // pred_fallthru
          _
        // Predicated region
        $region45: #{rec_conv_cell_forward.5} parent=39 // pred_check
          %p309 = pneg %p78
        $region46: #{rec_conv_cell_forward.5} parent=39 // pred_check_branch
          %311 = sbr.rel (%p309) target = $region48
        $region47: #{rec_conv_cell_forward.5} parent=39 // pred_region
          %s312 = smul.u32 8, %s26
          %p313 = scmp.lt.s32.totalorder %s25, 1
          %s314 = scalar_select %p313, %s25, 1
          %p315 = scmp.lt.s32.totalorder %s312, 15
          %s316 = scalar_select %p315, %s312, 15
          %s317 = smul.addr %s316, 2
          %s318 = smul.addr %s314, 32
          %s319 = sadd.s32 %s317, %s318
          %s320 = smul.addr %s319, 8
          %s321 = scalar_lea.vmem %s1, %s320
          %s322 = smul.u32 8, %s26
        $region48: #{rec_conv_cell_forward.5} parent=39 // pred_fallthru
          _
        // Predicated region
        $region49: #{rec_conv_cell_forward.5} parent=39 // pred_check
          %p323 = pneg %p104
        $region50: #{rec_conv_cell_forward.5} parent=39 // pred_check_branch
          %325 = sbr.rel (%p323) target = $region52
        $region51: #{rec_conv_cell_forward.5} parent=39 // pred_region
          %p326 = scmp.lt.s32.totalorder %s25, 1
          %s327 = scalar_select %p326, %s25, 1
          %s328 = smul.addr %s327, 36
          %s329 = smul.addr %s328, 8
          %s330 = scalar_lea.vmem %s2, %s329
        $region52: #{rec_conv_cell_forward.5} parent=39 // pred_fallthru
          _
      $region40: #{rec_conv_cell_forward.5} parent=5 // pred_fallthru
        _
      %p331 = scmp.le.s32.totalorder 1, %s18
      %p332 = scmp.lt.s32.totalorder %s18, 5
      %p333 = pnand %p331, %p332
      %p334 = pneg %p333
      // Predicated region
      $region53: #{rec_conv_cell_forward.5} parent=5 // pred_check
        _
      $region54: #{rec_conv_cell_forward.5} parent=5 // pred_check_branch
        %336 = sbr.rel (%p333) target = $region56
      $region55: #{rec_conv_cell_forward.5} parent=5 // pred_region
        %s337 = ssub.s32 %s18, 1
        %p338 = scmp.lt.s32.totalorder %s27, 1
        %s339 = scalar_select %p338, %s27, 1
        %s340 = smul.addr %s339, 60
        %s341 = smul.addr %s340, 4
        %s342 = scalar_lea.vmem %s0, %s341
        %p343 = pneg %p56
        %p344 = pneg %p53
        %s345 = smul.u32 8, %s28
        %p346 = scmp.lt.s32.totalorder %s27, 1
        %s347 = scalar_select %p346, %s27, 1
        %p348 = scmp.lt.s32.totalorder %s345, 15
        %s349 = scalar_select %p348, %s345, 15
        %s350 = smul.addr %s349, 2
        %s351 = smul.addr %s347, 32
        %s352 = sadd.s32 %s350, %s351
        %s353 = smul.addr %s352, 8
        %s354 = scalar_lea.vmem %s1, %s353
        %p355 = pneg %p84
        %p356 = pneg %p81
        %p357 = scmp.lt.s32.totalorder %s27, 1
        %s358 = scalar_select %p357, %s27, 1
        %s359 = smul.addr %s358, 36
        %s360 = smul.addr %s359, 8
        %s361 = scalar_lea.vmem %s2, %s360
        %p362 = pneg %p110
        %p363 = pneg %p107
        %p364 = pneg %p131
        %p365 = pneg %p128
        %p366 = pneg %p152
        %p367 = pneg %p149
        %p368 = pneg %p173
        %p369 = pneg %p170
        %p370 = pneg %p194
        %p371 = pneg %p191
        %p372 = pneg %p215
        %p373 = pneg %p212
        %p374 = pneg %p236
        %p375 = pneg %p233
        %p376 = pneg %p264
        %p377 = pneg %p261
        %s378 = sand.u32 %s251, 1
        %s379 = scalar_lea.sflag [#allocation4], %s378
        %s380 = sand.u32 %s251, 1
        %s381 = smul.addr %s380, 128
        %s382 = scalar_lea.vmem [#allocation3], %s381
        %p383 = scmp.lt.s32.totalorder %s27, 1
        %s384 = scalar_select %p383, %s27, 1
        %s385 = smul.addr %s384, 60
        %s386 = smul.addr %s385, 4
        %s387 = scalar_lea.vmem %s0, %s386
        %s388 = smul.u32 8, %s28
        %p389 = scmp.lt.s32.totalorder %s27, 1
        %s390 = scalar_select %p389, %s27, 1
        %p391 = scmp.lt.s32.totalorder %s388, 15
        %s392 = scalar_select %p391, %s388, 15
        %s393 = smul.addr %s392, 2
        %s394 = smul.addr %s390, 32
        %s395 = sadd.s32 %s393, %s394
        %s396 = smul.addr %s395, 8
        %s397 = scalar_lea.vmem %s1, %s396
        %s398 = smul.u32 8, %s28
        %p399 = scmp.lt.s32.totalorder %s27, 1
        %s400 = scalar_select %p399, %s27, 1
        %s401 = smul.addr %s400, 36
        %s402 = smul.addr %s401, 8
        %s403 = scalar_lea.vmem %s2, %s402
        %s404 = smul.u32 8, %s28
        %s406 = smul.u32 %s28, 8
        %s407 = smul.u32 %s406, 3
        %s408 = smul.addr %s407, 4
        %s409 = scalar_lea.vmem %s387, %s408
        %v410 = vld [vmem:[%s409] sm:$0xf]
        %v411 = vld [vmem:[%s409 + $0x4] sm:$0xf]
        %v412 = vld [vmem:[%s409 + $0x8] sm:$0x1]
        %v413 = vld [vmem:[%s409 + $0xc] sm:$0xf]
        %v414 = vld [vmem:[%s409 + $0x10] sm:$0xf]
        %v415 = vld [vmem:[%s409 + $0x14] sm:$0x1]
        %v416 = vld [vmem:[%s409 + $0x18] sm:$0xf]
        %v417 = vld [vmem:[%s409 + $0x1c] sm:$0xf]
        %v418 = vld [vmem:[%s409 + $0x20] sm:$0x1]
        %v419 = vld [vmem:[%s409 + $0x24] sm:$0xf]
        %v420 = vld [vmem:[%s409 + $0x28] sm:$0xf]
        %v421 = vld [vmem:[%s409 + $0x2c] sm:$0x1]
        %v422 = vld [vmem:[%s409 + $0x30] sm:$0xf]
        %v423 = vld [vmem:[%s409 + $0x34] sm:$0xf]
        %v424 = vld [vmem:[%s409 + $0x38] sm:$0x1]
        %v425 = vld [vmem:[%s409 + $0x3c] sm:$0xf]
        %v426 = vld [vmem:[%s409 + $0x40] sm:$0xf]
        %v427 = vld [vmem:[%s409 + $0x44] sm:$0x1]
        %v428 = vld [vmem:[%s409 + $0x48] sm:$0xf]
        %v429 = vld [vmem:[%s409 + $0x4c] sm:$0xf]
        %v430 = vld [vmem:[%s409 + $0x50] sm:$0x1]
        %v431 = vld [vmem:[%s409 + $0x54] sm:$0xf]
        %v432 = vld [vmem:[%s409 + $0x58] sm:$0xf]
        %v433 = vld [vmem:[%s409 + $0x5c] sm:$0x1]
        %v434 = vld [vmem:[%s409 + $0x60] sm:$0xf]
        %v435 = vld [vmem:[%s409 + $0x64] sm:$0xf]
        %v436 = vld [vmem:[%s409 + $0x68] sm:$0x1]
        %v437 = vld [vmem:[%s409 + $0x6c] sm:$0xf]
        %v438 = vld [vmem:[%s409 + $0x70] sm:$0xf]
        %v439 = vld [vmem:[%s409 + $0x74] sm:$0x1]
        %v440 = vld [vmem:[%s409 + $0x78] sm:$0xf]
        %v441 = vld [vmem:[%s409 + $0x7c] sm:$0xf]
        %v442 = vld [vmem:[%s409 + $0x80] sm:$0x1]
        %v443 = vld [vmem:[%s409 + $0x84] sm:$0xf]
        %v444 = vld [vmem:[%s409 + $0x88] sm:$0xf]
        %v445 = vld [vmem:[%s409 + $0x8c] sm:$0x1]
        %v446 = vunpack.c.l.bf16 %v410
        %v447 = vunpack.c.l.bf16 %v411
        %v448 = vunpack.c.l.bf16 %v412
        %v449 = vunpack.c.l.bf16 %v413
        %v450 = vunpack.c.l.bf16 %v414
        %v451 = vunpack.c.l.bf16 %v415
        %v452 = vunpack.c.l.bf16 %v416
        %v453 = vunpack.c.l.bf16 %v417
        %v454 = vunpack.c.l.bf16 %v418
        %v455 = vunpack.c.l.bf16 %v419
        %v456 = vunpack.c.l.bf16 %v420
        %v457 = vunpack.c.l.bf16 %v421
        %v458 = vunpack.c.l.bf16 %v422
        %v459 = vunpack.c.l.bf16 %v423
        %v460 = vunpack.c.l.bf16 %v424
        %v461 = vunpack.c.l.bf16 %v425
        %v462 = vunpack.c.l.bf16 %v426
        %v463 = vunpack.c.l.bf16 %v427
        %v464 = vunpack.c.l.bf16 %v428
        %v465 = vunpack.c.l.bf16 %v429
        %v466 = vunpack.c.l.bf16 %v430
        %v467 = vunpack.c.l.bf16 %v431
        %v468 = vunpack.c.l.bf16 %v432
        %v469 = vunpack.c.l.bf16 %v433
        %v470 = vunpack.c.l.bf16 %v434
        %v471 = vunpack.c.l.bf16 %v435
        %v472 = vunpack.c.l.bf16 %v436
        %v473 = vunpack.c.l.bf16 %v437
        %v474 = vunpack.c.l.bf16 %v438
        %v475 = vunpack.c.l.bf16 %v439
        %v476 = vunpack.c.l.bf16 %v440
        %v477 = vunpack.c.l.bf16 %v441
        %v478 = vunpack.c.l.bf16 %v442
        %v479 = vunpack.c.l.bf16 %v443
        %v480 = vunpack.c.l.bf16 %v444
        %v481 = vunpack.c.l.bf16 %v445
        %vm512 = vcmask 1046528
        %v513 = vrot.slane %v446, 1
        %v514 = vrot.slane %v447, 1
        %v515 = vsel %vm512, %v513, %v514
        %v516 = vrot.slane %v448, 1
        %v517 = vsel %vm512, %v514, %v516
        %v518 = vrot.slane %v449, 1
        %v519 = vrot.slane %v450, 1
        %v520 = vsel %vm512, %v518, %v519
        %v521 = vrot.slane %v451, 1
        %v522 = vsel %vm512, %v519, %v521
        %v523 = vrot.slane %v452, 1
        %v524 = vrot.slane %v453, 1
        %v525 = vsel %vm512, %v523, %v524
        %v526 = vrot.slane %v454, 1
        %v527 = vsel %vm512, %v524, %v526
        %v528 = vrot.slane %v455, 1
        %v529 = vrot.slane %v456, 1
        %v530 = vsel %vm512, %v528, %v529
        %v531 = vrot.slane %v457, 1
        %v532 = vsel %vm512, %v529, %v531
        %v533 = vrot.slane %v458, 1
        %v534 = vrot.slane %v459, 1
        %v535 = vsel %vm512, %v533, %v534
        %v536 = vrot.slane %v460, 1
        %v537 = vsel %vm512, %v534, %v536
        %v538 = vrot.slane %v461, 1
        %v539 = vrot.slane %v462, 1
        %v540 = vsel %vm512, %v538, %v539
        %v541 = vrot.slane %v463, 1
        %v542 = vsel %vm512, %v539, %v541
        %v543 = vrot.slane %v464, 1
        %v544 = vrot.slane %v465, 1
        %v545 = vsel %vm512, %v543, %v544
        %v546 = vrot.slane %v466, 1
        %v547 = vsel %vm512, %v544, %v546
        %v548 = vrot.slane %v467, 1
        %v549 = vrot.slane %v468, 1
        %v550 = vsel %vm512, %v548, %v549
        %v551 = vrot.slane %v469, 1
        %v552 = vsel %vm512, %v549, %v551
        %v553 = vrot.slane %v470, 1
        %v554 = vrot.slane %v471, 1
        %v555 = vsel %vm512, %v553, %v554
        %v556 = vrot.slane %v472, 1
        %v557 = vsel %vm512, %v554, %v556
        %v558 = vrot.slane %v473, 1
        %v559 = vrot.slane %v474, 1
        %v560 = vsel %vm512, %v558, %v559
        %v561 = vrot.slane %v475, 1
        %v562 = vsel %vm512, %v559, %v561
        %vm563 = vcmask 1045504
        %v564 = vrot.slane %v446, 2
        %v565 = vrot.slane %v447, 2
        %v566 = vsel %vm563, %v564, %v565
        %v567 = vrot.slane %v448, 2
        %v568 = vsel %vm563, %v565, %v567
        %v569 = vrot.slane %v449, 2
        %v570 = vrot.slane %v450, 2
        %v571 = vsel %vm563, %v569, %v570
        %v572 = vrot.slane %v451, 2
        %v573 = vsel %vm563, %v570, %v572
        %v574 = vrot.slane %v452, 2
        %v575 = vrot.slane %v453, 2
        %v576 = vsel %vm563, %v574, %v575
        %v577 = vrot.slane %v454, 2
        %v578 = vsel %vm563, %v575, %v577
        %v579 = vrot.slane %v455, 2
        %v580 = vrot.slane %v456, 2
        %v581 = vsel %vm563, %v579, %v580
        %v582 = vrot.slane %v457, 2
        %v583 = vsel %vm563, %v580, %v582
        %v584 = vrot.slane %v458, 2
        %v585 = vrot.slane %v459, 2
        %v586 = vsel %vm563, %v584, %v585
        %v587 = vrot.slane %v460, 2
        %v588 = vsel %vm563, %v585, %v587
        %v589 = vrot.slane %v461, 2
        %v590 = vrot.slane %v462, 2
        %v591 = vsel %vm563, %v589, %v590
        %v592 = vrot.slane %v463, 2
        %v593 = vsel %vm563, %v590, %v592
        %v594 = vrot.slane %v464, 2
        %v595 = vrot.slane %v465, 2
        %v596 = vsel %vm563, %v594, %v595
        %v597 = vrot.slane %v466, 2
        %v598 = vsel %vm563, %v595, %v597
        %v599 = vrot.slane %v467, 2
        %v600 = vrot.slane %v468, 2
        %v601 = vsel %vm563, %v599, %v600
        %v602 = vrot.slane %v469, 2
        %v603 = vsel %vm563, %v600, %v602
        %v604 = vrot.slane %v470, 2
        %v605 = vrot.slane %v471, 2
        %v606 = vsel %vm563, %v604, %v605
        %v607 = vrot.slane %v472, 2
        %v608 = vsel %vm563, %v605, %v607
        %v609 = vrot.slane %v473, 2
        %v610 = vrot.slane %v474, 2
        %v611 = vsel %vm563, %v609, %v610
        %v612 = vrot.slane %v475, 2
        %v613 = vsel %vm563, %v610, %v612
        %v617 = vrot.slane %v476, 1
        %v618 = vrot.slane %v477, 1
        %v619 = vsel %vm512, %v617, %v618
        %v620 = vrot.slane %v478, 1
        %v621 = vsel %vm512, %v618, %v620
        %v642 = vrot.slane %v476, 2
        %v643 = vrot.slane %v477, 2
        %v644 = vsel %vm563, %v642, %v643
        %v645 = vrot.slane %v478, 2
        %v646 = vsel %vm563, %v643, %v645
        %v650 = vrot.slane %v479, 1
        %v651 = vrot.slane %v480, 1
        %v652 = vsel %vm512, %v650, %v651
        %v653 = vrot.slane %v481, 1
        %v654 = vsel %vm512, %v651, %v653
        %v655 = vrot.slane %v479, 2
        %v656 = vrot.slane %v480, 2
        %v657 = vsel %vm563, %v655, %v656
        %v658 = vrot.slane %v481, 2
        %v659 = vsel %vm563, %v656, %v658
        %680 = vrot.lane.b32.xlu0 %v515, 32
        %v681 = vpop.permute.xlu0 %680
        %682 = vrot.lane.b32.xlu0 %v517, 32
        %v683 = vpop.permute.xlu0 %682
        %684 = vrot.lane.b32.xlu0 %v520, 32
        %v685 = vpop.permute.xlu0 %684
        %686 = vrot.lane.b32.xlu0 %v522, 32
        %v687 = vpop.permute.xlu0 %686
        %688 = vrot.lane.b32.xlu0 %v525, 32
        %v689 = vpop.permute.xlu0 %688
        %690 = vrot.lane.b32.xlu0 %v527, 32
        %v691 = vpop.permute.xlu0 %690
        %692 = vrot.lane.b32.xlu0 %v530, 32
        %v693 = vpop.permute.xlu0 %692
        %694 = vrot.lane.b32.xlu0 %v532, 32
        %v695 = vpop.permute.xlu0 %694
        %696 = vrot.lane.b32.xlu0 %v535, 32
        %v697 = vpop.permute.xlu0 %696
        %698 = vrot.lane.b32.xlu0 %v537, 32
        %v699 = vpop.permute.xlu0 %698
        %700 = vrot.lane.b32.xlu0 %v540, 32
        %v701 = vpop.permute.xlu0 %700
        %702 = vrot.lane.b32.xlu0 %v542, 32
        %v703 = vpop.permute.xlu0 %702
        %704 = vrot.lane.b32.xlu0 %v545, 32
        %v705 = vpop.permute.xlu0 %704
        %706 = vrot.lane.b32.xlu0 %v547, 32
        %v707 = vpop.permute.xlu0 %706
        %708 = vrot.lane.b32.xlu0 %v550, 32
        %v709 = vpop.permute.xlu0 %708
        %710 = vrot.lane.b32.xlu0 %v552, 32
        %v711 = vpop.permute.xlu0 %710
        %712 = vrot.lane.b32.xlu0 %v555, 32
        %v713 = vpop.permute.xlu0 %712
        %714 = vrot.lane.b32.xlu0 %v557, 32
        %v715 = vpop.permute.xlu0 %714
        %716 = vrot.lane.b32.xlu0 %v560, 32
        %v717 = vpop.permute.xlu0 %716
        %718 = vrot.lane.b32.xlu0 %v562, 32
        %v719 = vpop.permute.xlu0 %718
        %740 = vrot.lane.b32.xlu0 %v566, 64
        %v741 = vpop.permute.xlu0 %740
        %742 = vrot.lane.b32.xlu0 %v568, 64
        %v743 = vpop.permute.xlu0 %742
        %744 = vrot.lane.b32.xlu0 %v571, 64
        %v745 = vpop.permute.xlu0 %744
        %746 = vrot.lane.b32.xlu0 %v573, 64
        %v747 = vpop.permute.xlu0 %746
        %748 = vrot.lane.b32.xlu0 %v576, 64
        %v749 = vpop.permute.xlu0 %748
        %750 = vrot.lane.b32.xlu0 %v578, 64
        %v751 = vpop.permute.xlu0 %750
        %752 = vrot.lane.b32.xlu0 %v581, 64
        %v753 = vpop.permute.xlu0 %752
        %754 = vrot.lane.b32.xlu0 %v583, 64
        %v755 = vpop.permute.xlu0 %754
        %756 = vrot.lane.b32.xlu0 %v586, 64
        %v757 = vpop.permute.xlu0 %756
        %758 = vrot.lane.b32.xlu0 %v588, 64
        %v759 = vpop.permute.xlu0 %758
        %760 = vrot.lane.b32.xlu0 %v591, 64
        %v761 = vpop.permute.xlu0 %760
        %762 = vrot.lane.b32.xlu0 %v593, 64
        %v763 = vpop.permute.xlu0 %762
        %764 = vrot.lane.b32.xlu0 %v596, 64
        %v765 = vpop.permute.xlu0 %764
        %766 = vrot.lane.b32.xlu0 %v598, 64
        %v767 = vpop.permute.xlu0 %766
        %768 = vrot.lane.b32.xlu0 %v601, 64
        %v769 = vpop.permute.xlu0 %768
        %770 = vrot.lane.b32.xlu0 %v603, 64
        %v771 = vpop.permute.xlu0 %770
        %772 = vrot.lane.b32.xlu0 %v606, 64
        %v773 = vpop.permute.xlu0 %772
        %774 = vrot.lane.b32.xlu0 %v608, 64
        %v775 = vpop.permute.xlu0 %774
        %776 = vrot.lane.b32.xlu0 %v611, 64
        %v777 = vpop.permute.xlu0 %776
        %778 = vrot.lane.b32.xlu0 %v613, 64
        %v779 = vpop.permute.xlu0 %778
        %800 = vrot.lane.b32.xlu0 %v449, 96
        %v801 = vpop.permute.xlu0 %800
        %802 = vrot.lane.b32.xlu0 %v450, 96
        %v803 = vpop.permute.xlu0 %802
        %804 = vrot.lane.b32.xlu0 %v452, 96
        %v805 = vpop.permute.xlu0 %804
        %806 = vrot.lane.b32.xlu0 %v453, 96
        %v807 = vpop.permute.xlu0 %806
        %808 = vrot.lane.b32.xlu0 %v455, 96
        %v809 = vpop.permute.xlu0 %808
        %810 = vrot.lane.b32.xlu0 %v456, 96
        %v811 = vpop.permute.xlu0 %810
        %812 = vrot.lane.b32.xlu0 %v458, 96
        %v813 = vpop.permute.xlu0 %812
        %814 = vrot.lane.b32.xlu0 %v459, 96
        %v815 = vpop.permute.xlu0 %814
        %816 = vrot.lane.b32.xlu0 %v461, 96
        %v817 = vpop.permute.xlu0 %816
        %818 = vrot.lane.b32.xlu0 %v462, 96
        %v819 = vpop.permute.xlu0 %818
        %820 = vrot.lane.b32.xlu0 %v464, 96
        %v821 = vpop.permute.xlu0 %820
        %822 = vrot.lane.b32.xlu0 %v465, 96
        %v823 = vpop.permute.xlu0 %822
        %824 = vrot.lane.b32.xlu0 %v467, 96
        %v825 = vpop.permute.xlu0 %824
        %826 = vrot.lane.b32.xlu0 %v468, 96
        %v827 = vpop.permute.xlu0 %826
        %828 = vrot.lane.b32.xlu0 %v470, 96
        %v829 = vpop.permute.xlu0 %828
        %830 = vrot.lane.b32.xlu0 %v471, 96
        %v831 = vpop.permute.xlu0 %830
        %832 = vrot.lane.b32.xlu0 %v473, 96
        %v833 = vpop.permute.xlu0 %832
        %834 = vrot.lane.b32.xlu0 %v474, 96
        %v835 = vpop.permute.xlu0 %834
        %836 = vrot.lane.b32.xlu0 %v476, 96
        %v837 = vpop.permute.xlu0 %836
        %838 = vrot.lane.b32.xlu0 %v477, 96
        %v839 = vpop.permute.xlu0 %838
        %860 = vrot.lane.b32.xlu0 %v571, 32
        %v861 = vpop.permute.xlu0 %860
        %862 = vrot.lane.b32.xlu0 %v573, 32
        %v863 = vpop.permute.xlu0 %862
        %864 = vrot.lane.b32.xlu0 %v576, 32
        %v865 = vpop.permute.xlu0 %864
        %866 = vrot.lane.b32.xlu0 %v578, 32
        %v867 = vpop.permute.xlu0 %866
        %868 = vrot.lane.b32.xlu0 %v581, 32
        %v869 = vpop.permute.xlu0 %868
        %870 = vrot.lane.b32.xlu0 %v583, 32
        %v871 = vpop.permute.xlu0 %870
        %872 = vrot.lane.b32.xlu0 %v586, 32
        %v873 = vpop.permute.xlu0 %872
        %874 = vrot.lane.b32.xlu0 %v588, 32
        %v875 = vpop.permute.xlu0 %874
        %876 = vrot.lane.b32.xlu0 %v591, 32
        %v877 = vpop.permute.xlu0 %876
        %878 = vrot.lane.b32.xlu0 %v593, 32
        %v879 = vpop.permute.xlu0 %878
        %880 = vrot.lane.b32.xlu0 %v596, 32
        %v881 = vpop.permute.xlu0 %880
        %882 = vrot.lane.b32.xlu0 %v598, 32
        %v883 = vpop.permute.xlu0 %882
        %884 = vrot.lane.b32.xlu0 %v601, 32
        %v885 = vpop.permute.xlu0 %884
        %886 = vrot.lane.b32.xlu0 %v603, 32
        %v887 = vpop.permute.xlu0 %886
        %888 = vrot.lane.b32.xlu0 %v606, 32
        %v889 = vpop.permute.xlu0 %888
        %890 = vrot.lane.b32.xlu0 %v608, 32
        %v891 = vpop.permute.xlu0 %890
        %892 = vrot.lane.b32.xlu0 %v611, 32
        %v893 = vpop.permute.xlu0 %892
        %894 = vrot.lane.b32.xlu0 %v613, 32
        %v895 = vpop.permute.xlu0 %894
        %896 = vrot.lane.b32.xlu0 %v644, 32
        %v897 = vpop.permute.xlu0 %896
        %898 = vrot.lane.b32.xlu0 %v646, 32
        %v899 = vpop.permute.xlu0 %898
        %920 = vrot.lane.b32.xlu0 %v452, 64
        %v921 = vpop.permute.xlu0 %920
        %922 = vrot.lane.b32.xlu0 %v453, 64
        %v923 = vpop.permute.xlu0 %922
        %924 = vrot.lane.b32.xlu0 %v455, 64
        %v925 = vpop.permute.xlu0 %924
        %926 = vrot.lane.b32.xlu0 %v456, 64
        %v927 = vpop.permute.xlu0 %926
        %928 = vrot.lane.b32.xlu0 %v458, 64
        %v929 = vpop.permute.xlu0 %928
        %930 = vrot.lane.b32.xlu0 %v459, 64
        %v931 = vpop.permute.xlu0 %930
        %932 = vrot.lane.b32.xlu0 %v461, 64
        %v933 = vpop.permute.xlu0 %932
        %934 = vrot.lane.b32.xlu0 %v462, 64
        %v935 = vpop.permute.xlu0 %934
        %936 = vrot.lane.b32.xlu0 %v464, 64
        %v937 = vpop.permute.xlu0 %936
        %938 = vrot.lane.b32.xlu0 %v465, 64
        %v939 = vpop.permute.xlu0 %938
        %940 = vrot.lane.b32.xlu0 %v467, 64
        %v941 = vpop.permute.xlu0 %940
        %942 = vrot.lane.b32.xlu0 %v468, 64
        %v943 = vpop.permute.xlu0 %942
        %944 = vrot.lane.b32.xlu0 %v470, 64
        %v945 = vpop.permute.xlu0 %944
        %946 = vrot.lane.b32.xlu0 %v471, 64
        %v947 = vpop.permute.xlu0 %946
        %948 = vrot.lane.b32.xlu0 %v473, 64
        %v949 = vpop.permute.xlu0 %948
        %950 = vrot.lane.b32.xlu0 %v474, 64
        %v951 = vpop.permute.xlu0 %950
        %952 = vrot.lane.b32.xlu0 %v476, 64
        %v953 = vpop.permute.xlu0 %952
        %954 = vrot.lane.b32.xlu0 %v477, 64
        %v955 = vpop.permute.xlu0 %954
        %956 = vrot.lane.b32.xlu0 %v479, 64
        %v957 = vpop.permute.xlu0 %956
        %958 = vrot.lane.b32.xlu0 %v480, 64
        %v959 = vpop.permute.xlu0 %958
        %980 = vrot.lane.b32.xlu0 %v525, 96
        %v981 = vpop.permute.xlu0 %980
        %982 = vrot.lane.b32.xlu0 %v527, 96
        %v983 = vpop.permute.xlu0 %982
        %984 = vrot.lane.b32.xlu0 %v530, 96
        %v985 = vpop.permute.xlu0 %984
        %986 = vrot.lane.b32.xlu0 %v532, 96
        %v987 = vpop.permute.xlu0 %986
        %988 = vrot.lane.b32.xlu0 %v535, 96
        %v989 = vpop.permute.xlu0 %988
        %990 = vrot.lane.b32.xlu0 %v537, 96
        %v991 = vpop.permute.xlu0 %990
        %992 = vrot.lane.b32.xlu0 %v540, 96
        %v993 = vpop.permute.xlu0 %992
        %994 = vrot.lane.b32.xlu0 %v542, 96
        %v995 = vpop.permute.xlu0 %994
        %996 = vrot.lane.b32.xlu0 %v545, 96
        %v997 = vpop.permute.xlu0 %996
        %998 = vrot.lane.b32.xlu0 %v547, 96
        %v999 = vpop.permute.xlu0 %998
        %1000 = vrot.lane.b32.xlu0 %v550, 96
        %v1001 = vpop.permute.xlu0 %1000
        %1002 = vrot.lane.b32.xlu0 %v552, 96
        %v1003 = vpop.permute.xlu0 %1002
        %1004 = vrot.lane.b32.xlu0 %v555, 96
        %v1005 = vpop.permute.xlu0 %1004
        %1006 = vrot.lane.b32.xlu0 %v557, 96
        %v1007 = vpop.permute.xlu0 %1006
        %1008 = vrot.lane.b32.xlu0 %v560, 96
        %v1009 = vpop.permute.xlu0 %1008
        %1010 = vrot.lane.b32.xlu0 %v562, 96
        %v1011 = vpop.permute.xlu0 %1010
        %1012 = vrot.lane.b32.xlu0 %v619, 96
        %v1013 = vpop.permute.xlu0 %1012
        %1014 = vrot.lane.b32.xlu0 %v621, 96
        %v1015 = vpop.permute.xlu0 %1014
        %1016 = vrot.lane.b32.xlu0 %v652, 96
        %v1017 = vpop.permute.xlu0 %1016
        %1018 = vrot.lane.b32.xlu0 %v654, 96
        %v1019 = vpop.permute.xlu0 %1018
        %vm1040 = vcmask 261120
        %v1041 = vsel %vm1040, %v446, %v681
        %v1042 = vsel %vm1040, %v447, %v683
        %v1043 = vsel %vm1040, %v449, %v685
        %v1044 = vsel %vm1040, %v450, %v687
        %v1045 = vsel %vm1040, %v452, %v689
        %v1046 = vsel %vm1040, %v453, %v691
        %v1047 = vsel %vm1040, %v455, %v693
        %v1048 = vsel %vm1040, %v456, %v695
        %v1049 = vsel %vm1040, %v458, %v697
        %v1050 = vsel %vm1040, %v459, %v699
        %v1051 = vsel %vm1040, %v461, %v701
        %v1052 = vsel %vm1040, %v462, %v703
        %v1053 = vsel %vm1040, %v464, %v705
        %v1054 = vsel %vm1040, %v465, %v707
        %v1055 = vsel %vm1040, %v467, %v709
        %v1056 = vsel %vm1040, %v468, %v711
        %v1057 = vsel %vm1040, %v470, %v713
        %v1058 = vsel %vm1040, %v471, %v715
        %v1059 = vsel %vm1040, %v473, %v717
        %v1060 = vsel %vm1040, %v474, %v719
        %vm1061 = vcmask 523264
        %v1062 = vsel %vm1061, %v1041, %v741
        %v1063 = vsel %vm1061, %v1042, %v743
        %v1064 = vsel %vm1061, %v1043, %v745
        %v1065 = vsel %vm1061, %v1044, %v747
        %v1066 = vsel %vm1061, %v1045, %v749
        %v1067 = vsel %vm1061, %v1046, %v751
        %v1068 = vsel %vm1061, %v1047, %v753
        %v1069 = vsel %vm1061, %v1048, %v755
        %v1070 = vsel %vm1061, %v1049, %v757
        %v1071 = vsel %vm1061, %v1050, %v759
        %v1072 = vsel %vm1061, %v1051, %v761
        %v1073 = vsel %vm1061, %v1052, %v763
        %v1074 = vsel %vm1061, %v1053, %v765
        %v1075 = vsel %vm1061, %v1054, %v767
        %v1076 = vsel %vm1061, %v1055, %v769
        %v1077 = vsel %vm1061, %v1056, %v771
        %v1078 = vsel %vm1061, %v1057, %v773
        %v1079 = vsel %vm1061, %v1058, %v775
        %v1080 = vsel %vm1061, %v1059, %v777
        %v1081 = vsel %vm1061, %v1060, %v779
        %vm1082 = vcmask 785408
        %v1083 = vsel %vm1082, %v1062, %v801
        %v1084 = vsel %vm1082, %v1063, %v803
        %v1085 = vsel %vm1082, %v1064, %v805
        %v1086 = vsel %vm1082, %v1065, %v807
        %v1087 = vsel %vm1082, %v1066, %v809
        %v1088 = vsel %vm1082, %v1067, %v811
        %v1089 = vsel %vm1082, %v1068, %v813
        %v1090 = vsel %vm1082, %v1069, %v815
        %v1091 = vsel %vm1082, %v1070, %v817
        %v1092 = vsel %vm1082, %v1071, %v819
        %v1093 = vsel %vm1082, %v1072, %v821
        %v1094 = vsel %vm1082, %v1073, %v823
        %v1095 = vsel %vm1082, %v1074, %v825
        %v1096 = vsel %vm1082, %v1075, %v827
        %v1097 = vsel %vm1082, %v1076, %v829
        %v1098 = vsel %vm1082, %v1077, %v831
        %v1099 = vsel %vm1082, %v1078, %v833
        %v1100 = vsel %vm1082, %v1079, %v835
        %v1101 = vsel %vm1082, %v1080, %v837
        %v1102 = vsel %vm1082, %v1081, %v839
        %v1103 = vsel %vm1040, %v520, %v861
        %v1104 = vsel %vm1040, %v522, %v863
        %v1105 = vsel %vm1040, %v525, %v865
        %v1106 = vsel %vm1040, %v527, %v867
        %v1107 = vsel %vm1040, %v530, %v869
        %v1108 = vsel %vm1040, %v532, %v871
        %v1109 = vsel %vm1040, %v535, %v873
        %v1110 = vsel %vm1040, %v537, %v875
        %v1111 = vsel %vm1040, %v540, %v877
        %v1112 = vsel %vm1040, %v542, %v879
        %v1113 = vsel %vm1040, %v545, %v881
        %v1114 = vsel %vm1040, %v547, %v883
        %v1115 = vsel %vm1040, %v550, %v885
        %v1116 = vsel %vm1040, %v552, %v887
        %v1117 = vsel %vm1040, %v555, %v889
        %v1118 = vsel %vm1040, %v557, %v891
        %v1119 = vsel %vm1040, %v560, %v893
        %v1120 = vsel %vm1040, %v562, %v895
        %v1121 = vsel %vm1040, %v619, %v897
        %v1122 = vsel %vm1040, %v621, %v899
        %v1123 = vsel %vm1061, %v1103, %v921
        %v1124 = vsel %vm1061, %v1104, %v923
        %v1125 = vsel %vm1061, %v1105, %v925
        %v1126 = vsel %vm1061, %v1106, %v927
        %v1127 = vsel %vm1061, %v1107, %v929
        %v1128 = vsel %vm1061, %v1108, %v931
        %v1129 = vsel %vm1061, %v1109, %v933
        %v1130 = vsel %vm1061, %v1110, %v935
        %v1131 = vsel %vm1061, %v1111, %v937
        %v1132 = vsel %vm1061, %v1112, %v939
        %v1133 = vsel %vm1061, %v1113, %v941
        %v1134 = vsel %vm1061, %v1114, %v943
        %v1135 = vsel %vm1061, %v1115, %v945
        %v1136 = vsel %vm1061, %v1116, %v947
        %v1137 = vsel %vm1061, %v1117, %v949
        %v1138 = vsel %vm1061, %v1118, %v951
        %v1139 = vsel %vm1061, %v1119, %v953
        %v1140 = vsel %vm1061, %v1120, %v955
        %v1141 = vsel %vm1061, %v1121, %v957
        %v1142 = vsel %vm1061, %v1122, %v959
        %v1143 = vsel %vm1082, %v1123, %v981
        %v1144 = vsel %vm1082, %v1124, %v983
        %v1145 = vsel %vm1082, %v1125, %v985
        %v1146 = vsel %vm1082, %v1126, %v987
        %v1147 = vsel %vm1082, %v1127, %v989
        %v1148 = vsel %vm1082, %v1128, %v991
        %v1149 = vsel %vm1082, %v1129, %v993
        %v1150 = vsel %vm1082, %v1130, %v995
        %v1151 = vsel %vm1082, %v1131, %v997
        %v1152 = vsel %vm1082, %v1132, %v999
        %v1153 = vsel %vm1082, %v1133, %v1001
        %v1154 = vsel %vm1082, %v1134, %v1003
        %v1155 = vsel %vm1082, %v1135, %v1005
        %v1156 = vsel %vm1082, %v1136, %v1007
        %v1157 = vsel %vm1082, %v1137, %v1009
        %v1158 = vsel %vm1082, %v1138, %v1011
        %v1159 = vsel %vm1082, %v1139, %v1013
        %v1160 = vsel %vm1082, %v1140, %v1015
        %v1161 = vsel %vm1082, %v1141, %v1017
        %v1162 = vsel %vm1082, %v1142, %v1019
        %v1163 = vpack.c.bf16 %v1084, %v1083
        %v1164 = vpack.c.bf16 %v1144, %v1143
        %v1165 = vpack.c.bf16 %v578, %v576
        %v1166 = vpack.c.bf16 %v1086, %v1085
        %v1167 = vpack.c.bf16 %v1146, %v1145
        %v1168 = vpack.c.bf16 %v583, %v581
        %v1169 = vpack.c.bf16 %v1088, %v1087
        %v1170 = vpack.c.bf16 %v1148, %v1147
        %v1171 = vpack.c.bf16 %v588, %v586
        %v1172 = vpack.c.bf16 %v1090, %v1089
        %v1173 = vpack.c.bf16 %v1150, %v1149
        %v1174 = vpack.c.bf16 %v593, %v591
        %v1175 = vpack.c.bf16 %v1092, %v1091
        %v1176 = vpack.c.bf16 %v1152, %v1151
        %v1177 = vpack.c.bf16 %v598, %v596
        %v1178 = vpack.c.bf16 %v1094, %v1093
        %v1179 = vpack.c.bf16 %v1154, %v1153
        %v1180 = vpack.c.bf16 %v603, %v601
        %v1181 = vpack.c.bf16 %v1096, %v1095
        %v1182 = vpack.c.bf16 %v1156, %v1155
        %v1183 = vpack.c.bf16 %v608, %v606
        %v1184 = vpack.c.bf16 %v1098, %v1097
        %v1185 = vpack.c.bf16 %v1158, %v1157
        %v1186 = vpack.c.bf16 %v613, %v611
        %v1187 = vpack.c.bf16 %v1100, %v1099
        %v1188 = vpack.c.bf16 %v1160, %v1159
        %v1189 = vpack.c.bf16 %v646, %v644
        %v1190 = vpack.c.bf16 %v1102, %v1101
        %v1191 = vpack.c.bf16 %v1162, %v1161
        %v1192 = vpack.c.bf16 %v659, %v657
        %v1193 = vld [vmem:[%s3] sm:$0xf]
        %v1194 = vld [vmem:[%s3 + $0x4] sm:$0xf]
        %v1195 = vld [vmem:[%s3 + $0x8] sm:$0xf]
        %v1196 = vld [vmem:[%s3 + $0xc] sm:$0xf]
        %v1197 = vld [vmem:[%s3 + $0x10] sm:$0xf]
        %v1198 = vld [vmem:[%s3 + $0x14] sm:$0xf]
        %v1199 = vld [vmem:[%s3 + $0x18] sm:$0xf]
        %v1200 = vld [vmem:[%s3 + $0x1c] sm:$0xf]
        %v1201 = vld [vmem:[%s3 + $0x20] sm:$0xf]
        %v1202 = vld [vmem:[%s3 + $0x24] sm:$0xf]
        %v1203 = vld [vmem:[%s3 + $0x28] sm:$0xf]
        %v1204 = vld [vmem:[%s3 + $0x2c] sm:$0xf]
        %v1205 = vld [vmem:[%s3 + $0x30] sm:$0xf]
        %v1206 = vld [vmem:[%s3 + $0x34] sm:$0xf]
        %v1207 = vld [vmem:[%s3 + $0x38] sm:$0xf]
        %v1208 = vld [vmem:[%s3 + $0x3c] sm:$0xf]
        %v1209 = vld [vmem:[%s3 + $0x40] sm:$0xf]
        %v1210 = vld [vmem:[%s3 + $0x44] sm:$0xf]
        %v1211 = vld [vmem:[%s3 + $0x48] sm:$0xf]
        %v1212 = vld [vmem:[%s3 + $0x4c] sm:$0xf]
        %v1213 = vld [vmem:[%s3 + $0x50] sm:$0xf]
        %v1214 = vld [vmem:[%s3 + $0x54] sm:$0xf]
        %v1215 = vld [vmem:[%s3 + $0x58] sm:$0xf]
        %v1216 = vld [vmem:[%s3 + $0x5c] sm:$0xf]
        %v1217 = vld [vmem:[%s3 + $0x60] sm:$0xf]
        %v1218 = vld [vmem:[%s3 + $0x64] sm:$0xf]
        %v1219 = vld [vmem:[%s3 + $0x68] sm:$0xf]
        %v1220 = vld [vmem:[%s3 + $0x6c] sm:$0xf]
        %v1221 = vld [vmem:[%s3 + $0x70] sm:$0xf]
        %v1222 = vld [vmem:[%s3 + $0x74] sm:$0xf]
        %v1223 = vld [vmem:[%s3 + $0x78] sm:$0xf]
        %v1224 = vld [vmem:[%s3 + $0x7c] sm:$0xf]
        %v1225 = vld [vmem:[%s3 + $0x80] sm:$0xf]
        %v1226 = vld [vmem:[%s3 + $0x84] sm:$0xf]
        %v1227 = vld [vmem:[%s3 + $0x88] sm:$0xf]
        %v1228 = vld [vmem:[%s3 + $0x8c] sm:$0xf]
        %v1229 = vld [vmem:[%s4] sm:$0x1]
        %v1231 = vlaneseq
        %v1232 = vshrl.u32 %v1231, 7
        %v1233 = vsub.s32 0, %v1232
        %v1234 = vrot.slane %v1229, %v1233
        %v1272 = vunpack.c.l.b16 %v1193
        %v1273 = vunpack.c.l.b16 %v1194
        %v1274 = vunpack.c.l.b16 %v1195
        %v1275 = vunpack.c.l.b16 %v1196
        %v1276 = vunpack.c.l.b16 %v1197
        %v1277 = vunpack.c.l.b16 %v1198
        %v1278 = vunpack.c.l.b16 %v1199
        %v1279 = vunpack.c.l.b16 %v1200
        %v1280 = vunpack.c.l.b16 %v1201
        %v1281 = vunpack.c.l.b16 %v1202
        %v1282 = vunpack.c.l.b16 %v1203
        %v1283 = vunpack.c.l.b16 %v1204
        %v1284 = vunpack.c.l.b16 %v1205
        %v1285 = vunpack.c.l.b16 %v1206
        %v1286 = vunpack.c.l.b16 %v1207
        %v1287 = vunpack.c.l.b16 %v1208
        %v1288 = vunpack.c.l.b16 %v1209
        %v1289 = vunpack.c.l.b16 %v1210
        %v1290 = vunpack.c.l.b16 %v1211
        %v1291 = vunpack.c.l.b16 %v1212
        %v1292 = vunpack.c.l.b16 %v1213
        %v1293 = vunpack.c.l.b16 %v1214
        %v1294 = vunpack.c.l.b16 %v1215
        %v1295 = vunpack.c.l.b16 %v1216
        %v1296 = vunpack.c.l.b16 %v1217
        %v1297 = vunpack.c.l.b16 %v1218
        %v1298 = vunpack.c.l.b16 %v1219
        %v1299 = vunpack.c.l.b16 %v1220
        %v1300 = vunpack.c.l.b16 %v1221
        %v1301 = vunpack.c.l.b16 %v1222
        %v1302 = vunpack.c.l.b16 %v1223
        %v1303 = vunpack.c.l.b16 %v1224
        %v1304 = vunpack.c.l.b16 %v1225
        %v1305 = vunpack.c.l.b16 %v1226
        %v1306 = vunpack.c.l.b16 %v1227
        %v1307 = vunpack.c.l.b16 %v1228
        %v1308 = vpack.c.b16 %v1273, %v1272
        %v1309 = vpack.c.b16 %v1275, %v1274
        %v1310 = vpack.c.b16 %v1277, %v1276
        %v1311 = vpack.c.b16 %v1279, %v1278
        %v1312 = vpack.c.b16 %v1281, %v1280
        %v1313 = vpack.c.b16 %v1283, %v1282
        %v1314 = vpack.c.b16 %v1285, %v1284
        %v1315 = vpack.c.b16 %v1287, %v1286
        %v1316 = vpack.c.b16 %v1289, %v1288
        %v1317 = vpack.c.b16 %v1291, %v1290
        %v1318 = vpack.c.b16 %v1293, %v1292
        %v1319 = vpack.c.b16 %v1295, %v1294
        %v1320 = vpack.c.b16 %v1297, %v1296
        %v1321 = vpack.c.b16 %v1299, %v1298
        %v1322 = vpack.c.b16 %v1301, %v1300
        %v1323 = vpack.c.b16 %v1303, %v1302
        %v1324 = vpack.c.b16 %v1305, %v1304
        %v1325 = vpack.c.b16 %v1307, %v1306
        %v1345 = vsel %vm1040, %v1165, 0
        %v1348 = vsel %vm1040, %v1168, 0
        %v1351 = vsel %vm1040, %v1171, 0
        %v1354 = vsel %vm1040, %v1174, 0
        %v1357 = vsel %vm1040, %v1177, 0
        %v1360 = vsel %vm1040, %v1180, 0
        %v1363 = vsel %vm1040, %v1183, 0
        %v1366 = vsel %vm1040, %v1186, 0
        %v1369 = vsel %vm1040, %v1189, 0
        %v1372 = vsel %vm1040, %v1192, 0
        %1374 = vmatprep.subr.bf16.mxu0 0
        %1375 = vmatpush1.bf16.msra.mxu0 %v1308
        %1376 = vmatprep.subr.bf16.mxu0 0
        %1377 = vmatpush1.bf16.msra.mxu0 %v1309
        %1378 = vmatprep.subr.bf16.mxu0 0
        %1379 = vmatpush1.bf16.msra.mxu0 %v1310
        %1380 = vmatprep.subr.bf16.mxu0 0
        %1381 = vmatpush1.bf16.msra.mxu0 %v1311
        %1382 = vmatprep.subr.bf16.mxu0 0
        %1383 = vmatpush1.bf16.msra.mxu0 %v1312
        %1384 = vmatprep.subr.bf16.mxu0 0
        %1385 = vmatpush1.bf16.msra.mxu0 %v1313
        %1386 = vmatprep.subr.bf16.mxu0 0
        %1387 = vmatpush1.bf16.msra.mxu0 %v1314
        %1388 = vmatprep.subr.bf16.mxu0 0
        %1389 = vmatpush1.bf16.msra.mxu0 %v1315
        %1390 = vmatprep.subr.bf16.mxu0 0
        %1391 = vmatpush1.bf16.msra.mxu0 %v1316
        %1392 = vmatprep.subr.bf16.mxu0 0
        %1393 = vmatpush1.bf16.msra.mxu0 %v1317
        %1394 = vmatprep.subr.bf16.mxu0 0
        %1395 = vmatpush1.bf16.msra.mxu0 %v1318
        %1396 = vmatprep.subr.bf16.mxu0 0
        %1397 = vmatpush1.bf16.msra.mxu0 %v1319
        %1398 = vmatprep.subr.bf16.mxu0 0
        %1399 = vmatpush1.bf16.msra.mxu0 %v1320
        %1400 = vmatprep.subr.bf16.mxu0 0
        %1401 = vmatpush1.bf16.msra.mxu0 %v1321
        %1402 = vmatprep.subr.bf16.mxu0 0
        %1403 = vmatpush1.bf16.msra.mxu0 %v1322
        %1404 = vmatprep.subr.bf16.mxu0 0
        %1405 = vmatpush1.bf16.msra.mxu0 %v1323
        %1406 = vmatprep.mubr.bf16.mxu0 %v1164
        %1407 = vmatmul.mubr.bf16.gmra.mrb[0].mxu0 %v1163
        %v1408 = vpop.f32.mrb[0].mxu0
        %v1409 = vadd.f32 %v1234, %v1408
        %v1410 = vpop.f32.mrb[0].mxu0
        %v1411 = vpop.f32.mrb[0].mxu0
        %v1412 = vadd.f32 %v1234, %v1411
        %v1413 = vpop.f32.mrb[0].mxu0
        %1414 = vmatprep.mubr.bf16.mxu0 %v1167
        %1415 = vmatmul.mubr.bf16.gmra.mrb[0].mxu0 %v1166
        %v1416 = vpop.f32.mrb[0].mxu0
        %v1417 = vadd.f32 %v1234, %v1416
        %v1418 = vpop.f32.mrb[0].mxu0
        %v1419 = vpop.f32.mrb[0].mxu0
        %v1420 = vadd.f32 %v1234, %v1419
        %v1421 = vpop.f32.mrb[0].mxu0
        %1422 = vmatprep.mubr.bf16.mxu0 %v1170
        %1423 = vmatmul.mubr.bf16.gmra.mrb[0].mxu0 %v1169
        %v1424 = vpop.f32.mrb[0].mxu0
        %v1425 = vadd.f32 %v1234, %v1424
        %v1426 = vpop.f32.mrb[0].mxu0
        %v1427 = vpop.f32.mrb[0].mxu0
        %v1428 = vadd.f32 %v1234, %v1427
        %v1429 = vpop.f32.mrb[0].mxu0
        %1430 = vmatprep.mubr.bf16.mxu0 %v1173
        %1431 = vmatmul.mubr.bf16.gmra.mrb[0].mxu0 %v1172
        %v1432 = vpop.f32.mrb[0].mxu0
        %v1433 = vadd.f32 %v1234, %v1432
        %v1434 = vpop.f32.mrb[0].mxu0
        %v1435 = vpop.f32.mrb[0].mxu0
        %v1436 = vadd.f32 %v1234, %v1435
        %v1437 = vpop.f32.mrb[0].mxu0
        %1438 = vmatprep.mubr.bf16.mxu0 %v1176
        %1439 = vmatmul.mubr.bf16.gmra.mrb[0].mxu0 %v1175
        %v1440 = vpop.f32.mrb[0].mxu0
        %v1441 = vadd.f32 %v1234, %v1440
        %v1442 = vpop.f32.mrb[0].mxu0
        %v1443 = vpop.f32.mrb[0].mxu0
        %v1444 = vadd.f32 %v1234, %v1443
        %v1445 = vpop.f32.mrb[0].mxu0
        %1446 = vmatprep.mubr.bf16.mxu0 %v1179
        %1447 = vmatmul.mubr.bf16.gmra.mrb[0].mxu0 %v1178
        %v1448 = vpop.f32.mrb[0].mxu0
        %v1449 = vadd.f32 %v1234, %v1448
        %v1450 = vpop.f32.mrb[0].mxu0
        %v1451 = vpop.f32.mrb[0].mxu0
        %v1452 = vadd.f32 %v1234, %v1451
        %v1453 = vpop.f32.mrb[0].mxu0
        %1454 = vmatprep.mubr.bf16.mxu0 %v1182
        %1455 = vmatmul.mubr.bf16.gmra.mrb[0].mxu0 %v1181
        %v1456 = vpop.f32.mrb[0].mxu0
        %v1457 = vadd.f32 %v1234, %v1456
        %v1458 = vpop.f32.mrb[0].mxu0
        %v1459 = vpop.f32.mrb[0].mxu0
        %v1460 = vadd.f32 %v1234, %v1459
        %v1461 = vpop.f32.mrb[0].mxu0
        %1462 = vmatprep.mubr.bf16.mxu0 %v1185
        %1463 = vmatmul.mubr.bf16.gmra.mrb[0].mxu0 %v1184
        %v1464 = vpop.f32.mrb[0].mxu0
        %v1465 = vadd.f32 %v1234, %v1464
        %v1466 = vpop.f32.mrb[0].mxu0
        %v1467 = vpop.f32.mrb[0].mxu0
        %v1468 = vadd.f32 %v1234, %v1467
        %v1469 = vpop.f32.mrb[0].mxu0
        %1470 = vmatprep.mubr.bf16.mxu0 %v1188
        %1471 = vmatmul.mubr.bf16.gmra.mrb[0].mxu0 %v1187
        %v1472 = vpop.f32.mrb[0].mxu0
        %v1473 = vadd.f32 %v1234, %v1472
        %v1474 = vpop.f32.mrb[0].mxu0
        %v1475 = vpop.f32.mrb[0].mxu0
        %v1476 = vadd.f32 %v1234, %v1475
        %v1477 = vpop.f32.mrb[0].mxu0
        %1478 = vmatprep.mubr.bf16.mxu0 %v1191
        %1479 = vmatmul.mubr.bf16.gmra.mrb[0].mxu0 %v1190
        %v1480 = vpop.f32.mrb[0].mxu0
        %v1481 = vadd.f32 %v1234, %v1480
        %v1482 = vpop.f32.mrb[0].mxu0
        %v1483 = vpop.f32.mrb[0].mxu0
        %v1484 = vadd.f32 %v1234, %v1483
        %v1485 = vpop.f32.mrb[0].mxu0
        %1486 = vdwg.mxu0
        %1487 = vmatprep.subr.bf16.mxu0 0
        %1488 = vmatpush1.bf16.msra.mxu0 %v1324
        %1489 = vmatprep.subr.bf16.mxu0 0
        %1490 = vmatpush1.bf16.msra.mxu0 %v1325
        %1491 = vmatprep.subr.bf16.mxu0 0
        %1492 = vmatpush1.bf16.msra.mxu0 0
        %1493 = vmatprep.subr.bf16.mxu0 0
        %1494 = vmatpush1.bf16.msra.mxu0 0
        %1495 = vmatprep.subr.bf16.mxu0 0
        %1496 = vmatpush1.bf16.msra.mxu0 0
        %1497 = vmatprep.subr.bf16.mxu0 0
        %1498 = vmatpush1.bf16.msra.mxu0 0
        %1499 = vmatprep.subr.bf16.mxu0 0
        %1500 = vmatpush1.bf16.msra.mxu0 0
        %1501 = vmatprep.subr.bf16.mxu0 0
        %1502 = vmatpush1.bf16.msra.mxu0 0
        %1503 = vmatprep.subr.bf16.mxu0 0
        %1504 = vmatpush1.bf16.msra.mxu0 0
        %1505 = vmatprep.subr.bf16.mxu0 0
        %1506 = vmatpush1.bf16.msra.mxu0 0
        %1507 = vmatprep.subr.bf16.mxu0 0
        %1508 = vmatpush1.bf16.msra.mxu0 0
        %1509 = vmatprep.subr.bf16.mxu0 0
        %1510 = vmatpush1.bf16.msra.mxu0 0
        %1511 = vmatprep.subr.bf16.mxu0 0
        %1512 = vmatpush1.bf16.msra.mxu0 0
        %1513 = vmatprep.subr.bf16.mxu0 0
        %1514 = vmatpush1.bf16.msra.mxu0 0
        %1515 = vmatprep.subr.bf16.mxu0 0
        %1516 = vmatpush1.bf16.msra.mxu0 0
        %1517 = vmatprep.subr.bf16.mxu0 0
        %1518 = vmatpush1.bf16.msra.mxu0 0
        %1519 = vmatprep.mubr.bf16.mxu0 0
        %1520 = vmatmul.mubr.bf16.gmra.mrb[0].mxu0 %v1345
        %v1521 = vpop.f32.mrb[0].mxu0
        %v1522 = vadd.f32 %v1409, %v1521
        %v1523 = vpop.f32.mrb[0].mxu0
        %v1524 = vpop.f32.mrb[0].mxu0
        %v1525 = vadd.f32 %v1412, %v1524
        %v1526 = vpop.f32.mrb[0].mxu0
        %1527 = vmatprep.mubr.bf16.mxu0 0
        %1528 = vmatmul.mubr.bf16.gmra.mrb[0].mxu0 %v1348
        %v1529 = vpop.f32.mrb[0].mxu0
        %v1530 = vadd.f32 %v1417, %v1529
        %v1531 = vpop.f32.mrb[0].mxu0
        %v1532 = vpop.f32.mrb[0].mxu0
        %v1533 = vadd.f32 %v1420, %v1532
        %v1534 = vpop.f32.mrb[0].mxu0
        %1535 = vmatprep.mubr.bf16.mxu0 0
        %1536 = vmatmul.mubr.bf16.gmra.mrb[0].mxu0 %v1351
        %v1537 = vpop.f32.mrb[0].mxu0
        %v1538 = vadd.f32 %v1425, %v1537
        %v1539 = vpop.f32.mrb[0].mxu0
        %v1540 = vpop.f32.mrb[0].mxu0
        %v1541 = vadd.f32 %v1428, %v1540
        %v1542 = vpop.f32.mrb[0].mxu0
        %1543 = vmatprep.mubr.bf16.mxu0 0
        %1544 = vmatmul.mubr.bf16.gmra.mrb[0].mxu0 %v1354
        %v1545 = vpop.f32.mrb[0].mxu0
        %v1546 = vadd.f32 %v1433, %v1545
        %v1547 = vpop.f32.mrb[0].mxu0
        %v1548 = vpop.f32.mrb[0].mxu0
        %v1549 = vadd.f32 %v1436, %v1548
        %v1550 = vpop.f32.mrb[0].mxu0
        %1551 = vmatprep.mubr.bf16.mxu0 0
        %1552 = vmatmul.mubr.bf16.gmra.mrb[0].mxu0 %v1357
        %v1553 = vpop.f32.mrb[0].mxu0
        %v1554 = vadd.f32 %v1441, %v1553
        %v1555 = vpop.f32.mrb[0].mxu0
        %v1556 = vpop.f32.mrb[0].mxu0
        %v1557 = vadd.f32 %v1444, %v1556
        %v1558 = vpop.f32.mrb[0].mxu0
        %1559 = vmatprep.mubr.bf16.mxu0 0
        %1560 = vmatmul.mubr.bf16.gmra.mrb[0].mxu0 %v1360
        %v1561 = vpop.f32.mrb[0].mxu0
        %v1562 = vadd.f32 %v1449, %v1561
        %v1563 = vpop.f32.mrb[0].mxu0
        %v1564 = vpop.f32.mrb[0].mxu0
        %v1565 = vadd.f32 %v1452, %v1564
        %v1566 = vpop.f32.mrb[0].mxu0
        %1567 = vmatprep.mubr.bf16.mxu0 0
        %1568 = vmatmul.mubr.bf16.gmra.mrb[0].mxu0 %v1363
        %v1569 = vpop.f32.mrb[0].mxu0
        %v1570 = vadd.f32 %v1457, %v1569
        %v1571 = vpop.f32.mrb[0].mxu0
        %v1572 = vpop.f32.mrb[0].mxu0
        %v1573 = vadd.f32 %v1460, %v1572
        %v1574 = vpop.f32.mrb[0].mxu0
        %1575 = vmatprep.mubr.bf16.mxu0 0
        %1576 = vmatmul.mubr.bf16.gmra.mrb[0].mxu0 %v1366
        %v1577 = vpop.f32.mrb[0].mxu0
        %v1578 = vadd.f32 %v1465, %v1577
        %v1579 = vpop.f32.mrb[0].mxu0
        %v1580 = vpop.f32.mrb[0].mxu0
        %v1581 = vadd.f32 %v1468, %v1580
        %v1582 = vpop.f32.mrb[0].mxu0
        %1583 = vmatprep.mubr.bf16.mxu0 0
        %1584 = vmatmul.mubr.bf16.gmra.mrb[0].mxu0 %v1369
        %v1585 = vpop.f32.mrb[0].mxu0
        %v1586 = vadd.f32 %v1473, %v1585
        %v1587 = vpop.f32.mrb[0].mxu0
        %v1588 = vpop.f32.mrb[0].mxu0
        %v1589 = vadd.f32 %v1476, %v1588
        %v1590 = vpop.f32.mrb[0].mxu0
        %1591 = vmatprep.mubr.bf16.mxu0 0
        %1592 = vmatmul.mubr.bf16.gmra.mrb[0].mxu0 %v1372
        %v1593 = vpop.f32.mrb[0].mxu0
        %v1594 = vadd.f32 %v1481, %v1593
        %v1595 = vpop.f32.mrb[0].mxu0
        %v1596 = vpop.f32.mrb[0].mxu0
        %v1597 = vadd.f32 %v1484, %v1596
        %v1598 = vpop.f32.mrb[0].mxu0
        %1599 = vdwg.mxu0
        %v1600 = vmul.f32 %v1522, %v1522
        %v1601 = vmul.f32 %v1525, %v1525
        %v1602 = vmul.f32 %v1530, %v1530
        %v1603 = vmul.f32 %v1533, %v1533
        %v1604 = vmul.f32 %v1538, %v1538
        %v1605 = vmul.f32 %v1541, %v1541
        %v1606 = vmul.f32 %v1546, %v1546
        %v1607 = vmul.f32 %v1549, %v1549
        %v1608 = vmul.f32 %v1554, %v1554
        %v1609 = vmul.f32 %v1557, %v1557
        %v1610 = vmul.f32 %v1562, %v1562
        %v1611 = vmul.f32 %v1565, %v1565
        %v1612 = vmul.f32 %v1570, %v1570
        %v1613 = vmul.f32 %v1573, %v1573
        %v1614 = vmul.f32 %v1578, %v1578
        %v1615 = vmul.f32 %v1581, %v1581
        %v1616 = vmul.f32 %v1586, %v1586
        %v1617 = vmul.f32 %v1589, %v1589
        %v1618 = vmul.f32 %v1594, %v1594
        %v1619 = vmul.f32 %v1597, %v1597
        %v1620 = vmul.f32 %v1522, %v1600
        %v1621 = vmul.f32 %v1525, %v1601
        %v1622 = vmul.f32 %v1530, %v1602
        %v1623 = vmul.f32 %v1533, %v1603
        %v1624 = vmul.f32 %v1538, %v1604
        %v1625 = vmul.f32 %v1541, %v1605
        %v1626 = vmul.f32 %v1546, %v1606
        %v1627 = vmul.f32 %v1549, %v1607
        %v1628 = vmul.f32 %v1554, %v1608
        %v1629 = vmul.f32 %v1557, %v1609
        %v1630 = vmul.f32 %v1562, %v1610
        %v1631 = vmul.f32 %v1565, %v1611
        %v1632 = vmul.f32 %v1570, %v1612
        %v1633 = vmul.f32 %v1573, %v1613
        %v1634 = vmul.f32 %v1578, %v1614
        %v1635 = vmul.f32 %v1581, %v1615
        %v1636 = vmul.f32 %v1586, %v1616
        %v1637 = vmul.f32 %v1589, %v1617
        %v1638 = vmul.f32 %v1594, %v1618
        %v1639 = vmul.f32 %v1597, %v1619
        %v1640 = vmul.f32 %v1620, 0.044715
        %v1641 = vmul.f32 %v1621, 0.044715
        %v1642 = vmul.f32 %v1622, 0.044715
        %v1643 = vmul.f32 %v1623, 0.044715
        %v1644 = vmul.f32 %v1624, 0.044715
        %v1645 = vmul.f32 %v1625, 0.044715
        %v1646 = vmul.f32 %v1626, 0.044715
        %v1647 = vmul.f32 %v1627, 0.044715
        %v1648 = vmul.f32 %v1628, 0.044715
        %v1649 = vmul.f32 %v1629, 0.044715
        %v1650 = vmul.f32 %v1630, 0.044715
        %v1651 = vmul.f32 %v1631, 0.044715
        %v1652 = vmul.f32 %v1632, 0.044715
        %v1653 = vmul.f32 %v1633, 0.044715
        %v1654 = vmul.f32 %v1634, 0.044715
        %v1655 = vmul.f32 %v1635, 0.044715
        %v1656 = vmul.f32 %v1636, 0.044715
        %v1657 = vmul.f32 %v1637, 0.044715
        %v1658 = vmul.f32 %v1638, 0.044715
        %v1659 = vmul.f32 %v1639, 0.044715
        %v1660 = vadd.f32 %v1522, %v1640
        %v1661 = vadd.f32 %v1525, %v1641
        %v1662 = vadd.f32 %v1530, %v1642
        %v1663 = vadd.f32 %v1533, %v1643
        %v1664 = vadd.f32 %v1538, %v1644
        %v1665 = vadd.f32 %v1541, %v1645
        %v1666 = vadd.f32 %v1546, %v1646
        %v1667 = vadd.f32 %v1549, %v1647
        %v1668 = vadd.f32 %v1554, %v1648
        %v1669 = vadd.f32 %v1557, %v1649
        %v1670 = vadd.f32 %v1562, %v1650
        %v1671 = vadd.f32 %v1565, %v1651
        %v1672 = vadd.f32 %v1570, %v1652
        %v1673 = vadd.f32 %v1573, %v1653
        %v1674 = vadd.f32 %v1578, %v1654
        %v1675 = vadd.f32 %v1581, %v1655
        %v1676 = vadd.f32 %v1586, %v1656
        %v1677 = vadd.f32 %v1589, %v1657
        %v1678 = vadd.f32 %v1594, %v1658
        %v1679 = vadd.f32 %v1597, %v1659
        %v1680 = vmul.f32 %v1660, 0.7978846
        %v1681 = vmul.f32 %v1661, 0.7978846
        %v1682 = vmul.f32 %v1662, 0.7978846
        %v1683 = vmul.f32 %v1663, 0.7978846
        %v1684 = vmul.f32 %v1664, 0.7978846
        %v1685 = vmul.f32 %v1665, 0.7978846
        %v1686 = vmul.f32 %v1666, 0.7978846
        %v1687 = vmul.f32 %v1667, 0.7978846
        %v1688 = vmul.f32 %v1668, 0.7978846
        %v1689 = vmul.f32 %v1669, 0.7978846
        %v1690 = vmul.f32 %v1670, 0.7978846
        %v1691 = vmul.f32 %v1671, 0.7978846
        %v1692 = vmul.f32 %v1672, 0.7978846
        %v1693 = vmul.f32 %v1673, 0.7978846
        %v1694 = vmul.f32 %v1674, 0.7978846
        %v1695 = vmul.f32 %v1675, 0.7978846
        %v1696 = vmul.f32 %v1676, 0.7978846
        %v1697 = vmul.f32 %v1677, 0.7978846
        %v1698 = vmul.f32 %v1678, 0.7978846
        %v1699 = vmul.f32 %v1679, 0.7978846
        %v1700 = vtanh.pop %v1680
        %v1701 = vtanh.pop %v1681
        %v1702 = vtanh.pop %v1682
        %v1703 = vtanh.pop %v1683
        %v1704 = vtanh.pop %v1684
        %v1705 = vtanh.pop %v1685
        %v1706 = vtanh.pop %v1686
        %v1707 = vtanh.pop %v1687
        %v1708 = vtanh.pop %v1688
        %v1709 = vtanh.pop %v1689
        %v1710 = vtanh.pop %v1690
        %v1711 = vtanh.pop %v1691
        %v1712 = vtanh.pop %v1692
        %v1713 = vtanh.pop %v1693
        %v1714 = vtanh.pop %v1694
        %v1715 = vtanh.pop %v1695
        %v1716 = vtanh.pop %v1696
        %v1717 = vtanh.pop %v1697
        %v1718 = vtanh.pop %v1698
        %v1719 = vtanh.pop %v1699
        %v1720 = vadd.f32 %v1700, 1.0
        %v1721 = vadd.f32 %v1701, 1.0
        %v1722 = vadd.f32 %v1702, 1.0
        %v1723 = vadd.f32 %v1703, 1.0
        %v1724 = vadd.f32 %v1704, 1.0
        %v1725 = vadd.f32 %v1705, 1.0
        %v1726 = vadd.f32 %v1706, 1.0
        %v1727 = vadd.f32 %v1707, 1.0
        %v1728 = vadd.f32 %v1708, 1.0
        %v1729 = vadd.f32 %v1709, 1.0
        %v1730 = vadd.f32 %v1710, 1.0
        %v1731 = vadd.f32 %v1711, 1.0
        %v1732 = vadd.f32 %v1712, 1.0
        %v1733 = vadd.f32 %v1713, 1.0
        %v1734 = vadd.f32 %v1714, 1.0
        %v1735 = vadd.f32 %v1715, 1.0
        %v1736 = vadd.f32 %v1716, 1.0
        %v1737 = vadd.f32 %v1717, 1.0
        %v1738 = vadd.f32 %v1718, 1.0
        %v1739 = vadd.f32 %v1719, 1.0
        %v1740 = vmul.f32 %v1720, 0.5
        %v1741 = vmul.f32 %v1721, 0.5
        %v1742 = vmul.f32 %v1722, 0.5
        %v1743 = vmul.f32 %v1723, 0.5
        %v1744 = vmul.f32 %v1724, 0.5
        %v1745 = vmul.f32 %v1725, 0.5
        %v1746 = vmul.f32 %v1726, 0.5
        %v1747 = vmul.f32 %v1727, 0.5
        %v1748 = vmul.f32 %v1728, 0.5
        %v1749 = vmul.f32 %v1729, 0.5
        %v1750 = vmul.f32 %v1730, 0.5
        %v1751 = vmul.f32 %v1731, 0.5
        %v1752 = vmul.f32 %v1732, 0.5
        %v1753 = vmul.f32 %v1733, 0.5
        %v1754 = vmul.f32 %v1734, 0.5
        %v1755 = vmul.f32 %v1735, 0.5
        %v1756 = vmul.f32 %v1736, 0.5
        %v1757 = vmul.f32 %v1737, 0.5
        %v1758 = vmul.f32 %v1738, 0.5
        %v1759 = vmul.f32 %v1739, 0.5
        %v1760 = vmul.f32 %v1522, %v1740
        %v1761 = vmul.f32 %v1525, %v1741
        %v1762 = vmul.f32 %v1530, %v1742
        %v1763 = vmul.f32 %v1533, %v1743
        %v1764 = vmul.f32 %v1538, %v1744
        %v1765 = vmul.f32 %v1541, %v1745
        %v1766 = vmul.f32 %v1546, %v1746
        %v1767 = vmul.f32 %v1549, %v1747
        %v1768 = vmul.f32 %v1554, %v1748
        %v1769 = vmul.f32 %v1557, %v1749
        %v1770 = vmul.f32 %v1562, %v1750
        %v1771 = vmul.f32 %v1565, %v1751
        %v1772 = vmul.f32 %v1570, %v1752
        %v1773 = vmul.f32 %v1573, %v1753
        %v1774 = vmul.f32 %v1578, %v1754
        %v1775 = vmul.f32 %v1581, %v1755
        %v1776 = vmul.f32 %v1586, %v1756
        %v1777 = vmul.f32 %v1589, %v1757
        %v1778 = vmul.f32 %v1594, %v1758
        %v1779 = vmul.f32 %v1597, %v1759
        %v1780 = vpack.c.bf16 %v1761, %v1760
        %v1781 = vpack.c.bf16 %v1763, %v1762
        %v1782 = vpack.c.bf16 %v1765, %v1764
        %v1783 = vpack.c.bf16 %v1767, %v1766
        %v1784 = vpack.c.bf16 %v1769, %v1768
        %v1785 = vpack.c.bf16 %v1771, %v1770
        %v1786 = vpack.c.bf16 %v1773, %v1772
        %v1787 = vpack.c.bf16 %v1775, %v1774
        %v1788 = vpack.c.bf16 %v1777, %v1776
        %v1789 = vpack.c.bf16 %v1779, %v1778
        %v1790 = vld [vmem:[%s5] sm:$0xf]
        %v1791 = vld [vmem:[%s5 + $0x4] sm:$0xf]
        %v1792 = vld [vmem:[%s5 + $0x8] sm:$0xf]
        %v1793 = vld [vmem:[%s5 + $0xc] sm:$0xf]
        %v1794 = vld [vmem:[%s6] sm:$0x1]
        %v1796 = vlaneseq
        %v1797 = vshrl.u32 %v1796, 7
        %v1798 = vsub.s32 0, %v1797
        %v1799 = vrot.slane %v1794, %v1798
        %v1805 = vunpack.c.l.b16 %v1790
        %v1806 = vunpack.c.l.b16 %v1791
        %v1807 = vunpack.c.l.b16 %v1792
        %v1808 = vunpack.c.l.b16 %v1793
        %v1809 = vpack.c.b16 %v1806, %v1805
        %v1810 = vpack.c.b16 %v1808, %v1807
        %v1814 = vsel %vm1040, %v1780, 0
        %v1817 = vsel %vm1040, %v1781, 0
        %v1820 = vsel %vm1040, %v1782, 0
        %v1823 = vsel %vm1040, %v1783, 0
        %v1826 = vsel %vm1040, %v1784, 0
        %v1829 = vsel %vm1040, %v1785, 0
        %v1832 = vsel %vm1040, %v1786, 0
        %v1835 = vsel %vm1040, %v1787, 0
        %v1838 = vsel %vm1040, %v1788, 0
        %v1841 = vsel %vm1040, %v1789, 0
        %1843 = vmatprep.subr.bf16.mxu0 0
        %1844 = vmatpush1.bf16.msra.mxu0 %v1809
        %1845 = vmatprep.subr.bf16.mxu0 0
        %1846 = vmatpush1.bf16.msra.mxu0 %v1810
        %1847 = vmatprep.subr.bf16.mxu0 0
        %1848 = vmatpush1.bf16.msra.mxu0 0
        %1849 = vmatprep.subr.bf16.mxu0 0
        %1850 = vmatpush1.bf16.msra.mxu0 0
        %1851 = vmatprep.subr.bf16.mxu0 0
        %1852 = vmatpush1.bf16.msra.mxu0 0
        %1853 = vmatprep.subr.bf16.mxu0 0
        %1854 = vmatpush1.bf16.msra.mxu0 0
        %1855 = vmatprep.subr.bf16.mxu0 0
        %1856 = vmatpush1.bf16.msra.mxu0 0
        %1857 = vmatprep.subr.bf16.mxu0 0
        %1858 = vmatpush1.bf16.msra.mxu0 0
        %1859 = vmatprep.subr.bf16.mxu0 0
        %1860 = vmatpush1.bf16.msra.mxu0 0
        %1861 = vmatprep.subr.bf16.mxu0 0
        %1862 = vmatpush1.bf16.msra.mxu0 0
        %1863 = vmatprep.subr.bf16.mxu0 0
        %1864 = vmatpush1.bf16.msra.mxu0 0
        %1865 = vmatprep.subr.bf16.mxu0 0
        %1866 = vmatpush1.bf16.msra.mxu0 0
        %1867 = vmatprep.subr.bf16.mxu0 0
        %1868 = vmatpush1.bf16.msra.mxu0 0
        %1869 = vmatprep.subr.bf16.mxu0 0
        %1870 = vmatpush1.bf16.msra.mxu0 0
        %1871 = vmatprep.subr.bf16.mxu0 0
        %1872 = vmatpush1.bf16.msra.mxu0 0
        %1873 = vmatprep.subr.bf16.mxu0 0
        %1874 = vmatpush1.bf16.msra.mxu0 0
        %1875 = vmatprep.mubr.bf16.mxu0 0
        %1876 = vmatmul.mubr.bf16.gmra.mrb[0].mxu0 %v1814
        %v1877 = vpop.f32.mrb[0].mxu0
        %v1878 = vadd.f32 %v1799, %v1877
        %v1879 = vpop.f32.mrb[0].mxu0
        %v1880 = vpop.f32.mrb[0].mxu0
        %v1881 = vadd.f32 %v1799, %v1880
        %v1882 = vpop.f32.mrb[0].mxu0
        %1883 = vmatprep.mubr.bf16.mxu0 0
        %1884 = vmatmul.mubr.bf16.gmra.mrb[0].mxu0 %v1817
        %v1885 = vpop.f32.mrb[0].mxu0
        %v1886 = vadd.f32 %v1799, %v1885
        %v1887 = vpop.f32.mrb[0].mxu0
        %v1888 = vpop.f32.mrb[0].mxu0
        %v1889 = vadd.f32 %v1799, %v1888
        %v1890 = vpop.f32.mrb[0].mxu0
        %1891 = vmatprep.mubr.bf16.mxu0 0
        %1892 = vmatmul.mubr.bf16.gmra.mrb[0].mxu0 %v1820
        %v1893 = vpop.f32.mrb[0].mxu0
        %v1894 = vadd.f32 %v1799, %v1893
        %v1895 = vpop.f32.mrb[0].mxu0
        %v1896 = vpop.f32.mrb[0].mxu0
        %v1897 = vadd.f32 %v1799, %v1896
        %v1898 = vpop.f32.mrb[0].mxu0
        %1899 = vmatprep.mubr.bf16.mxu0 0
        %1900 = vmatmul.mubr.bf16.gmra.mrb[0].mxu0 %v1823
        %v1901 = vpop.f32.mrb[0].mxu0
        %v1902 = vadd.f32 %v1799, %v1901
        %v1903 = vpop.f32.mrb[0].mxu0
        %v1904 = vpop.f32.mrb[0].mxu0
        %v1905 = vadd.f32 %v1799, %v1904
        %v1906 = vpop.f32.mrb[0].mxu0
        %1907 = vmatprep.mubr.bf16.mxu0 0
        %1908 = vmatmul.mubr.bf16.gmra.mrb[0].mxu0 %v1826
        %v1909 = vpop.f32.mrb[0].mxu0
        %v1910 = vadd.f32 %v1799, %v1909
        %v1911 = vpop.f32.mrb[0].mxu0
        %v1912 = vpop.f32.mrb[0].mxu0
        %v1913 = vadd.f32 %v1799, %v1912
        %v1914 = vpop.f32.mrb[0].mxu0
        %1915 = vmatprep.mubr.bf16.mxu0 0
        %1916 = vmatmul.mubr.bf16.gmra.mrb[0].mxu0 %v1829
        %v1917 = vpop.f32.mrb[0].mxu0
        %v1918 = vadd.f32 %v1799, %v1917
        %v1919 = vpop.f32.mrb[0].mxu0
        %v1920 = vpop.f32.mrb[0].mxu0
        %v1921 = vadd.f32 %v1799, %v1920
        %v1922 = vpop.f32.mrb[0].mxu0
        %1923 = vmatprep.mubr.bf16.mxu0 0
        %1924 = vmatmul.mubr.bf16.gmra.mrb[0].mxu0 %v1832
        %v1925 = vpop.f32.mrb[0].mxu0
        %v1926 = vadd.f32 %v1799, %v1925
        %v1927 = vpop.f32.mrb[0].mxu0
        %v1928 = vpop.f32.mrb[0].mxu0
        %v1929 = vadd.f32 %v1799, %v1928
        %v1930 = vpop.f32.mrb[0].mxu0
        %1931 = vmatprep.mubr.bf16.mxu0 0
        %1932 = vmatmul.mubr.bf16.gmra.mrb[0].mxu0 %v1835
        %v1933 = vpop.f32.mrb[0].mxu0
        %v1934 = vadd.f32 %v1799, %v1933
        %v1935 = vpop.f32.mrb[0].mxu0
        %v1936 = vpop.f32.mrb[0].mxu0
        %v1937 = vadd.f32 %v1799, %v1936
        %v1938 = vpop.f32.mrb[0].mxu0
        %1939 = vmatprep.mubr.bf16.mxu0 0
        %1940 = vmatmul.mubr.bf16.gmra.mrb[0].mxu0 %v1838
        %v1941 = vpop.f32.mrb[0].mxu0
        %v1942 = vadd.f32 %v1799, %v1941
        %v1943 = vpop.f32.mrb[0].mxu0
        %v1944 = vpop.f32.mrb[0].mxu0
        %v1945 = vadd.f32 %v1799, %v1944
        %v1946 = vpop.f32.mrb[0].mxu0
        %1947 = vmatprep.mubr.bf16.mxu0 0
        %1948 = vmatmul.mubr.bf16.gmra.mrb[0].mxu0 %v1841
        %v1949 = vpop.f32.mrb[0].mxu0
        %v1950 = vadd.f32 %v1799, %v1949
        %v1951 = vpop.f32.mrb[0].mxu0
        %v1952 = vpop.f32.mrb[0].mxu0
        %v1953 = vadd.f32 %v1799, %v1952
        %v1954 = vpop.f32.mrb[0].mxu0
        %1955 = vdwg.mxu0
        %v1956 = vmul.f32 %v1878, %v1878
        %v1957 = vmul.f32 %v1881, %v1881
        %v1958 = vmul.f32 %v1886, %v1886
        %v1959 = vmul.f32 %v1889, %v1889
        %v1960 = vmul.f32 %v1894, %v1894
        %v1961 = vmul.f32 %v1897, %v1897
        %v1962 = vmul.f32 %v1902, %v1902
        %v1963 = vmul.f32 %v1905, %v1905
        %v1964 = vmul.f32 %v1910, %v1910
        %v1965 = vmul.f32 %v1913, %v1913
        %v1966 = vmul.f32 %v1918, %v1918
        %v1967 = vmul.f32 %v1921, %v1921
        %v1968 = vmul.f32 %v1926, %v1926
        %v1969 = vmul.f32 %v1929, %v1929
        %v1970 = vmul.f32 %v1934, %v1934
        %v1971 = vmul.f32 %v1937, %v1937
        %v1972 = vmul.f32 %v1942, %v1942
        %v1973 = vmul.f32 %v1945, %v1945
        %v1974 = vmul.f32 %v1950, %v1950
        %v1975 = vmul.f32 %v1953, %v1953
        %v1976 = vmul.f32 %v1878, %v1956
        %v1977 = vmul.f32 %v1881, %v1957
        %v1978 = vmul.f32 %v1886, %v1958
        %v1979 = vmul.f32 %v1889, %v1959
        %v1980 = vmul.f32 %v1894, %v1960
        %v1981 = vmul.f32 %v1897, %v1961
        %v1982 = vmul.f32 %v1902, %v1962
        %v1983 = vmul.f32 %v1905, %v1963
        %v1984 = vmul.f32 %v1910, %v1964
        %v1985 = vmul.f32 %v1913, %v1965
        %v1986 = vmul.f32 %v1918, %v1966
        %v1987 = vmul.f32 %v1921, %v1967
        %v1988 = vmul.f32 %v1926, %v1968
        %v1989 = vmul.f32 %v1929, %v1969
        %v1990 = vmul.f32 %v1934, %v1970
        %v1991 = vmul.f32 %v1937, %v1971
        %v1992 = vmul.f32 %v1942, %v1972
        %v1993 = vmul.f32 %v1945, %v1973
        %v1994 = vmul.f32 %v1950, %v1974
        %v1995 = vmul.f32 %v1953, %v1975
        %v1996 = vmul.f32 %v1976, 0.044715
        %v1997 = vmul.f32 %v1977, 0.044715
        %v1998 = vmul.f32 %v1978, 0.044715
        %v1999 = vmul.f32 %v1979, 0.044715
        %v2000 = vmul.f32 %v1980, 0.044715
        %v2001 = vmul.f32 %v1981, 0.044715
        %v2002 = vmul.f32 %v1982, 0.044715
        %v2003 = vmul.f32 %v1983, 0.044715
        %v2004 = vmul.f32 %v1984, 0.044715
        %v2005 = vmul.f32 %v1985, 0.044715
        %v2006 = vmul.f32 %v1986, 0.044715
        %v2007 = vmul.f32 %v1987, 0.044715
        %v2008 = vmul.f32 %v1988, 0.044715
        %v2009 = vmul.f32 %v1989, 0.044715
        %v2010 = vmul.f32 %v1990, 0.044715
        %v2011 = vmul.f32 %v1991, 0.044715
        %v2012 = vmul.f32 %v1992, 0.044715
        %v2013 = vmul.f32 %v1993, 0.044715
        %v2014 = vmul.f32 %v1994, 0.044715
        %v2015 = vmul.f32 %v1995, 0.044715
        %v2016 = vadd.f32 %v1878, %v1996
        %v2017 = vadd.f32 %v1881, %v1997
        %v2018 = vadd.f32 %v1886, %v1998
        %v2019 = vadd.f32 %v1889, %v1999
        %v2020 = vadd.f32 %v1894, %v2000
        %v2021 = vadd.f32 %v1897, %v2001
        %v2022 = vadd.f32 %v1902, %v2002
        %v2023 = vadd.f32 %v1905, %v2003
        %v2024 = vadd.f32 %v1910, %v2004
        %v2025 = vadd.f32 %v1913, %v2005
        %v2026 = vadd.f32 %v1918, %v2006
        %v2027 = vadd.f32 %v1921, %v2007
        %v2028 = vadd.f32 %v1926, %v2008
        %v2029 = vadd.f32 %v1929, %v2009
        %v2030 = vadd.f32 %v1934, %v2010
        %v2031 = vadd.f32 %v1937, %v2011
        %v2032 = vadd.f32 %v1942, %v2012
        %v2033 = vadd.f32 %v1945, %v2013
        %v2034 = vadd.f32 %v1950, %v2014
        %v2035 = vadd.f32 %v1953, %v2015
        %v2036 = vmul.f32 %v2016, 0.7978846
        %v2037 = vmul.f32 %v2017, 0.7978846
        %v2038 = vmul.f32 %v2018, 0.7978846
        %v2039 = vmul.f32 %v2019, 0.7978846
        %v2040 = vmul.f32 %v2020, 0.7978846
        %v2041 = vmul.f32 %v2021, 0.7978846
        %v2042 = vmul.f32 %v2022, 0.7978846
        %v2043 = vmul.f32 %v2023, 0.7978846
        %v2044 = vmul.f32 %v2024, 0.7978846
        %v2045 = vmul.f32 %v2025, 0.7978846
        %v2046 = vmul.f32 %v2026, 0.7978846
        %v2047 = vmul.f32 %v2027, 0.7978846
        %v2048 = vmul.f32 %v2028, 0.7978846
        %v2049 = vmul.f32 %v2029, 0.7978846
        %v2050 = vmul.f32 %v2030, 0.7978846
        %v2051 = vmul.f32 %v2031, 0.7978846
        %v2052 = vmul.f32 %v2032, 0.7978846
        %v2053 = vmul.f32 %v2033, 0.7978846
        %v2054 = vmul.f32 %v2034, 0.7978846
        %v2055 = vmul.f32 %v2035, 0.7978846
        %v2056 = vtanh.pop %v2036
        %v2057 = vtanh.pop %v2037
        %v2058 = vtanh.pop %v2038
        %v2059 = vtanh.pop %v2039
        %v2060 = vtanh.pop %v2040
        %v2061 = vtanh.pop %v2041
        %v2062 = vtanh.pop %v2042
        %v2063 = vtanh.pop %v2043
        %v2064 = vtanh.pop %v2044
        %v2065 = vtanh.pop %v2045
        %v2066 = vtanh.pop %v2046
        %v2067 = vtanh.pop %v2047
        %v2068 = vtanh.pop %v2048
        %v2069 = vtanh.pop %v2049
        %v2070 = vtanh.pop %v2050
        %v2071 = vtanh.pop %v2051
        %v2072 = vtanh.pop %v2052
        %v2073 = vtanh.pop %v2053
        %v2074 = vtanh.pop %v2054
        %v2075 = vtanh.pop %v2055
        %v2076 = vadd.f32 %v2056, 1.0
        %v2077 = vadd.f32 %v2057, 1.0
        %v2078 = vadd.f32 %v2058, 1.0
        %v2079 = vadd.f32 %v2059, 1.0
        %v2080 = vadd.f32 %v2060, 1.0
        %v2081 = vadd.f32 %v2061, 1.0
        %v2082 = vadd.f32 %v2062, 1.0
        %v2083 = vadd.f32 %v2063, 1.0
        %v2084 = vadd.f32 %v2064, 1.0
        %v2085 = vadd.f32 %v2065, 1.0
        %v2086 = vadd.f32 %v2066, 1.0
        %v2087 = vadd.f32 %v2067, 1.0
        %v2088 = vadd.f32 %v2068, 1.0
        %v2089 = vadd.f32 %v2069, 1.0
        %v2090 = vadd.f32 %v2070, 1.0
        %v2091 = vadd.f32 %v2071, 1.0
        %v2092 = vadd.f32 %v2072, 1.0
        %v2093 = vadd.f32 %v2073, 1.0
        %v2094 = vadd.f32 %v2074, 1.0
        %v2095 = vadd.f32 %v2075, 1.0
        %v2096 = vmul.f32 %v2076, 0.5
        %v2097 = vmul.f32 %v2077, 0.5
        %v2098 = vmul.f32 %v2078, 0.5
        %v2099 = vmul.f32 %v2079, 0.5
        %v2100 = vmul.f32 %v2080, 0.5
        %v2101 = vmul.f32 %v2081, 0.5
        %v2102 = vmul.f32 %v2082, 0.5
        %v2103 = vmul.f32 %v2083, 0.5
        %v2104 = vmul.f32 %v2084, 0.5
        %v2105 = vmul.f32 %v2085, 0.5
        %v2106 = vmul.f32 %v2086, 0.5
        %v2107 = vmul.f32 %v2087, 0.5
        %v2108 = vmul.f32 %v2088, 0.5
        %v2109 = vmul.f32 %v2089, 0.5
        %v2110 = vmul.f32 %v2090, 0.5
        %v2111 = vmul.f32 %v2091, 0.5
        %v2112 = vmul.f32 %v2092, 0.5
        %v2113 = vmul.f32 %v2093, 0.5
        %v2114 = vmul.f32 %v2094, 0.5
        %v2115 = vmul.f32 %v2095, 0.5
        %v2116 = vmul.f32 %v1878, %v2096
        %v2117 = vmul.f32 %v1881, %v2097
        %v2118 = vmul.f32 %v1886, %v2098
        %v2119 = vmul.f32 %v1889, %v2099
        %v2120 = vmul.f32 %v1894, %v2100
        %v2121 = vmul.f32 %v1897, %v2101
        %v2122 = vmul.f32 %v1902, %v2102
        %v2123 = vmul.f32 %v1905, %v2103
        %v2124 = vmul.f32 %v1910, %v2104
        %v2125 = vmul.f32 %v1913, %v2105
        %v2126 = vmul.f32 %v1918, %v2106
        %v2127 = vmul.f32 %v1921, %v2107
        %v2128 = vmul.f32 %v1926, %v2108
        %v2129 = vmul.f32 %v1929, %v2109
        %v2130 = vmul.f32 %v1934, %v2110
        %v2131 = vmul.f32 %v1937, %v2111
        %v2132 = vmul.f32 %v1942, %v2112
        %v2133 = vmul.f32 %v1945, %v2113
        %v2134 = vmul.f32 %v1950, %v2114
        %v2135 = vmul.f32 %v1953, %v2115
        %s2136 = ssub.s32 %s406, 1
        %v2137 = vstv %s2136
        %v2138 = vadd.s32 %v2137, 1
        %v2139 = vadd.s32 %v2137, 2
        %v2140 = vadd.s32 %v2137, 3
        %v2141 = vadd.s32 %v2137, 4
        %v2142 = vadd.s32 %v2137, 5
        %v2143 = vadd.s32 %v2137, 6
        %v2144 = vadd.s32 %v2137, 7
        %v2145 = vadd.s32 %v2137, 8
        %v2146 = vadd.s32 %v2137, 9
        %vm2147 = vcmp.ge.s32.totalorder %v2137, 0
        %vm2148 = vcmp.ge.s32.totalorder %v2138, 0
        %vm2149 = vcmp.ge.s32.totalorder %v2139, 0
        %vm2150 = vcmp.ge.s32.totalorder %v2140, 0
        %vm2151 = vcmp.ge.s32.totalorder %v2141, 0
        %vm2152 = vcmp.ge.s32.totalorder %v2142, 0
        %vm2153 = vcmp.ge.s32.totalorder %v2143, 0
        %vm2154 = vcmp.ge.s32.totalorder %v2144, 0
        %vm2155 = vcmp.ge.s32.totalorder %v2145, 0
        %vm2156 = vcmp.ge.s32.totalorder %v2146, 0
        %vm2157 = vcmp.lt.s32.totalorder %v2137, 16
        %vm2158 = vcmp.lt.s32.totalorder %v2138, 16
        %vm2159 = vcmp.lt.s32.totalorder %v2139, 16
        %vm2160 = vcmp.lt.s32.totalorder %v2140, 16
        %vm2161 = vcmp.lt.s32.totalorder %v2141, 16
        %vm2162 = vcmp.lt.s32.totalorder %v2142, 16
        %vm2163 = vcmp.lt.s32.totalorder %v2143, 16
        %vm2164 = vcmp.lt.s32.totalorder %v2144, 16
        %vm2165 = vcmp.lt.s32.totalorder %v2145, 16
        %vm2166 = vcmp.lt.s32.totalorder %v2146, 16
        %vm2167 = vmand %vm2147, %vm2157
        %vm2168 = vmand %vm2148, %vm2158
        %vm2169 = vmand %vm2149, %vm2159
        %vm2170 = vmand %vm2150, %vm2160
        %vm2171 = vmand %vm2151, %vm2161
        %vm2172 = vmand %vm2152, %vm2162
        %vm2173 = vmand %vm2153, %vm2163
        %vm2174 = vmand %vm2154, %vm2164
        %vm2175 = vmand %vm2155, %vm2165
        %vm2176 = vmand %vm2156, %vm2166
        %v2177 = vsel %vm2167, 1, 0
        %v2178 = vsel %vm2168, 1, 0
        %v2179 = vsel %vm2169, 1, 0
        %v2180 = vsel %vm2170, 1, 0
        %v2181 = vsel %vm2171, 1, 0
        %v2182 = vsel %vm2172, 1, 0
        %v2183 = vsel %vm2173, 1, 0
        %v2184 = vsel %vm2174, 1, 0
        %v2185 = vsel %vm2175, 1, 0
        %v2186 = vsel %vm2176, 1, 0
        %vm2187 = vcmp.eq.s32.totalorder %v2177, 1
        %vm2188 = vcmp.eq.s32.totalorder %v2178, 1
        %vm2189 = vcmp.eq.s32.totalorder %v2179, 1
        %vm2190 = vcmp.eq.s32.totalorder %v2180, 1
        %vm2191 = vcmp.eq.s32.totalorder %v2181, 1
        %vm2192 = vcmp.eq.s32.totalorder %v2182, 1
        %vm2193 = vcmp.eq.s32.totalorder %v2183, 1
        %vm2194 = vcmp.eq.s32.totalorder %v2184, 1
        %vm2195 = vcmp.eq.s32.totalorder %v2185, 1
        %vm2196 = vcmp.eq.s32.totalorder %v2186, 1
        %v2197 = vsel %vm2187, %v2116, 0.0
        %v2198 = vsel %vm2187, %v2117, 0.0
        %v2199 = vsel %vm2188, %v2118, 0.0
        %v2200 = vsel %vm2188, %v2119, 0.0
        %v2201 = vsel %vm2189, %v2120, 0.0
        %v2202 = vsel %vm2189, %v2121, 0.0
        %v2203 = vsel %vm2190, %v2122, 0.0
        %v2204 = vsel %vm2190, %v2123, 0.0
        %v2205 = vsel %vm2191, %v2124, 0.0
        %v2206 = vsel %vm2191, %v2125, 0.0
        %v2207 = vsel %vm2192, %v2126, 0.0
        %v2208 = vsel %vm2192, %v2127, 0.0
        %v2209 = vsel %vm2193, %v2128, 0.0
        %v2210 = vsel %vm2193, %v2129, 0.0
        %v2211 = vsel %vm2194, %v2130, 0.0
        %v2212 = vsel %vm2194, %v2131, 0.0
        %v2213 = vsel %vm2195, %v2132, 0.0
        %v2214 = vsel %vm2195, %v2133, 0.0
        %v2215 = vsel %vm2196, %v2134, 0.0
        %v2216 = vsel %vm2196, %v2135, 0.0
        %vm2217 = vcmask 253952
        %2218 = vst.msk [vmem:[#allocation2] sm:$0x1] %vm2217, 0.0
        %2219 = vst.msk [vmem:[#allocation2 + $0x18] sm:$0x1] %vm2217, 0.0
        %2220 = vst.msk [vmem:[#allocation2 + $0x30] sm:$0x1] %vm2217, 0.0
        %2221 = vst.msk [vmem:[#allocation2 + $0x48] sm:$0x1] %vm2217, 0.0
        %2222 = vst.msk [vmem:[#allocation2 + $0x60] sm:$0x1] %vm2217, 0.0
        %2223 = vst.msk [vmem:[#allocation2 + $0x78] sm:$0x1] %vm2217, 0.0
        %2224 = vst.msk [vmem:[#allocation2 + $0x90] sm:$0x1] %vm2217, 0.0
        %2225 = vst.msk [vmem:[#allocation2 + $0xa8] sm:$0x1] %vm2217, 0.0
        %2226 = vst.msk [vmem:[#allocation2 + $0xc0] sm:$0x1] %vm2217, 0.0
        %2227 = vst.msk [vmem:[#allocation2 + $0xd8] sm:$0x1] %vm2217, 0.0
        %2228 = vst.msk [vmem:[#allocation2 + $0x11] sm:$0x1] %vm2217, 0.0
        %2229 = vst.msk [vmem:[#allocation2 + $0x29] sm:$0x1] %vm2217, 0.0
        %2230 = vst.msk [vmem:[#allocation2 + $0x41] sm:$0x1] %vm2217, 0.0
        %2231 = vst.msk [vmem:[#allocation2 + $0x59] sm:$0x1] %vm2217, 0.0
        %2232 = vst.msk [vmem:[#allocation2 + $0x71] sm:$0x1] %vm2217, 0.0
        %2233 = vst.msk [vmem:[#allocation2 + $0x89] sm:$0x1] %vm2217, 0.0
        %2234 = vst.msk [vmem:[#allocation2 + $0xa1] sm:$0x1] %vm2217, 0.0
        %2235 = vst.msk [vmem:[#allocation2 + $0xb9] sm:$0x1] %vm2217, 0.0
        %2236 = vst.msk [vmem:[#allocation2 + $0xd1] sm:$0x1] %vm2217, 0.0
        %2237 = vst.msk [vmem:[#allocation2 + $0xe9] sm:$0x1] %vm2217, 0.0
        %2238 = vst.msk [vmem:[#allocation2 + $0x1] sm:$0xff] %vm1040, %v2197
        %2239 = vst.msk [vmem:[#allocation2 + $0x9] sm:$0xff] %vm1040, %v2198
        %2240 = vst.msk [vmem:[#allocation2 + $0x19] sm:$0xff] %vm1040, %v2199
        %2241 = vst.msk [vmem:[#allocation2 + $0x21] sm:$0xff] %vm1040, %v2200
        %2242 = vst.msk [vmem:[#allocation2 + $0x31] sm:$0xff] %vm1040, %v2201
        %2243 = vst.msk [vmem:[#allocation2 + $0x39] sm:$0xff] %vm1040, %v2202
        %2244 = vst.msk [vmem:[#allocation2 + $0x49] sm:$0xff] %vm1040, %v2203
        %2245 = vst.msk [vmem:[#allocation2 + $0x51] sm:$0xff] %vm1040, %v2204
        %2246 = vst.msk [vmem:[#allocation2 + $0x61] sm:$0xff] %vm1040, %v2205
        %2247 = vst.msk [vmem:[#allocation2 + $0x69] sm:$0xff] %vm1040, %v2206
        %2248 = vst.msk [vmem:[#allocation2 + $0x79] sm:$0xff] %vm1040, %v2207
        %2249 = vst.msk [vmem:[#allocation2 + $0x81] sm:$0xff] %vm1040, %v2208
        %2250 = vst.msk [vmem:[#allocation2 + $0x91] sm:$0xff] %vm1040, %v2209
        %2251 = vst.msk [vmem:[#allocation2 + $0x99] sm:$0xff] %vm1040, %v2210
        %2252 = vst.msk [vmem:[#allocation2 + $0xa9] sm:$0xff] %vm1040, %v2211
        %2253 = vst.msk [vmem:[#allocation2 + $0xb1] sm:$0xff] %vm1040, %v2212
        %2254 = vst.msk [vmem:[#allocation2 + $0xc1] sm:$0xff] %vm1040, %v2213
        %2255 = vst.msk [vmem:[#allocation2 + $0xc9] sm:$0xff] %vm1040, %v2214
        %2256 = vst.msk [vmem:[#allocation2 + $0xd9] sm:$0xff] %vm1040, %v2215
        %2257 = vst.msk [vmem:[#allocation2 + $0xe1] sm:$0xff] %vm1040, %v2216
        %v2258 = vld [vmem:[%s7] sm:$0xff]
        %v2259 = vld [vmem:[%s7 + $0x8] sm:$0x1]
        %v2260 = vld [vmem:[%s8] sm:$0x1]
        %v2261 = vld [vmem:[#allocation2] sm:$0xff]
        %v2262 = vld [vmem:[#allocation2 + $0x8] sm:$0xff]
        %v2263 = vld [vmem:[#allocation2 + $0x18] sm:$0xff]
        %v2264 = vld [vmem:[#allocation2 + $0x20] sm:$0xff]
        %v2265 = vld [vmem:[#allocation2 + $0x30] sm:$0xff]
        %v2266 = vld [vmem:[#allocation2 + $0x38] sm:$0xff]
        %v2267 = vld [vmem:[#allocation2 + $0x48] sm:$0xff]
        %v2268 = vld [vmem:[#allocation2 + $0x50] sm:$0xff]
        %v2269 = vld [vmem:[#allocation2 + $0x60] sm:$0xff]
        %v2270 = vld [vmem:[#allocation2 + $0x68] sm:$0xff]
        %v2271 = vld [vmem:[#allocation2 + $0x78] sm:$0xff]
        %v2272 = vld [vmem:[#allocation2 + $0x80] sm:$0xff]
        %v2273 = vld [vmem:[#allocation2 + $0x90] sm:$0xff]
        %v2274 = vld [vmem:[#allocation2 + $0x98] sm:$0xff]
        %v2275 = vld [vmem:[#allocation2 + $0xa8] sm:$0xff]
        %v2276 = vld [vmem:[#allocation2 + $0xb0] sm:$0xff]
        %v2277 = vlaneseq
        %v2278 = vshrl.u32 %v2277, 7
        %v2279 = vsub.s32 0, %v2278
        %v2280 = vrot.slane %v2258, %v2279
        %v2281 = vmul.f32 %v2261, %v2280
        %v2282 = vmul.f32 %v2262, %v2280
        %v2283 = vmul.f32 %v2263, %v2280
        %v2284 = vmul.f32 %v2264, %v2280
        %v2285 = vmul.f32 %v2265, %v2280
        %v2286 = vmul.f32 %v2266, %v2280
        %v2287 = vmul.f32 %v2267, %v2280
        %v2288 = vmul.f32 %v2268, %v2280
        %v2289 = vmul.f32 %v2269, %v2280
        %v2290 = vmul.f32 %v2270, %v2280
        %v2291 = vmul.f32 %v2271, %v2280
        %v2292 = vmul.f32 %v2272, %v2280
        %v2293 = vmul.f32 %v2273, %v2280
        %v2294 = vmul.f32 %v2274, %v2280
        %v2295 = vmul.f32 %v2275, %v2280
        %v2296 = vmul.f32 %v2276, %v2280
        %v2297 = vld [vmem:[#allocation2 + $0x1] sm:$0xff]
        %v2298 = vld [vmem:[#allocation2 + $0x9] sm:$0xff]
        %v2299 = vld [vmem:[#allocation2 + $0x19] sm:$0xff]
        %v2300 = vld [vmem:[#allocation2 + $0x21] sm:$0xff]
        %v2301 = vld [vmem:[#allocation2 + $0x31] sm:$0xff]
        %v2302 = vld [vmem:[#allocation2 + $0x39] sm:$0xff]
        %v2303 = vld [vmem:[#allocation2 + $0x49] sm:$0xff]
        %v2304 = vld [vmem:[#allocation2 + $0x51] sm:$0xff]
        %v2305 = vld [vmem:[#allocation2 + $0x61] sm:$0xff]
        %v2306 = vld [vmem:[#allocation2 + $0x69] sm:$0xff]
        %v2307 = vld [vmem:[#allocation2 + $0x79] sm:$0xff]
        %v2308 = vld [vmem:[#allocation2 + $0x81] sm:$0xff]
        %v2309 = vld [vmem:[#allocation2 + $0x91] sm:$0xff]
        %v2310 = vld [vmem:[#allocation2 + $0x99] sm:$0xff]
        %v2311 = vld [vmem:[#allocation2 + $0xa9] sm:$0xff]
        %v2312 = vld [vmem:[#allocation2 + $0xb1] sm:$0xff]
        %v2313 = vlaneseq
        %v2314 = vshrl.u32 %v2313, 7
        %v2315 = vsub.s32 1, %v2314
        %v2316 = vrot.slane %v2258, %v2315
        %v2317 = vmul.f32 %v2297, %v2316
        %v2318 = vmul.f32 %v2298, %v2316
        %v2319 = vmul.f32 %v2299, %v2316
        %v2320 = vmul.f32 %v2300, %v2316
        %v2321 = vmul.f32 %v2301, %v2316
        %v2322 = vmul.f32 %v2302, %v2316
        %v2323 = vmul.f32 %v2303, %v2316
        %v2324 = vmul.f32 %v2304, %v2316
        %v2325 = vmul.f32 %v2305, %v2316
        %v2326 = vmul.f32 %v2306, %v2316
        %v2327 = vmul.f32 %v2307, %v2316
        %v2328 = vmul.f32 %v2308, %v2316
        %v2329 = vmul.f32 %v2309, %v2316
        %v2330 = vmul.f32 %v2310, %v2316
        %v2331 = vmul.f32 %v2311, %v2316
        %v2332 = vmul.f32 %v2312, %v2316
        %v2333 = vadd.f32 %v2281, %v2317
        %v2334 = vadd.f32 %v2282, %v2318
        %v2335 = vadd.f32 %v2283, %v2319
        %v2336 = vadd.f32 %v2284, %v2320
        %v2337 = vadd.f32 %v2285, %v2321
        %v2338 = vadd.f32 %v2286, %v2322
        %v2339 = vadd.f32 %v2287, %v2323
        %v2340 = vadd.f32 %v2288, %v2324
        %v2341 = vadd.f32 %v2289, %v2325
        %v2342 = vadd.f32 %v2290, %v2326
        %v2343 = vadd.f32 %v2291, %v2327
        %v2344 = vadd.f32 %v2292, %v2328
        %v2345 = vadd.f32 %v2293, %v2329
        %v2346 = vadd.f32 %v2294, %v2330
        %v2347 = vadd.f32 %v2295, %v2331
        %v2348 = vadd.f32 %v2296, %v2332
        %v2349 = vld [vmem:[#allocation2 + $0x2] sm:$0xff]
        %v2350 = vld [vmem:[#allocation2 + $0xa] sm:$0xff]
        %v2351 = vld [vmem:[#allocation2 + $0x1a] sm:$0xff]
        %v2352 = vld [vmem:[#allocation2 + $0x22] sm:$0xff]
        %v2353 = vld [vmem:[#allocation2 + $0x32] sm:$0xff]
        %v2354 = vld [vmem:[#allocation2 + $0x3a] sm:$0xff]
        %v2355 = vld [vmem:[#allocation2 + $0x4a] sm:$0xff]
        %v2356 = vld [vmem:[#allocation2 + $0x52] sm:$0xff]
        %v2357 = vld [vmem:[#allocation2 + $0x62] sm:$0xff]
        %v2358 = vld [vmem:[#allocation2 + $0x6a] sm:$0xff]
        %v2359 = vld [vmem:[#allocation2 + $0x7a] sm:$0xff]
        %v2360 = vld [vmem:[#allocation2 + $0x82] sm:$0xff]
        %v2361 = vld [vmem:[#allocation2 + $0x92] sm:$0xff]
        %v2362 = vld [vmem:[#allocation2 + $0x9a] sm:$0xff]
        %v2363 = vld [vmem:[#allocation2 + $0xaa] sm:$0xff]
        %v2364 = vld [vmem:[#allocation2 + $0xb2] sm:$0xff]
        %v2365 = vlaneseq
        %v2366 = vshrl.u32 %v2365, 7
        %v2367 = vsub.s32 2, %v2366
        %v2368 = vrot.slane %v2258, %v2367
        %v2369 = vmul.f32 %v2349, %v2368
        %v2370 = vmul.f32 %v2350, %v2368
        %v2371 = vmul.f32 %v2351, %v2368
        %v2372 = vmul.f32 %v2352, %v2368
        %v2373 = vmul.f32 %v2353, %v2368
        %v2374 = vmul.f32 %v2354, %v2368
        %v2375 = vmul.f32 %v2355, %v2368
        %v2376 = vmul.f32 %v2356, %v2368
        %v2377 = vmul.f32 %v2357, %v2368
        %v2378 = vmul.f32 %v2358, %v2368
        %v2379 = vmul.f32 %v2359, %v2368
        %v2380 = vmul.f32 %v2360, %v2368
        %v2381 = vmul.f32 %v2361, %v2368
        %v2382 = vmul.f32 %v2362, %v2368
        %v2383 = vmul.f32 %v2363, %v2368
        %v2384 = vmul.f32 %v2364, %v2368
        %v2385 = vadd.f32 %v2333, %v2369
        %v2386 = vadd.f32 %v2334, %v2370
        %v2387 = vadd.f32 %v2335, %v2371
        %v2388 = vadd.f32 %v2336, %v2372
        %v2389 = vadd.f32 %v2337, %v2373
        %v2390 = vadd.f32 %v2338, %v2374
        %v2391 = vadd.f32 %v2339, %v2375
        %v2392 = vadd.f32 %v2340, %v2376
        %v2393 = vadd.f32 %v2341, %v2377
        %v2394 = vadd.f32 %v2342, %v2378
        %v2395 = vadd.f32 %v2343, %v2379
        %v2396 = vadd.f32 %v2344, %v2380
        %v2397 = vadd.f32 %v2345, %v2381
        %v2398 = vadd.f32 %v2346, %v2382
        %v2399 = vadd.f32 %v2347, %v2383
        %v2400 = vadd.f32 %v2348, %v2384
        %s2401 = scalar_lea.vmem [#allocation2], 24
        %v2402 = vld [vmem:[%s2401] sm:$0xff]
        %v2403 = vld [vmem:[%s2401 + $0x8] sm:$0xff]
        %v2404 = vld [vmem:[%s2401 + $0x18] sm:$0xff]
        %v2405 = vld [vmem:[%s2401 + $0x20] sm:$0xff]
        %v2406 = vld [vmem:[%s2401 + $0x30] sm:$0xff]
        %v2407 = vld [vmem:[%s2401 + $0x38] sm:$0xff]
        %v2408 = vld [vmem:[%s2401 + $0x48] sm:$0xff]
        %v2409 = vld [vmem:[%s2401 + $0x50] sm:$0xff]
        %v2410 = vld [vmem:[%s2401 + $0x60] sm:$0xff]
        %v2411 = vld [vmem:[%s2401 + $0x68] sm:$0xff]
        %v2412 = vld [vmem:[%s2401 + $0x78] sm:$0xff]
        %v2413 = vld [vmem:[%s2401 + $0x80] sm:$0xff]
        %v2414 = vld [vmem:[%s2401 + $0x90] sm:$0xff]
        %v2415 = vld [vmem:[%s2401 + $0x98] sm:$0xff]
        %v2416 = vld [vmem:[%s2401 + $0xa8] sm:$0xff]
        %v2417 = vld [vmem:[%s2401 + $0xb0] sm:$0xff]
        %v2418 = vlaneseq
        %v2419 = vshrl.u32 %v2418, 7
        %v2420 = vsub.s32 3, %v2419
        %v2421 = vrot.slane %v2258, %v2420
        %v2422 = vmul.f32 %v2402, %v2421
        %v2423 = vmul.f32 %v2403, %v2421
        %v2424 = vmul.f32 %v2404, %v2421
        %v2425 = vmul.f32 %v2405, %v2421
        %v2426 = vmul.f32 %v2406, %v2421
        %v2427 = vmul.f32 %v2407, %v2421
        %v2428 = vmul.f32 %v2408, %v2421
        %v2429 = vmul.f32 %v2409, %v2421
        %v2430 = vmul.f32 %v2410, %v2421
        %v2431 = vmul.f32 %v2411, %v2421
        %v2432 = vmul.f32 %v2412, %v2421
        %v2433 = vmul.f32 %v2413, %v2421
        %v2434 = vmul.f32 %v2414, %v2421
        %v2435 = vmul.f32 %v2415, %v2421
        %v2436 = vmul.f32 %v2416, %v2421
        %v2437 = vmul.f32 %v2417, %v2421
        %v2438 = vadd.f32 %v2385, %v2422
        %v2439 = vadd.f32 %v2386, %v2423
        %v2440 = vadd.f32 %v2387, %v2424
        %v2441 = vadd.f32 %v2388, %v2425
        %v2442 = vadd.f32 %v2389, %v2426
        %v2443 = vadd.f32 %v2390, %v2427
        %v2444 = vadd.f32 %v2391, %v2428
        %v2445 = vadd.f32 %v2392, %v2429
        %v2446 = vadd.f32 %v2393, %v2430
        %v2447 = vadd.f32 %v2394, %v2431
        %v2448 = vadd.f32 %v2395, %v2432
        %v2449 = vadd.f32 %v2396, %v2433
        %v2450 = vadd.f32 %v2397, %v2434
        %v2451 = vadd.f32 %v2398, %v2435
        %v2452 = vadd.f32 %v2399, %v2436
        %v2453 = vadd.f32 %v2400, %v2437
        %v2454 = vld [vmem:[%s2401 + $0x1] sm:$0xff]
        %v2455 = vld [vmem:[%s2401 + $0x9] sm:$0xff]
        %v2456 = vld [vmem:[%s2401 + $0x19] sm:$0xff]
        %v2457 = vld [vmem:[%s2401 + $0x21] sm:$0xff]
        %v2458 = vld [vmem:[%s2401 + $0x31] sm:$0xff]
        %v2459 = vld [vmem:[%s2401 + $0x39] sm:$0xff]
        %v2460 = vld [vmem:[%s2401 + $0x49] sm:$0xff]
        %v2461 = vld [vmem:[%s2401 + $0x51] sm:$0xff]
        %v2462 = vld [vmem:[%s2401 + $0x61] sm:$0xff]
        %v2463 = vld [vmem:[%s2401 + $0x69] sm:$0xff]
        %v2464 = vld [vmem:[%s2401 + $0x79] sm:$0xff]
        %v2465 = vld [vmem:[%s2401 + $0x81] sm:$0xff]
        %v2466 = vld [vmem:[%s2401 + $0x91] sm:$0xff]
        %v2467 = vld [vmem:[%s2401 + $0x99] sm:$0xff]
        %v2468 = vld [vmem:[%s2401 + $0xa9] sm:$0xff]
        %v2469 = vld [vmem:[%s2401 + $0xb1] sm:$0xff]
        %v2470 = vlaneseq
        %v2471 = vshrl.u32 %v2470, 7
        %v2472 = vsub.s32 4, %v2471
        %v2473 = vrot.slane %v2258, %v2472
        %v2474 = vmul.f32 %v2454, %v2473
        %v2475 = vmul.f32 %v2455, %v2473
        %v2476 = vmul.f32 %v2456, %v2473
        %v2477 = vmul.f32 %v2457, %v2473
        %v2478 = vmul.f32 %v2458, %v2473
        %v2479 = vmul.f32 %v2459, %v2473
        %v2480 = vmul.f32 %v2460, %v2473
        %v2481 = vmul.f32 %v2461, %v2473
        %v2482 = vmul.f32 %v2462, %v2473
        %v2483 = vmul.f32 %v2463, %v2473
        %v2484 = vmul.f32 %v2464, %v2473
        %v2485 = vmul.f32 %v2465, %v2473
        %v2486 = vmul.f32 %v2466, %v2473
        %v2487 = vmul.f32 %v2467, %v2473
        %v2488 = vmul.f32 %v2468, %v2473
        %v2489 = vmul.f32 %v2469, %v2473
        %v2490 = vadd.f32 %v2438, %v2474
        %v2491 = vadd.f32 %v2439, %v2475
        %v2492 = vadd.f32 %v2440, %v2476
        %v2493 = vadd.f32 %v2441, %v2477
        %v2494 = vadd.f32 %v2442, %v2478
        %v2495 = vadd.f32 %v2443, %v2479
        %v2496 = vadd.f32 %v2444, %v2480
        %v2497 = vadd.f32 %v2445, %v2481
        %v2498 = vadd.f32 %v2446, %v2482
        %v2499 = vadd.f32 %v2447, %v2483
        %v2500 = vadd.f32 %v2448, %v2484
        %v2501 = vadd.f32 %v2449, %v2485
        %v2502 = vadd.f32 %v2450, %v2486
        %v2503 = vadd.f32 %v2451, %v2487
        %v2504 = vadd.f32 %v2452, %v2488
        %v2505 = vadd.f32 %v2453, %v2489
        %v2506 = vld [vmem:[%s2401 + $0x2] sm:$0xff]
        %v2507 = vld [vmem:[%s2401 + $0xa] sm:$0xff]
        %v2508 = vld [vmem:[%s2401 + $0x1a] sm:$0xff]
        %v2509 = vld [vmem:[%s2401 + $0x22] sm:$0xff]
        %v2510 = vld [vmem:[%s2401 + $0x32] sm:$0xff]
        %v2511 = vld [vmem:[%s2401 + $0x3a] sm:$0xff]
        %v2512 = vld [vmem:[%s2401 + $0x4a] sm:$0xff]
        %v2513 = vld [vmem:[%s2401 + $0x52] sm:$0xff]
        %v2514 = vld [vmem:[%s2401 + $0x62] sm:$0xff]
        %v2515 = vld [vmem:[%s2401 + $0x6a] sm:$0xff]
        %v2516 = vld [vmem:[%s2401 + $0x7a] sm:$0xff]
        %v2517 = vld [vmem:[%s2401 + $0x82] sm:$0xff]
        %v2518 = vld [vmem:[%s2401 + $0x92] sm:$0xff]
        %v2519 = vld [vmem:[%s2401 + $0x9a] sm:$0xff]
        %v2520 = vld [vmem:[%s2401 + $0xaa] sm:$0xff]
        %v2521 = vld [vmem:[%s2401 + $0xb2] sm:$0xff]
        %v2522 = vlaneseq
        %v2523 = vshrl.u32 %v2522, 7
        %v2524 = vsub.s32 5, %v2523
        %v2525 = vrot.slane %v2258, %v2524
        %v2526 = vmul.f32 %v2506, %v2525
        %v2527 = vmul.f32 %v2507, %v2525
        %v2528 = vmul.f32 %v2508, %v2525
        %v2529 = vmul.f32 %v2509, %v2525
        %v2530 = vmul.f32 %v2510, %v2525
        %v2531 = vmul.f32 %v2511, %v2525
        %v2532 = vmul.f32 %v2512, %v2525
        %v2533 = vmul.f32 %v2513, %v2525
        %v2534 = vmul.f32 %v2514, %v2525
        %v2535 = vmul.f32 %v2515, %v2525
        %v2536 = vmul.f32 %v2516, %v2525
        %v2537 = vmul.f32 %v2517, %v2525
        %v2538 = vmul.f32 %v2518, %v2525
        %v2539 = vmul.f32 %v2519, %v2525
        %v2540 = vmul.f32 %v2520, %v2525
        %v2541 = vmul.f32 %v2521, %v2525
        %v2542 = vadd.f32 %v2490, %v2526
        %v2543 = vadd.f32 %v2491, %v2527
        %v2544 = vadd.f32 %v2492, %v2528
        %v2545 = vadd.f32 %v2493, %v2529
        %v2546 = vadd.f32 %v2494, %v2530
        %v2547 = vadd.f32 %v2495, %v2531
        %v2548 = vadd.f32 %v2496, %v2532
        %v2549 = vadd.f32 %v2497, %v2533
        %v2550 = vadd.f32 %v2498, %v2534
        %v2551 = vadd.f32 %v2499, %v2535
        %v2552 = vadd.f32 %v2500, %v2536
        %v2553 = vadd.f32 %v2501, %v2537
        %v2554 = vadd.f32 %v2502, %v2538
        %v2555 = vadd.f32 %v2503, %v2539
        %v2556 = vadd.f32 %v2504, %v2540
        %v2557 = vadd.f32 %v2505, %v2541
        %s2558 = scalar_lea.vmem [#allocation2], 48
        %v2559 = vld [vmem:[%s2558] sm:$0xff]
        %v2560 = vld [vmem:[%s2558 + $0x8] sm:$0xff]
        %v2561 = vld [vmem:[%s2558 + $0x18] sm:$0xff]
        %v2562 = vld [vmem:[%s2558 + $0x20] sm:$0xff]
        %v2563 = vld [vmem:[%s2558 + $0x30] sm:$0xff]
        %v2564 = vld [vmem:[%s2558 + $0x38] sm:$0xff]
        %v2565 = vld [vmem:[%s2558 + $0x48] sm:$0xff]
        %v2566 = vld [vmem:[%s2558 + $0x50] sm:$0xff]
        %v2567 = vld [vmem:[%s2558 + $0x60] sm:$0xff]
        %v2568 = vld [vmem:[%s2558 + $0x68] sm:$0xff]
        %v2569 = vld [vmem:[%s2558 + $0x78] sm:$0xff]
        %v2570 = vld [vmem:[%s2558 + $0x80] sm:$0xff]
        %v2571 = vld [vmem:[%s2558 + $0x90] sm:$0xff]
        %v2572 = vld [vmem:[%s2558 + $0x98] sm:$0xff]
        %v2573 = vld [vmem:[%s2558 + $0xa8] sm:$0xff]
        %v2574 = vld [vmem:[%s2558 + $0xb0] sm:$0xff]
        %v2575 = vlaneseq
        %v2576 = vshrl.u32 %v2575, 7
        %v2577 = vsub.s32 6, %v2576
        %v2578 = vrot.slane %v2258, %v2577
        %v2579 = vmul.f32 %v2559, %v2578
        %v2580 = vmul.f32 %v2560, %v2578
        %v2581 = vmul.f32 %v2561, %v2578
        %v2582 = vmul.f32 %v2562, %v2578
        %v2583 = vmul.f32 %v2563, %v2578
        %v2584 = vmul.f32 %v2564, %v2578
        %v2585 = vmul.f32 %v2565, %v2578
        %v2586 = vmul.f32 %v2566, %v2578
        %v2587 = vmul.f32 %v2567, %v2578
        %v2588 = vmul.f32 %v2568, %v2578
        %v2589 = vmul.f32 %v2569, %v2578
        %v2590 = vmul.f32 %v2570, %v2578
        %v2591 = vmul.f32 %v2571, %v2578
        %v2592 = vmul.f32 %v2572, %v2578
        %v2593 = vmul.f32 %v2573, %v2578
        %v2594 = vmul.f32 %v2574, %v2578
        %v2595 = vadd.f32 %v2542, %v2579
        %v2596 = vadd.f32 %v2543, %v2580
        %v2597 = vadd.f32 %v2544, %v2581
        %v2598 = vadd.f32 %v2545, %v2582
        %v2599 = vadd.f32 %v2546, %v2583
        %v2600 = vadd.f32 %v2547, %v2584
        %v2601 = vadd.f32 %v2548, %v2585
        %v2602 = vadd.f32 %v2549, %v2586
        %v2603 = vadd.f32 %v2550, %v2587
        %v2604 = vadd.f32 %v2551, %v2588
        %v2605 = vadd.f32 %v2552, %v2589
        %v2606 = vadd.f32 %v2553, %v2590
        %v2607 = vadd.f32 %v2554, %v2591
        %v2608 = vadd.f32 %v2555, %v2592
        %v2609 = vadd.f32 %v2556, %v2593
        %v2610 = vadd.f32 %v2557, %v2594
        %v2611 = vld [vmem:[%s2558 + $0x1] sm:$0xff]
        %v2612 = vld [vmem:[%s2558 + $0x9] sm:$0xff]
        %v2613 = vld [vmem:[%s2558 + $0x19] sm:$0xff]
        %v2614 = vld [vmem:[%s2558 + $0x21] sm:$0xff]
        %v2615 = vld [vmem:[%s2558 + $0x31] sm:$0xff]
        %v2616 = vld [vmem:[%s2558 + $0x39] sm:$0xff]
        %v2617 = vld [vmem:[%s2558 + $0x49] sm:$0xff]
        %v2618 = vld [vmem:[%s2558 + $0x51] sm:$0xff]
        %v2619 = vld [vmem:[%s2558 + $0x61] sm:$0xff]
        %v2620 = vld [vmem:[%s2558 + $0x69] sm:$0xff]
        %v2621 = vld [vmem:[%s2558 + $0x79] sm:$0xff]
        %v2622 = vld [vmem:[%s2558 + $0x81] sm:$0xff]
        %v2623 = vld [vmem:[%s2558 + $0x91] sm:$0xff]
        %v2624 = vld [vmem:[%s2558 + $0x99] sm:$0xff]
        %v2625 = vld [vmem:[%s2558 + $0xa9] sm:$0xff]
        %v2626 = vld [vmem:[%s2558 + $0xb1] sm:$0xff]
        %v2627 = vlaneseq
        %v2628 = vshrl.u32 %v2627, 7
        %v2629 = vsub.s32 7, %v2628
        %v2630 = vrot.slane %v2258, %v2629
        %v2631 = vmul.f32 %v2611, %v2630
        %v2632 = vmul.f32 %v2612, %v2630
        %v2633 = vmul.f32 %v2613, %v2630
        %v2634 = vmul.f32 %v2614, %v2630
        %v2635 = vmul.f32 %v2615, %v2630
        %v2636 = vmul.f32 %v2616, %v2630
        %v2637 = vmul.f32 %v2617, %v2630
        %v2638 = vmul.f32 %v2618, %v2630
        %v2639 = vmul.f32 %v2619, %v2630
        %v2640 = vmul.f32 %v2620, %v2630
        %v2641 = vmul.f32 %v2621, %v2630
        %v2642 = vmul.f32 %v2622, %v2630
        %v2643 = vmul.f32 %v2623, %v2630
        %v2644 = vmul.f32 %v2624, %v2630
        %v2645 = vmul.f32 %v2625, %v2630
        %v2646 = vmul.f32 %v2626, %v2630
        %v2647 = vadd.f32 %v2595, %v2631
        %v2648 = vadd.f32 %v2596, %v2632
        %v2649 = vadd.f32 %v2597, %v2633
        %v2650 = vadd.f32 %v2598, %v2634
        %v2651 = vadd.f32 %v2599, %v2635
        %v2652 = vadd.f32 %v2600, %v2636
        %v2653 = vadd.f32 %v2601, %v2637
        %v2654 = vadd.f32 %v2602, %v2638
        %v2655 = vadd.f32 %v2603, %v2639
        %v2656 = vadd.f32 %v2604, %v2640
        %v2657 = vadd.f32 %v2605, %v2641
        %v2658 = vadd.f32 %v2606, %v2642
        %v2659 = vadd.f32 %v2607, %v2643
        %v2660 = vadd.f32 %v2608, %v2644
        %v2661 = vadd.f32 %v2609, %v2645
        %v2662 = vadd.f32 %v2610, %v2646
        %v2663 = vld [vmem:[%s2558 + $0x2] sm:$0xff]
        %v2664 = vld [vmem:[%s2558 + $0xa] sm:$0xff]
        %v2665 = vld [vmem:[%s2558 + $0x1a] sm:$0xff]
        %v2666 = vld [vmem:[%s2558 + $0x22] sm:$0xff]
        %v2667 = vld [vmem:[%s2558 + $0x32] sm:$0xff]
        %v2668 = vld [vmem:[%s2558 + $0x3a] sm:$0xff]
        %v2669 = vld [vmem:[%s2558 + $0x4a] sm:$0xff]
        %v2670 = vld [vmem:[%s2558 + $0x52] sm:$0xff]
        %v2671 = vld [vmem:[%s2558 + $0x62] sm:$0xff]
        %v2672 = vld [vmem:[%s2558 + $0x6a] sm:$0xff]
        %v2673 = vld [vmem:[%s2558 + $0x7a] sm:$0xff]
        %v2674 = vld [vmem:[%s2558 + $0x82] sm:$0xff]
        %v2675 = vld [vmem:[%s2558 + $0x92] sm:$0xff]
        %v2676 = vld [vmem:[%s2558 + $0x9a] sm:$0xff]
        %v2677 = vld [vmem:[%s2558 + $0xaa] sm:$0xff]
        %v2678 = vld [vmem:[%s2558 + $0xb2] sm:$0xff]
        %v2679 = vlaneseq
        %v2680 = vshrl.u32 %v2679, 7
        %v2681 = vsub.s32 0, %v2680
        %v2682 = vrot.slane %v2259, %v2681
        %v2683 = vmul.f32 %v2663, %v2682
        %v2684 = vmul.f32 %v2664, %v2682
        %v2685 = vmul.f32 %v2665, %v2682
        %v2686 = vmul.f32 %v2666, %v2682
        %v2687 = vmul.f32 %v2667, %v2682
        %v2688 = vmul.f32 %v2668, %v2682
        %v2689 = vmul.f32 %v2669, %v2682
        %v2690 = vmul.f32 %v2670, %v2682
        %v2691 = vmul.f32 %v2671, %v2682
        %v2692 = vmul.f32 %v2672, %v2682
        %v2693 = vmul.f32 %v2673, %v2682
        %v2694 = vmul.f32 %v2674, %v2682
        %v2695 = vmul.f32 %v2675, %v2682
        %v2696 = vmul.f32 %v2676, %v2682
        %v2697 = vmul.f32 %v2677, %v2682
        %v2698 = vmul.f32 %v2678, %v2682
        %v2699 = vadd.f32 %v2647, %v2683
        %v2700 = vadd.f32 %v2648, %v2684
        %v2701 = vadd.f32 %v2649, %v2685
        %v2702 = vadd.f32 %v2650, %v2686
        %v2703 = vadd.f32 %v2651, %v2687
        %v2704 = vadd.f32 %v2652, %v2688
        %v2705 = vadd.f32 %v2653, %v2689
        %v2706 = vadd.f32 %v2654, %v2690
        %v2707 = vadd.f32 %v2655, %v2691
        %v2708 = vadd.f32 %v2656, %v2692
        %v2709 = vadd.f32 %v2657, %v2693
        %v2710 = vadd.f32 %v2658, %v2694
        %v2711 = vadd.f32 %v2659, %v2695
        %v2712 = vadd.f32 %v2660, %v2696
        %v2713 = vadd.f32 %v2661, %v2697
        %v2714 = vadd.f32 %v2662, %v2698
        %v2716 = vlaneseq
        %v2717 = vshrl.u32 %v2716, 7
        %v2718 = vsub.s32 0, %v2717
        %v2719 = vrot.slane %v2260, %v2718
        %v2721 = vadd.f32 %v2699, %v2719
        %v2722 = vadd.f32 %v2700, %v2719
        %v2723 = vadd.f32 %v2701, %v2719
        %v2724 = vadd.f32 %v2702, %v2719
        %v2725 = vadd.f32 %v2703, %v2719
        %v2726 = vadd.f32 %v2704, %v2719
        %v2727 = vadd.f32 %v2705, %v2719
        %v2728 = vadd.f32 %v2706, %v2719
        %v2729 = vadd.f32 %v2707, %v2719
        %v2730 = vadd.f32 %v2708, %v2719
        %v2731 = vadd.f32 %v2709, %v2719
        %v2732 = vadd.f32 %v2710, %v2719
        %v2733 = vadd.f32 %v2711, %v2719
        %v2734 = vadd.f32 %v2712, %v2719
        %v2735 = vadd.f32 %v2713, %v2719
        %v2736 = vadd.f32 %v2714, %v2719
        %v2737 = vmul.f32 %v2721, %v2721
        %v2738 = vmul.f32 %v2722, %v2722
        %v2739 = vmul.f32 %v2723, %v2723
        %v2740 = vmul.f32 %v2724, %v2724
        %v2741 = vmul.f32 %v2725, %v2725
        %v2742 = vmul.f32 %v2726, %v2726
        %v2743 = vmul.f32 %v2727, %v2727
        %v2744 = vmul.f32 %v2728, %v2728
        %v2745 = vmul.f32 %v2729, %v2729
        %v2746 = vmul.f32 %v2730, %v2730
        %v2747 = vmul.f32 %v2731, %v2731
        %v2748 = vmul.f32 %v2732, %v2732
        %v2749 = vmul.f32 %v2733, %v2733
        %v2750 = vmul.f32 %v2734, %v2734
        %v2751 = vmul.f32 %v2735, %v2735
        %v2752 = vmul.f32 %v2736, %v2736
        %v2753 = vmul.f32 %v2721, %v2737
        %v2754 = vmul.f32 %v2722, %v2738
        %v2755 = vmul.f32 %v2723, %v2739
        %v2756 = vmul.f32 %v2724, %v2740
        %v2757 = vmul.f32 %v2725, %v2741
        %v2758 = vmul.f32 %v2726, %v2742
        %v2759 = vmul.f32 %v2727, %v2743
        %v2760 = vmul.f32 %v2728, %v2744
        %v2761 = vmul.f32 %v2729, %v2745
        %v2762 = vmul.f32 %v2730, %v2746
        %v2763 = vmul.f32 %v2731, %v2747
        %v2764 = vmul.f32 %v2732, %v2748
        %v2765 = vmul.f32 %v2733, %v2749
        %v2766 = vmul.f32 %v2734, %v2750
        %v2767 = vmul.f32 %v2735, %v2751
        %v2768 = vmul.f32 %v2736, %v2752
        %v2769 = vmul.f32 %v2753, 0.044715
        %v2770 = vmul.f32 %v2754, 0.044715
        %v2771 = vmul.f32 %v2755, 0.044715
        %v2772 = vmul.f32 %v2756, 0.044715
        %v2773 = vmul.f32 %v2757, 0.044715
        %v2774 = vmul.f32 %v2758, 0.044715
        %v2775 = vmul.f32 %v2759, 0.044715
        %v2776 = vmul.f32 %v2760, 0.044715
        %v2777 = vmul.f32 %v2761, 0.044715
        %v2778 = vmul.f32 %v2762, 0.044715
        %v2779 = vmul.f32 %v2763, 0.044715
        %v2780 = vmul.f32 %v2764, 0.044715
        %v2781 = vmul.f32 %v2765, 0.044715
        %v2782 = vmul.f32 %v2766, 0.044715
        %v2783 = vmul.f32 %v2767, 0.044715
        %v2784 = vmul.f32 %v2768, 0.044715
        %v2785 = vadd.f32 %v2721, %v2769
        %v2786 = vadd.f32 %v2722, %v2770
        %v2787 = vadd.f32 %v2723, %v2771
        %v2788 = vadd.f32 %v2724, %v2772
        %v2789 = vadd.f32 %v2725, %v2773
        %v2790 = vadd.f32 %v2726, %v2774
        %v2791 = vadd.f32 %v2727, %v2775
        %v2792 = vadd.f32 %v2728, %v2776
        %v2793 = vadd.f32 %v2729, %v2777
        %v2794 = vadd.f32 %v2730, %v2778
        %v2795 = vadd.f32 %v2731, %v2779
        %v2796 = vadd.f32 %v2732, %v2780
        %v2797 = vadd.f32 %v2733, %v2781
        %v2798 = vadd.f32 %v2734, %v2782
        %v2799 = vadd.f32 %v2735, %v2783
        %v2800 = vadd.f32 %v2736, %v2784
        %v2801 = vmul.f32 %v2785, 0.7978846
        %v2802 = vmul.f32 %v2786, 0.7978846
        %v2803 = vmul.f32 %v2787, 0.7978846
        %v2804 = vmul.f32 %v2788, 0.7978846
        %v2805 = vmul.f32 %v2789, 0.7978846
        %v2806 = vmul.f32 %v2790, 0.7978846
        %v2807 = vmul.f32 %v2791, 0.7978846
        %v2808 = vmul.f32 %v2792, 0.7978846
        %v2809 = vmul.f32 %v2793, 0.7978846
        %v2810 = vmul.f32 %v2794, 0.7978846
        %v2811 = vmul.f32 %v2795, 0.7978846
        %v2812 = vmul.f32 %v2796, 0.7978846
        %v2813 = vmul.f32 %v2797, 0.7978846
        %v2814 = vmul.f32 %v2798, 0.7978846
        %v2815 = vmul.f32 %v2799, 0.7978846
        %v2816 = vmul.f32 %v2800, 0.7978846
        %v2817 = vtanh.pop %v2801
        %v2818 = vtanh.pop %v2802
        %v2819 = vtanh.pop %v2803
        %v2820 = vtanh.pop %v2804
        %v2821 = vtanh.pop %v2805
        %v2822 = vtanh.pop %v2806
        %v2823 = vtanh.pop %v2807
        %v2824 = vtanh.pop %v2808
        %v2825 = vtanh.pop %v2809
        %v2826 = vtanh.pop %v2810
        %v2827 = vtanh.pop %v2811
        %v2828 = vtanh.pop %v2812
        %v2829 = vtanh.pop %v2813
        %v2830 = vtanh.pop %v2814
        %v2831 = vtanh.pop %v2815
        %v2832 = vtanh.pop %v2816
        %v2833 = vadd.f32 %v2817, 1.0
        %v2834 = vadd.f32 %v2818, 1.0
        %v2835 = vadd.f32 %v2819, 1.0
        %v2836 = vadd.f32 %v2820, 1.0
        %v2837 = vadd.f32 %v2821, 1.0
        %v2838 = vadd.f32 %v2822, 1.0
        %v2839 = vadd.f32 %v2823, 1.0
        %v2840 = vadd.f32 %v2824, 1.0
        %v2841 = vadd.f32 %v2825, 1.0
        %v2842 = vadd.f32 %v2826, 1.0
        %v2843 = vadd.f32 %v2827, 1.0
        %v2844 = vadd.f32 %v2828, 1.0
        %v2845 = vadd.f32 %v2829, 1.0
        %v2846 = vadd.f32 %v2830, 1.0
        %v2847 = vadd.f32 %v2831, 1.0
        %v2848 = vadd.f32 %v2832, 1.0
        %v2849 = vmul.f32 %v2833, 0.5
        %v2850 = vmul.f32 %v2834, 0.5
        %v2851 = vmul.f32 %v2835, 0.5
        %v2852 = vmul.f32 %v2836, 0.5
        %v2853 = vmul.f32 %v2837, 0.5
        %v2854 = vmul.f32 %v2838, 0.5
        %v2855 = vmul.f32 %v2839, 0.5
        %v2856 = vmul.f32 %v2840, 0.5
        %v2857 = vmul.f32 %v2841, 0.5
        %v2858 = vmul.f32 %v2842, 0.5
        %v2859 = vmul.f32 %v2843, 0.5
        %v2860 = vmul.f32 %v2844, 0.5
        %v2861 = vmul.f32 %v2845, 0.5
        %v2862 = vmul.f32 %v2846, 0.5
        %v2863 = vmul.f32 %v2847, 0.5
        %v2864 = vmul.f32 %v2848, 0.5
        %v2865 = vmul.f32 %v2721, %v2849
        %v2866 = vmul.f32 %v2722, %v2850
        %v2867 = vmul.f32 %v2723, %v2851
        %v2868 = vmul.f32 %v2724, %v2852
        %v2869 = vmul.f32 %v2725, %v2853
        %v2870 = vmul.f32 %v2726, %v2854
        %v2871 = vmul.f32 %v2727, %v2855
        %v2872 = vmul.f32 %v2728, %v2856
        %v2873 = vmul.f32 %v2729, %v2857
        %v2874 = vmul.f32 %v2730, %v2858
        %v2875 = vmul.f32 %v2731, %v2859
        %v2876 = vmul.f32 %v2732, %v2860
        %v2877 = vmul.f32 %v2733, %v2861
        %v2878 = vmul.f32 %v2734, %v2862
        %v2879 = vmul.f32 %v2735, %v2863
        %v2880 = vmul.f32 %v2736, %v2864
        %v2881 = vxor.u32 %v2865, 2147483648
        %v2882 = vxor.u32 %v2866, 2147483648
        %v2883 = vxor.u32 %v2867, 2147483648
        %v2884 = vxor.u32 %v2868, 2147483648
        %v2885 = vxor.u32 %v2869, 2147483648
        %v2886 = vxor.u32 %v2870, 2147483648
        %v2887 = vxor.u32 %v2871, 2147483648
        %v2888 = vxor.u32 %v2872, 2147483648
        %v2889 = vxor.u32 %v2873, 2147483648
        %v2890 = vxor.u32 %v2874, 2147483648
        %v2891 = vxor.u32 %v2875, 2147483648
        %v2892 = vxor.u32 %v2876, 2147483648
        %v2893 = vxor.u32 %v2877, 2147483648
        %v2894 = vxor.u32 %v2878, 2147483648
        %v2895 = vxor.u32 %v2879, 2147483648
        %v2896 = vxor.u32 %v2880, 2147483648
        %v2897 = vmul.f32 %v2881, 1.442695
        %v2898 = vpow.pop %v2897
        %v2899 = vmul.f32 %v2882, 1.442695
        %v2900 = vpow.pop %v2899
        %v2901 = vmul.f32 %v2883, 1.442695
        %v2902 = vpow.pop %v2901
        %v2903 = vmul.f32 %v2884, 1.442695
        %v2904 = vpow.pop %v2903
        %v2905 = vmul.f32 %v2885, 1.442695
        %v2906 = vpow.pop %v2905
        %v2907 = vmul.f32 %v2886, 1.442695
        %v2908 = vpow.pop %v2907
        %v2909 = vmul.f32 %v2887, 1.442695
        %v2910 = vpow.pop %v2909
        %v2911 = vmul.f32 %v2888, 1.442695
        %v2912 = vpow.pop %v2911
        %v2913 = vmul.f32 %v2889, 1.442695
        %v2914 = vpow.pop %v2913
        %v2915 = vmul.f32 %v2890, 1.442695
        %v2916 = vpow.pop %v2915
        %v2917 = vmul.f32 %v2891, 1.442695
        %v2918 = vpow.pop %v2917
        %v2919 = vmul.f32 %v2892, 1.442695
        %v2920 = vpow.pop %v2919
        %v2921 = vmul.f32 %v2893, 1.442695
        %v2922 = vpow.pop %v2921
        %v2923 = vmul.f32 %v2894, 1.442695
        %v2924 = vpow.pop %v2923
        %v2925 = vmul.f32 %v2895, 1.442695
        %v2926 = vpow.pop %v2925
        %v2927 = vmul.f32 %v2896, 1.442695
        %v2928 = vpow.pop %v2927
        %v2929 = vadd.f32 %v2898, 1.0
        %v2930 = vadd.f32 %v2900, 1.0
        %v2931 = vadd.f32 %v2902, 1.0
        %v2932 = vadd.f32 %v2904, 1.0
        %v2933 = vadd.f32 %v2906, 1.0
        %v2934 = vadd.f32 %v2908, 1.0
        %v2935 = vadd.f32 %v2910, 1.0
        %v2936 = vadd.f32 %v2912, 1.0
        %v2937 = vadd.f32 %v2914, 1.0
        %v2938 = vadd.f32 %v2916, 1.0
        %v2939 = vadd.f32 %v2918, 1.0
        %v2940 = vadd.f32 %v2920, 1.0
        %v2941 = vadd.f32 %v2922, 1.0
        %v2942 = vadd.f32 %v2924, 1.0
        %v2943 = vadd.f32 %v2926, 1.0
        %v2944 = vadd.f32 %v2928, 1.0
        %v2945 = vrcp.pop %v2929
        %v2946 = vmul.f32 1.0, %v2945
        %v2947 = vrcp.pop %v2930
        %v2948 = vmul.f32 1.0, %v2947
        %v2949 = vrcp.pop %v2931
        %v2950 = vmul.f32 1.0, %v2949
        %v2951 = vrcp.pop %v2932
        %v2952 = vmul.f32 1.0, %v2951
        %v2953 = vrcp.pop %v2933
        %v2954 = vmul.f32 1.0, %v2953
        %v2955 = vrcp.pop %v2934
        %v2956 = vmul.f32 1.0, %v2955
        %v2957 = vrcp.pop %v2935
        %v2958 = vmul.f32 1.0, %v2957
        %v2959 = vrcp.pop %v2936
        %v2960 = vmul.f32 1.0, %v2959
        %v2961 = vrcp.pop %v2937
        %v2962 = vmul.f32 1.0, %v2961
        %v2963 = vrcp.pop %v2938
        %v2964 = vmul.f32 1.0, %v2963
        %v2965 = vrcp.pop %v2939
        %v2966 = vmul.f32 1.0, %v2965
        %v2967 = vrcp.pop %v2940
        %v2968 = vmul.f32 1.0, %v2967
        %v2969 = vrcp.pop %v2941
        %v2970 = vmul.f32 1.0, %v2969
        %v2971 = vrcp.pop %v2942
        %v2972 = vmul.f32 1.0, %v2971
        %v2973 = vrcp.pop %v2943
        %v2974 = vmul.f32 1.0, %v2973
        %v2975 = vrcp.pop %v2944
        %v2976 = vmul.f32 1.0, %v2975
        %v2977 = vld [vmem:[%s397] sm:$0xff]
        %v2978 = vld [vmem:[%s397 + $0x8] sm:$0xff]
        %v2979 = vld [vmem:[%s397 + $0x10] sm:$0xff]
        %v2980 = vld [vmem:[%s397 + $0x18] sm:$0xff]
        %v2981 = vld [vmem:[%s397 + $0x20] sm:$0xff]
        %v2982 = vld [vmem:[%s397 + $0x28] sm:$0xff]
        %v2983 = vld [vmem:[%s397 + $0x30] sm:$0xff]
        %v2984 = vld [vmem:[%s397 + $0x38] sm:$0xff]
        %v2985 = vld [vmem:[%s397 + $0x40] sm:$0xff]
        %v2986 = vld [vmem:[%s397 + $0x48] sm:$0xff]
        %v2987 = vld [vmem:[%s397 + $0x50] sm:$0xff]
        %v2988 = vld [vmem:[%s397 + $0x58] sm:$0xff]
        %v2989 = vld [vmem:[%s397 + $0x60] sm:$0xff]
        %v2990 = vld [vmem:[%s397 + $0x68] sm:$0xff]
        %v2991 = vld [vmem:[%s397 + $0x70] sm:$0xff]
        %v2992 = vld [vmem:[%s397 + $0x78] sm:$0xff]
        %s2993 = sadd.s32 %s406, 1
        %s2994 = smul.u32 %s2993, 16
        %s2995 = scalar_lea.vmem %s403, %s2994
        %v2996 = vld [vmem:[%s2995] sm:$0xff]
        %v2997 = vld [vmem:[%s2995 + $0x8] sm:$0xff]
        %v2998 = vld [vmem:[%s2995 + $0x10] sm:$0xff]
        %v2999 = vld [vmem:[%s2995 + $0x18] sm:$0xff]
        %v3000 = vld [vmem:[%s2995 + $0x20] sm:$0xff]
        %v3001 = vld [vmem:[%s2995 + $0x28] sm:$0xff]
        %v3002 = vld [vmem:[%s2995 + $0x30] sm:$0xff]
        %v3003 = vld [vmem:[%s2995 + $0x38] sm:$0xff]
        %v3004 = vld [vmem:[%s2995 + $0x40] sm:$0xff]
        %v3005 = vld [vmem:[%s2995 + $0x48] sm:$0xff]
        %v3006 = vld [vmem:[%s2995 + $0x50] sm:$0xff]
        %v3007 = vld [vmem:[%s2995 + $0x58] sm:$0xff]
        %v3008 = vld [vmem:[%s2995 + $0x60] sm:$0xff]
        %v3009 = vld [vmem:[%s2995 + $0x68] sm:$0xff]
        %v3010 = vld [vmem:[%s2995 + $0x70] sm:$0xff]
        %v3011 = vld [vmem:[%s2995 + $0x78] sm:$0xff]
        %v3012 = vmul.f32 %v2977, %v2946
        %v3013 = vmul.f32 %v2978, %v2948
        %v3014 = vmul.f32 %v2979, %v2950
        %v3015 = vmul.f32 %v2980, %v2952
        %v3016 = vmul.f32 %v2981, %v2954
        %v3017 = vmul.f32 %v2982, %v2956
        %v3018 = vmul.f32 %v2983, %v2958
        %v3019 = vmul.f32 %v2984, %v2960
        %v3020 = vmul.f32 %v2985, %v2962
        %v3021 = vmul.f32 %v2986, %v2964
        %v3022 = vmul.f32 %v2987, %v2966
        %v3023 = vmul.f32 %v2988, %v2968
        %v3024 = vmul.f32 %v2989, %v2970
        %v3025 = vmul.f32 %v2990, %v2972
        %v3026 = vmul.f32 %v2991, %v2974
        %v3027 = vmul.f32 %v2992, %v2976
        %v3028 = vsub.f32 1.0, %v2977
        %v3029 = vsub.f32 1.0, %v2978
        %v3030 = vsub.f32 1.0, %v2979
        %v3031 = vsub.f32 1.0, %v2980
        %v3032 = vsub.f32 1.0, %v2981
        %v3033 = vsub.f32 1.0, %v2982
        %v3034 = vsub.f32 1.0, %v2983
        %v3035 = vsub.f32 1.0, %v2984
        %v3036 = vsub.f32 1.0, %v2985
        %v3037 = vsub.f32 1.0, %v2986
        %v3038 = vsub.f32 1.0, %v2987
        %v3039 = vsub.f32 1.0, %v2988
        %v3040 = vsub.f32 1.0, %v2989
        %v3041 = vsub.f32 1.0, %v2990
        %v3042 = vsub.f32 1.0, %v2991
        %v3043 = vsub.f32 1.0, %v2992
        %v3044 = vmul.f32 %v3028, %v2996
        %v3045 = vmul.f32 %v3029, %v2997
        %v3046 = vmul.f32 %v3030, %v2998
        %v3047 = vmul.f32 %v3031, %v2999
        %v3048 = vmul.f32 %v3032, %v3000
        %v3049 = vmul.f32 %v3033, %v3001
        %v3050 = vmul.f32 %v3034, %v3002
        %v3051 = vmul.f32 %v3035, %v3003
        %v3052 = vmul.f32 %v3036, %v3004
        %v3053 = vmul.f32 %v3037, %v3005
        %v3054 = vmul.f32 %v3038, %v3006
        %v3055 = vmul.f32 %v3039, %v3007
        %v3056 = vmul.f32 %v3040, %v3008
        %v3057 = vmul.f32 %v3041, %v3009
        %v3058 = vmul.f32 %v3042, %v3010
        %v3059 = vmul.f32 %v3043, %v3011
        %v3060 = vadd.f32 %v3012, %v3044
        %v3061 = vadd.f32 %v3013, %v3045
        %v3062 = vadd.f32 %v3014, %v3046
        %v3063 = vadd.f32 %v3015, %v3047
        %v3064 = vadd.f32 %v3016, %v3048
        %v3065 = vadd.f32 %v3017, %v3049
        %v3066 = vadd.f32 %v3018, %v3050
        %v3067 = vadd.f32 %v3019, %v3051
        %v3068 = vadd.f32 %v3020, %v3052
        %v3069 = vadd.f32 %v3021, %v3053
        %v3070 = vadd.f32 %v3022, %v3054
        %v3071 = vadd.f32 %v3023, %v3055
        %v3072 = vadd.f32 %v3024, %v3056
        %v3073 = vadd.f32 %v3025, %v3057
        %v3074 = vadd.f32 %v3026, %v3058
        %v3075 = vadd.f32 %v3027, %v3059
        %3076 = vst.msk [vmem:[%s382] sm:$0xff] %vm1040, %v3060
        %3077 = vst.msk [vmem:[%s382 + $0x8] sm:$0xff] %vm1040, %v3061
        %3078 = vst.msk [vmem:[%s382 + $0x10] sm:$0xff] %vm1040, %v3062
        %3079 = vst.msk [vmem:[%s382 + $0x18] sm:$0xff] %vm1040, %v3063
        %3080 = vst.msk [vmem:[%s382 + $0x20] sm:$0xff] %vm1040, %v3064
        %3081 = vst.msk [vmem:[%s382 + $0x28] sm:$0xff] %vm1040, %v3065
        %3082 = vst.msk [vmem:[%s382 + $0x30] sm:$0xff] %vm1040, %v3066
        %3083 = vst.msk [vmem:[%s382 + $0x38] sm:$0xff] %vm1040, %v3067
        %3084 = vst.msk [vmem:[%s382 + $0x40] sm:$0xff] %vm1040, %v3068
        %3085 = vst.msk [vmem:[%s382 + $0x48] sm:$0xff] %vm1040, %v3069
        %3086 = vst.msk [vmem:[%s382 + $0x50] sm:$0xff] %vm1040, %v3070
        %3087 = vst.msk [vmem:[%s382 + $0x58] sm:$0xff] %vm1040, %v3071
        %3088 = vst.msk [vmem:[%s382 + $0x60] sm:$0xff] %vm1040, %v3072
        %3089 = vst.msk [vmem:[%s382 + $0x68] sm:$0xff] %vm1040, %v3073
        %3090 = vst.msk [vmem:[%s382 + $0x70] sm:$0xff] %vm1040, %v3074
        %3091 = vst.msk [vmem:[%s382 + $0x78] sm:$0xff] %vm1040, %v3075
        %s3092 = sand.u32 %s251, 1
        %s3093 = scalar_lea.sflag [#allocation4], %s3092
        %s3094 = sand.u32 %s251, 1
        %s3095 = smul.addr %s3094, 128
        %s3096 = scalar_lea.vmem [#allocation3], %s3095
        // Predicated region
        $region57: #{rec_conv_cell_forward.5} parent=55 // pred_check
          %p3097 = pneg %p261
        $region58: #{rec_conv_cell_forward.5} parent=55 // pred_check_branch
          %3099 = sbr.rel (%p3097) target = $region60
        $region59: #{rec_conv_cell_forward.5} parent=55 // pred_region
          %s3100 = smul.u32 8, %s28
          %s3102 = ssub.s32 2048, 2048
          %3103 = vsyncadd %s3093, %s3102
          %s3104 = smul.addr %s3100, 2
          %s3105 = smul.addr %s27, 32
          %s3106 = sadd.s32 %s3104, %s3105
          %s3107 = smul.addr %s3106, 128
          %s3108 = scalar_lea.hbm %s9, %s3107
          %s3109 = sshll.u32 %s3096, 4
          %s3110 = int_to_ptr.vmem [resolvable:$true] %s3109
          %3115 = dma.vmem_to_hbm [thread:$0]  %s3110, 2048, %s3108, %s3093, 128, 128, 8
        $region60: #{rec_conv_cell_forward.5} parent=55 // pred_fallthru
          _
      $region56: #{rec_conv_cell_forward.5} parent=5 // pred_fallthru
        _
      %p3116 = scmp.le.s32.totalorder 2, %s18
      // Predicated region
      $region61: #{rec_conv_cell_forward.5} parent=5 // pred_check
        %p3117 = pneg %p3116
      $region62: #{rec_conv_cell_forward.5} parent=5 // pred_check_branch
        %3119 = sbr.rel (%p3117) target = $region64
      $region63: #{rec_conv_cell_forward.5} parent=5 // pred_region
        %s3120 = ssub.s32 %s18, 2
        // Predicated region
        $region65: #{rec_conv_cell_forward.5} parent=63 // pred_check
          %p3121 = pneg %p267
        $region66: #{rec_conv_cell_forward.5} parent=63 // pred_check_branch
          %3123 = sbr.rel (%p3121) target = $region68
        $region67: #{rec_conv_cell_forward.5} parent=63 // pred_region
          %s3124 = sand.u32 %s252, 1
          %s3125 = scalar_lea.sflag [#allocation4], %s3124
          %s3126 = sand.u32 %s252, 1
          %s3127 = smul.addr %s3126, 128
          %s3128 = scalar_lea.vmem [#allocation3], %s3127
          %3129 = dma.done %s3125, 2048
        $region68: #{rec_conv_cell_forward.5} parent=63 // pred_fallthru
          _
      $region64: #{rec_conv_cell_forward.5} parent=5 // pred_fallthru
        _
    $region6: #{rec_conv_cell_forward.5} parent=1 // loop_footer
      %s22 = sadd.s32 1, %s18
    $region7: #{rec_conv_cell_forward.5} parent=1 // loop_footer_branch
      %17 = sbr.rel target = $region3
    $region8: #{rec_conv_cell_forward.5} parent=1 // loop_exit
      _
    %3130 = vsyncpa [#allocation4], 1
    %s3131 = scalar_lea.sflag [#allocation4], 1
    %3132 = vsyncpa %s3131, 1

</llo_original>
